<compile_context>
chip_gen: v7x
topology: tpu7x:2x2x1
jax: 0.10.0
libtpu: 0.0.40
codegen_flags: <defaults>
</compile_context>

<pallas_src>
import functools

import jax
import jax.numpy as jnp
from jax import lax
from jax.experimental import pallas as pl
from jax.experimental.pallas import tpu as pltpu

EMBED_DIM = 16      # Uformer embed_dim=16
MLP_RATIO = 4       # mlp_ratio=4.0
DEG_DIM = 32        # degradation-representation vector width (stand-in)
CIN = 3             # RGB
CIN_PAD = 8         # RGB channels zero-padded to a full sublane tile

_COMPILER_PARAMS = pltpu.CompilerParams(
    dimension_semantics=("parallel",),        # shard batch across TCs on v7x
    vmem_limit_bytes=32 * 1024 * 1024,        # explicit; fits v5e/v6e/v7x budgets
)


# ----------------------------------------------------------------------------
# In-kernel 3x3 conv: 9 shifted-view MXU dots (im2col never materialized)
# ----------------------------------------------------------------------------

def _conv3x3_tokens(xp, cw_ref, H, W):
    """xp: (H+2, W+2, Cin) value with a zero halo.  cw_ref: (9, Cin, Cout).
    Returns (H*W, Cout) f32 accumulated over the 9 taps."""
    T = H * W
    cin = xp.shape[-1]
    cout = cw_ref.shape[-1]
    acc = jnp.zeros((T, cout), jnp.float32)
    for tap in range(9):
        dy, dx = tap // 3, tap % 3
        x_tap = xp[dy:dy + H, dx:dx + W, :].reshape(T, cin)
        acc = acc + jnp.dot(x_tap, cw_ref[tap],
                            preferred_element_type=jnp.float32)
    return acc


# ----------------------------------------------------------------------------
# Kernel 1: fused encoder (conv proj + LeakyReLU + token MLP + residual)
# ----------------------------------------------------------------------------

def _encoder_kernel(xp_ref, cw_ref, cb_ref, w1_ref, b1_ref, w2_ref, b2_ref,
                    o_ref, *, H, W):
    xp = xp_ref[0]                                            # (H+2, W+2, Cpad)
    feat = _conv3x3_tokens(xp, cw_ref, H, W) + cb_ref[...]    # (H*W, E)
    feat = jnp.where(feat >= 0.0, feat, 0.01 * feat)          # LeakyReLU(0.01)
    # TODO(synk): LeFF-style token MLP + residual stands in for the Uformer body.
    h = jnp.dot(feat, w1_ref[...],
                preferred_element_type=jnp.float32) + b1_ref[...]
    # TODO(synk): PyTorch nn.GELU defaults to exact erf; tanh approx used here.
    h = jax.nn.gelu(h, approximate=True)
    h = jnp.dot(h, w2_ref[...],
                preferred_element_type=jnp.float32) + b2_ref[...]
    o_ref[0] = (feat + h).astype(o_ref.dtype)


def encoder_forward(params, xp):
    B, Hp, Wp, Cin = xp.shape
    H, W = Hp - 2, Wp - 2
    T = H * W
    E, HD = EMBED_DIM, EMBED_DIM * MLP_RATIO
    return pl.pallas_call(
        functools.partial(_encoder_kernel, H=H, W=W),
        out_shape=jax.ShapeDtypeStruct((B, T, E), jnp.float32),
        grid=(B,),
        in_specs=[
            pl.BlockSpec((1, Hp, Wp, Cin), lambda b: (b, 0, 0, 0)),
            pl.BlockSpec((9, Cin, E), lambda b: (0, 0, 0)),   # VMEM-resident
            pl.BlockSpec((1, E), lambda b: (0, 0)),
            pl.BlockSpec((E, HD), lambda b: (0, 0)),
            pl.BlockSpec((1, HD), lambda b: (0, 0)),
            pl.BlockSpec((HD, E), lambda b: (0, 0)),
            pl.BlockSpec((1, E), lambda b: (0, 0)),
        ],
        out_specs=pl.BlockSpec((1, T, E), lambda b: (b, 0, 0)),
        compiler_params=_COMPILER_PARAMS,
    )(xp, params["enc_conv_w"], params["enc_conv_b"],
      params["enc_mlp_w1"], params["enc_mlp_b1"],
      params["enc_mlp_w2"], params["enc_mlp_b2"])


# ----------------------------------------------------------------------------
# Kernel 2: fused degrep extractor (conv + ReLU + global mean pool + fc)
# ----------------------------------------------------------------------------

def _degrep_kernel(rp_ref, wl_ref, cw_ref, cb_ref, fc_ref, fcb_ref, o_ref,
                   *, H, W):
    E = cb_ref.shape[-1]
    rp = rp_ref[0]                                            # (H+2, W+2, Cpad)
    rf = _conv3x3_tokens(rp, cw_ref, H, W) + cb_ref[...]
    rf = jnp.maximum(rf, 0.0)                                 # ReLU
    pooled = jnp.mean(rf, axis=0, keepdims=True)              # (1, E) global pool
    fc = fc_ref[...]                                          # (E+1, DEG_DIM)
    # concat([pooled, white_level]) @ fc  ==  pooled @ fc[:E] + wl * fc[E:]
    nv = (jnp.dot(pooled, fc[:E, :], preferred_element_type=jnp.float32)
          + wl_ref[0] * fc[E:E + 1, :] + fcb_ref[...])
    o_ref[0] = nv.astype(o_ref.dtype)


def degrep_forward(params, rp, white_level):
    B, Hp, Wp, Cin = rp.shape
    H, W = Hp - 2, Wp - 2
    E, D = EMBED_DIM, DEG_DIM
    wl = white_level.reshape(B, 1, 1).astype(jnp.float32)
    return pl.pallas_call(
        functools.partial(_degrep_kernel, H=H, W=W),
        out_shape=jax.ShapeDtypeStruct((B, 1, D), jnp.float32),
        grid=(B,),
        in_specs=[
            pl.BlockSpec((1, Hp, Wp, Cin), lambda b: (b, 0, 0, 0)),
            pl.BlockSpec((1, 1, 1), lambda b: (b, 0, 0)),
            pl.BlockSpec((9, Cin, E), lambda b: (0, 0, 0)),
            pl.BlockSpec((1, E), lambda b: (0, 0)),
            pl.BlockSpec((E + 1, D), lambda b: (0, 0)),
            pl.BlockSpec((1, D), lambda b: (0, 0)),
        ],
        out_specs=pl.BlockSpec((1, 1, D), lambda b: (b, 0, 0)),
        compiler_params=_COMPILER_PARAMS,
    )(rp, wl, params["deg_conv_w"], params["deg_conv_b"],
      params["deg_fc_w"], params["deg_fc_b"])


# ----------------------------------------------------------------------------
# Kernel 3: fused decoder (noise_vec -> FiLM modulation + conv3x3 -> RGB)
# ----------------------------------------------------------------------------

def _decoder_kernel(*refs, H, W, C, use_mod):
    if use_mod:
        embp_ref, nv_ref, wm_ref, bm_ref, cw_ref, cb_ref, o_ref = refs
    else:
        embp_ref, cw_ref, cb_ref, o_ref = refs
    Hp, Wp = H + 2, W + 2
    y = embp_ref[0]                                           # (H+2, W+2, C), zero halo
    if use_mod:
        nv = nv_ref[0]                                        # (1, DEG_DIM)
        mod = jnp.dot(nv, wm_ref[...],
                      preferred_element_type=jnp.float32) + bm_ref[...]
        scale = mod[:, :C].reshape(1, 1, C)
        shift = mod[:, C:].reshape(1, 1, C)
        # FiLM modulation fused with the conv; keep the zero-pad halo at zero.
        row = lax.broadcasted_iota(jnp.int32, (Hp, Wp, C), 0)
        col = lax.broadcasted_iota(jnp.int32, (Hp, Wp, C), 1)
        interior = ((row >= 1) & (row <= H) &
                    (col >= 1) & (col <= W)).astype(jnp.float32)
        y = (y * (1.0 + scale) + shift) * interior
    acc = _conv3x3_tokens(y, cw_ref, H, W)                    # (H*W, 3)
    # TODO(synk): a transposed (3, H*W) lane-dense store would also delete the
    #             wrapper-side NHWC->NCHW transpose; kept simple for robustness.
    o_ref[0] = (acc + cb_ref[...]).astype(o_ref.dtype)


def decoder_forward(params, emb_pad, noise_vec):
    B, Hp, Wp, E = emb_pad.shape
    H, W = Hp - 2, Wp - 2
    T = H * W
    use_mod = noise_vec is not None
    in_specs = [pl.BlockSpec((1, Hp, Wp, E), lambda b: (b, 0, 0, 0))]
    args = [emb_pad]
    if use_mod:
        in_specs += [
            pl.BlockSpec((1, 1, DEG_DIM), lambda b: (b, 0, 0)),
            pl.BlockSpec((DEG_DIM, 2 * E), lambda b: (0, 0)),
            pl.BlockSpec((1, 2 * E), lambda b: (0, 0)),
        ]
        args += [noise_vec, params["dec_mod_w"], params["dec_mod_b"]]
    in_specs += [
        pl.BlockSpec((9, E, 3), lambda b: (0, 0, 0)),
        pl.BlockSpec((1, 3), lambda b: (0, 0)),
    ]
    args += [params["dec_conv_w"], params["dec_conv_b"]]
    return pl.pallas_call(
        functools.partial(_decoder_kernel, H=H, W=W, C=E, use_mod=use_mod),
        out_shape=jax.ShapeDtypeStruct((B, T, 3), jnp.float32),
        grid=(B,),
        in_specs=in_specs,
        out_specs=pl.BlockSpec((1, T, 3), lambda b: (b, 0, 0)),
        compiler_params=_COMPILER_PARAMS,
    )(*args)


# ----------------------------------------------------------------------------
# Parameters and forward composition
# ----------------------------------------------------------------------------

def init_params(key):
    def normal(k, shape):
        return 0.02 * jax.random.normal(k, shape, dtype=jnp.float32)

    ks = jax.random.split(key, 8)
    E, HD, D = EMBED_DIM, EMBED_DIM * MLP_RATIO, DEG_DIM

    def rgb_conv_w(k):
        w = normal(k, (9, CIN, E))
        return jnp.pad(w, ((0, 0), (0, CIN_PAD - CIN), (0, 0)))  # inert pad rows

    return {
        # encoder (Uformer stub): input_proj conv3x3 3->16 + LeFF token MLP
        "enc_conv_w": rgb_conv_w(ks[0]),
        "enc_conv_b": jnp.zeros((1, E), jnp.float32),
        "enc_mlp_w1": normal(ks[1], (E, HD)),
        "enc_mlp_b1": jnp.zeros((1, HD), jnp.float32),
        "enc_mlp_w2": normal(ks[2], (HD, E)),
        "enc_mlp_b2": jnp.zeros((1, E), jnp.float32),
        # degrep extractor: conv3x3 3->16, global pool, concat white_level, fc
        "deg_conv_w": rgb_conv_w(ks[3]),
        "deg_conv_b": jnp.zeros((1, E), jnp.float32),
        "deg_fc_w": normal(ks[4], (E + 1, D)),
        "deg_fc_b": jnp.zeros((1, D), jnp.float32),
        # decoder: noise_vec -> (scale, shift) FiLM, conv3x3 16->3
        "dec_mod_w": normal(ks[5], (D, 2 * E)),
        "dec_mod_b": jnp.zeros((1, 2 * E), jnp.float32),
        "dec_conv_w": normal(ks[6], (9, E, 3)),
        "dec_conv_b": jnp.zeros((1, 3), jnp.float32),
    }


def _nhwc_halo_pad(x_nchw, c_pad):
    """NCHW -> NHWC, zero-pad channels to c_pad and spatial dims by 1 (conv halo)."""
    B, C, H, W = x_nchw.shape
    x = jnp.transpose(x_nchw, (0, 2, 3, 1))
    return jnp.pad(x, ((0, 0), (1, 1), (1, 1), (0, c_pad - C)))


def degae_forward(params, noisy_rgb, ref_rgb, white_level, skip_condition=False):
    """noisy_rgb/ref_rgb: (B,3,H,W) NCHW; white_level: (B,1). Returns (B,3,H,W)."""
    B, _, H, W = noisy_rgb.shape

    # encoder: img_embed = Uformer(noisy_rgb)
    xp = _nhwc_halo_pad(noisy_rgb, CIN_PAD)
    img_embed = encoder_forward(params, xp)                     # (B, H*W, 16)

    # degrep_extractor(ref_rgb, white_level)
    noise_vec = None
    if not skip_condition:
        rp = _nhwc_halo_pad(ref_rgb, CIN_PAD)
        noise_vec = degrep_forward(params, rp, white_level)     # (B, 1, 32)

    # decoder(img_embed, noise_vec)  (zero halo added for the 3x3 conv)
    emb_pad = jnp.pad(img_embed.reshape(B, H, W, EMBED_DIM),
                      ((0, 0), (1, 1), (1, 1), (0, 0)))
    out = decoder_forward(params, emb_pad, noise_vec)           # (B, H*W, 3)
    out = out.reshape(B, H, W, 3)
    return jnp.transpose(out, (0, 3, 1, 2))                     # NCHW


# ----------------------------------------------------------------------------
# Driver
# ----------------------------------------------------------------------------

if __name__ == "__main__":
    key = jax.random.PRNGKey(0)
    k_par, k_noisy, k_ref, k_wl = jax.random.split(key, 4)

    params = init_params(k_par)

    B, H, W = 2, 16, 16
    noisy_rgb = jax.random.normal(k_noisy, (B, 3, H, W), dtype=jnp.float32)
    ref_rgb = jax.random.normal(k_ref, (B, 3, H, W), dtype=jnp.float32)
    white_level = jax.random.uniform(k_wl, (B, 1), dtype=jnp.float32,
                                     minval=0.5, maxval=1.0)

    fwd = jax.jit(functools.partial(degae_forward, skip_condition=False))
    reconst = fwd(params, noisy_rgb, ref_rgb, white_level)
    jax.block_until_ready(reconst)

    assert reconst.shape == (B, 3, H, W), reconst.shape
    assert reconst.dtype == jnp.float32
    print("KERNEL_OK")
</pallas_src>

<mosaic_0001>
module attributes {stable_mosaic.version = 11 : i64} {
  func.func @_encoder_kernel(%arg0: i32, %arg1: memref<1x18x18x8xf32, #tpu.memory_space<vmem>>, %arg2: memref<9x8x16xf32, #tpu.memory_space<vmem>>, %arg3: memref<1x16xf32, #tpu.memory_space<vmem>>, %arg4: memref<16x64xf32, #tpu.memory_space<vmem>>, %arg5: memref<1x64xf32, #tpu.memory_space<vmem>>, %arg6: memref<64x16xf32, #tpu.memory_space<vmem>>, %arg7: memref<1x16xf32, #tpu.memory_space<vmem>>, %arg8: memref<1x256x16xf32, #tpu.memory_space<vmem>>) attributes {dimension_semantics = [#tpu.dimension_semantics<parallel>], iteration_bounds = array<i64: 2>, scalar_prefetch = 0 : i64, scratch_operands = 0 : i64, tpu.core_type = #tpu.core_type<tc>, window_params = [{transform_indices = @transform_0, window_bounds = array<i64: 1, 18, 18, 8>}, {pipeline_mode = #tpu.pipeline_mode<synchronous>, transform_indices = @transform_1, window_bounds = array<i64: 9, 8, 16>}, {pipeline_mode = #tpu.pipeline_mode<synchronous>, transform_indices = @transform_2, window_bounds = array<i64: 1, 16>}, {pipeline_mode = #tpu.pipeline_mode<synchronous>, transform_indices = @transform_3, window_bounds = array<i64: 16, 64>}, {pipeline_mode = #tpu.pipeline_mode<synchronous>, transform_indices = @transform_4, window_bounds = array<i64: 1, 64>}, {pipeline_mode = #tpu.pipeline_mode<synchronous>, transform_indices = @transform_5, window_bounds = array<i64: 64, 16>}, {pipeline_mode = #tpu.pipeline_mode<synchronous>, transform_indices = @transform_6, window_bounds = array<i64: 1, 16>}, {transform_indices = @transform_7, window_bounds = array<i64: 1, 256, 16>}]} {
    %c0 = arith.constant 0 : index
    %c0_0 = arith.constant 0 : index
    %c0_1 = arith.constant 0 : index
    %c0_2 = arith.constant 0 : index
    %0 = vector.load %arg1[%c0, %c0_0, %c0_1, %c0_2] : memref<1x18x18x8xf32, #tpu.memory_space<vmem>>, vector<1x18x18x8xf32>
    %1 = vector.shape_cast %0 : vector<1x18x18x8xf32> to vector<18x18x8xf32>
    %cst = arith.constant 0.000000e+00 : f32
    %2 = vector.broadcast %cst : f32 to vector<256x16xf32>
    %3 = vector.extract_strided_slice %1 {offsets = [0, 0, 0], sizes = [16, 16, 8], strides = [1, 1, 1]} : vector<18x18x8xf32> to vector<16x16x8xf32>
    %4 = vector.shape_cast %3 : vector<16x16x8xf32> to vector<256x8xf32>
    %c0_3 = arith.constant 0 : index
    %c0_4 = arith.constant 0 : index
    %c0_5 = arith.constant 0 : index
    %5 = vector.load %arg2[%c0_3, %c0_4, %c0_5] : memref<9x8x16xf32, #tpu.memory_space<vmem>>, vector<1x8x16xf32>
    %6 = vector.shape_cast %5 : vector<1x8x16xf32> to vector<8x16xf32>
    %cst_6 = arith.constant dense<0.000000e+00> : vector<256x16xf32>
    %7 = tpu.matmul %4, %6, %cst_6 {dimension_numbers = #tpu.dot_dimension_numbers<[1], [0], [0], [1], [0, 0, 1, 1], [], []>} : vector<256x8xf32>, vector<8x16xf32>, vector<256x16xf32> -> vector<256x16xf32>
    %8 = arith.addf %2, %7 : vector<256x16xf32>
    %9 = vector.extract_strided_slice %1 {offsets = [0, 1, 0], sizes = [16, 16, 8], strides = [1, 1, 1]} : vector<18x18x8xf32> to vector<16x16x8xf32>
    %10 = vector.shape_cast %9 : vector<16x16x8xf32> to vector<256x8xf32>
    %c1 = arith.constant 1 : index
    %c0_7 = arith.constant 0 : index
    %c0_8 = arith.constant 0 : index
    %11 = vector.load %arg2[%c1, %c0_7, %c0_8] : memref<9x8x16xf32, #tpu.memory_space<vmem>>, vector<1x8x16xf32>
    %12 = vector.shape_cast %11 : vector<1x8x16xf32> to vector<8x16xf32>
    %cst_9 = arith.constant dense<0.000000e+00> : vector<256x16xf32>
    %13 = tpu.matmul %10, %12, %cst_9 {dimension_numbers = #tpu.dot_dimension_numbers<[1], [0], [0], [1], [0, 0, 1, 1], [], []>} : vector<256x8xf32>, vector<8x16xf32>, vector<256x16xf32> -> vector<256x16xf32>
    %14 = arith.addf %8, %13 : vector<256x16xf32>
    %15 = vector.extract_strided_slice %1 {offsets = [0, 2, 0], sizes = [16, 16, 8], strides = [1, 1, 1]} : vector<18x18x8xf32> to vector<16x16x8xf32>
    %16 = vector.shape_cast %15 : vector<16x16x8xf32> to vector<256x8xf32>
    %c2 = arith.constant 2 : index
    %c0_10 = arith.constant 0 : index
    %c0_11 = arith.constant 0 : index
    %17 = vector.load %arg2[%c2, %c0_10, %c0_11] : memref<9x8x16xf32, #tpu.memory_space<vmem>>, vector<1x8x16xf32>
    %18 = vector.shape_cast %17 : vector<1x8x16xf32> to vector<8x16xf32>
    %cst_12 = arith.constant dense<0.000000e+00> : vector<256x16xf32>
    %19 = tpu.matmul %16, %18, %cst_12 {dimension_numbers = #tpu.dot_dimension_numbers<[1], [0], [0], [1], [0, 0, 1, 1], [], []>} : vector<256x8xf32>, vector<8x16xf32>, vector<256x16xf32> -> vector<256x16xf32>
    %20 = arith.addf %14, %19 : vector<256x16xf32>
    %21 = vector.extract_strided_slice %1 {offsets = [1, 0, 0], sizes = [16, 16, 8], strides = [1, 1, 1]} : vector<18x18x8xf32> to vector<16x16x8xf32>
    %22 = vector.shape_cast %21 : vector<16x16x8xf32> to vector<256x8xf32>
    %c3 = arith.constant 3 : index
    %c0_13 = arith.constant 0 : index
    %c0_14 = arith.constant 0 : index
    %23 = vector.load %arg2[%c3, %c0_13, %c0_14] : memref<9x8x16xf32, #tpu.memory_space<vmem>>, vector<1x8x16xf32>
    %24 = vector.shape_cast %23 : vector<1x8x16xf32> to vector<8x16xf32>
    %cst_15 = arith.constant dense<0.000000e+00> : vector<256x16xf32>
    %25 = tpu.matmul %22, %24, %cst_15 {dimension_numbers = #tpu.dot_dimension_numbers<[1], [0], [0], [1], [0, 0, 1, 1], [], []>} : vector<256x8xf32>, vector<8x16xf32>, vector<256x16xf32> -> vector<256x16xf32>
    %26 = arith.addf %20, %25 : vector<256x16xf32>
    %27 = vector.extract_strided_slice %1 {offsets = [1, 1, 0], sizes = [16, 16, 8], strides = [1, 1, 1]} : vector<18x18x8xf32> to vector<16x16x8xf32>
    %28 = vector.shape_cast %27 : vector<16x16x8xf32> to vector<256x8xf32>
    %c4 = arith.constant 4 : index
    %c0_16 = arith.constant 0 : index
    %c0_17 = arith.constant 0 : index
    %29 = vector.load %arg2[%c4, %c0_16, %c0_17] : memref<9x8x16xf32, #tpu.memory_space<vmem>>, vector<1x8x16xf32>
    %30 = vector.shape_cast %29 : vector<1x8x16xf32> to vector<8x16xf32>
    %cst_18 = arith.constant dense<0.000000e+00> : vector<256x16xf32>
    %31 = tpu.matmul %28, %30, %cst_18 {dimension_numbers = #tpu.dot_dimension_numbers<[1], [0], [0], [1], [0, 0, 1, 1], [], []>} : vector<256x8xf32>, vector<8x16xf32>, vector<256x16xf32> -> vector<256x16xf32>
    %32 = arith.addf %26, %31 : vector<256x16xf32>
    %33 = vector.extract_strided_slice %1 {offsets = [1, 2, 0], sizes = [16, 16, 8], strides = [1, 1, 1]} : vector<18x18x8xf32> to vector<16x16x8xf32>
    %34 = vector.shape_cast %33 : vector<16x16x8xf32> to vector<256x8xf32>
    %c5 = arith.constant 5 : index
    %c0_19 = arith.constant 0 : index
    %c0_20 = arith.constant 0 : index
    %35 = vector.load %arg2[%c5, %c0_19, %c0_20] : memref<9x8x16xf32, #tpu.memory_space<vmem>>, vector<1x8x16xf32>
    %36 = vector.shape_cast %35 : vector<1x8x16xf32> to vector<8x16xf32>
    %cst_21 = arith.constant dense<0.000000e+00> : vector<256x16xf32>
    %37 = tpu.matmul %34, %36, %cst_21 {dimension_numbers = #tpu.dot_dimension_numbers<[1], [0], [0], [1], [0, 0, 1, 1], [], []>} : vector<256x8xf32>, vector<8x16xf32>, vector<256x16xf32> -> vector<256x16xf32>
    %38 = arith.addf %32, %37 : vector<256x16xf32>
    %39 = vector.extract_strided_slice %1 {offsets = [2, 0, 0], sizes = [16, 16, 8], strides = [1, 1, 1]} : vector<18x18x8xf32> to vector<16x16x8xf32>
    %40 = vector.shape_cast %39 : vector<16x16x8xf32> to vector<256x8xf32>
    %c6 = arith.constant 6 : index
    %c0_22 = arith.constant 0 : index
    %c0_23 = arith.constant 0 : index
    %41 = vector.load %arg2[%c6, %c0_22, %c0_23] : memref<9x8x16xf32, #tpu.memory_space<vmem>>, vector<1x8x16xf32>
    %42 = vector.shape_cast %41 : vector<1x8x16xf32> to vector<8x16xf32>
    %cst_24 = arith.constant dense<0.000000e+00> : vector<256x16xf32>
    %43 = tpu.matmul %40, %42, %cst_24 {dimension_numbers = #tpu.dot_dimension_numbers<[1], [0], [0], [1], [0, 0, 1, 1], [], []>} : vector<256x8xf32>, vector<8x16xf32>, vector<256x16xf32> -> vector<256x16xf32>
    %44 = arith.addf %38, %43 : vector<256x16xf32>
    %45 = vector.extract_strided_slice %1 {offsets = [2, 1, 0], sizes = [16, 16, 8], strides = [1, 1, 1]} : vector<18x18x8xf32> to vector<16x16x8xf32>
    %46 = vector.shape_cast %45 : vector<16x16x8xf32> to vector<256x8xf32>
    %c7 = arith.constant 7 : index
    %c0_25 = arith.constant 0 : index
    %c0_26 = arith.constant 0 : index
    %47 = vector.load %arg2[%c7, %c0_25, %c0_26] : memref<9x8x16xf32, #tpu.memory_space<vmem>>, vector<1x8x16xf32>
    %48 = vector.shape_cast %47 : vector<1x8x16xf32> to vector<8x16xf32>
    %cst_27 = arith.constant dense<0.000000e+00> : vector<256x16xf32>
    %49 = tpu.matmul %46, %48, %cst_27 {dimension_numbers = #tpu.dot_dimension_numbers<[1], [0], [0], [1], [0, 0, 1, 1], [], []>} : vector<256x8xf32>, vector<8x16xf32>, vector<256x16xf32> -> vector<256x16xf32>
    %50 = arith.addf %44, %49 : vector<256x16xf32>
    %51 = vector.extract_strided_slice %1 {offsets = [2, 2, 0], sizes = [16, 16, 8], strides = [1, 1, 1]} : vector<18x18x8xf32> to vector<16x16x8xf32>
    %52 = vector.shape_cast %51 : vector<16x16x8xf32> to vector<256x8xf32>
    %c8 = arith.constant 8 : index
    %c0_28 = arith.constant 0 : index
    %c0_29 = arith.constant 0 : index
    %53 = vector.load %arg2[%c8, %c0_28, %c0_29] : memref<9x8x16xf32, #tpu.memory_space<vmem>>, vector<1x8x16xf32>
    %54 = vector.shape_cast %53 : vector<1x8x16xf32> to vector<8x16xf32>
    %cst_30 = arith.constant dense<0.000000e+00> : vector<256x16xf32>
    %55 = tpu.matmul %52, %54, %cst_30 {dimension_numbers = #tpu.dot_dimension_numbers<[1], [0], [0], [1], [0, 0, 1, 1], [], []>} : vector<256x8xf32>, vector<8x16xf32>, vector<256x16xf32> -> vector<256x16xf32>
    %56 = arith.addf %50, %55 : vector<256x16xf32>
    %c0_31 = arith.constant 0 : index
    %c0_32 = arith.constant 0 : index
    %57 = vector.load %arg3[%c0_31, %c0_32] : memref<1x16xf32, #tpu.memory_space<vmem>>, vector<1x16xf32>
    %58 = vector.broadcast %57 : vector<1x16xf32> to vector<256x16xf32>
    %59 = arith.addf %56, %58 : vector<256x16xf32>
    %cst_33 = arith.constant 0.000000e+00 : f32
    %60 = vector.broadcast %cst_33 : f32 to vector<256x16xf32>
    %61 = arith.cmpf oge, %59, %60 : vector<256x16xf32>
    %cst_34 = arith.constant 0.00999999977 : f32
    %62 = vector.broadcast %cst_34 : f32 to vector<256x16xf32>
    %63 = arith.mulf %62, %59 : vector<256x16xf32>
    %64 = arith.select %61, %59, %63 : vector<256x16xi1>, vector<256x16xf32>
    %c0_35 = arith.constant 0 : index
    %c0_36 = arith.constant 0 : index
    %65 = vector.load %arg4[%c0_35, %c0_36] : memref<16x64xf32, #tpu.memory_space<vmem>>, vector<16x64xf32>
    %cst_37 = arith.constant dense<0.000000e+00> : vector<256x64xf32>
    %66 = tpu.matmul %64, %65, %cst_37 {dimension_numbers = #tpu.dot_dimension_numbers<[1], [0], [0], [1], [0, 0, 1, 1], [], []>} : vector<256x16xf32>, vector<16x64xf32>, vector<256x64xf32> -> vector<256x64xf32>
    %c0_38 = arith.constant 0 : index
    %c0_39 = arith.constant 0 : index
    %67 = vector.load %arg5[%c0_38, %c0_39] : memref<1x64xf32, #tpu.memory_space<vmem>>, vector<1x64xf32>
    %68 = vector.broadcast %67 : vector<1x64xf32> to vector<256x64xf32>
    %69 = arith.addf %66, %68 : vector<256x64xf32>
    %70 = arith.mulf %69, %69 : vector<256x64xf32>
    %71 = arith.mulf %69, %70 : vector<256x64xf32>
    %cst_40 = arith.constant 4.471500e-02 : f32
    %72 = vector.broadcast %cst_40 : f32 to vector<256x64xf32>
    %73 = arith.mulf %72, %71 : vector<256x64xf32>
    %74 = arith.addf %69, %73 : vector<256x64xf32>
    %cst_41 = arith.constant 0.797884583 : f32
    %75 = vector.broadcast %cst_41 : f32 to vector<256x64xf32>
    %76 = arith.mulf %75, %74 : vector<256x64xf32>
    %77 = math.tanh %76 : vector<256x64xf32>
    %cst_42 = arith.constant 1.000000e+00 : f32
    %78 = vector.broadcast %cst_42 : f32 to vector<256x64xf32>
    %79 = arith.addf %78, %77 : vector<256x64xf32>
    %cst_43 = arith.constant 5.000000e-01 : f32
    %80 = vector.broadcast %cst_43 : f32 to vector<256x64xf32>
    %81 = arith.mulf %80, %79 : vector<256x64xf32>
    %82 = arith.mulf %69, %81 : vector<256x64xf32>
    %c0_44 = arith.constant 0 : index
    %c0_45 = arith.constant 0 : index
    %83 = vector.load %arg6[%c0_44, %c0_45] : memref<64x16xf32, #tpu.memory_space<vmem>>, vector<64x16xf32>
    %cst_46 = arith.constant dense<0.000000e+00> : vector<256x16xf32>
    %84 = tpu.matmul %82, %83, %cst_46 {dimension_numbers = #tpu.dot_dimension_numbers<[1], [0], [0], [1], [0, 0, 1, 1], [], []>} : vector<256x64xf32>, vector<64x16xf32>, vector<256x16xf32> -> vector<256x16xf32>
    %c0_47 = arith.constant 0 : index
    %c0_48 = arith.constant 0 : index
    %85 = vector.load %arg7[%c0_47, %c0_48] : memref<1x16xf32, #tpu.memory_space<vmem>>, vector<1x16xf32>
    %86 = vector.broadcast %85 : vector<1x16xf32> to vector<256x16xf32>
    %87 = arith.addf %84, %86 : vector<256x16xf32>
    %88 = arith.addf %64, %87 : vector<256x16xf32>
    %c0_49 = arith.constant 0 : index
    %c0_50 = arith.constant 0 : index
    %c0_51 = arith.constant 0 : index
    %89 = vector.load %arg8[%c0_49, %c0_50, %c0_51] : memref<1x256x16xf32, #tpu.memory_space<vmem>>, vector<1x256x16xf32>
    %90 = vector.shape_cast %89 : vector<1x256x16xf32> to vector<256x16xf32>
    %91 = vector.shape_cast %88 : vector<256x16xf32> to vector<1x256x16xf32>
    tpu.vector_store %arg8[%c0_49, %c0_50, %c0_51], %91 {strides = array<i32>} : memref<1x256x16xf32, #tpu.memory_space<vmem>>, vector<1x256x16xf32>,
    return
  }
  func.func @transform_0(%arg0: i32) -> (i32, i32, i32, i32) {
    %c0_i32 = arith.constant 0 : i32
    %c0_i32_0 = arith.constant 0 : i32
    %c0_i32_1 = arith.constant 0 : i32
    %c0_i32_2 = arith.constant 0 : i32
    return %arg0, %c0_i32, %c0_i32_0, %c0_i32_1 : i32, i32, i32, i32
  }
  func.func @transform_1(%arg0: i32) -> (i32, i32, i32) {
    %c0_i32 = arith.constant 0 : i32
    %c0_i32_0 = arith.constant 0 : i32
    %c0_i32_1 = arith.constant 0 : i32
    %c0_i32_2 = arith.constant 0 : i32
    return %c0_i32, %c0_i32_0, %c0_i32_1 : i32, i32, i32
  }
  func.func @transform_2(%arg0: i32) -> (i32, i32) {
    %c0_i32 = arith.constant 0 : i32
    %c0_i32_0 = arith.constant 0 : i32
    %c0_i32_1 = arith.constant 0 : i32
    return %c0_i32, %c0_i32_0 : i32, i32
  }
  func.func @transform_3(%arg0: i32) -> (i32, i32) {
    %c0_i32 = arith.constant 0 : i32
    %c0_i32_0 = arith.constant 0 : i32
    %c0_i32_1 = arith.constant 0 : i32
    return %c0_i32, %c0_i32_0 : i32, i32
  }
  func.func @transform_4(%arg0: i32) -> (i32, i32) {
    %c0_i32 = arith.constant 0 : i32
    %c0_i32_0 = arith.constant 0 : i32
    %c0_i32_1 = arith.constant 0 : i32
    return %c0_i32, %c0_i32_0 : i32, i32
  }
  func.func @transform_5(%arg0: i32) -> (i32, i32) {
    %c0_i32 = arith.constant 0 : i32
    %c0_i32_0 = arith.constant 0 : i32
    %c0_i32_1 = arith.constant 0 : i32
    return %c0_i32, %c0_i32_0 : i32, i32
  }
  func.func @transform_6(%arg0: i32) -> (i32, i32) {
    %c0_i32 = arith.constant 0 : i32
    %c0_i32_0 = arith.constant 0 : i32
    %c0_i32_1 = arith.constant 0 : i32
    return %c0_i32, %c0_i32_0 : i32, i32
  }
  func.func @transform_7(%arg0: i32) -> (i32, i32, i32) {
    %c0_i32 = arith.constant 0 : i32
    %c0_i32_0 = arith.constant 0 : i32
    %c0_i32_1 = arith.constant 0 : i32
    return %arg0, %c0_i32, %c0_i32_0 : i32, i32, i32
  }
}

module attributes {stable_mosaic.version = 11 : i64} {
  func.func @_degrep_kernel(%arg0: i32, %arg1: memref<1x18x18x8xf32, #tpu.memory_space<vmem>>, %arg2: memref<1x1x1xf32, #tpu.memory_space<vmem>>, %arg3: memref<9x8x16xf32, #tpu.memory_space<vmem>>, %arg4: memref<1x16xf32, #tpu.memory_space<vmem>>, %arg5: memref<17x32xf32, #tpu.memory_space<vmem>>, %arg6: memref<1x32xf32, #tpu.memory_space<vmem>>, %arg7: memref<1x1x32xf32, #tpu.memory_space<vmem>>) attributes {dimension_semantics = [#tpu.dimension_semantics<parallel>], iteration_bounds = array<i64: 2>, scalar_prefetch = 0 : i64, scratch_operands = 0 : i64, tpu.core_type = #tpu.core_type<tc>, window_params = [{transform_indices = @transform_0, window_bounds = array<i64: 1, 18, 18, 8>}, {transform_indices = @transform_1, window_bounds = array<i64: 1, 1, 1>}, {pipeline_mode = #tpu.pipeline_mode<synchronous>, transform_indices = @transform_2, window_bounds = array<i64: 9, 8, 16>}, {pipeline_mode = #tpu.pipeline_mode<synchronous>, transform_indices = @transform_3, window_bounds = array<i64: 1, 16>}, {pipeline_mode = #tpu.pipeline_mode<synchronous>, transform_indices = @transform_4, window_bounds = array<i64: 17, 32>}, {pipeline_mode = #tpu.pipeline_mode<synchronous>, transform_indices = @transform_5, window_bounds = array<i64: 1, 32>}, {transform_indices = @transform_6, window_bounds = array<i64: 1, 1, 32>}]} {
    %c0 = arith.constant 0 : index
    %c0_0 = arith.constant 0 : index
    %c0_1 = arith.constant 0 : index
    %c0_2 = arith.constant 0 : index
    %0 = vector.load %arg1[%c0, %c0_0, %c0_1, %c0_2] : memref<1x18x18x8xf32, #tpu.memory_space<vmem>>, vector<1x18x18x8xf32>
    %1 = vector.shape_cast %0 : vector<1x18x18x8xf32> to vector<18x18x8xf32>
    %cst = arith.constant 0.000000e+00 : f32
    %2 = vector.broadcast %cst : f32 to vector<256x16xf32>
    %3 = vector.extract_strided_slice %1 {offsets = [0, 0, 0], sizes = [16, 16, 8], strides = [1, 1, 1]} : vector<18x18x8xf32> to vector<16x16x8xf32>
    %4 = vector.shape_cast %3 : vector<16x16x8xf32> to vector<256x8xf32>
    %c0_3 = arith.constant 0 : index
    %c0_4 = arith.constant 0 : index
    %c0_5 = arith.constant 0 : index
    %5 = vector.load %arg3[%c0_3, %c0_4, %c0_5] : memref<9x8x16xf32, #tpu.memory_space<vmem>>, vector<1x8x16xf32>
    %6 = vector.shape_cast %5 : vector<1x8x16xf32> to vector<8x16xf32>
    %cst_6 = arith.constant dense<0.000000e+00> : vector<256x16xf32>
    %7 = tpu.matmul %4, %6, %cst_6 {dimension_numbers = #tpu.dot_dimension_numbers<[1], [0], [0], [1], [0, 0, 1, 1], [], []>} : vector<256x8xf32>, vector<8x16xf32>, vector<256x16xf32> -> vector<256x16xf32>
    %8 = arith.addf %2, %7 : vector<256x16xf32>
    %9 = vector.extract_strided_slice %1 {offsets = [0, 1, 0], sizes = [16, 16, 8], strides = [1, 1, 1]} : vector<18x18x8xf32> to vector<16x16x8xf32>
    %10 = vector.shape_cast %9 : vector<16x16x8xf32> to vector<256x8xf32>
    %c1 = arith.constant 1 : index
    %c0_7 = arith.constant 0 : index
    %c0_8 = arith.constant 0 : index
    %11 = vector.load %arg3[%c1, %c0_7, %c0_8] : memref<9x8x16xf32, #tpu.memory_space<vmem>>, vector<1x8x16xf32>
    %12 = vector.shape_cast %11 : vector<1x8x16xf32> to vector<8x16xf32>
    %cst_9 = arith.constant dense<0.000000e+00> : vector<256x16xf32>
    %13 = tpu.matmul %10, %12, %cst_9 {dimension_numbers = #tpu.dot_dimension_numbers<[1], [0], [0], [1], [0, 0, 1, 1], [], []>} : vector<256x8xf32>, vector<8x16xf32>, vector<256x16xf32> -> vector<256x16xf32>
    %14 = arith.addf %8, %13 : vector<256x16xf32>
    %15 = vector.extract_strided_slice %1 {offsets = [0, 2, 0], sizes = [16, 16, 8], strides = [1, 1, 1]} : vector<18x18x8xf32> to vector<16x16x8xf32>
    %16 = vector.shape_cast %15 : vector<16x16x8xf32> to vector<256x8xf32>
    %c2 = arith.constant 2 : index
    %c0_10 = arith.constant 0 : index
    %c0_11 = arith.constant 0 : index
    %17 = vector.load %arg3[%c2, %c0_10, %c0_11] : memref<9x8x16xf32, #tpu.memory_space<vmem>>, vector<1x8x16xf32>
    %18 = vector.shape_cast %17 : vector<1x8x16xf32> to vector<8x16xf32>
    %cst_12 = arith.constant dense<0.000000e+00> : vector<256x16xf32>
    %19 = tpu.matmul %16, %18, %cst_12 {dimension_numbers = #tpu.dot_dimension_numbers<[1], [0], [0], [1], [0, 0, 1, 1], [], []>} : vector<256x8xf32>, vector<8x16xf32>, vector<256x16xf32> -> vector<256x16xf32>
    %20 = arith.addf %14, %19 : vector<256x16xf32>
    %21 = vector.extract_strided_slice %1 {offsets = [1, 0, 0], sizes = [16, 16, 8], strides = [1, 1, 1]} : vector<18x18x8xf32> to vector<16x16x8xf32>
    %22 = vector.shape_cast %21 : vector<16x16x8xf32> to vector<256x8xf32>
    %c3 = arith.constant 3 : index
    %c0_13 = arith.constant 0 : index
    %c0_14 = arith.constant 0 : index
    %23 = vector.load %arg3[%c3, %c0_13, %c0_14] : memref<9x8x16xf32, #tpu.memory_space<vmem>>, vector<1x8x16xf32>
    %24 = vector.shape_cast %23 : vector<1x8x16xf32> to vector<8x16xf32>
    %cst_15 = arith.constant dense<0.000000e+00> : vector<256x16xf32>
    %25 = tpu.matmul %22, %24, %cst_15 {dimension_numbers = #tpu.dot_dimension_numbers<[1], [0], [0], [1], [0, 0, 1, 1], [], []>} : vector<256x8xf32>, vector<8x16xf32>, vector<256x16xf32> -> vector<256x16xf32>
    %26 = arith.addf %20, %25 : vector<256x16xf32>
    %27 = vector.extract_strided_slice %1 {offsets = [1, 1, 0], sizes = [16, 16, 8], strides = [1, 1, 1]} : vector<18x18x8xf32> to vector<16x16x8xf32>
    %28 = vector.shape_cast %27 : vector<16x16x8xf32> to vector<256x8xf32>
    %c4 = arith.constant 4 : index
    %c0_16 = arith.constant 0 : index
    %c0_17 = arith.constant 0 : index
    %29 = vector.load %arg3[%c4, %c0_16, %c0_17] : memref<9x8x16xf32, #tpu.memory_space<vmem>>, vector<1x8x16xf32>
    %30 = vector.shape_cast %29 : vector<1x8x16xf32> to vector<8x16xf32>
    %cst_18 = arith.constant dense<0.000000e+00> : vector<256x16xf32>
    %31 = tpu.matmul %28, %30, %cst_18 {dimension_numbers = #tpu.dot_dimension_numbers<[1], [0], [0], [1], [0, 0, 1, 1], [], []>} : vector<256x8xf32>, vector<8x16xf32>, vector<256x16xf32> -> vector<256x16xf32>
    %32 = arith.addf %26, %31 : vector<256x16xf32>
    %33 = vector.extract_strided_slice %1 {offsets = [1, 2, 0], sizes = [16, 16, 8], strides = [1, 1, 1]} : vector<18x18x8xf32> to vector<16x16x8xf32>
    %34 = vector.shape_cast %33 : vector<16x16x8xf32> to vector<256x8xf32>
    %c5 = arith.constant 5 : index
    %c0_19 = arith.constant 0 : index
    %c0_20 = arith.constant 0 : index
    %35 = vector.load %arg3[%c5, %c0_19, %c0_20] : memref<9x8x16xf32, #tpu.memory_space<vmem>>, vector<1x8x16xf32>
    %36 = vector.shape_cast %35 : vector<1x8x16xf32> to vector<8x16xf32>
    %cst_21 = arith.constant dense<0.000000e+00> : vector<256x16xf32>
    %37 = tpu.matmul %34, %36, %cst_21 {dimension_numbers = #tpu.dot_dimension_numbers<[1], [0], [0], [1], [0, 0, 1, 1], [], []>} : vector<256x8xf32>, vector<8x16xf32>, vector<256x16xf32> -> vector<256x16xf32>
    %38 = arith.addf %32, %37 : vector<256x16xf32>
    %39 = vector.extract_strided_slice %1 {offsets = [2, 0, 0], sizes = [16, 16, 8], strides = [1, 1, 1]} : vector<18x18x8xf32> to vector<16x16x8xf32>
    %40 = vector.shape_cast %39 : vector<16x16x8xf32> to vector<256x8xf32>
    %c6 = arith.constant 6 : index
    %c0_22 = arith.constant 0 : index
    %c0_23 = arith.constant 0 : index
    %41 = vector.load %arg3[%c6, %c0_22, %c0_23] : memref<9x8x16xf32, #tpu.memory_space<vmem>>, vector<1x8x16xf32>
    %42 = vector.shape_cast %41 : vector<1x8x16xf32> to vector<8x16xf32>
    %cst_24 = arith.constant dense<0.000000e+00> : vector<256x16xf32>
    %43 = tpu.matmul %40, %42, %cst_24 {dimension_numbers = #tpu.dot_dimension_numbers<[1], [0], [0], [1], [0, 0, 1, 1], [], []>} : vector<256x8xf32>, vector<8x16xf32>, vector<256x16xf32> -> vector<256x16xf32>
    %44 = arith.addf %38, %43 : vector<256x16xf32>
    %45 = vector.extract_strided_slice %1 {offsets = [2, 1, 0], sizes = [16, 16, 8], strides = [1, 1, 1]} : vector<18x18x8xf32> to vector<16x16x8xf32>
    %46 = vector.shape_cast %45 : vector<16x16x8xf32> to vector<256x8xf32>
    %c7 = arith.constant 7 : index
    %c0_25 = arith.constant 0 : index
    %c0_26 = arith.constant 0 : index
    %47 = vector.load %arg3[%c7, %c0_25, %c0_26] : memref<9x8x16xf32, #tpu.memory_space<vmem>>, vector<1x8x16xf32>
    %48 = vector.shape_cast %47 : vector<1x8x16xf32> to vector<8x16xf32>
    %cst_27 = arith.constant dense<0.000000e+00> : vector<256x16xf32>
    %49 = tpu.matmul %46, %48, %cst_27 {dimension_numbers = #tpu.dot_dimension_numbers<[1], [0], [0], [1], [0, 0, 1, 1], [], []>} : vector<256x8xf32>, vector<8x16xf32>, vector<256x16xf32> -> vector<256x16xf32>
    %50 = arith.addf %44, %49 : vector<256x16xf32>
    %51 = vector.extract_strided_slice %1 {offsets = [2, 2, 0], sizes = [16, 16, 8], strides = [1, 1, 1]} : vector<18x18x8xf32> to vector<16x16x8xf32>
    %52 = vector.shape_cast %51 : vector<16x16x8xf32> to vector<256x8xf32>
    %c8 = arith.constant 8 : index
    %c0_28 = arith.constant 0 : index
    %c0_29 = arith.constant 0 : index
    %53 = vector.load %arg3[%c8, %c0_28, %c0_29] : memref<9x8x16xf32, #tpu.memory_space<vmem>>, vector<1x8x16xf32>
    %54 = vector.shape_cast %53 : vector<1x8x16xf32> to vector<8x16xf32>
    %cst_30 = arith.constant dense<0.000000e+00> : vector<256x16xf32>
    %55 = tpu.matmul %52, %54, %cst_30 {dimension_numbers = #tpu.dot_dimension_numbers<[1], [0], [0], [1], [0, 0, 1, 1], [], []>} : vector<256x8xf32>, vector<8x16xf32>, vector<256x16xf32> -> vector<256x16xf32>
    %56 = arith.addf %50, %55 : vector<256x16xf32>
    %c0_31 = arith.constant 0 : index
    %c0_32 = arith.constant 0 : index
    %57 = vector.load %arg4[%c0_31, %c0_32] : memref<1x16xf32, #tpu.memory_space<vmem>>, vector<1x16xf32>
    %58 = vector.broadcast %57 : vector<1x16xf32> to vector<256x16xf32>
    %59 = arith.addf %56, %58 : vector<256x16xf32>
    %cst_33 = arith.constant 0.000000e+00 : f32
    %60 = vector.broadcast %cst_33 : f32 to vector<256x16xf32>
    %61 = arith.maximumf %59, %60 : vector<256x16xf32>
    %cst_34 = arith.constant dense<0.000000e+00> : vector<16xf32>
    %62 = vector.multi_reduction <add>, %61, %cst_34 [0] : vector<256x16xf32> to vector<16xf32>
    %63 = vector.shape_cast %62 : vector<16xf32> to vector<1x16xf32>
    %cst_35 = arith.constant 2.560000e+02 : f32
    %64 = vector.broadcast %cst_35 : f32 to vector<1x16xf32>
    %65 = arith.divf %63, %64 : vector<1x16xf32>
    %c0_36 = arith.constant 0 : index
    %c0_37 = arith.constant 0 : index
    %66 = vector.load %arg5[%c0_36, %c0_37] : memref<17x32xf32, #tpu.memory_space<vmem>>, vector<17x32xf32>
    %67 = vector.extract_strided_slice %66 {offsets = [0, 0], sizes = [16, 32], strides = [1, 1]} : vector<17x32xf32> to vector<16x32xf32>
    %cst_38 = arith.constant dense<0.000000e+00> : vector<1x32xf32>
    %68 = tpu.matmul %65, %67, %cst_38 {dimension_numbers = #tpu.dot_dimension_numbers<[1], [0], [0], [1], [0, 0, 1, 1], [], []>} : vector<1x16xf32>, vector<16x32xf32>, vector<1x32xf32> -> vector<1x32xf32>
    %c0_39 = arith.constant 0 : index
    %c0_40 = arith.constant 0 : index
    %c0_41 = arith.constant 0 : index
    %69 = vector.load %arg2[%c0_39, %c0_40, %c0_41] : memref<1x1x1xf32, #tpu.memory_space<vmem>>, vector<1x1x1xf32>
    %70 = vector.shape_cast %69 : vector<1x1x1xf32> to vector<1x1xf32>
    %71 = vector.extract_strided_slice %66 {offsets = [16, 0], sizes = [1, 32], strides = [1, 1]} : vector<17x32xf32> to vector<1x32xf32>
    %72 = vector.broadcast %70 : vector<1x1xf32> to vector<1x32xf32>
    %73 = arith.mulf %72, %71 : vector<1x32xf32>
    %74 = arith.addf %68, %73 : vector<1x32xf32>
    %c0_42 = arith.constant 0 : index
    %c0_43 = arith.constant 0 : index
    %75 = vector.load %arg6[%c0_42, %c0_43] : memref<1x32xf32, #tpu.memory_space<vmem>>, vector<1x32xf32>
    %76 = arith.addf %74, %75 : vector<1x32xf32>
    %c0_44 = arith.constant 0 : index
    %c0_45 = arith.constant 0 : index
    %c0_46 = arith.constant 0 : index
    %77 = vector.load %arg7[%c0_44, %c0_45, %c0_46] : memref<1x1x32xf32, #tpu.memory_space<vmem>>, vector<1x1x32xf32>
    %78 = vector.shape_cast %77 : vector<1x1x32xf32> to vector<1x32xf32>
    %79 = vector.shape_cast %76 : vector<1x32xf32> to vector<1x1x32xf32>
    tpu.vector_store %arg7[%c0_44, %c0_45, %c0_46], %79 {strides = array<i32>} : memref<1x1x32xf32, #tpu.memory_space<vmem>>, vector<1x1x32xf32>,
    return
  }
  func.func @transform_0(%arg0: i32) -> (i32, i32, i32, i32) {
    %c0_i32 = arith.constant 0 : i32
    %c0_i32_0 = arith.constant 0 : i32
    %c0_i32_1 = arith.constant 0 : i32
    %c0_i32_2 = arith.constant 0 : i32
    return %arg0, %c0_i32, %c0_i32_0, %c0_i32_1 : i32, i32, i32, i32
  }
  func.func @transform_1(%arg0: i32) -> (i32, i32, i32) {
    %c0_i32 = arith.constant 0 : i32
    %c0_i32_0 = arith.constant 0 : i32
    %c0_i32_1 = arith.constant 0 : i32
    return %arg0, %c0_i32, %c0_i32_0 : i32, i32, i32
  }
  func.func @transform_2(%arg0: i32) -> (i32, i32, i32) {
    %c0_i32 = arith.constant 0 : i32
    %c0_i32_0 = arith.constant 0 : i32
    %c0_i32_1 = arith.constant 0 : i32
    %c0_i32_2 = arith.constant 0 : i32
    return %c0_i32, %c0_i32_0, %c0_i32_1 : i32, i32, i32
  }
  func.func @transform_3(%arg0: i32) -> (i32, i32) {
    %c0_i32 = arith.constant 0 : i32
    %c0_i32_0 = arith.constant 0 : i32
    %c0_i32_1 = arith.constant 0 : i32
    return %c0_i32, %c0_i32_0 : i32, i32
  }
  func.func @transform_4(%arg0: i32) -> (i32, i32) {
    %c0_i32 = arith.constant 0 : i32
    %c0_i32_0 = arith.constant 0 : i32
    %c0_i32_1 = arith.constant 0 : i32
    return %c0_i32, %c0_i32_0 : i32, i32
  }
  func.func @transform_5(%arg0: i32) -> (i32, i32) {
    %c0_i32 = arith.constant 0 : i32
    %c0_i32_0 = arith.constant 0 : i32
    %c0_i32_1 = arith.constant 0 : i32
    return %c0_i32, %c0_i32_0 : i32, i32
  }
  func.func @transform_6(%arg0: i32) -> (i32, i32, i32) {
    %c0_i32 = arith.constant 0 : i32
    %c0_i32_0 = arith.constant 0 : i32
    %c0_i32_1 = arith.constant 0 : i32
    return %arg0, %c0_i32, %c0_i32_0 : i32, i32, i32
  }
}

module attributes {stable_mosaic.version = 11 : i64} {
  func.func @_decoder_kernel(%arg0: i32, %arg1: memref<1x18x18x16xf32, #tpu.memory_space<vmem>>, %arg2: memref<1x1x32xf32, #tpu.memory_space<vmem>>, %arg3: memref<32x32xf32, #tpu.memory_space<vmem>>, %arg4: memref<1x32xf32, #tpu.memory_space<vmem>>, %arg5: memref<9x16x3xf32, #tpu.memory_space<vmem>>, %arg6: memref<1x3xf32, #tpu.memory_space<vmem>>, %arg7: memref<1x256x3xf32, #tpu.memory_space<vmem>>) attributes {dimension_semantics = [#tpu.dimension_semantics<parallel>], iteration_bounds = array<i64: 2>, scalar_prefetch = 0 : i64, scratch_operands = 0 : i64, tpu.core_type = #tpu.core_type<tc>, window_params = [{transform_indices = @transform_0, window_bounds = array<i64: 1, 18, 18, 16>}, {transform_indices = @transform_1, window_bounds = array<i64: 1, 1, 32>}, {pipeline_mode = #tpu.pipeline_mode<synchronous>, transform_indices = @transform_2, window_bounds = array<i64: 32, 32>}, {pipeline_mode = #tpu.pipeline_mode<synchronous>, transform_indices = @transform_3, window_bounds = array<i64: 1, 32>}, {pipeline_mode = #tpu.pipeline_mode<synchronous>, transform_indices = @transform_4, window_bounds = array<i64: 9, 16, 3>}, {pipeline_mode = #tpu.pipeline_mode<synchronous>, transform_indices = @transform_5, window_bounds = array<i64: 1, 3>}, {transform_indices = @transform_6, window_bounds = array<i64: 1, 256, 3>}]} {
    %c0 = arith.constant 0 : index
    %c0_0 = arith.constant 0 : index
    %c0_1 = arith.constant 0 : index
    %c0_2 = arith.constant 0 : index
    %0 = vector.load %arg1[%c0, %c0_0, %c0_1, %c0_2] : memref<1x18x18x16xf32, #tpu.memory_space<vmem>>, vector<1x18x18x16xf32>
    %1 = vector.shape_cast %0 : vector<1x18x18x16xf32> to vector<18x18x16xf32>
    %c0_3 = arith.constant 0 : index
    %c0_4 = arith.constant 0 : index
    %c0_5 = arith.constant 0 : index
    %2 = vector.load %arg2[%c0_3, %c0_4, %c0_5] : memref<1x1x32xf32, #tpu.memory_space<vmem>>, vector<1x1x32xf32>
    %3 = vector.shape_cast %2 : vector<1x1x32xf32> to vector<1x32xf32>
    %c0_6 = arith.constant 0 : index
    %c0_7 = arith.constant 0 : index
    %4 = vector.load %arg3[%c0_6, %c0_7] : memref<32x32xf32, #tpu.memory_space<vmem>>, vector<32x32xf32>
    %cst = arith.constant dense<0.000000e+00> : vector<1x32xf32>
    %5 = tpu.matmul %3, %4, %cst {dimension_numbers = #tpu.dot_dimension_numbers<[1], [0], [0], [1], [0, 0, 1, 1], [], []>} : vector<1x32xf32>, vector<32x32xf32>, vector<1x32xf32> -> vector<1x32xf32>
    %c0_8 = arith.constant 0 : index
    %c0_9 = arith.constant 0 : index
    %6 = vector.load %arg4[%c0_8, %c0_9] : memref<1x32xf32, #tpu.memory_space<vmem>>, vector<1x32xf32>
    %7 = arith.addf %5, %6 : vector<1x32xf32>
    %8 = vector.extract_strided_slice %7 {offsets = [0, 0], sizes = [1, 16], strides = [1, 1]} : vector<1x32xf32> to vector<1x16xf32>
    %9 = vector.shape_cast %8 : vector<1x16xf32> to vector<1x1x16xf32>
    %10 = vector.extract_strided_slice %7 {offsets = [0, 16], sizes = [1, 16], strides = [1, 1]} : vector<1x32xf32> to vector<1x16xf32>
    %11 = vector.shape_cast %10 : vector<1x16xf32> to vector<1x1x16xf32>
    %12 = tpu.iota {dimensions = array<i32: 0>} : vector<18x18x16xi32>
    %13 = tpu.iota {dimensions = array<i32: 1>} : vector<18x18x16xi32>
    %c1_i32 = arith.constant 1 : i32
    %14 = vector.broadcast %c1_i32 : i32 to vector<18x18x16xi32>
    %15 = arith.cmpi sge, %12, %14 : vector<18x18x16xi32>
    %c16_i32 = arith.constant 16 : i32
    %16 = vector.broadcast %c16_i32 : i32 to vector<18x18x16xi32>
    %17 = arith.cmpi sle, %12, %16 : vector<18x18x16xi32>
    %18 = arith.andi %15, %17 : vector<18x18x16xi1>
    %c1_i32_10 = arith.constant 1 : i32
    %19 = vector.broadcast %c1_i32_10 : i32 to vector<18x18x16xi32>
    %20 = arith.cmpi sge, %13, %19 : vector<18x18x16xi32>
    %21 = arith.andi %18, %20 : vector<18x18x16xi1>
    %c16_i32_11 = arith.constant 16 : i32
    %22 = vector.broadcast %c16_i32_11 : i32 to vector<18x18x16xi32>
    %23 = arith.cmpi sle, %13, %22 : vector<18x18x16xi32>
    %24 = arith.andi %21, %23 : vector<18x18x16xi1>
    %25 = arith.extui %24 : vector<18x18x16xi1> to vector<18x18x16xi32>
    %26 = arith.sitofp %25 : vector<18x18x16xi32> to vector<18x18x16xf32>
    %cst_12 = arith.constant 1.000000e+00 : f32
    %27 = vector.broadcast %cst_12 : f32 to vector<1x1x16xf32>
    %28 = arith.addf %27, %9 : vector<1x1x16xf32>
    %29 = vector.broadcast %28 : vector<1x1x16xf32> to vector<18x18x16xf32>
    %30 = arith.mulf %1, %29 : vector<18x18x16xf32>
    %31 = vector.broadcast %11 : vector<1x1x16xf32> to vector<18x18x16xf32>
    %32 = arith.addf %30, %31 : vector<18x18x16xf32>
    %33 = arith.mulf %32, %26 : vector<18x18x16xf32>
    %cst_13 = arith.constant 0.000000e+00 : f32
    %34 = vector.broadcast %cst_13 : f32 to vector<256x3xf32>
    %35 = vector.extract_strided_slice %33 {offsets = [0, 0, 0], sizes = [16, 16, 16], strides = [1, 1, 1]} : vector<18x18x16xf32> to vector<16x16x16xf32>
    %36 = vector.shape_cast %35 : vector<16x16x16xf32> to vector<256x16xf32>
    %c0_14 = arith.constant 0 : index
    %c0_15 = arith.constant 0 : index
    %c0_16 = arith.constant 0 : index
    %37 = vector.load %arg5[%c0_14, %c0_15, %c0_16] : memref<9x16x3xf32, #tpu.memory_space<vmem>>, vector<1x16x3xf32>
    %38 = vector.shape_cast %37 : vector<1x16x3xf32> to vector<16x3xf32>
    %cst_17 = arith.constant dense<0.000000e+00> : vector<256x3xf32>
    %39 = tpu.matmul %36, %38, %cst_17 {dimension_numbers = #tpu.dot_dimension_numbers<[1], [0], [0], [1], [0, 0, 1, 1], [], []>} : vector<256x16xf32>, vector<16x3xf32>, vector<256x3xf32> -> vector<256x3xf32>
    %40 = arith.addf %34, %39 : vector<256x3xf32>
    %41 = vector.extract_strided_slice %33 {offsets = [0, 1, 0], sizes = [16, 16, 16], strides = [1, 1, 1]} : vector<18x18x16xf32> to vector<16x16x16xf32>
    %42 = vector.shape_cast %41 : vector<16x16x16xf32> to vector<256x16xf32>
    %c1 = arith.constant 1 : index
    %c0_18 = arith.constant 0 : index
    %c0_19 = arith.constant 0 : index
    %43 = vector.load %arg5[%c1, %c0_18, %c0_19] : memref<9x16x3xf32, #tpu.memory_space<vmem>>, vector<1x16x3xf32>
    %44 = vector.shape_cast %43 : vector<1x16x3xf32> to vector<16x3xf32>
    %cst_20 = arith.constant dense<0.000000e+00> : vector<256x3xf32>
    %45 = tpu.matmul %42, %44, %cst_20 {dimension_numbers = #tpu.dot_dimension_numbers<[1], [0], [0], [1], [0, 0, 1, 1], [], []>} : vector<256x16xf32>, vector<16x3xf32>, vector<256x3xf32> -> vector<256x3xf32>
    %46 = arith.addf %40, %45 : vector<256x3xf32>
    %47 = vector.extract_strided_slice %33 {offsets = [0, 2, 0], sizes = [16, 16, 16], strides = [1, 1, 1]} : vector<18x18x16xf32> to vector<16x16x16xf32>
    %48 = vector.shape_cast %47 : vector<16x16x16xf32> to vector<256x16xf32>
    %c2 = arith.constant 2 : index
    %c0_21 = arith.constant 0 : index
    %c0_22 = arith.constant 0 : index
    %49 = vector.load %arg5[%c2, %c0_21, %c0_22] : memref<9x16x3xf32, #tpu.memory_space<vmem>>, vector<1x16x3xf32>
    %50 = vector.shape_cast %49 : vector<1x16x3xf32> to vector<16x3xf32>
    %cst_23 = arith.constant dense<0.000000e+00> : vector<256x3xf32>
    %51 = tpu.matmul %48, %50, %cst_23 {dimension_numbers = #tpu.dot_dimension_numbers<[1], [0], [0], [1], [0, 0, 1, 1], [], []>} : vector<256x16xf32>, vector<16x3xf32>, vector<256x3xf32> -> vector<256x3xf32>
    %52 = arith.addf %46, %51 : vector<256x3xf32>
    %53 = vector.extract_strided_slice %33 {offsets = [1, 0, 0], sizes = [16, 16, 16], strides = [1, 1, 1]} : vector<18x18x16xf32> to vector<16x16x16xf32>
    %54 = vector.shape_cast %53 : vector<16x16x16xf32> to vector<256x16xf32>
    %c3 = arith.constant 3 : index
    %c0_24 = arith.constant 0 : index
    %c0_25 = arith.constant 0 : index
    %55 = vector.load %arg5[%c3, %c0_24, %c0_25] : memref<9x16x3xf32, #tpu.memory_space<vmem>>, vector<1x16x3xf32>
    %56 = vector.shape_cast %55 : vector<1x16x3xf32> to vector<16x3xf32>
    %cst_26 = arith.constant dense<0.000000e+00> : vector<256x3xf32>
    %57 = tpu.matmul %54, %56, %cst_26 {dimension_numbers = #tpu.dot_dimension_numbers<[1], [0], [0], [1], [0, 0, 1, 1], [], []>} : vector<256x16xf32>, vector<16x3xf32>, vector<256x3xf32> -> vector<256x3xf32>
    %58 = arith.addf %52, %57 : vector<256x3xf32>
    %59 = vector.extract_strided_slice %33 {offsets = [1, 1, 0], sizes = [16, 16, 16], strides = [1, 1, 1]} : vector<18x18x16xf32> to vector<16x16x16xf32>
    %60 = vector.shape_cast %59 : vector<16x16x16xf32> to vector<256x16xf32>
    %c4 = arith.constant 4 : index
    %c0_27 = arith.constant 0 : index
    %c0_28 = arith.constant 0 : index
    %61 = vector.load %arg5[%c4, %c0_27, %c0_28] : memref<9x16x3xf32, #tpu.memory_space<vmem>>, vector<1x16x3xf32>
    %62 = vector.shape_cast %61 : vector<1x16x3xf32> to vector<16x3xf32>
    %cst_29 = arith.constant dense<0.000000e+00> : vector<256x3xf32>
    %63 = tpu.matmul %60, %62, %cst_29 {dimension_numbers = #tpu.dot_dimension_numbers<[1], [0], [0], [1], [0, 0, 1, 1], [], []>} : vector<256x16xf32>, vector<16x3xf32>, vector<256x3xf32> -> vector<256x3xf32>
    %64 = arith.addf %58, %63 : vector<256x3xf32>
    %65 = vector.extract_strided_slice %33 {offsets = [1, 2, 0], sizes = [16, 16, 16], strides = [1, 1, 1]} : vector<18x18x16xf32> to vector<16x16x16xf32>
    %66 = vector.shape_cast %65 : vector<16x16x16xf32> to vector<256x16xf32>
    %c5 = arith.constant 5 : index
    %c0_30 = arith.constant 0 : index
    %c0_31 = arith.constant 0 : index
    %67 = vector.load %arg5[%c5, %c0_30, %c0_31] : memref<9x16x3xf32, #tpu.memory_space<vmem>>, vector<1x16x3xf32>
    %68 = vector.shape_cast %67 : vector<1x16x3xf32> to vector<16x3xf32>
    %cst_32 = arith.constant dense<0.000000e+00> : vector<256x3xf32>
    %69 = tpu.matmul %66, %68, %cst_32 {dimension_numbers = #tpu.dot_dimension_numbers<[1], [0], [0], [1], [0, 0, 1, 1], [], []>} : vector<256x16xf32>, vector<16x3xf32>, vector<256x3xf32> -> vector<256x3xf32>
    %70 = arith.addf %64, %69 : vector<256x3xf32>
    %71 = vector.extract_strided_slice %33 {offsets = [2, 0, 0], sizes = [16, 16, 16], strides = [1, 1, 1]} : vector<18x18x16xf32> to vector<16x16x16xf32>
    %72 = vector.shape_cast %71 : vector<16x16x16xf32> to vector<256x16xf32>
    %c6 = arith.constant 6 : index
    %c0_33 = arith.constant 0 : index
    %c0_34 = arith.constant 0 : index
    %73 = vector.load %arg5[%c6, %c0_33, %c0_34] : memref<9x16x3xf32, #tpu.memory_space<vmem>>, vector<1x16x3xf32>
    %74 = vector.shape_cast %73 : vector<1x16x3xf32> to vector<16x3xf32>
    %cst_35 = arith.constant dense<0.000000e+00> : vector<256x3xf32>
    %75 = tpu.matmul %72, %74, %cst_35 {dimension_numbers = #tpu.dot_dimension_numbers<[1], [0], [0], [1], [0, 0, 1, 1], [], []>} : vector<256x16xf32>, vector<16x3xf32>, vector<256x3xf32> -> vector<256x3xf32>
    %76 = arith.addf %70, %75 : vector<256x3xf32>
    %77 = vector.extract_strided_slice %33 {offsets = [2, 1, 0], sizes = [16, 16, 16], strides = [1, 1, 1]} : vector<18x18x16xf32> to vector<16x16x16xf32>
    %78 = vector.shape_cast %77 : vector<16x16x16xf32> to vector<256x16xf32>
    %c7 = arith.constant 7 : index
    %c0_36 = arith.constant 0 : index
    %c0_37 = arith.constant 0 : index
    %79 = vector.load %arg5[%c7, %c0_36, %c0_37] : memref<9x16x3xf32, #tpu.memory_space<vmem>>, vector<1x16x3xf32>
    %80 = vector.shape_cast %79 : vector<1x16x3xf32> to vector<16x3xf32>
    %cst_38 = arith.constant dense<0.000000e+00> : vector<256x3xf32>
    %81 = tpu.matmul %78, %80, %cst_38 {dimension_numbers = #tpu.dot_dimension_numbers<[1], [0], [0], [1], [0, 0, 1, 1], [], []>} : vector<256x16xf32>, vector<16x3xf32>, vector<256x3xf32> -> vector<256x3xf32>
    %82 = arith.addf %76, %81 : vector<256x3xf32>
    %83 = vector.extract_strided_slice %33 {offsets = [2, 2, 0], sizes = [16, 16, 16], strides = [1, 1, 1]} : vector<18x18x16xf32> to vector<16x16x16xf32>
    %84 = vector.shape_cast %83 : vector<16x16x16xf32> to vector<256x16xf32>
    %c8 = arith.constant 8 : index
    %c0_39 = arith.constant 0 : index
    %c0_40 = arith.constant 0 : index
    %85 = vector.load %arg5[%c8, %c0_39, %c0_40] : memref<9x16x3xf32, #tpu.memory_space<vmem>>, vector<1x16x3xf32>
    %86 = vector.shape_cast %85 : vector<1x16x3xf32> to vector<16x3xf32>
    %cst_41 = arith.constant dense<0.000000e+00> : vector<256x3xf32>
    %87 = tpu.matmul %84, %86, %cst_41 {dimension_numbers = #tpu.dot_dimension_numbers<[1], [0], [0], [1], [0, 0, 1, 1], [], []>} : vector<256x16xf32>, vector<16x3xf32>, vector<256x3xf32> -> vector<256x3xf32>
    %88 = arith.addf %82, %87 : vector<256x3xf32>
    %c0_42 = arith.constant 0 : index
    %c0_43 = arith.constant 0 : index
    %89 = vector.load %arg6[%c0_42, %c0_43] : memref<1x3xf32, #tpu.memory_space<vmem>>, vector<1x3xf32>
    %90 = vector.broadcast %89 : vector<1x3xf32> to vector<256x3xf32>
    %91 = arith.addf %88, %90 : vector<256x3xf32>
    %c0_44 = arith.constant 0 : index
    %c0_45 = arith.constant 0 : index
    %c0_46 = arith.constant 0 : index
    %92 = vector.load %arg7[%c0_44, %c0_45, %c0_46] : memref<1x256x3xf32, #tpu.memory_space<vmem>>, vector<1x256x3xf32>
    %93 = vector.shape_cast %92 : vector<1x256x3xf32> to vector<256x3xf32>
    %94 = vector.shape_cast %91 : vector<256x3xf32> to vector<1x256x3xf32>
    tpu.vector_store %arg7[%c0_44, %c0_45, %c0_46], %94 {strides = array<i32>} : memref<1x256x3xf32, #tpu.memory_space<vmem>>, vector<1x256x3xf32>,
    return
  }
  func.func @transform_0(%arg0: i32) -> (i32, i32, i32, i32) {
    %c0_i32 = arith.constant 0 : i32
    %c0_i32_0 = arith.constant 0 : i32
    %c0_i32_1 = arith.constant 0 : i32
    %c0_i32_2 = arith.constant 0 : i32
    return %arg0, %c0_i32, %c0_i32_0, %c0_i32_1 : i32, i32, i32, i32
  }
  func.func @transform_1(%arg0: i32) -> (i32, i32, i32) {
    %c0_i32 = arith.constant 0 : i32
    %c0_i32_0 = arith.constant 0 : i32
    %c0_i32_1 = arith.constant 0 : i32
    return %arg0, %c0_i32, %c0_i32_0 : i32, i32, i32
  }
  func.func @transform_2(%arg0: i32) -> (i32, i32) {
    %c0_i32 = arith.constant 0 : i32
    %c0_i32_0 = arith.constant 0 : i32
    %c0_i32_1 = arith.constant 0 : i32
    return %c0_i32, %c0_i32_0 : i32, i32
  }
  func.func @transform_3(%arg0: i32) -> (i32, i32) {
    %c0_i32 = arith.constant 0 : i32
    %c0_i32_0 = arith.constant 0 : i32
    %c0_i32_1 = arith.constant 0 : i32
    return %c0_i32, %c0_i32_0 : i32, i32
  }
  func.func @transform_4(%arg0: i32) -> (i32, i32, i32) {
    %c0_i32 = arith.constant 0 : i32
    %c0_i32_0 = arith.constant 0 : i32
    %c0_i32_1 = arith.constant 0 : i32
    %c0_i32_2 = arith.constant 0 : i32
    return %c0_i32, %c0_i32_0, %c0_i32_1 : i32, i32, i32
  }
  func.func @transform_5(%arg0: i32) -> (i32, i32) {
    %c0_i32 = arith.constant 0 : i32
    %c0_i32_0 = arith.constant 0 : i32
    %c0_i32_1 = arith.constant 0 : i32
    return %c0_i32, %c0_i32_0 : i32, i32
  }
  func.func @transform_6(%arg0: i32) -> (i32, i32, i32) {
    %c0_i32 = arith.constant 0 : i32
    %c0_i32_0 = arith.constant 0 : i32
    %c0_i32_1 = arith.constant 0 : i32
    return %arg0, %c0_i32, %c0_i32_0 : i32, i32, i32
  }
}

</mosaic_0001>

<llo_original>
// kernel: degae_forward.3
$region0: #{degae_forward.3}
  #allocation0 [shape = 'u32[]', space=smem, size = 0x4, offset = 0x4, fixed_abs, tag = 'smem constant byte address 0x4 - core index']
  #allocation1 [shape = 'u32[144,128]{1,0:T(1,128)}', space=vmem, size = 0x12000, scoped, tag = 'internal scratch']
  %s0 = inlined_call_operand.vmem [shape: f32[2,18,18,8], index: 0, kind: input, shape index: {}]
  %s1 = inlined_call_operand.vmem [shape: f32[9,8,16], index: 1, kind: input, shape index: {}]
  %s2 = inlined_call_operand.vmem [shape: f32[1,16], index: 2, kind: input, shape index: {}]
  %s3 = inlined_call_operand.vmem [shape: f32[16,64], index: 3, kind: input, shape index: {}]
  %s4 = inlined_call_operand.vmem [shape: f32[1,64], index: 4, kind: input, shape index: {}]
  %s5 = inlined_call_operand.vmem [shape: f32[64,16], index: 5, kind: input, shape index: {}]
  %s6 = inlined_call_operand.vmem [shape: f32[1,16], index: 6, kind: input, shape index: {}]
  %s7 = inlined_call_operand.vmem [shape: f32[2,256,16], index: 7, kind: output, shape index: {}]
  %s8 = sld [smem:[#allocation0]]
  $region61: #{degae_forward.3} parent=0
    _
  %s10 = ssub.s32 1, %s8
  %s11 = scalar_select 0, %s10, %s8
  loop: start=0, step=1, limit=4
  $region2: #{degae_forward.3} parent=0 // loop_pre_header
    _
  $region3: #{degae_forward.3} parent=0 // loop_header
    %s13 = sphi 0, %s17
    %p14 = scmp.ge.s32.totalorder %s13, 4
    %s23 = sphi 0, %s25
    %s26 = sphi 0, %s23
    %s27 = sphi 0, %s26
    %s43 = sphi 0, %s27
    %s47 = sphi 0, %s47
    %s49 = sphi 0, %s47
    %s50 = sphi 0, %s49
    %s64 = sphi 0, %s50
    %s68 = sphi 0, %s68
    %s70 = sphi 0, %s68
    %s71 = sphi 0, %s70
    %s85 = sphi 0, %s71
    %s89 = sphi 0, %s89
    %s91 = sphi 0, %s89
    %s92 = sphi 0, %s91
    %s106 = sphi 0, %s92
    %s110 = sphi 0, %s110
    %s112 = sphi 0, %s110
    %s113 = sphi 0, %s112
    %s127 = sphi 0, %s113
    %s131 = sphi 0, %s131
    %s133 = sphi 0, %s131
    %s134 = sphi 0, %s133
    %s148 = sphi 0, %s134
    %s152 = sphi 0, %s152
    %s154 = sphi 0, %s152
    %s155 = sphi 0, %s154
    %s169 = sphi 0, %s155
    %s175 = sphi 0, %s177
    %s178 = sphi 0, %s175
    %s179 = sphi 0, %s178
    %s195 = sphi 0, %s179
  $region4: #{degae_forward.3} parent=0 // loop_header_branch
    %16 = sbr.rel (%p14) target = $region8
  $region5: #{degae_forward.3} parent=0 // loop_body
    %s18 = ssub.s32 %s13, 1
    %s19 = ssub.s32 %s13, 2
    %s20 = sadd.s32 %s13, 1
    %s21 = ssub.s32 %s13, %s20
    %p22 = scmp.eq.s32.totalorder %s21, 0
    %s24 = sadd.s32 %s23, 1
    %s25 = scalar_select %p22, %s23, %s24
    %p28 = pneg %p22
    %p29 = scmp.eq.s32.totalorder %s13, 1
    %p30 = por %p28, %p29
    %p31 = scmp.ne.s32.totalorder %s23, %s26
    %p32 = scmp.eq.s32.totalorder %s13, 0
    %p33 = por %p31, %p32
    %p34 = scmp.ne.s32.totalorder %s23, %s26
    %p35 = scmp.eq.s32.totalorder %s18, 1
    %p36 = por %p34, %p35
    %p37 = scmp.ne.s32.totalorder %s26, %s27
    %p38 = scmp.eq.s32.totalorder %s18, 0
    %p39 = por %p37, %p38
    %p40 = scmp.ne.s32.totalorder %s26, %s27
    %p41 = scmp.eq.s32.totalorder %s19, 1
    %p42 = por %p40, %p41
    %p44 = scmp.ne.s32.totalorder %s27, %s43
    %p45 = scmp.eq.s32.totalorder %s19, 0
    %p46 = por %p44, %p45
    %s48 = sadd.s32 %s47, 1
    %p51 = scmp.eq.s32.totalorder %s13, 1
    %p52 = scmp.ne.s32.totalorder %s47, %s49
    %p53 = scmp.eq.s32.totalorder %s13, 0
    %p54 = por %p52, %p53
    %p55 = scmp.ne.s32.totalorder %s47, %s49
    %p56 = scmp.eq.s32.totalorder %s18, 1
    %p57 = por %p55, %p56
    %p58 = scmp.ne.s32.totalorder %s49, %s50
    %p59 = scmp.eq.s32.totalorder %s18, 0
    %p60 = por %p58, %p59
    %p61 = scmp.ne.s32.totalorder %s49, %s50
    %p62 = scmp.eq.s32.totalorder %s19, 1
    %p63 = por %p61, %p62
    %p65 = scmp.ne.s32.totalorder %s50, %s64
    %p66 = scmp.eq.s32.totalorder %s19, 0
    %p67 = por %p65, %p66
    %s69 = sadd.s32 %s68, 1
    %p72 = scmp.eq.s32.totalorder %s13, 1
    %p73 = scmp.ne.s32.totalorder %s68, %s70
    %p74 = scmp.eq.s32.totalorder %s13, 0
    %p75 = por %p73, %p74
    %p76 = scmp.ne.s32.totalorder %s68, %s70
    %p77 = scmp.eq.s32.totalorder %s18, 1
    %p78 = por %p76, %p77
    %p79 = scmp.ne.s32.totalorder %s70, %s71
    %p80 = scmp.eq.s32.totalorder %s18, 0
    %p81 = por %p79, %p80
    %p82 = scmp.ne.s32.totalorder %s70, %s71
    %p83 = scmp.eq.s32.totalorder %s19, 1
    %p84 = por %p82, %p83
    %p86 = scmp.ne.s32.totalorder %s71, %s85
    %p87 = scmp.eq.s32.totalorder %s19, 0
    %p88 = por %p86, %p87
    %s90 = sadd.s32 %s89, 1
    %p93 = scmp.eq.s32.totalorder %s13, 1
    %p94 = scmp.ne.s32.totalorder %s89, %s91
    %p95 = scmp.eq.s32.totalorder %s13, 0
    %p96 = por %p94, %p95
    %p97 = scmp.ne.s32.totalorder %s89, %s91
    %p98 = scmp.eq.s32.totalorder %s18, 1
    %p99 = por %p97, %p98
    %p100 = scmp.ne.s32.totalorder %s91, %s92
    %p101 = scmp.eq.s32.totalorder %s18, 0
    %p102 = por %p100, %p101
    %p103 = scmp.ne.s32.totalorder %s91, %s92
    %p104 = scmp.eq.s32.totalorder %s19, 1
    %p105 = por %p103, %p104
    %p107 = scmp.ne.s32.totalorder %s92, %s106
    %p108 = scmp.eq.s32.totalorder %s19, 0
    %p109 = por %p107, %p108
    %s111 = sadd.s32 %s110, 1
    %p114 = scmp.eq.s32.totalorder %s13, 1
    %p115 = scmp.ne.s32.totalorder %s110, %s112
    %p116 = scmp.eq.s32.totalorder %s13, 0
    %p117 = por %p115, %p116
    %p118 = scmp.ne.s32.totalorder %s110, %s112
    %p119 = scmp.eq.s32.totalorder %s18, 1
    %p120 = por %p118, %p119
    %p121 = scmp.ne.s32.totalorder %s112, %s113
    %p122 = scmp.eq.s32.totalorder %s18, 0
    %p123 = por %p121, %p122
    %p124 = scmp.ne.s32.totalorder %s112, %s113
    %p125 = scmp.eq.s32.totalorder %s19, 1
    %p126 = por %p124, %p125
    %p128 = scmp.ne.s32.totalorder %s113, %s127
    %p129 = scmp.eq.s32.totalorder %s19, 0
    %p130 = por %p128, %p129
    %s132 = sadd.s32 %s131, 1
    %p135 = scmp.eq.s32.totalorder %s13, 1
    %p136 = scmp.ne.s32.totalorder %s131, %s133
    %p137 = scmp.eq.s32.totalorder %s13, 0
    %p138 = por %p136, %p137
    %p139 = scmp.ne.s32.totalorder %s131, %s133
    %p140 = scmp.eq.s32.totalorder %s18, 1
    %p141 = por %p139, %p140
    %p142 = scmp.ne.s32.totalorder %s133, %s134
    %p143 = scmp.eq.s32.totalorder %s18, 0
    %p144 = por %p142, %p143
    %p145 = scmp.ne.s32.totalorder %s133, %s134
    %p146 = scmp.eq.s32.totalorder %s19, 1
    %p147 = por %p145, %p146
    %p149 = scmp.ne.s32.totalorder %s134, %s148
    %p150 = scmp.eq.s32.totalorder %s19, 0
    %p151 = por %p149, %p150
    %s153 = sadd.s32 %s152, 1
    %p156 = scmp.eq.s32.totalorder %s13, 1
    %p157 = scmp.ne.s32.totalorder %s152, %s154
    %p158 = scmp.eq.s32.totalorder %s13, 0
    %p159 = por %p157, %p158
    %p160 = scmp.ne.s32.totalorder %s152, %s154
    %p161 = scmp.eq.s32.totalorder %s18, 1
    %p162 = por %p160, %p161
    %p163 = scmp.ne.s32.totalorder %s154, %s155
    %p164 = scmp.eq.s32.totalorder %s18, 0
    %p165 = por %p163, %p164
    %p166 = scmp.ne.s32.totalorder %s154, %s155
    %p167 = scmp.eq.s32.totalorder %s19, 1
    %p168 = por %p166, %p167
    %p170 = scmp.ne.s32.totalorder %s155, %s169
    %p171 = scmp.eq.s32.totalorder %s19, 0
    %p172 = por %p170, %p171
    %s173 = ssub.s32 %s13, %s20
    %p174 = scmp.eq.s32.totalorder %s173, 0
    %s176 = sadd.s32 %s175, 1
    %s177 = scalar_select %p174, %s175, %s176
    %p180 = pneg %p174
    %p181 = scmp.eq.s32.totalorder %s13, 1
    %p182 = por %p180, %p181
    %p183 = scmp.ne.s32.totalorder %s175, %s178
    %p184 = scmp.eq.s32.totalorder %s13, 0
    %p185 = por %p183, %p184
    %p186 = scmp.ne.s32.totalorder %s175, %s178
    %p187 = scmp.eq.s32.totalorder %s18, 1
    %p188 = por %p186, %p187
    %p189 = scmp.ne.s32.totalorder %s178, %s179
    %p190 = scmp.eq.s32.totalorder %s18, 0
    %p191 = por %p189, %p190
    %p192 = scmp.ne.s32.totalorder %s178, %s179
    %p193 = scmp.eq.s32.totalorder %s19, 1
    %p194 = por %p192, %p193
    %p196 = scmp.ne.s32.totalorder %s179, %s195
    %p197 = scmp.eq.s32.totalorder %s19, 0
    %p198 = por %p196, %p197
    %p199 = scmp.le.s32.totalorder 1, %s13
    %p200 = scmp.lt.s32.totalorder %s13, 3
    %p201 = pnand %p199, %p200
    %p202 = pneg %p201
    // Predicated region
    $region9: #{degae_forward.3} parent=5 // pred_check
      _
    $region10: #{degae_forward.3} parent=5 // pred_check_branch
      %204 = sbr.rel (%p201) target = $region12
    $region11: #{degae_forward.3} parent=5 // pred_region
      %s205 = ssub.s32 %s13, 1
      // Predicated region
      $region13: #{degae_forward.3} parent=11 // pred_check
        %p206 = pneg %p60
      $region14: #{degae_forward.3} parent=11 // pred_check_branch
        %208 = sbr.rel (%p206) target = $region16
      $region15: #{degae_forward.3} parent=11 // pred_region
        _
      $region16: #{degae_forward.3} parent=11 // pred_fallthru
        _
      // Predicated region
      $region17: #{degae_forward.3} parent=11 // pred_check
        %p209 = pneg %p81
      $region18: #{degae_forward.3} parent=11 // pred_check_branch
        %211 = sbr.rel (%p209) target = $region20
      $region19: #{degae_forward.3} parent=11 // pred_region
        _
      $region20: #{degae_forward.3} parent=11 // pred_fallthru
        _
      // Predicated region
      $region21: #{degae_forward.3} parent=11 // pred_check
        %p212 = pneg %p102
      $region22: #{degae_forward.3} parent=11 // pred_check_branch
        %214 = sbr.rel (%p212) target = $region24
      $region23: #{degae_forward.3} parent=11 // pred_region
        _
      $region24: #{degae_forward.3} parent=11 // pred_fallthru
        _
      // Predicated region
      $region25: #{degae_forward.3} parent=11 // pred_check
        %p215 = pneg %p123
      $region26: #{degae_forward.3} parent=11 // pred_check_branch
        %217 = sbr.rel (%p215) target = $region28
      $region27: #{degae_forward.3} parent=11 // pred_region
        _
      $region28: #{degae_forward.3} parent=11 // pred_fallthru
        _
      // Predicated region
      $region29: #{degae_forward.3} parent=11 // pred_check
        %p218 = pneg %p144
      $region30: #{degae_forward.3} parent=11 // pred_check_branch
        %220 = sbr.rel (%p218) target = $region32
      $region31: #{degae_forward.3} parent=11 // pred_region
        _
      $region32: #{degae_forward.3} parent=11 // pred_fallthru
        _
      // Predicated region
      $region33: #{degae_forward.3} parent=11 // pred_check
        %p221 = pneg %p165
      $region34: #{degae_forward.3} parent=11 // pred_check_branch
        %223 = sbr.rel (%p221) target = $region36
      $region35: #{degae_forward.3} parent=11 // pred_region
        _
      $region36: #{degae_forward.3} parent=11 // pred_fallthru
        _
    $region12: #{degae_forward.3} parent=5 // pred_fallthru
      _
    %p224 = scmp.lt.s32.totalorder %s13, 2
    // Predicated region
    $region37: #{degae_forward.3} parent=5 // pred_check
      %p225 = pneg %p224
    $region38: #{degae_forward.3} parent=5 // pred_check_branch
      %227 = sbr.rel (%p225) target = $region40
    $region39: #{degae_forward.3} parent=5 // pred_region
      // Predicated region
      $region41: #{degae_forward.3} parent=39 // pred_check
        %p228 = pneg %p33
      $region42: #{degae_forward.3} parent=39 // pred_check_branch
        %230 = sbr.rel (%p228) target = $region44
      $region43: #{degae_forward.3} parent=39 // pred_region
        %p231 = scmp.lt.s32.totalorder %s13, 1
        %s232 = scalar_select %p231, %s13, 1
        %s233 = smul.addr %s232, 54
        %s234 = smul.addr %s233, 8
        %s235 = scalar_lea.vmem %s0, %s234
      $region44: #{degae_forward.3} parent=39 // pred_fallthru
        _
    $region40: #{degae_forward.3} parent=5 // pred_fallthru
      _
    %p236 = scmp.le.s32.totalorder 1, %s13
    %p237 = scmp.lt.s32.totalorder %s13, 3
    %p238 = pnand %p236, %p237
    %p239 = pneg %p238
    // Predicated region
    $region45: #{degae_forward.3} parent=5 // pred_check
      _
    $region46: #{degae_forward.3} parent=5 // pred_check_branch
      %241 = sbr.rel (%p238) target = $region48
    $region47: #{degae_forward.3} parent=5 // pred_region
      %s242 = ssub.s32 %s13, 1
      %p243 = scmp.lt.s32.totalorder %s18, 1
      %s244 = scalar_select %p243, %s18, 1
      %s245 = smul.addr %s244, 54
      %s246 = smul.addr %s245, 8
      %s247 = scalar_lea.vmem %s0, %s246
      %p248 = pneg %p39
      %p249 = pneg %p36
      %p250 = pneg %p60
      %p251 = pneg %p57
      %p252 = pneg %p81
      %p253 = pneg %p78
      %p254 = pneg %p102
      %p255 = pneg %p99
      %p256 = pneg %p123
      %p257 = pneg %p120
      %p258 = pneg %p144
      %p259 = pneg %p141
      %p260 = pneg %p165
      %p261 = pneg %p162
      %p262 = pneg %p191
      %p263 = pneg %p188
      %p264 = scmp.lt.s32.totalorder %s18, 1
      %s265 = scalar_select %p264, %s18, 1
      %s266 = smul.addr %s265, 32
      %s267 = smul.addr %s266, 8
      %s268 = scalar_lea.vmem %s7, %s267
      %p269 = scmp.lt.s32.totalorder %s18, 1
      %s270 = scalar_select %p269, %s18, 1
      %s271 = smul.addr %s270, 54
      %s272 = smul.addr %s271, 8
      %s273 = scalar_lea.vmem %s0, %s272
      %p274 = scmp.lt.s32.totalorder %s18, 1
      %s275 = scalar_select %p274, %s18, 1
      %s276 = smul.addr %s275, 32
      %s277 = smul.addr %s276, 8
      %s278 = scalar_lea.vmem %s7, %s277
      %v279 = vld [vmem:[%s273] sm:$0xff]
      %v280 = vld [vmem:[%s273 + $0x8] sm:$0xff]
      %v281 = vld [vmem:[%s273 + $0x10] sm:$0x3]
      %v282 = vld [vmem:[%s273 + $0x18] sm:$0xff]
      %v283 = vld [vmem:[%s273 + $0x20] sm:$0xff]
      %v284 = vld [vmem:[%s273 + $0x28] sm:$0x3]
      %v285 = vld [vmem:[%s273 + $0x30] sm:$0xff]
      %v286 = vld [vmem:[%s273 + $0x38] sm:$0xff]
      %v287 = vld [vmem:[%s273 + $0x40] sm:$0x3]
      %v288 = vld [vmem:[%s273 + $0x48] sm:$0xff]
      %v289 = vld [vmem:[%s273 + $0x50] sm:$0xff]
      %v290 = vld [vmem:[%s273 + $0x58] sm:$0x3]
      %v291 = vld [vmem:[%s273 + $0x60] sm:$0xff]
      %v292 = vld [vmem:[%s273 + $0x68] sm:$0xff]
      %v293 = vld [vmem:[%s273 + $0x70] sm:$0x3]
      %v294 = vld [vmem:[%s273 + $0x78] sm:$0xff]
      %v295 = vld [vmem:[%s273 + $0x80] sm:$0xff]
      %v296 = vld [vmem:[%s273 + $0x88] sm:$0x3]
      %v297 = vld [vmem:[%s273 + $0x90] sm:$0xff]
      %v298 = vld [vmem:[%s273 + $0x98] sm:$0xff]
      %v299 = vld [vmem:[%s273 + $0xa0] sm:$0x3]
      %v300 = vld [vmem:[%s273 + $0xa8] sm:$0xff]
      %v301 = vld [vmem:[%s273 + $0xb0] sm:$0xff]
      %v302 = vld [vmem:[%s273 + $0xb8] sm:$0x3]
      %v303 = vld [vmem:[%s273 + $0xc0] sm:$0xff]
      %v304 = vld [vmem:[%s273 + $0xc8] sm:$0xff]
      %v305 = vld [vmem:[%s273 + $0xd0] sm:$0x3]
      %v306 = vld [vmem:[%s273 + $0xd8] sm:$0xff]
      %v307 = vld [vmem:[%s273 + $0xe0] sm:$0xff]
      %v308 = vld [vmem:[%s273 + $0xe8] sm:$0x3]
      %v309 = vld [vmem:[%s273 + $0xf0] sm:$0xff]
      %v310 = vld [vmem:[%s273 + $0xf8] sm:$0xff]
      %v311 = vld [vmem:[%s273 + $0x100] sm:$0x3]
      %v312 = vld [vmem:[%s273 + $0x108] sm:$0xff]
      %v313 = vld [vmem:[%s273 + $0x110] sm:$0xff]
      %v314 = vld [vmem:[%s273 + $0x118] sm:$0x3]
      %v315 = vld [vmem:[%s273 + $0x120] sm:$0xff]
      %v316 = vld [vmem:[%s273 + $0x128] sm:$0xff]
      %v317 = vld [vmem:[%s273 + $0x130] sm:$0x3]
      %v318 = vld [vmem:[%s273 + $0x138] sm:$0xff]
      %v319 = vld [vmem:[%s273 + $0x140] sm:$0xff]
      %v320 = vld [vmem:[%s273 + $0x148] sm:$0x3]
      %v321 = vld [vmem:[%s273 + $0x150] sm:$0xff]
      %v322 = vld [vmem:[%s273 + $0x158] sm:$0xff]
      %v323 = vld [vmem:[%s273 + $0x160] sm:$0x3]
      %v324 = vld [vmem:[%s273 + $0x168] sm:$0xff]
      %v325 = vld [vmem:[%s273 + $0x170] sm:$0xff]
      %v326 = vld [vmem:[%s273 + $0x178] sm:$0x3]
      %v327 = vld [vmem:[%s273 + $0x180] sm:$0xff]
      %v328 = vld [vmem:[%s273 + $0x188] sm:$0xff]
      %v329 = vld [vmem:[%s273 + $0x190] sm:$0x3]
      %v330 = vld [vmem:[%s273 + $0x198] sm:$0xff]
      %v331 = vld [vmem:[%s273 + $0x1a0] sm:$0xff]
      %v332 = vld [vmem:[%s273 + $0x1a8] sm:$0x3]
      %v333 = vld [vmem:[%s1] sm:$0xff]
      %vm382 = vcmask 1046528
      %v383 = vrot.slane %v279, 1
      %v384 = vrot.slane %v280, 1
      %v385 = vsel %vm382, %v383, %v384
      %v386 = vrot.slane %v281, 1
      %v387 = vsel %vm382, %v384, %v386
      %v388 = vrot.slane %v282, 1
      %v389 = vrot.slane %v283, 1
      %v390 = vsel %vm382, %v388, %v389
      %v391 = vrot.slane %v284, 1
      %v392 = vsel %vm382, %v389, %v391
      %v393 = vrot.slane %v285, 1
      %v394 = vrot.slane %v286, 1
      %v395 = vsel %vm382, %v393, %v394
      %v396 = vrot.slane %v287, 1
      %v397 = vsel %vm382, %v394, %v396
      %v398 = vrot.slane %v288, 1
      %v399 = vrot.slane %v289, 1
      %v400 = vsel %vm382, %v398, %v399
      %v401 = vrot.slane %v290, 1
      %v402 = vsel %vm382, %v399, %v401
      %v403 = vrot.slane %v291, 1
      %v404 = vrot.slane %v292, 1
      %v405 = vsel %vm382, %v403, %v404
      %v406 = vrot.slane %v293, 1
      %v407 = vsel %vm382, %v404, %v406
      %v408 = vrot.slane %v294, 1
      %v409 = vrot.slane %v295, 1
      %v410 = vsel %vm382, %v408, %v409
      %v411 = vrot.slane %v296, 1
      %v412 = vsel %vm382, %v409, %v411
      %v413 = vrot.slane %v297, 1
      %v414 = vrot.slane %v298, 1
      %v415 = vsel %vm382, %v413, %v414
      %v416 = vrot.slane %v299, 1
      %v417 = vsel %vm382, %v414, %v416
      %v418 = vrot.slane %v300, 1
      %v419 = vrot.slane %v301, 1
      %v420 = vsel %vm382, %v418, %v419
      %v421 = vrot.slane %v302, 1
      %v422 = vsel %vm382, %v419, %v421
      %v423 = vrot.slane %v303, 1
      %v424 = vrot.slane %v304, 1
      %v425 = vsel %vm382, %v423, %v424
      %v426 = vrot.slane %v305, 1
      %v427 = vsel %vm382, %v424, %v426
      %v428 = vrot.slane %v306, 1
      %v429 = vrot.slane %v307, 1
      %v430 = vsel %vm382, %v428, %v429
      %v431 = vrot.slane %v308, 1
      %v432 = vsel %vm382, %v429, %v431
      %v433 = vrot.slane %v309, 1
      %v434 = vrot.slane %v310, 1
      %v435 = vsel %vm382, %v433, %v434
      %v436 = vrot.slane %v311, 1
      %v437 = vsel %vm382, %v434, %v436
      %v438 = vrot.slane %v312, 1
      %v439 = vrot.slane %v313, 1
      %v440 = vsel %vm382, %v438, %v439
      %v441 = vrot.slane %v314, 1
      %v442 = vsel %vm382, %v439, %v441
      %v443 = vrot.slane %v315, 1
      %v444 = vrot.slane %v316, 1
      %v445 = vsel %vm382, %v443, %v444
      %v446 = vrot.slane %v317, 1
      %v447 = vsel %vm382, %v444, %v446
      %v448 = vrot.slane %v318, 1
      %v449 = vrot.slane %v319, 1
      %v450 = vsel %vm382, %v448, %v449
      %v451 = vrot.slane %v320, 1
      %v452 = vsel %vm382, %v449, %v451
      %v453 = vrot.slane %v321, 1
      %v454 = vrot.slane %v322, 1
      %v455 = vsel %vm382, %v453, %v454
      %v456 = vrot.slane %v323, 1
      %v457 = vsel %vm382, %v454, %v456
      %v458 = vrot.slane %v324, 1
      %v459 = vrot.slane %v325, 1
      %v460 = vsel %vm382, %v458, %v459
      %v461 = vrot.slane %v326, 1
      %v462 = vsel %vm382, %v459, %v461
      %s463 = scalar_lea.vmem %s1, 8
      %v464 = vld [vmem:[%s463] sm:$0xff]
      %vm465 = vcmask 64512
      %v466 = vsel %vm465, %v385, 0
      %v468 = vsel %vm465, %v387, 0
      %v470 = vsel %vm465, %v390, 0
      %v472 = vsel %vm465, %v392, 0
      %v474 = vsel %vm465, %v395, 0
      %v476 = vsel %vm465, %v397, 0
      %v478 = vsel %vm465, %v400, 0
      %v480 = vsel %vm465, %v402, 0
      %v482 = vsel %vm465, %v405, 0
      %v484 = vsel %vm465, %v407, 0
      %v486 = vsel %vm465, %v410, 0
      %v488 = vsel %vm465, %v412, 0
      %v490 = vsel %vm465, %v415, 0
      %v492 = vsel %vm465, %v417, 0
      %v494 = vsel %vm465, %v420, 0
      %v496 = vsel %vm465, %v422, 0
      %v498 = vsel %vm465, %v425, 0
      %v500 = vsel %vm465, %v427, 0
      %v502 = vsel %vm465, %v430, 0
      %v504 = vsel %vm465, %v432, 0
      %v506 = vsel %vm465, %v435, 0
      %v508 = vsel %vm465, %v437, 0
      %v510 = vsel %vm465, %v440, 0
      %v512 = vsel %vm465, %v442, 0
      %v514 = vsel %vm465, %v445, 0
      %v516 = vsel %vm465, %v447, 0
      %v518 = vsel %vm465, %v450, 0
      %v520 = vsel %vm465, %v452, 0
      %v522 = vsel %vm465, %v455, 0
      %v524 = vsel %vm465, %v457, 0
      %v526 = vsel %vm465, %v460, 0
      %v528 = vsel %vm465, %v462, 0
      %530 = vmatprep.subr.mxu0 0.0
      %531 = vmatpush1.msra.mxu0 %v464
      %532 = vmatprep.subr.mxu0 0.0
      %533 = vmatpush1.msra.mxu0 0.0
      %534 = vmatprep.subr.mxu0 0.0
      %535 = vmatpush1.msra.mxu0 0.0
      %536 = vmatprep.subr.mxu0 0.0
      %537 = vmatpush1.msra.mxu0 0.0
      %538 = vmatprep.subr.mxu0 0.0
      %539 = vmatpush1.msra.mxu0 0.0
      %540 = vmatprep.subr.mxu0 0.0
      %541 = vmatpush1.msra.mxu0 0.0
      %542 = vmatprep.subr.mxu0 0.0
      %543 = vmatpush1.msra.mxu0 0.0
      %544 = vmatprep.subr.mxu0 0.0
      %545 = vmatpush1.msra.mxu0 0.0
      %546 = vmatprep.subr.mxu0 0.0
      %547 = vmatpush1.msra.mxu0 0.0
      %548 = vmatprep.subr.mxu0 0.0
      %549 = vmatpush1.msra.mxu0 0.0
      %550 = vmatprep.subr.mxu0 0.0
      %551 = vmatpush1.msra.mxu0 0.0
      %552 = vmatprep.subr.mxu0 0.0
      %553 = vmatpush1.msra.mxu0 0.0
      %554 = vmatprep.subr.mxu0 0.0
      %555 = vmatpush1.msra.mxu0 0.0
      %556 = vmatprep.subr.mxu0 0.0
      %557 = vmatpush1.msra.mxu0 0.0
      %558 = vmatprep.subr.mxu0 0.0
      %559 = vmatpush1.msra.mxu0 0.0
      %560 = vmatprep.subr.mxu0 0.0
      %561 = vmatpush1.msra.mxu0 0.0
      %562 = vmatprep.subr.mxu0 0.0
      %563 = vmatpush1.msra.mxu0 0.0
      %564 = vmatprep.subr.mxu0 0.0
      %565 = vmatpush1.msra.mxu0 0.0
      %566 = vmatprep.subr.mxu0 0.0
      %567 = vmatpush1.msra.mxu0 0.0
      %568 = vmatprep.subr.mxu0 0.0
      %569 = vmatpush1.msra.mxu0 0.0
      %570 = vmatprep.subr.mxu0 0.0
      %571 = vmatpush1.msra.mxu0 0.0
      %572 = vmatprep.subr.mxu0 0.0
      %573 = vmatpush1.msra.mxu0 0.0
      %574 = vmatprep.subr.mxu0 0.0
      %575 = vmatpush1.msra.mxu0 0.0
      %576 = vmatprep.subr.mxu0 0.0
      %577 = vmatpush1.msra.mxu0 0.0
      %578 = vmatprep.subr.mxu0 0.0
      %579 = vmatpush1.msra.mxu0 0.0
      %580 = vmatprep.subr.mxu0 0.0
      %581 = vmatpush1.msra.mxu0 0.0
      %582 = vmatprep.subr.mxu0 0.0
      %583 = vmatpush1.msra.mxu0 0.0
      %584 = vmatprep.subr.mxu0 0.0
      %585 = vmatpush1.msra.mxu0 0.0
      %586 = vmatprep.subr.mxu0 0.0
      %587 = vmatpush1.msra.mxu0 0.0
      %588 = vmatprep.subr.mxu0 0.0
      %589 = vmatpush1.msra.mxu0 0.0
      %590 = vmatprep.subr.mxu0 0.0
      %591 = vmatpush1.msra.mxu0 0.0
      %592 = vmatprep.subr.mxu0 0.0
      %593 = vmatpush1.msra.mxu0 0.0
      %594 = vmatprep.mubr.f32.mxu0 0.0
      %595 = vmatmul.mubr.f32.gmra.mrb[0].mxu0 %v466
      %v596 = vpop.f32.mrb[0].mxu0
      %v597 = vadd.f32 0.0, %v596
      %v598 = vpop.f32.mrb[0].mxu0
      %599 = vmatprep.mubr.f32.mxu0 0.0
      %600 = vmatmul.mubr.f32.gmra.mrb[0].mxu0 %v468
      %v601 = vpop.f32.mrb[0].mxu0
      %v602 = vadd.f32 0.0, %v601
      %v603 = vpop.f32.mrb[0].mxu0
      %604 = vmatprep.mubr.f32.mxu0 0.0
      %605 = vmatmul.mubr.f32.gmra.mrb[0].mxu0 %v470
      %v606 = vpop.f32.mrb[0].mxu0
      %v607 = vadd.f32 0.0, %v606
      %v608 = vpop.f32.mrb[0].mxu0
      %609 = vmatprep.mubr.f32.mxu0 0.0
      %610 = vmatmul.mubr.f32.gmra.mrb[0].mxu0 %v472
      %v611 = vpop.f32.mrb[0].mxu0
      %v612 = vadd.f32 0.0, %v611
      %v613 = vpop.f32.mrb[0].mxu0
      %614 = vmatprep.mubr.f32.mxu0 0.0
      %615 = vmatmul.mubr.f32.gmra.mrb[0].mxu0 %v474
      %v616 = vpop.f32.mrb[0].mxu0
      %v617 = vadd.f32 0.0, %v616
      %v618 = vpop.f32.mrb[0].mxu0
      %619 = vmatprep.mubr.f32.mxu0 0.0
      %620 = vmatmul.mubr.f32.gmra.mrb[0].mxu0 %v476
      %v621 = vpop.f32.mrb[0].mxu0
      %v622 = vadd.f32 0.0, %v621
      %v623 = vpop.f32.mrb[0].mxu0
      %624 = vmatprep.mubr.f32.mxu0 0.0
      %625 = vmatmul.mubr.f32.gmra.mrb[0].mxu0 %v478
      %v626 = vpop.f32.mrb[0].mxu0
      %v627 = vadd.f32 0.0, %v626
      %v628 = vpop.f32.mrb[0].mxu0
      %629 = vmatprep.mubr.f32.mxu0 0.0
      %630 = vmatmul.mubr.f32.gmra.mrb[0].mxu0 %v480
      %v631 = vpop.f32.mrb[0].mxu0
      %v632 = vadd.f32 0.0, %v631
      %v633 = vpop.f32.mrb[0].mxu0
      %634 = vmatprep.mubr.f32.mxu0 0.0
      %635 = vmatmul.mubr.f32.gmra.mrb[0].mxu0 %v482
      %v636 = vpop.f32.mrb[0].mxu0
      %v637 = vadd.f32 0.0, %v636
      %v638 = vpop.f32.mrb[0].mxu0
      %639 = vmatprep.mubr.f32.mxu0 0.0
      %640 = vmatmul.mubr.f32.gmra.mrb[0].mxu0 %v484
      %v641 = vpop.f32.mrb[0].mxu0
      %v642 = vadd.f32 0.0, %v641
      %v643 = vpop.f32.mrb[0].mxu0
      %644 = vmatprep.mubr.f32.mxu0 0.0
      %645 = vmatmul.mubr.f32.gmra.mrb[0].mxu0 %v486
      %v646 = vpop.f32.mrb[0].mxu0
      %v647 = vadd.f32 0.0, %v646
      %v648 = vpop.f32.mrb[0].mxu0
      %649 = vmatprep.mubr.f32.mxu0 0.0
      %650 = vmatmul.mubr.f32.gmra.mrb[0].mxu0 %v488
      %v651 = vpop.f32.mrb[0].mxu0
      %v652 = vadd.f32 0.0, %v651
      %v653 = vpop.f32.mrb[0].mxu0
      %654 = vmatprep.mubr.f32.mxu0 0.0
      %655 = vmatmul.mubr.f32.gmra.mrb[0].mxu0 %v490
      %v656 = vpop.f32.mrb[0].mxu0
      %v657 = vadd.f32 0.0, %v656
      %v658 = vpop.f32.mrb[0].mxu0
      %659 = vmatprep.mubr.f32.mxu0 0.0
      %660 = vmatmul.mubr.f32.gmra.mrb[0].mxu0 %v492
      %v661 = vpop.f32.mrb[0].mxu0
      %v662 = vadd.f32 0.0, %v661
      %v663 = vpop.f32.mrb[0].mxu0
      %664 = vmatprep.mubr.f32.mxu0 0.0
      %665 = vmatmul.mubr.f32.gmra.mrb[0].mxu0 %v494
      %v666 = vpop.f32.mrb[0].mxu0
      %v667 = vadd.f32 0.0, %v666
      %v668 = vpop.f32.mrb[0].mxu0
      %669 = vmatprep.mubr.f32.mxu0 0.0
      %670 = vmatmul.mubr.f32.gmra.mrb[0].mxu0 %v496
      %v671 = vpop.f32.mrb[0].mxu0
      %v672 = vadd.f32 0.0, %v671
      %v673 = vpop.f32.mrb[0].mxu0
      %674 = vmatprep.mubr.f32.mxu0 0.0
      %675 = vmatmul.mubr.f32.gmra.mrb[0].mxu0 %v498
      %v676 = vpop.f32.mrb[0].mxu0
      %v677 = vadd.f32 0.0, %v676
      %v678 = vpop.f32.mrb[0].mxu0
      %679 = vmatprep.mubr.f32.mxu0 0.0
      %680 = vmatmul.mubr.f32.gmra.mrb[0].mxu0 %v500
      %v681 = vpop.f32.mrb[0].mxu0
      %v682 = vadd.f32 0.0, %v681
      %v683 = vpop.f32.mrb[0].mxu0
      %684 = vmatprep.mubr.f32.mxu0 0.0
      %685 = vmatmul.mubr.f32.gmra.mrb[0].mxu0 %v502
      %v686 = vpop.f32.mrb[0].mxu0
      %v687 = vadd.f32 0.0, %v686
      %v688 = vpop.f32.mrb[0].mxu0
      %689 = vmatprep.mubr.f32.mxu0 0.0
      %690 = vmatmul.mubr.f32.gmra.mrb[0].mxu0 %v504
      %v691 = vpop.f32.mrb[0].mxu0
      %v692 = vadd.f32 0.0, %v691
      %v693 = vpop.f32.mrb[0].mxu0
      %694 = vmatprep.mubr.f32.mxu0 0.0
      %695 = vmatmul.mubr.f32.gmra.mrb[0].mxu0 %v506
      %v696 = vpop.f32.mrb[0].mxu0
      %v697 = vadd.f32 0.0, %v696
      %v698 = vpop.f32.mrb[0].mxu0
      %699 = vmatprep.mubr.f32.mxu0 0.0
      %700 = vmatmul.mubr.f32.gmra.mrb[0].mxu0 %v508
      %v701 = vpop.f32.mrb[0].mxu0
      %v702 = vadd.f32 0.0, %v701
      %v703 = vpop.f32.mrb[0].mxu0
      %704 = vmatprep.mubr.f32.mxu0 0.0
      %705 = vmatmul.mubr.f32.gmra.mrb[0].mxu0 %v510
      %v706 = vpop.f32.mrb[0].mxu0
      %v707 = vadd.f32 0.0, %v706
      %v708 = vpop.f32.mrb[0].mxu0
      %709 = vmatprep.mubr.f32.mxu0 0.0
      %710 = vmatmul.mubr.f32.gmra.mrb[0].mxu0 %v512
      %v711 = vpop.f32.mrb[0].mxu0
      %v712 = vadd.f32 0.0, %v711
      %v713 = vpop.f32.mrb[0].mxu0
      %714 = vmatprep.mubr.f32.mxu0 0.0
      %715 = vmatmul.mubr.f32.gmra.mrb[0].mxu0 %v514
      %v716 = vpop.f32.mrb[0].mxu0
      %v717 = vadd.f32 0.0, %v716
      %v718 = vpop.f32.mrb[0].mxu0
      %719 = vmatprep.mubr.f32.mxu0 0.0
      %720 = vmatmul.mubr.f32.gmra.mrb[0].mxu0 %v516
      %v721 = vpop.f32.mrb[0].mxu0
      %v722 = vadd.f32 0.0, %v721
      %v723 = vpop.f32.mrb[0].mxu0
      %724 = vmatprep.mubr.f32.mxu0 0.0
      %725 = vmatmul.mubr.f32.gmra.mrb[0].mxu0 %v518
      %v726 = vpop.f32.mrb[0].mxu0
      %v727 = vadd.f32 0.0, %v726
      %v728 = vpop.f32.mrb[0].mxu0
      %729 = vmatprep.mubr.f32.mxu0 0.0
      %730 = vmatmul.mubr.f32.gmra.mrb[0].mxu0 %v520
      %v731 = vpop.f32.mrb[0].mxu0
      %v732 = vadd.f32 0.0, %v731
      %v733 = vpop.f32.mrb[0].mxu0
      %734 = vmatprep.mubr.f32.mxu0 0.0
      %735 = vmatmul.mubr.f32.gmra.mrb[0].mxu0 %v522
      %v736 = vpop.f32.mrb[0].mxu0
      %v737 = vadd.f32 0.0, %v736
      %v738 = vpop.f32.mrb[0].mxu0
      %739 = vmatprep.mubr.f32.mxu0 0.0
      %740 = vmatmul.mubr.f32.gmra.mrb[0].mxu0 %v524
      %v741 = vpop.f32.mrb[0].mxu0
      %v742 = vadd.f32 0.0, %v741
      %v743 = vpop.f32.mrb[0].mxu0
      %744 = vmatprep.mubr.f32.mxu0 0.0
      %745 = vmatmul.mubr.f32.gmra.mrb[0].mxu0 %v526
      %v746 = vpop.f32.mrb[0].mxu0
      %v747 = vadd.f32 0.0, %v746
      %v748 = vpop.f32.mrb[0].mxu0
      %749 = vmatprep.mubr.f32.mxu0 0.0
      %750 = vmatmul.mubr.f32.gmra.mrb[0].mxu0 %v528
      %v751 = vpop.f32.mrb[0].mxu0
      %v752 = vadd.f32 0.0, %v751
      %v753 = vpop.f32.mrb[0].mxu0
      %754 = vdwg.mxu0
      %v755 = vsel %vm465, %v279, 0
      %v757 = vsel %vm465, %v280, 0
      %v759 = vsel %vm465, %v282, 0
      %v761 = vsel %vm465, %v283, 0
      %v763 = vsel %vm465, %v285, 0
      %v765 = vsel %vm465, %v286, 0
      %v767 = vsel %vm465, %v288, 0
      %v769 = vsel %vm465, %v289, 0
      %v771 = vsel %vm465, %v291, 0
      %v773 = vsel %vm465, %v292, 0
      %v775 = vsel %vm465, %v294, 0
      %v777 = vsel %vm465, %v295, 0
      %v779 = vsel %vm465, %v297, 0
      %v781 = vsel %vm465, %v298, 0
      %v783 = vsel %vm465, %v300, 0
      %v785 = vsel %vm465, %v301, 0
      %v787 = vsel %vm465, %v303, 0
      %v789 = vsel %vm465, %v304, 0
      %v791 = vsel %vm465, %v306, 0
      %v793 = vsel %vm465, %v307, 0
      %v795 = vsel %vm465, %v309, 0
      %v797 = vsel %vm465, %v310, 0
      %v799 = vsel %vm465, %v312, 0
      %v801 = vsel %vm465, %v313, 0
      %v803 = vsel %vm465, %v315, 0
      %v805 = vsel %vm465, %v316, 0
      %v807 = vsel %vm465, %v318, 0
      %v809 = vsel %vm465, %v319, 0
      %v811 = vsel %vm465, %v321, 0
      %v813 = vsel %vm465, %v322, 0
      %v815 = vsel %vm465, %v324, 0
      %v817 = vsel %vm465, %v325, 0
      %819 = vmatprep.subr.mxu0 0.0
      %820 = vmatpush1.msra.mxu0 %v333
      %821 = vmatprep.subr.mxu0 0.0
      %822 = vmatpush1.msra.mxu0 0.0
      %823 = vmatprep.subr.mxu0 0.0
      %824 = vmatpush1.msra.mxu0 0.0
      %825 = vmatprep.subr.mxu0 0.0
      %826 = vmatpush1.msra.mxu0 0.0
      %827 = vmatprep.subr.mxu0 0.0
      %828 = vmatpush1.msra.mxu0 0.0
      %829 = vmatprep.subr.mxu0 0.0
      %830 = vmatpush1.msra.mxu0 0.0
      %831 = vmatprep.subr.mxu0 0.0
      %832 = vmatpush1.msra.mxu0 0.0
      %833 = vmatprep.subr.mxu0 0.0
      %834 = vmatpush1.msra.mxu0 0.0
      %835 = vmatprep.subr.mxu0 0.0
      %836 = vmatpush1.msra.mxu0 0.0
      %837 = vmatprep.subr.mxu0 0.0
      %838 = vmatpush1.msra.mxu0 0.0
      %839 = vmatprep.subr.mxu0 0.0
      %840 = vmatpush1.msra.mxu0 0.0
      %841 = vmatprep.subr.mxu0 0.0
      %842 = vmatpush1.msra.mxu0 0.0
      %843 = vmatprep.subr.mxu0 0.0
      %844 = vmatpush1.msra.mxu0 0.0
      %845 = vmatprep.subr.mxu0 0.0
      %846 = vmatpush1.msra.mxu0 0.0
      %847 = vmatprep.subr.mxu0 0.0
      %848 = vmatpush1.msra.mxu0 0.0
      %849 = vmatprep.subr.mxu0 0.0
      %850 = vmatpush1.msra.mxu0 0.0
      %851 = vmatprep.subr.mxu0 0.0
      %852 = vmatpush1.msra.mxu0 0.0
      %853 = vmatprep.subr.mxu0 0.0
      %854 = vmatpush1.msra.mxu0 0.0
      %855 = vmatprep.subr.mxu0 0.0
      %856 = vmatpush1.msra.mxu0 0.0
      %857 = vmatprep.subr.mxu0 0.0
      %858 = vmatpush1.msra.mxu0 0.0
      %859 = vmatprep.subr.mxu0 0.0
      %860 = vmatpush1.msra.mxu0 0.0
      %861 = vmatprep.subr.mxu0 0.0
      %862 = vmatpush1.msra.mxu0 0.0
      %863 = vmatprep.subr.mxu0 0.0
      %864 = vmatpush1.msra.mxu0 0.0
      %865 = vmatprep.subr.mxu0 0.0
      %866 = vmatpush1.msra.mxu0 0.0
      %867 = vmatprep.subr.mxu0 0.0
      %868 = vmatpush1.msra.mxu0 0.0
      %869 = vmatprep.subr.mxu0 0.0
      %870 = vmatpush1.msra.mxu0 0.0
      %871 = vmatprep.subr.mxu0 0.0
      %872 = vmatpush1.msra.mxu0 0.0
      %873 = vmatprep.subr.mxu0 0.0
      %874 = vmatpush1.msra.mxu0 0.0
      %875 = vmatprep.subr.mxu0 0.0
      %876 = vmatpush1.msra.mxu0 0.0
      %877 = vmatprep.subr.mxu0 0.0
      %878 = vmatpush1.msra.mxu0 0.0
      %879 = vmatprep.subr.mxu0 0.0
      %880 = vmatpush1.msra.mxu0 0.0
      %881 = vmatprep.subr.mxu0 0.0
      %882 = vmatpush1.msra.mxu0 0.0
      %883 = vmatprep.mubr.f32.mxu0 0.0
      %884 = vmatmul.mubr.f32.gmra.mrb[0].mxu0 %v755
      %v885 = vpop.f32.mrb[0].mxu0
      %v886 = vadd.f32 %v597, %v885
      %v887 = vpop.f32.mrb[0].mxu0
      %888 = vmatprep.mubr.f32.mxu0 0.0
      %889 = vmatmul.mubr.f32.gmra.mrb[0].mxu0 %v757
      %v890 = vpop.f32.mrb[0].mxu0
      %v891 = vadd.f32 %v602, %v890
      %v892 = vpop.f32.mrb[0].mxu0
      %893 = vmatprep.mubr.f32.mxu0 0.0
      %894 = vmatmul.mubr.f32.gmra.mrb[0].mxu0 %v759
      %v895 = vpop.f32.mrb[0].mxu0
      %v896 = vadd.f32 %v607, %v895
      %v897 = vpop.f32.mrb[0].mxu0
      %898 = vmatprep.mubr.f32.mxu0 0.0
      %899 = vmatmul.mubr.f32.gmra.mrb[0].mxu0 %v761
      %v900 = vpop.f32.mrb[0].mxu0
      %v901 = vadd.f32 %v612, %v900
      %v902 = vpop.f32.mrb[0].mxu0
      %903 = vmatprep.mubr.f32.mxu0 0.0
      %904 = vmatmul.mubr.f32.gmra.mrb[0].mxu0 %v763
      %v905 = vpop.f32.mrb[0].mxu0
      %v906 = vadd.f32 %v617, %v905
      %v907 = vpop.f32.mrb[0].mxu0
      %908 = vmatprep.mubr.f32.mxu0 0.0
      %909 = vmatmul.mubr.f32.gmra.mrb[0].mxu0 %v765
      %v910 = vpop.f32.mrb[0].mxu0
      %v911 = vadd.f32 %v622, %v910
      %v912 = vpop.f32.mrb[0].mxu0
      %913 = vmatprep.mubr.f32.mxu0 0.0
      %914 = vmatmul.mubr.f32.gmra.mrb[0].mxu0 %v767
      %v915 = vpop.f32.mrb[0].mxu0
      %v916 = vadd.f32 %v627, %v915
      %v917 = vpop.f32.mrb[0].mxu0
      %918 = vmatprep.mubr.f32.mxu0 0.0
      %919 = vmatmul.mubr.f32.gmra.mrb[0].mxu0 %v769
      %v920 = vpop.f32.mrb[0].mxu0
      %v921 = vadd.f32 %v632, %v920
      %v922 = vpop.f32.mrb[0].mxu0
      %923 = vmatprep.mubr.f32.mxu0 0.0
      %924 = vmatmul.mubr.f32.gmra.mrb[0].mxu0 %v771
      %v925 = vpop.f32.mrb[0].mxu0
      %v926 = vadd.f32 %v637, %v925
      %v927 = vpop.f32.mrb[0].mxu0
      %928 = vmatprep.mubr.f32.mxu0 0.0
      %929 = vmatmul.mubr.f32.gmra.mrb[0].mxu0 %v773
      %v930 = vpop.f32.mrb[0].mxu0
      %v931 = vadd.f32 %v642, %v930
      %v932 = vpop.f32.mrb[0].mxu0
      %933 = vmatprep.mubr.f32.mxu0 0.0
      %934 = vmatmul.mubr.f32.gmra.mrb[0].mxu0 %v775
      %v935 = vpop.f32.mrb[0].mxu0
      %v936 = vadd.f32 %v647, %v935
      %v937 = vpop.f32.mrb[0].mxu0
      %938 = vmatprep.mubr.f32.mxu0 0.0
      %939 = vmatmul.mubr.f32.gmra.mrb[0].mxu0 %v777
      %v940 = vpop.f32.mrb[0].mxu0
      %v941 = vadd.f32 %v652, %v940
      %v942 = vpop.f32.mrb[0].mxu0
      %943 = vmatprep.mubr.f32.mxu0 0.0
      %944 = vmatmul.mubr.f32.gmra.mrb[0].mxu0 %v779
      %v945 = vpop.f32.mrb[0].mxu0
      %v946 = vadd.f32 %v657, %v945
      %v947 = vpop.f32.mrb[0].mxu0
      %948 = vmatprep.mubr.f32.mxu0 0.0
      %949 = vmatmul.mubr.f32.gmra.mrb[0].mxu0 %v781
      %v950 = vpop.f32.mrb[0].mxu0
      %v951 = vadd.f32 %v662, %v950
      %v952 = vpop.f32.mrb[0].mxu0
      %953 = vmatprep.mubr.f32.mxu0 0.0
      %954 = vmatmul.mubr.f32.gmra.mrb[0].mxu0 %v783
      %v955 = vpop.f32.mrb[0].mxu0
      %v956 = vadd.f32 %v667, %v955
      %v957 = vpop.f32.mrb[0].mxu0
      %958 = vmatprep.mubr.f32.mxu0 0.0
      %959 = vmatmul.mubr.f32.gmra.mrb[0].mxu0 %v785
      %v960 = vpop.f32.mrb[0].mxu0
      %v961 = vadd.f32 %v672, %v960
      %v962 = vpop.f32.mrb[0].mxu0
      %963 = vmatprep.mubr.f32.mxu0 0.0
      %964 = vmatmul.mubr.f32.gmra.mrb[0].mxu0 %v787
      %v965 = vpop.f32.mrb[0].mxu0
      %v966 = vadd.f32 %v677, %v965
      %v967 = vpop.f32.mrb[0].mxu0
      %968 = vmatprep.mubr.f32.mxu0 0.0
      %969 = vmatmul.mubr.f32.gmra.mrb[0].mxu0 %v789
      %v970 = vpop.f32.mrb[0].mxu0
      %v971 = vadd.f32 %v682, %v970
      %v972 = vpop.f32.mrb[0].mxu0
      %973 = vmatprep.mubr.f32.mxu0 0.0
      %974 = vmatmul.mubr.f32.gmra.mrb[0].mxu0 %v791
      %v975 = vpop.f32.mrb[0].mxu0
      %v976 = vadd.f32 %v687, %v975
      %v977 = vpop.f32.mrb[0].mxu0
      %978 = vmatprep.mubr.f32.mxu0 0.0
      %979 = vmatmul.mubr.f32.gmra.mrb[0].mxu0 %v793
      %v980 = vpop.f32.mrb[0].mxu0
      %v981 = vadd.f32 %v692, %v980
      %v982 = vpop.f32.mrb[0].mxu0
      %983 = vmatprep.mubr.f32.mxu0 0.0
      %984 = vmatmul.mubr.f32.gmra.mrb[0].mxu0 %v795
      %v985 = vpop.f32.mrb[0].mxu0
      %v986 = vadd.f32 %v697, %v985
      %v987 = vpop.f32.mrb[0].mxu0
      %988 = vmatprep.mubr.f32.mxu0 0.0
      %989 = vmatmul.mubr.f32.gmra.mrb[0].mxu0 %v797
      %v990 = vpop.f32.mrb[0].mxu0
      %v991 = vadd.f32 %v702, %v990
      %v992 = vpop.f32.mrb[0].mxu0
      %993 = vmatprep.mubr.f32.mxu0 0.0
      %994 = vmatmul.mubr.f32.gmra.mrb[0].mxu0 %v799
      %v995 = vpop.f32.mrb[0].mxu0
      %v996 = vadd.f32 %v707, %v995
      %v997 = vpop.f32.mrb[0].mxu0
      %998 = vmatprep.mubr.f32.mxu0 0.0
      %999 = vmatmul.mubr.f32.gmra.mrb[0].mxu0 %v801
      %v1000 = vpop.f32.mrb[0].mxu0
      %v1001 = vadd.f32 %v712, %v1000
      %v1002 = vpop.f32.mrb[0].mxu0
      %1003 = vmatprep.mubr.f32.mxu0 0.0
      %1004 = vmatmul.mubr.f32.gmra.mrb[0].mxu0 %v803
      %v1005 = vpop.f32.mrb[0].mxu0
      %v1006 = vadd.f32 %v717, %v1005
      %v1007 = vpop.f32.mrb[0].mxu0
      %1008 = vmatprep.mubr.f32.mxu0 0.0
      %1009 = vmatmul.mubr.f32.gmra.mrb[0].mxu0 %v805
      %v1010 = vpop.f32.mrb[0].mxu0
      %v1011 = vadd.f32 %v722, %v1010
      %v1012 = vpop.f32.mrb[0].mxu0
      %1013 = vmatprep.mubr.f32.mxu0 0.0
      %1014 = vmatmul.mubr.f32.gmra.mrb[0].mxu0 %v807
      %v1015 = vpop.f32.mrb[0].mxu0
      %v1016 = vadd.f32 %v727, %v1015
      %v1017 = vpop.f32.mrb[0].mxu0
      %1018 = vmatprep.mubr.f32.mxu0 0.0
      %1019 = vmatmul.mubr.f32.gmra.mrb[0].mxu0 %v809
      %v1020 = vpop.f32.mrb[0].mxu0
      %v1021 = vadd.f32 %v732, %v1020
      %v1022 = vpop.f32.mrb[0].mxu0
      %1023 = vmatprep.mubr.f32.mxu0 0.0
      %1024 = vmatmul.mubr.f32.gmra.mrb[0].mxu0 %v811
      %v1025 = vpop.f32.mrb[0].mxu0
      %v1026 = vadd.f32 %v737, %v1025
      %v1027 = vpop.f32.mrb[0].mxu0
      %1028 = vmatprep.mubr.f32.mxu0 0.0
      %1029 = vmatmul.mubr.f32.gmra.mrb[0].mxu0 %v813
      %v1030 = vpop.f32.mrb[0].mxu0
      %v1031 = vadd.f32 %v742, %v1030
      %v1032 = vpop.f32.mrb[0].mxu0
      %1033 = vmatprep.mubr.f32.mxu0 0.0
      %1034 = vmatmul.mubr.f32.gmra.mrb[0].mxu0 %v815
      %v1035 = vpop.f32.mrb[0].mxu0
      %v1036 = vadd.f32 %v747, %v1035
      %v1037 = vpop.f32.mrb[0].mxu0
      %1038 = vmatprep.mubr.f32.mxu0 0.0
      %1039 = vmatmul.mubr.f32.gmra.mrb[0].mxu0 %v817
      %v1040 = vpop.f32.mrb[0].mxu0
      %v1041 = vadd.f32 %v752, %v1040
      %v1042 = vpop.f32.mrb[0].mxu0
      %1043 = vdwg.mxu0
      %vm1044 = vcmask 1045504
      %v1045 = vrot.slane %v279, 2
      %v1046 = vrot.slane %v280, 2
      %v1047 = vsel %vm1044, %v1045, %v1046
      %v1048 = vrot.slane %v281, 2
      %v1049 = vsel %vm1044, %v1046, %v1048
      %v1050 = vrot.slane %v282, 2
      %v1051 = vrot.slane %v283, 2
      %v1052 = vsel %vm1044, %v1050, %v1051
      %v1053 = vrot.slane %v284, 2
      %v1054 = vsel %vm1044, %v1051, %v1053
      %v1055 = vrot.slane %v285, 2
      %v1056 = vrot.slane %v286, 2
      %v1057 = vsel %vm1044, %v1055, %v1056
      %v1058 = vrot.slane %v287, 2
      %v1059 = vsel %vm1044, %v1056, %v1058
      %v1060 = vrot.slane %v288, 2
      %v1061 = vrot.slane %v289, 2
      %v1062 = vsel %vm1044, %v1060, %v1061
      %v1063 = vrot.slane %v290, 2
      %v1064 = vsel %vm1044, %v1061, %v1063
      %v1065 = vrot.slane %v291, 2
      %v1066 = vrot.slane %v292, 2
      %v1067 = vsel %vm1044, %v1065, %v1066
      %v1068 = vrot.slane %v293, 2
      %v1069 = vsel %vm1044, %v1066, %v1068
      %v1070 = vrot.slane %v294, 2
      %v1071 = vrot.slane %v295, 2
      %v1072 = vsel %vm1044, %v1070, %v1071
      %v1073 = vrot.slane %v296, 2
      %v1074 = vsel %vm1044, %v1071, %v1073
      %v1075 = vrot.slane %v297, 2
      %v1076 = vrot.slane %v298, 2
      %v1077 = vsel %vm1044, %v1075, %v1076
      %v1078 = vrot.slane %v299, 2
      %v1079 = vsel %vm1044, %v1076, %v1078
      %v1080 = vrot.slane %v300, 2
      %v1081 = vrot.slane %v301, 2
      %v1082 = vsel %vm1044, %v1080, %v1081
      %v1083 = vrot.slane %v302, 2
      %v1084 = vsel %vm1044, %v1081, %v1083
      %v1085 = vrot.slane %v303, 2
      %v1086 = vrot.slane %v304, 2
      %v1087 = vsel %vm1044, %v1085, %v1086
      %v1088 = vrot.slane %v305, 2
      %v1089 = vsel %vm1044, %v1086, %v1088
      %v1090 = vrot.slane %v306, 2
      %v1091 = vrot.slane %v307, 2
      %v1092 = vsel %vm1044, %v1090, %v1091
      %v1093 = vrot.slane %v308, 2
      %v1094 = vsel %vm1044, %v1091, %v1093
      %v1095 = vrot.slane %v309, 2
      %v1096 = vrot.slane %v310, 2
      %v1097 = vsel %vm1044, %v1095, %v1096
      %v1098 = vrot.slane %v311, 2
      %v1099 = vsel %vm1044, %v1096, %v1098
      %v1100 = vrot.slane %v312, 2
      %v1101 = vrot.slane %v313, 2
      %v1102 = vsel %vm1044, %v1100, %v1101
      %v1103 = vrot.slane %v314, 2
      %v1104 = vsel %vm1044, %v1101, %v1103
      %v1105 = vrot.slane %v315, 2
      %v1106 = vrot.slane %v316, 2
      %v1107 = vsel %vm1044, %v1105, %v1106
      %v1108 = vrot.slane %v317, 2
      %v1109 = vsel %vm1044, %v1106, %v1108
      %v1110 = vrot.slane %v318, 2
      %v1111 = vrot.slane %v319, 2
      %v1112 = vsel %vm1044, %v1110, %v1111
      %v1113 = vrot.slane %v320, 2
      %v1114 = vsel %vm1044, %v1111, %v1113
      %v1115 = vrot.slane %v321, 2
      %v1116 = vrot.slane %v322, 2
      %v1117 = vsel %vm1044, %v1115, %v1116
      %v1118 = vrot.slane %v323, 2
      %v1119 = vsel %vm1044, %v1116, %v1118
      %v1120 = vrot.slane %v324, 2
      %v1121 = vrot.slane %v325, 2
      %v1122 = vsel %vm1044, %v1120, %v1121
      %v1123 = vrot.slane %v326, 2
      %v1124 = vsel %vm1044, %v1121, %v1123
      %s1125 = scalar_lea.vmem %s1, 16
      %v1126 = vld [vmem:[%s1125] sm:$0xff]
      %v1127 = vsel %vm465, %v1047, 0
      %v1129 = vsel %vm465, %v1049, 0
      %v1131 = vsel %vm465, %v1052, 0
      %v1133 = vsel %vm465, %v1054, 0
      %v1135 = vsel %vm465, %v1057, 0
      %v1137 = vsel %vm465, %v1059, 0
      %v1139 = vsel %vm465, %v1062, 0
      %v1141 = vsel %vm465, %v1064, 0
      %v1143 = vsel %vm465, %v1067, 0
      %v1145 = vsel %vm465, %v1069, 0
      %v1147 = vsel %vm465, %v1072, 0
      %v1149 = vsel %vm465, %v1074, 0
      %v1151 = vsel %vm465, %v1077, 0
      %v1153 = vsel %vm465, %v1079, 0
      %v1155 = vsel %vm465, %v1082, 0
      %v1157 = vsel %vm465, %v1084, 0
      %v1159 = vsel %vm465, %v1087, 0
      %v1161 = vsel %vm465, %v1089, 0
      %v1163 = vsel %vm465, %v1092, 0
      %v1165 = vsel %vm465, %v1094, 0
      %v1167 = vsel %vm465, %v1097, 0
      %v1169 = vsel %vm465, %v1099, 0
      %v1171 = vsel %vm465, %v1102, 0
      %v1173 = vsel %vm465, %v1104, 0
      %v1175 = vsel %vm465, %v1107, 0
      %v1177 = vsel %vm465, %v1109, 0
      %v1179 = vsel %vm465, %v1112, 0
      %v1181 = vsel %vm465, %v1114, 0
      %v1183 = vsel %vm465, %v1117, 0
      %v1185 = vsel %vm465, %v1119, 0
      %v1187 = vsel %vm465, %v1122, 0
      %v1189 = vsel %vm465, %v1124, 0
      %1191 = vmatprep.subr.mxu0 0.0
      %1192 = vmatpush1.msra.mxu0 %v1126
      %1193 = vmatprep.subr.mxu0 0.0
      %1194 = vmatpush1.msra.mxu0 0.0
      %1195 = vmatprep.subr.mxu0 0.0
      %1196 = vmatpush1.msra.mxu0 0.0
      %1197 = vmatprep.subr.mxu0 0.0
      %1198 = vmatpush1.msra.mxu0 0.0
      %1199 = vmatprep.subr.mxu0 0.0
      %1200 = vmatpush1.msra.mxu0 0.0
      %1201 = vmatprep.subr.mxu0 0.0
      %1202 = vmatpush1.msra.mxu0 0.0
      %1203 = vmatprep.subr.mxu0 0.0
      %1204 = vmatpush1.msra.mxu0 0.0
      %1205 = vmatprep.subr.mxu0 0.0
      %1206 = vmatpush1.msra.mxu0 0.0
      %1207 = vmatprep.subr.mxu0 0.0
      %1208 = vmatpush1.msra.mxu0 0.0
      %1209 = vmatprep.subr.mxu0 0.0
      %1210 = vmatpush1.msra.mxu0 0.0
      %1211 = vmatprep.subr.mxu0 0.0
      %1212 = vmatpush1.msra.mxu0 0.0
      %1213 = vmatprep.subr.mxu0 0.0
      %1214 = vmatpush1.msra.mxu0 0.0
      %1215 = vmatprep.subr.mxu0 0.0
      %1216 = vmatpush1.msra.mxu0 0.0
      %1217 = vmatprep.subr.mxu0 0.0
      %1218 = vmatpush1.msra.mxu0 0.0
      %1219 = vmatprep.subr.mxu0 0.0
      %1220 = vmatpush1.msra.mxu0 0.0
      %1221 = vmatprep.subr.mxu0 0.0
      %1222 = vmatpush1.msra.mxu0 0.0
      %1223 = vmatprep.subr.mxu0 0.0
      %1224 = vmatpush1.msra.mxu0 0.0
      %1225 = vmatprep.subr.mxu0 0.0
      %1226 = vmatpush1.msra.mxu0 0.0
      %1227 = vmatprep.subr.mxu0 0.0
      %1228 = vmatpush1.msra.mxu0 0.0
      %1229 = vmatprep.subr.mxu0 0.0
      %1230 = vmatpush1.msra.mxu0 0.0
      %1231 = vmatprep.subr.mxu0 0.0
      %1232 = vmatpush1.msra.mxu0 0.0
      %1233 = vmatprep.subr.mxu0 0.0
      %1234 = vmatpush1.msra.mxu0 0.0
      %1235 = vmatprep.subr.mxu0 0.0
      %1236 = vmatpush1.msra.mxu0 0.0
      %1237 = vmatprep.subr.mxu0 0.0
      %1238 = vmatpush1.msra.mxu0 0.0
      %1239 = vmatprep.subr.mxu0 0.0
      %1240 = vmatpush1.msra.mxu0 0.0
      %1241 = vmatprep.subr.mxu0 0.0
      %1242 = vmatpush1.msra.mxu0 0.0
      %1243 = vmatprep.subr.mxu0 0.0
      %1244 = vmatpush1.msra.mxu0 0.0
      %1245 = vmatprep.subr.mxu0 0.0
      %1246 = vmatpush1.msra.mxu0 0.0
      %1247 = vmatprep.subr.mxu0 0.0
      %1248 = vmatpush1.msra.mxu0 0.0
      %1249 = vmatprep.subr.mxu0 0.0
      %1250 = vmatpush1.msra.mxu0 0.0
      %1251 = vmatprep.subr.mxu0 0.0
      %1252 = vmatpush1.msra.mxu0 0.0
      %1253 = vmatprep.subr.mxu0 0.0
      %1254 = vmatpush1.msra.mxu0 0.0
      %1255 = vmatprep.mubr.f32.mxu0 0.0
      %1256 = vmatmul.mubr.f32.gmra.mrb[0].mxu0 %v1127
      %v1257 = vpop.f32.mrb[0].mxu0
      %v1258 = vadd.f32 0.0, %v1257
      %v1259 = vpop.f32.mrb[0].mxu0
      %1260 = vmatprep.mubr.f32.mxu0 0.0
      %1261 = vmatmul.mubr.f32.gmra.mrb[0].mxu0 %v1129
      %v1262 = vpop.f32.mrb[0].mxu0
      %v1263 = vadd.f32 0.0, %v1262
      %v1264 = vpop.f32.mrb[0].mxu0
      %1265 = vmatprep.mubr.f32.mxu0 0.0
      %1266 = vmatmul.mubr.f32.gmra.mrb[0].mxu0 %v1131
      %v1267 = vpop.f32.mrb[0].mxu0
      %v1268 = vadd.f32 0.0, %v1267
      %v1269 = vpop.f32.mrb[0].mxu0
      %1270 = vmatprep.mubr.f32.mxu0 0.0
      %1271 = vmatmul.mubr.f32.gmra.mrb[0].mxu0 %v1133
      %v1272 = vpop.f32.mrb[0].mxu0
      %v1273 = vadd.f32 0.0, %v1272
      %v1274 = vpop.f32.mrb[0].mxu0
      %1275 = vmatprep.mubr.f32.mxu0 0.0
      %1276 = vmatmul.mubr.f32.gmra.mrb[0].mxu0 %v1135
      %v1277 = vpop.f32.mrb[0].mxu0
      %v1278 = vadd.f32 0.0, %v1277
      %v1279 = vpop.f32.mrb[0].mxu0
      %1280 = vmatprep.mubr.f32.mxu0 0.0
      %1281 = vmatmul.mubr.f32.gmra.mrb[0].mxu0 %v1137
      %v1282 = vpop.f32.mrb[0].mxu0
      %v1283 = vadd.f32 0.0, %v1282
      %v1284 = vpop.f32.mrb[0].mxu0
      %1285 = vmatprep.mubr.f32.mxu0 0.0
      %1286 = vmatmul.mubr.f32.gmra.mrb[0].mxu0 %v1139
      %v1287 = vpop.f32.mrb[0].mxu0
      %v1288 = vadd.f32 0.0, %v1287
      %v1289 = vpop.f32.mrb[0].mxu0
      %1290 = vmatprep.mubr.f32.mxu0 0.0
      %1291 = vmatmul.mubr.f32.gmra.mrb[0].mxu0 %v1141
      %v1292 = vpop.f32.mrb[0].mxu0
      %v1293 = vadd.f32 0.0, %v1292
      %v1294 = vpop.f32.mrb[0].mxu0
      %1295 = vmatprep.mubr.f32.mxu0 0.0
      %1296 = vmatmul.mubr.f32.gmra.mrb[0].mxu0 %v1143
      %v1297 = vpop.f32.mrb[0].mxu0
      %v1298 = vadd.f32 0.0, %v1297
      %v1299 = vpop.f32.mrb[0].mxu0
      %1300 = vmatprep.mubr.f32.mxu0 0.0
      %1301 = vmatmul.mubr.f32.gmra.mrb[0].mxu0 %v1145
      %v1302 = vpop.f32.mrb[0].mxu0
      %v1303 = vadd.f32 0.0, %v1302
      %v1304 = vpop.f32.mrb[0].mxu0
      %1305 = vmatprep.mubr.f32.mxu0 0.0
      %1306 = vmatmul.mubr.f32.gmra.mrb[0].mxu0 %v1147
      %v1307 = vpop.f32.mrb[0].mxu0
      %v1308 = vadd.f32 0.0, %v1307
      %v1309 = vpop.f32.mrb[0].mxu0
      %1310 = vmatprep.mubr.f32.mxu0 0.0
      %1311 = vmatmul.mubr.f32.gmra.mrb[0].mxu0 %v1149
      %v1312 = vpop.f32.mrb[0].mxu0
      %v1313 = vadd.f32 0.0, %v1312
      %v1314 = vpop.f32.mrb[0].mxu0
      %1315 = vmatprep.mubr.f32.mxu0 0.0
      %1316 = vmatmul.mubr.f32.gmra.mrb[0].mxu0 %v1151
      %v1317 = vpop.f32.mrb[0].mxu0
      %v1318 = vadd.f32 0.0, %v1317
      %v1319 = vpop.f32.mrb[0].mxu0
      %1320 = vmatprep.mubr.f32.mxu0 0.0
      %1321 = vmatmul.mubr.f32.gmra.mrb[0].mxu0 %v1153
      %v1322 = vpop.f32.mrb[0].mxu0
      %v1323 = vadd.f32 0.0, %v1322
      %v1324 = vpop.f32.mrb[0].mxu0
      %1325 = vmatprep.mubr.f32.mxu0 0.0
      %1326 = vmatmul.mubr.f32.gmra.mrb[0].mxu0 %v1155
      %v1327 = vpop.f32.mrb[0].mxu0
      %v1328 = vadd.f32 0.0, %v1327
      %v1329 = vpop.f32.mrb[0].mxu0
      %1330 = vmatprep.mubr.f32.mxu0 0.0
      %1331 = vmatmul.mubr.f32.gmra.mrb[0].mxu0 %v1157
      %v1332 = vpop.f32.mrb[0].mxu0
      %v1333 = vadd.f32 0.0, %v1332
      %v1334 = vpop.f32.mrb[0].mxu0
      %1335 = vmatprep.mubr.f32.mxu0 0.0
      %1336 = vmatmul.mubr.f32.gmra.mrb[0].mxu0 %v1159
      %v1337 = vpop.f32.mrb[0].mxu0
      %v1338 = vadd.f32 0.0, %v1337
      %v1339 = vpop.f32.mrb[0].mxu0
      %1340 = vmatprep.mubr.f32.mxu0 0.0
      %1341 = vmatmul.mubr.f32.gmra.mrb[0].mxu0 %v1161
      %v1342 = vpop.f32.mrb[0].mxu0
      %v1343 = vadd.f32 0.0, %v1342
      %v1344 = vpop.f32.mrb[0].mxu0
      %1345 = vmatprep.mubr.f32.mxu0 0.0
      %1346 = vmatmul.mubr.f32.gmra.mrb[0].mxu0 %v1163
      %v1347 = vpop.f32.mrb[0].mxu0
      %v1348 = vadd.f32 0.0, %v1347
      %v1349 = vpop.f32.mrb[0].mxu0
      %1350 = vmatprep.mubr.f32.mxu0 0.0
      %1351 = vmatmul.mubr.f32.gmra.mrb[0].mxu0 %v1165
      %v1352 = vpop.f32.mrb[0].mxu0
      %v1353 = vadd.f32 0.0, %v1352
      %v1354 = vpop.f32.mrb[0].mxu0
      %1355 = vmatprep.mubr.f32.mxu0 0.0
      %1356 = vmatmul.mubr.f32.gmra.mrb[0].mxu0 %v1167
      %v1357 = vpop.f32.mrb[0].mxu0
      %v1358 = vadd.f32 0.0, %v1357
      %v1359 = vpop.f32.mrb[0].mxu0
      %1360 = vmatprep.mubr.f32.mxu0 0.0
      %1361 = vmatmul.mubr.f32.gmra.mrb[0].mxu0 %v1169
      %v1362 = vpop.f32.mrb[0].mxu0
      %v1363 = vadd.f32 0.0, %v1362
      %v1364 = vpop.f32.mrb[0].mxu0
      %1365 = vmatprep.mubr.f32.mxu0 0.0
      %1366 = vmatmul.mubr.f32.gmra.mrb[0].mxu0 %v1171
      %v1367 = vpop.f32.mrb[0].mxu0
      %v1368 = vadd.f32 0.0, %v1367
      %v1369 = vpop.f32.mrb[0].mxu0
      %1370 = vmatprep.mubr.f32.mxu0 0.0
      %1371 = vmatmul.mubr.f32.gmra.mrb[0].mxu0 %v1173
      %v1372 = vpop.f32.mrb[0].mxu0
      %v1373 = vadd.f32 0.0, %v1372
      %v1374 = vpop.f32.mrb[0].mxu0
      %1375 = vmatprep.mubr.f32.mxu0 0.0
      %1376 = vmatmul.mubr.f32.gmra.mrb[0].mxu0 %v1175
      %v1377 = vpop.f32.mrb[0].mxu0
      %v1378 = vadd.f32 0.0, %v1377
      %v1379 = vpop.f32.mrb[0].mxu0
      %1380 = vmatprep.mubr.f32.mxu0 0.0
      %1381 = vmatmul.mubr.f32.gmra.mrb[0].mxu0 %v1177
      %v1382 = vpop.f32.mrb[0].mxu0
      %v1383 = vadd.f32 0.0, %v1382
      %v1384 = vpop.f32.mrb[0].mxu0
      %1385 = vmatprep.mubr.f32.mxu0 0.0
      %1386 = vmatmul.mubr.f32.gmra.mrb[0].mxu0 %v1179
      %v1387 = vpop.f32.mrb[0].mxu0
      %v1388 = vadd.f32 0.0, %v1387
      %v1389 = vpop.f32.mrb[0].mxu0
      %1390 = vmatprep.mubr.f32.mxu0 0.0
      %1391 = vmatmul.mubr.f32.gmra.mrb[0].mxu0 %v1181
      %v1392 = vpop.f32.mrb[0].mxu0
      %v1393 = vadd.f32 0.0, %v1392
      %v1394 = vpop.f32.mrb[0].mxu0
      %1395 = vmatprep.mubr.f32.mxu0 0.0
      %1396 = vmatmul.mubr.f32.gmra.mrb[0].mxu0 %v1183
      %v1397 = vpop.f32.mrb[0].mxu0
      %v1398 = vadd.f32 0.0, %v1397
      %v1399 = vpop.f32.mrb[0].mxu0
      %1400 = vmatprep.mubr.f32.mxu0 0.0
      %1401 = vmatmul.mubr.f32.gmra.mrb[0].mxu0 %v1185
      %v1402 = vpop.f32.mrb[0].mxu0
      %v1403 = vadd.f32 0.0, %v1402
      %v1404 = vpop.f32.mrb[0].mxu0
      %1405 = vmatprep.mubr.f32.mxu0 0.0
      %1406 = vmatmul.mubr.f32.gmra.mrb[0].mxu0 %v1187
      %v1407 = vpop.f32.mrb[0].mxu0
      %v1408 = vadd.f32 0.0, %v1407
      %v1409 = vpop.f32.mrb[0].mxu0
      %1410 = vmatprep.mubr.f32.mxu0 0.0
      %1411 = vmatmul.mubr.f32.gmra.mrb[0].mxu0 %v1189
      %v1412 = vpop.f32.mrb[0].mxu0
      %v1413 = vadd.f32 0.0, %v1412
      %v1414 = vpop.f32.mrb[0].mxu0
      %1415 = vdwg.mxu0
      %v1416 = vadd.f32 %v886, %v1258
      %v1417 = vadd.f32 %v891, %v1263
      %v1418 = vadd.f32 %v896, %v1268
      %v1419 = vadd.f32 %v901, %v1273
      %v1420 = vadd.f32 %v906, %v1278
      %v1421 = vadd.f32 %v911, %v1283
      %v1422 = vadd.f32 %v916, %v1288
      %v1423 = vadd.f32 %v921, %v1293
      %v1424 = vadd.f32 %v926, %v1298
      %v1425 = vadd.f32 %v931, %v1303
      %v1426 = vadd.f32 %v936, %v1308
      %v1427 = vadd.f32 %v941, %v1313
      %v1428 = vadd.f32 %v946, %v1318
      %v1429 = vadd.f32 %v951, %v1323
      %v1430 = vadd.f32 %v956, %v1328
      %v1431 = vadd.f32 %v961, %v1333
      %v1432 = vadd.f32 %v966, %v1338
      %v1433 = vadd.f32 %v971, %v1343
      %v1434 = vadd.f32 %v976, %v1348
      %v1435 = vadd.f32 %v981, %v1353
      %v1436 = vadd.f32 %v986, %v1358
      %v1437 = vadd.f32 %v991, %v1363
      %v1438 = vadd.f32 %v996, %v1368
      %v1439 = vadd.f32 %v1001, %v1373
      %v1440 = vadd.f32 %v1006, %v1378
      %v1441 = vadd.f32 %v1011, %v1383
      %v1442 = vadd.f32 %v1016, %v1388
      %v1443 = vadd.f32 %v1021, %v1393
      %v1444 = vadd.f32 %v1026, %v1398
      %v1445 = vadd.f32 %v1031, %v1403
      %v1446 = vadd.f32 %v1036, %v1408
      %v1447 = vadd.f32 %v1041, %v1413
      %s1448 = scalar_lea.vmem %s1, 24
      %v1449 = vld [vmem:[%s1448] sm:$0xff]
      %v1451 = vsel %vm465, %v327, 0
      %v1454 = vsel %vm465, %v328, 0
      %1456 = vmatprep.subr.mxu0 0.0
      %1457 = vmatpush1.msra.mxu0 %v1449
      %1458 = vmatprep.subr.mxu0 0.0
      %1459 = vmatpush1.msra.mxu0 0.0
      %1460 = vmatprep.subr.mxu0 0.0
      %1461 = vmatpush1.msra.mxu0 0.0
      %1462 = vmatprep.subr.mxu0 0.0
      %1463 = vmatpush1.msra.mxu0 0.0
      %1464 = vmatprep.subr.mxu0 0.0
      %1465 = vmatpush1.msra.mxu0 0.0
      %1466 = vmatprep.subr.mxu0 0.0
      %1467 = vmatpush1.msra.mxu0 0.0
      %1468 = vmatprep.subr.mxu0 0.0
      %1469 = vmatpush1.msra.mxu0 0.0
      %1470 = vmatprep.subr.mxu0 0.0
      %1471 = vmatpush1.msra.mxu0 0.0
      %1472 = vmatprep.subr.mxu0 0.0
      %1473 = vmatpush1.msra.mxu0 0.0
      %1474 = vmatprep.subr.mxu0 0.0
      %1475 = vmatpush1.msra.mxu0 0.0
      %1476 = vmatprep.subr.mxu0 0.0
      %1477 = vmatpush1.msra.mxu0 0.0
      %1478 = vmatprep.subr.mxu0 0.0
      %1479 = vmatpush1.msra.mxu0 0.0
      %1480 = vmatprep.subr.mxu0 0.0
      %1481 = vmatpush1.msra.mxu0 0.0
      %1482 = vmatprep.subr.mxu0 0.0
      %1483 = vmatpush1.msra.mxu0 0.0
      %1484 = vmatprep.subr.mxu0 0.0
      %1485 = vmatpush1.msra.mxu0 0.0
      %1486 = vmatprep.subr.mxu0 0.0
      %1487 = vmatpush1.msra.mxu0 0.0
      %1488 = vmatprep.subr.mxu0 0.0
      %1489 = vmatpush1.msra.mxu0 0.0
      %1490 = vmatprep.subr.mxu0 0.0
      %1491 = vmatpush1.msra.mxu0 0.0
      %1492 = vmatprep.subr.mxu0 0.0
      %1493 = vmatpush1.msra.mxu0 0.0
      %1494 = vmatprep.subr.mxu0 0.0
      %1495 = vmatpush1.msra.mxu0 0.0
      %1496 = vmatprep.subr.mxu0 0.0
      %1497 = vmatpush1.msra.mxu0 0.0
      %1498 = vmatprep.subr.mxu0 0.0
      %1499 = vmatpush1.msra.mxu0 0.0
      %1500 = vmatprep.subr.mxu0 0.0
      %1501 = vmatpush1.msra.mxu0 0.0
      %1502 = vmatprep.subr.mxu0 0.0
      %1503 = vmatpush1.msra.mxu0 0.0
      %1504 = vmatprep.subr.mxu0 0.0
      %1505 = vmatpush1.msra.mxu0 0.0
      %1506 = vmatprep.subr.mxu0 0.0
      %1507 = vmatpush1.msra.mxu0 0.0
      %1508 = vmatprep.subr.mxu0 0.0
      %1509 = vmatpush1.msra.mxu0 0.0
      %1510 = vmatprep.subr.mxu0 0.0
      %1511 = vmatpush1.msra.mxu0 0.0
      %1512 = vmatprep.subr.mxu0 0.0
      %1513 = vmatpush1.msra.mxu0 0.0
      %1514 = vmatprep.subr.mxu0 0.0
      %1515 = vmatpush1.msra.mxu0 0.0
      %1516 = vmatprep.subr.mxu0 0.0
      %1517 = vmatpush1.msra.mxu0 0.0
      %1518 = vmatprep.subr.mxu0 0.0
      %1519 = vmatpush1.msra.mxu0 0.0
      %1520 = vmatprep.mubr.f32.mxu0 0.0
      %1521 = vmatmul.mubr.f32.gmra.mrb[0].mxu0 %v759
      %v1522 = vpop.f32.mrb[0].mxu0
      %v1523 = vadd.f32 0.0, %v1522
      %v1524 = vpop.f32.mrb[0].mxu0
      %1525 = vmatprep.mubr.f32.mxu0 0.0
      %1526 = vmatmul.mubr.f32.gmra.mrb[0].mxu0 %v761
      %v1527 = vpop.f32.mrb[0].mxu0
      %v1528 = vadd.f32 0.0, %v1527
      %v1529 = vpop.f32.mrb[0].mxu0
      %1530 = vmatprep.mubr.f32.mxu0 0.0
      %1531 = vmatmul.mubr.f32.gmra.mrb[0].mxu0 %v763
      %v1532 = vpop.f32.mrb[0].mxu0
      %v1533 = vadd.f32 0.0, %v1532
      %v1534 = vpop.f32.mrb[0].mxu0
      %1535 = vmatprep.mubr.f32.mxu0 0.0
      %1536 = vmatmul.mubr.f32.gmra.mrb[0].mxu0 %v765
      %v1537 = vpop.f32.mrb[0].mxu0
      %v1538 = vadd.f32 0.0, %v1537
      %v1539 = vpop.f32.mrb[0].mxu0
      %1540 = vmatprep.mubr.f32.mxu0 0.0
      %1541 = vmatmul.mubr.f32.gmra.mrb[0].mxu0 %v767
      %v1542 = vpop.f32.mrb[0].mxu0
      %v1543 = vadd.f32 0.0, %v1542
      %v1544 = vpop.f32.mrb[0].mxu0
      %1545 = vmatprep.mubr.f32.mxu0 0.0
      %1546 = vmatmul.mubr.f32.gmra.mrb[0].mxu0 %v769
      %v1547 = vpop.f32.mrb[0].mxu0
      %v1548 = vadd.f32 0.0, %v1547
      %v1549 = vpop.f32.mrb[0].mxu0
      %1550 = vmatprep.mubr.f32.mxu0 0.0
      %1551 = vmatmul.mubr.f32.gmra.mrb[0].mxu0 %v771
      %v1552 = vpop.f32.mrb[0].mxu0
      %v1553 = vadd.f32 0.0, %v1552
      %v1554 = vpop.f32.mrb[0].mxu0
      %1555 = vmatprep.mubr.f32.mxu0 0.0
      %1556 = vmatmul.mubr.f32.gmra.mrb[0].mxu0 %v773
      %v1557 = vpop.f32.mrb[0].mxu0
      %v1558 = vadd.f32 0.0, %v1557
      %v1559 = vpop.f32.mrb[0].mxu0
      %1560 = vmatprep.mubr.f32.mxu0 0.0
      %1561 = vmatmul.mubr.f32.gmra.mrb[0].mxu0 %v775
      %v1562 = vpop.f32.mrb[0].mxu0
      %v1563 = vadd.f32 0.0, %v1562
      %v1564 = vpop.f32.mrb[0].mxu0
      %1565 = vmatprep.mubr.f32.mxu0 0.0
      %1566 = vmatmul.mubr.f32.gmra.mrb[0].mxu0 %v777
      %v1567 = vpop.f32.mrb[0].mxu0
      %v1568 = vadd.f32 0.0, %v1567
      %v1569 = vpop.f32.mrb[0].mxu0
      %1570 = vmatprep.mubr.f32.mxu0 0.0
      %1571 = vmatmul.mubr.f32.gmra.mrb[0].mxu0 %v779
      %v1572 = vpop.f32.mrb[0].mxu0
      %v1573 = vadd.f32 0.0, %v1572
      %v1574 = vpop.f32.mrb[0].mxu0
      %1575 = vmatprep.mubr.f32.mxu0 0.0
      %1576 = vmatmul.mubr.f32.gmra.mrb[0].mxu0 %v781
      %v1577 = vpop.f32.mrb[0].mxu0
      %v1578 = vadd.f32 0.0, %v1577
      %v1579 = vpop.f32.mrb[0].mxu0
      %1580 = vmatprep.mubr.f32.mxu0 0.0
      %1581 = vmatmul.mubr.f32.gmra.mrb[0].mxu0 %v783
      %v1582 = vpop.f32.mrb[0].mxu0
      %v1583 = vadd.f32 0.0, %v1582
      %v1584 = vpop.f32.mrb[0].mxu0
      %1585 = vmatprep.mubr.f32.mxu0 0.0
      %1586 = vmatmul.mubr.f32.gmra.mrb[0].mxu0 %v785
      %v1587 = vpop.f32.mrb[0].mxu0
      %v1588 = vadd.f32 0.0, %v1587
      %v1589 = vpop.f32.mrb[0].mxu0
      %1590 = vmatprep.mubr.f32.mxu0 0.0
      %1591 = vmatmul.mubr.f32.gmra.mrb[0].mxu0 %v787
      %v1592 = vpop.f32.mrb[0].mxu0
      %v1593 = vadd.f32 0.0, %v1592
      %v1594 = vpop.f32.mrb[0].mxu0
      %1595 = vmatprep.mubr.f32.mxu0 0.0
      %1596 = vmatmul.mubr.f32.gmra.mrb[0].mxu0 %v789
      %v1597 = vpop.f32.mrb[0].mxu0
      %v1598 = vadd.f32 0.0, %v1597
      %v1599 = vpop.f32.mrb[0].mxu0
      %1600 = vmatprep.mubr.f32.mxu0 0.0
      %1601 = vmatmul.mubr.f32.gmra.mrb[0].mxu0 %v791
      %v1602 = vpop.f32.mrb[0].mxu0
      %v1603 = vadd.f32 0.0, %v1602
      %v1604 = vpop.f32.mrb[0].mxu0
      %1605 = vmatprep.mubr.f32.mxu0 0.0
      %1606 = vmatmul.mubr.f32.gmra.mrb[0].mxu0 %v793
      %v1607 = vpop.f32.mrb[0].mxu0
      %v1608 = vadd.f32 0.0, %v1607
      %v1609 = vpop.f32.mrb[0].mxu0
      %1610 = vmatprep.mubr.f32.mxu0 0.0
      %1611 = vmatmul.mubr.f32.gmra.mrb[0].mxu0 %v795
      %v1612 = vpop.f32.mrb[0].mxu0
      %v1613 = vadd.f32 0.0, %v1612
      %v1614 = vpop.f32.mrb[0].mxu0
      %1615 = vmatprep.mubr.f32.mxu0 0.0
      %1616 = vmatmul.mubr.f32.gmra.mrb[0].mxu0 %v797
      %v1617 = vpop.f32.mrb[0].mxu0
      %v1618 = vadd.f32 0.0, %v1617
      %v1619 = vpop.f32.mrb[0].mxu0
      %1620 = vmatprep.mubr.f32.mxu0 0.0
      %1621 = vmatmul.mubr.f32.gmra.mrb[0].mxu0 %v799
      %v1622 = vpop.f32.mrb[0].mxu0
      %v1623 = vadd.f32 0.0, %v1622
      %v1624 = vpop.f32.mrb[0].mxu0
      %1625 = vmatprep.mubr.f32.mxu0 0.0
      %1626 = vmatmul.mubr.f32.gmra.mrb[0].mxu0 %v801
      %v1627 = vpop.f32.mrb[0].mxu0
      %v1628 = vadd.f32 0.0, %v1627
      %v1629 = vpop.f32.mrb[0].mxu0
      %1630 = vmatprep.mubr.f32.mxu0 0.0
      %1631 = vmatmul.mubr.f32.gmra.mrb[0].mxu0 %v803
      %v1632 = vpop.f32.mrb[0].mxu0
      %v1633 = vadd.f32 0.0, %v1632
      %v1634 = vpop.f32.mrb[0].mxu0
      %1635 = vmatprep.mubr.f32.mxu0 0.0
      %1636 = vmatmul.mubr.f32.gmra.mrb[0].mxu0 %v805
      %v1637 = vpop.f32.mrb[0].mxu0
      %v1638 = vadd.f32 0.0, %v1637
      %v1639 = vpop.f32.mrb[0].mxu0
      %1640 = vmatprep.mubr.f32.mxu0 0.0
      %1641 = vmatmul.mubr.f32.gmra.mrb[0].mxu0 %v807
      %v1642 = vpop.f32.mrb[0].mxu0
      %v1643 = vadd.f32 0.0, %v1642
      %v1644 = vpop.f32.mrb[0].mxu0
      %1645 = vmatprep.mubr.f32.mxu0 0.0
      %1646 = vmatmul.mubr.f32.gmra.mrb[0].mxu0 %v809
      %v1647 = vpop.f32.mrb[0].mxu0
      %v1648 = vadd.f32 0.0, %v1647
      %v1649 = vpop.f32.mrb[0].mxu0
      %1650 = vmatprep.mubr.f32.mxu0 0.0
      %1651 = vmatmul.mubr.f32.gmra.mrb[0].mxu0 %v811
      %v1652 = vpop.f32.mrb[0].mxu0
      %v1653 = vadd.f32 0.0, %v1652
      %v1654 = vpop.f32.mrb[0].mxu0
      %1655 = vmatprep.mubr.f32.mxu0 0.0
      %1656 = vmatmul.mubr.f32.gmra.mrb[0].mxu0 %v813
      %v1657 = vpop.f32.mrb[0].mxu0
      %v1658 = vadd.f32 0.0, %v1657
      %v1659 = vpop.f32.mrb[0].mxu0
      %1660 = vmatprep.mubr.f32.mxu0 0.0
      %1661 = vmatmul.mubr.f32.gmra.mrb[0].mxu0 %v815
      %v1662 = vpop.f32.mrb[0].mxu0
      %v1663 = vadd.f32 0.0, %v1662
      %v1664 = vpop.f32.mrb[0].mxu0
      %1665 = vmatprep.mubr.f32.mxu0 0.0
      %1666 = vmatmul.mubr.f32.gmra.mrb[0].mxu0 %v817
      %v1667 = vpop.f32.mrb[0].mxu0
      %v1668 = vadd.f32 0.0, %v1667
      %v1669 = vpop.f32.mrb[0].mxu0
      %1670 = vmatprep.mubr.f32.mxu0 0.0
      %1671 = vmatmul.mubr.f32.gmra.mrb[0].mxu0 %v1451
      %v1672 = vpop.f32.mrb[0].mxu0
      %v1673 = vadd.f32 0.0, %v1672
      %v1674 = vpop.f32.mrb[0].mxu0
      %1675 = vmatprep.mubr.f32.mxu0 0.0
      %1676 = vmatmul.mubr.f32.gmra.mrb[0].mxu0 %v1454
      %v1677 = vpop.f32.mrb[0].mxu0
      %v1678 = vadd.f32 0.0, %v1677
      %v1679 = vpop.f32.mrb[0].mxu0
      %1680 = vdwg.mxu0
      %v1681 = vadd.f32 %v1416, %v1523
      %v1682 = vadd.f32 %v1417, %v1528
      %v1683 = vadd.f32 %v1418, %v1533
      %v1684 = vadd.f32 %v1419, %v1538
      %v1685 = vadd.f32 %v1420, %v1543
      %v1686 = vadd.f32 %v1421, %v1548
      %v1687 = vadd.f32 %v1422, %v1553
      %v1688 = vadd.f32 %v1423, %v1558
      %v1689 = vadd.f32 %v1424, %v1563
      %v1690 = vadd.f32 %v1425, %v1568
      %v1691 = vadd.f32 %v1426, %v1573
      %v1692 = vadd.f32 %v1427, %v1578
      %v1693 = vadd.f32 %v1428, %v1583
      %v1694 = vadd.f32 %v1429, %v1588
      %v1695 = vadd.f32 %v1430, %v1593
      %v1696 = vadd.f32 %v1431, %v1598
      %v1697 = vadd.f32 %v1432, %v1603
      %v1698 = vadd.f32 %v1433, %v1608
      %v1699 = vadd.f32 %v1434, %v1613
      %v1700 = vadd.f32 %v1435, %v1618
      %v1701 = vadd.f32 %v1436, %v1623
      %v1702 = vadd.f32 %v1437, %v1628
      %v1703 = vadd.f32 %v1438, %v1633
      %v1704 = vadd.f32 %v1439, %v1638
      %v1705 = vadd.f32 %v1440, %v1643
      %v1706 = vadd.f32 %v1441, %v1648
      %v1707 = vadd.f32 %v1442, %v1653
      %v1708 = vadd.f32 %v1443, %v1658
      %v1709 = vadd.f32 %v1444, %v1663
      %v1710 = vadd.f32 %v1445, %v1668
      %v1711 = vadd.f32 %v1446, %v1673
      %v1712 = vadd.f32 %v1447, %v1678
      %v1714 = vrot.slane %v327, 1
      %v1715 = vrot.slane %v328, 1
      %v1716 = vsel %vm382, %v1714, %v1715
      %v1717 = vrot.slane %v329, 1
      %v1718 = vsel %vm382, %v1715, %v1717
      %s1719 = scalar_lea.vmem %s1, 32
      %v1720 = vld [vmem:[%s1719] sm:$0xff]
      %v1721 = vsel %vm465, %v1716, 0
      %v1723 = vsel %vm465, %v1718, 0
      %1725 = vmatprep.subr.mxu0 0.0
      %1726 = vmatpush1.msra.mxu0 %v1720
      %1727 = vmatprep.subr.mxu0 0.0
      %1728 = vmatpush1.msra.mxu0 0.0
      %1729 = vmatprep.subr.mxu0 0.0
      %1730 = vmatpush1.msra.mxu0 0.0
      %1731 = vmatprep.subr.mxu0 0.0
      %1732 = vmatpush1.msra.mxu0 0.0
      %1733 = vmatprep.subr.mxu0 0.0
      %1734 = vmatpush1.msra.mxu0 0.0
      %1735 = vmatprep.subr.mxu0 0.0
      %1736 = vmatpush1.msra.mxu0 0.0
      %1737 = vmatprep.subr.mxu0 0.0
      %1738 = vmatpush1.msra.mxu0 0.0
      %1739 = vmatprep.subr.mxu0 0.0
      %1740 = vmatpush1.msra.mxu0 0.0
      %1741 = vmatprep.subr.mxu0 0.0
      %1742 = vmatpush1.msra.mxu0 0.0
      %1743 = vmatprep.subr.mxu0 0.0
      %1744 = vmatpush1.msra.mxu0 0.0
      %1745 = vmatprep.subr.mxu0 0.0
      %1746 = vmatpush1.msra.mxu0 0.0
      %1747 = vmatprep.subr.mxu0 0.0
      %1748 = vmatpush1.msra.mxu0 0.0
      %1749 = vmatprep.subr.mxu0 0.0
      %1750 = vmatpush1.msra.mxu0 0.0
      %1751 = vmatprep.subr.mxu0 0.0
      %1752 = vmatpush1.msra.mxu0 0.0
      %1753 = vmatprep.subr.mxu0 0.0
      %1754 = vmatpush1.msra.mxu0 0.0
      %1755 = vmatprep.subr.mxu0 0.0
      %1756 = vmatpush1.msra.mxu0 0.0
      %1757 = vmatprep.subr.mxu0 0.0
      %1758 = vmatpush1.msra.mxu0 0.0
      %1759 = vmatprep.subr.mxu0 0.0
      %1760 = vmatpush1.msra.mxu0 0.0
      %1761 = vmatprep.subr.mxu0 0.0
      %1762 = vmatpush1.msra.mxu0 0.0
      %1763 = vmatprep.subr.mxu0 0.0
      %1764 = vmatpush1.msra.mxu0 0.0
      %1765 = vmatprep.subr.mxu0 0.0
      %1766 = vmatpush1.msra.mxu0 0.0
      %1767 = vmatprep.subr.mxu0 0.0
      %1768 = vmatpush1.msra.mxu0 0.0
      %1769 = vmatprep.subr.mxu0 0.0
      %1770 = vmatpush1.msra.mxu0 0.0
      %1771 = vmatprep.subr.mxu0 0.0
      %1772 = vmatpush1.msra.mxu0 0.0
      %1773 = vmatprep.subr.mxu0 0.0
      %1774 = vmatpush1.msra.mxu0 0.0
      %1775 = vmatprep.subr.mxu0 0.0
      %1776 = vmatpush1.msra.mxu0 0.0
      %1777 = vmatprep.subr.mxu0 0.0
      %1778 = vmatpush1.msra.mxu0 0.0
      %1779 = vmatprep.subr.mxu0 0.0
      %1780 = vmatpush1.msra.mxu0 0.0
      %1781 = vmatprep.subr.mxu0 0.0
      %1782 = vmatpush1.msra.mxu0 0.0
      %1783 = vmatprep.subr.mxu0 0.0
      %1784 = vmatpush1.msra.mxu0 0.0
      %1785 = vmatprep.subr.mxu0 0.0
      %1786 = vmatpush1.msra.mxu0 0.0
      %1787 = vmatprep.subr.mxu0 0.0
      %1788 = vmatpush1.msra.mxu0 0.0
      %1789 = vmatprep.mubr.f32.mxu0 0.0
      %1790 = vmatmul.mubr.f32.gmra.mrb[0].mxu0 %v470
      %v1791 = vpop.f32.mrb[0].mxu0
      %v1792 = vadd.f32 0.0, %v1791
      %v1793 = vpop.f32.mrb[0].mxu0
      %1794 = vmatprep.mubr.f32.mxu0 0.0
      %1795 = vmatmul.mubr.f32.gmra.mrb[0].mxu0 %v472
      %v1796 = vpop.f32.mrb[0].mxu0
      %v1797 = vadd.f32 0.0, %v1796
      %v1798 = vpop.f32.mrb[0].mxu0
      %1799 = vmatprep.mubr.f32.mxu0 0.0
      %1800 = vmatmul.mubr.f32.gmra.mrb[0].mxu0 %v474
      %v1801 = vpop.f32.mrb[0].mxu0
      %v1802 = vadd.f32 0.0, %v1801
      %v1803 = vpop.f32.mrb[0].mxu0
      %1804 = vmatprep.mubr.f32.mxu0 0.0
      %1805 = vmatmul.mubr.f32.gmra.mrb[0].mxu0 %v476
      %v1806 = vpop.f32.mrb[0].mxu0
      %v1807 = vadd.f32 0.0, %v1806
      %v1808 = vpop.f32.mrb[0].mxu0
      %1809 = vmatprep.mubr.f32.mxu0 0.0
      %1810 = vmatmul.mubr.f32.gmra.mrb[0].mxu0 %v478
      %v1811 = vpop.f32.mrb[0].mxu0
      %v1812 = vadd.f32 0.0, %v1811
      %v1813 = vpop.f32.mrb[0].mxu0
      %1814 = vmatprep.mubr.f32.mxu0 0.0
      %1815 = vmatmul.mubr.f32.gmra.mrb[0].mxu0 %v480
      %v1816 = vpop.f32.mrb[0].mxu0
      %v1817 = vadd.f32 0.0, %v1816
      %v1818 = vpop.f32.mrb[0].mxu0
      %1819 = vmatprep.mubr.f32.mxu0 0.0
      %1820 = vmatmul.mubr.f32.gmra.mrb[0].mxu0 %v482
      %v1821 = vpop.f32.mrb[0].mxu0
      %v1822 = vadd.f32 0.0, %v1821
      %v1823 = vpop.f32.mrb[0].mxu0
      %1824 = vmatprep.mubr.f32.mxu0 0.0
      %1825 = vmatmul.mubr.f32.gmra.mrb[0].mxu0 %v484
      %v1826 = vpop.f32.mrb[0].mxu0
      %v1827 = vadd.f32 0.0, %v1826
      %v1828 = vpop.f32.mrb[0].mxu0
      %1829 = vmatprep.mubr.f32.mxu0 0.0
      %1830 = vmatmul.mubr.f32.gmra.mrb[0].mxu0 %v486
      %v1831 = vpop.f32.mrb[0].mxu0
      %v1832 = vadd.f32 0.0, %v1831
      %v1833 = vpop.f32.mrb[0].mxu0
      %1834 = vmatprep.mubr.f32.mxu0 0.0
      %1835 = vmatmul.mubr.f32.gmra.mrb[0].mxu0 %v488
      %v1836 = vpop.f32.mrb[0].mxu0
      %v1837 = vadd.f32 0.0, %v1836
      %v1838 = vpop.f32.mrb[0].mxu0
      %1839 = vmatprep.mubr.f32.mxu0 0.0
      %1840 = vmatmul.mubr.f32.gmra.mrb[0].mxu0 %v490
      %v1841 = vpop.f32.mrb[0].mxu0
      %v1842 = vadd.f32 0.0, %v1841
      %v1843 = vpop.f32.mrb[0].mxu0
      %1844 = vmatprep.mubr.f32.mxu0 0.0
      %1845 = vmatmul.mubr.f32.gmra.mrb[0].mxu0 %v492
      %v1846 = vpop.f32.mrb[0].mxu0
      %v1847 = vadd.f32 0.0, %v1846
      %v1848 = vpop.f32.mrb[0].mxu0
      %1849 = vmatprep.mubr.f32.mxu0 0.0
      %1850 = vmatmul.mubr.f32.gmra.mrb[0].mxu0 %v494
      %v1851 = vpop.f32.mrb[0].mxu0
      %v1852 = vadd.f32 0.0, %v1851
      %v1853 = vpop.f32.mrb[0].mxu0
      %1854 = vmatprep.mubr.f32.mxu0 0.0
      %1855 = vmatmul.mubr.f32.gmra.mrb[0].mxu0 %v496
      %v1856 = vpop.f32.mrb[0].mxu0
      %v1857 = vadd.f32 0.0, %v1856
      %v1858 = vpop.f32.mrb[0].mxu0
      %1859 = vmatprep.mubr.f32.mxu0 0.0
      %1860 = vmatmul.mubr.f32.gmra.mrb[0].mxu0 %v498
      %v1861 = vpop.f32.mrb[0].mxu0
      %v1862 = vadd.f32 0.0, %v1861
      %v1863 = vpop.f32.mrb[0].mxu0
      %1864 = vmatprep.mubr.f32.mxu0 0.0
      %1865 = vmatmul.mubr.f32.gmra.mrb[0].mxu0 %v500
      %v1866 = vpop.f32.mrb[0].mxu0
      %v1867 = vadd.f32 0.0, %v1866
      %v1868 = vpop.f32.mrb[0].mxu0
      %1869 = vmatprep.mubr.f32.mxu0 0.0
      %1870 = vmatmul.mubr.f32.gmra.mrb[0].mxu0 %v502
      %v1871 = vpop.f32.mrb[0].mxu0
      %v1872 = vadd.f32 0.0, %v1871
      %v1873 = vpop.f32.mrb[0].mxu0
      %1874 = vmatprep.mubr.f32.mxu0 0.0
      %1875 = vmatmul.mubr.f32.gmra.mrb[0].mxu0 %v504
      %v1876 = vpop.f32.mrb[0].mxu0
      %v1877 = vadd.f32 0.0, %v1876
      %v1878 = vpop.f32.mrb[0].mxu0
      %1879 = vmatprep.mubr.f32.mxu0 0.0
      %1880 = vmatmul.mubr.f32.gmra.mrb[0].mxu0 %v506
      %v1881 = vpop.f32.mrb[0].mxu0
      %v1882 = vadd.f32 0.0, %v1881
      %v1883 = vpop.f32.mrb[0].mxu0
      %1884 = vmatprep.mubr.f32.mxu0 0.0
      %1885 = vmatmul.mubr.f32.gmra.mrb[0].mxu0 %v508
      %v1886 = vpop.f32.mrb[0].mxu0
      %v1887 = vadd.f32 0.0, %v1886
      %v1888 = vpop.f32.mrb[0].mxu0
      %1889 = vmatprep.mubr.f32.mxu0 0.0
      %1890 = vmatmul.mubr.f32.gmra.mrb[0].mxu0 %v510
      %v1891 = vpop.f32.mrb[0].mxu0
      %v1892 = vadd.f32 0.0, %v1891
      %v1893 = vpop.f32.mrb[0].mxu0
      %1894 = vmatprep.mubr.f32.mxu0 0.0
      %1895 = vmatmul.mubr.f32.gmra.mrb[0].mxu0 %v512
      %v1896 = vpop.f32.mrb[0].mxu0
      %v1897 = vadd.f32 0.0, %v1896
      %v1898 = vpop.f32.mrb[0].mxu0
      %1899 = vmatprep.mubr.f32.mxu0 0.0
      %1900 = vmatmul.mubr.f32.gmra.mrb[0].mxu0 %v514
      %v1901 = vpop.f32.mrb[0].mxu0
      %v1902 = vadd.f32 0.0, %v1901
      %v1903 = vpop.f32.mrb[0].mxu0
      %1904 = vmatprep.mubr.f32.mxu0 0.0
      %1905 = vmatmul.mubr.f32.gmra.mrb[0].mxu0 %v516
      %v1906 = vpop.f32.mrb[0].mxu0
      %v1907 = vadd.f32 0.0, %v1906
      %v1908 = vpop.f32.mrb[0].mxu0
      %1909 = vmatprep.mubr.f32.mxu0 0.0
      %1910 = vmatmul.mubr.f32.gmra.mrb[0].mxu0 %v518
      %v1911 = vpop.f32.mrb[0].mxu0
      %v1912 = vadd.f32 0.0, %v1911
      %v1913 = vpop.f32.mrb[0].mxu0
      %1914 = vmatprep.mubr.f32.mxu0 0.0
      %1915 = vmatmul.mubr.f32.gmra.mrb[0].mxu0 %v520
      %v1916 = vpop.f32.mrb[0].mxu0
      %v1917 = vadd.f32 0.0, %v1916
      %v1918 = vpop.f32.mrb[0].mxu0
      %1919 = vmatprep.mubr.f32.mxu0 0.0
      %1920 = vmatmul.mubr.f32.gmra.mrb[0].mxu0 %v522
      %v1921 = vpop.f32.mrb[0].mxu0
      %v1922 = vadd.f32 0.0, %v1921
      %v1923 = vpop.f32.mrb[0].mxu0
      %1924 = vmatprep.mubr.f32.mxu0 0.0
      %1925 = vmatmul.mubr.f32.gmra.mrb[0].mxu0 %v524
      %v1926 = vpop.f32.mrb[0].mxu0
      %v1927 = vadd.f32 0.0, %v1926
      %v1928 = vpop.f32.mrb[0].mxu0
      %1929 = vmatprep.mubr.f32.mxu0 0.0
      %1930 = vmatmul.mubr.f32.gmra.mrb[0].mxu0 %v526
      %v1931 = vpop.f32.mrb[0].mxu0
      %v1932 = vadd.f32 0.0, %v1931
      %v1933 = vpop.f32.mrb[0].mxu0
      %1934 = vmatprep.mubr.f32.mxu0 0.0
      %1935 = vmatmul.mubr.f32.gmra.mrb[0].mxu0 %v528
      %v1936 = vpop.f32.mrb[0].mxu0
      %v1937 = vadd.f32 0.0, %v1936
      %v1938 = vpop.f32.mrb[0].mxu0
      %1939 = vmatprep.mubr.f32.mxu0 0.0
      %1940 = vmatmul.mubr.f32.gmra.mrb[0].mxu0 %v1721
      %v1941 = vpop.f32.mrb[0].mxu0
      %v1942 = vadd.f32 0.0, %v1941
      %v1943 = vpop.f32.mrb[0].mxu0
      %1944 = vmatprep.mubr.f32.mxu0 0.0
      %1945 = vmatmul.mubr.f32.gmra.mrb[0].mxu0 %v1723
      %v1946 = vpop.f32.mrb[0].mxu0
      %v1947 = vadd.f32 0.0, %v1946
      %v1948 = vpop.f32.mrb[0].mxu0
      %1949 = vdwg.mxu0
      %v1950 = vadd.f32 %v1681, %v1792
      %v1951 = vadd.f32 %v1682, %v1797
      %v1952 = vadd.f32 %v1683, %v1802
      %v1953 = vadd.f32 %v1684, %v1807
      %v1954 = vadd.f32 %v1685, %v1812
      %v1955 = vadd.f32 %v1686, %v1817
      %v1956 = vadd.f32 %v1687, %v1822
      %v1957 = vadd.f32 %v1688, %v1827
      %v1958 = vadd.f32 %v1689, %v1832
      %v1959 = vadd.f32 %v1690, %v1837
      %v1960 = vadd.f32 %v1691, %v1842
      %v1961 = vadd.f32 %v1692, %v1847
      %v1962 = vadd.f32 %v1693, %v1852
      %v1963 = vadd.f32 %v1694, %v1857
      %v1964 = vadd.f32 %v1695, %v1862
      %v1965 = vadd.f32 %v1696, %v1867
      %v1966 = vadd.f32 %v1697, %v1872
      %v1967 = vadd.f32 %v1698, %v1877
      %v1968 = vadd.f32 %v1699, %v1882
      %v1969 = vadd.f32 %v1700, %v1887
      %v1970 = vadd.f32 %v1701, %v1892
      %v1971 = vadd.f32 %v1702, %v1897
      %v1972 = vadd.f32 %v1703, %v1902
      %v1973 = vadd.f32 %v1704, %v1907
      %v1974 = vadd.f32 %v1705, %v1912
      %v1975 = vadd.f32 %v1706, %v1917
      %v1976 = vadd.f32 %v1707, %v1922
      %v1977 = vadd.f32 %v1708, %v1927
      %v1978 = vadd.f32 %v1709, %v1932
      %v1979 = vadd.f32 %v1710, %v1937
      %v1980 = vadd.f32 %v1711, %v1942
      %v1981 = vadd.f32 %v1712, %v1947
      %v1982 = vrot.slane %v327, 2
      %v1983 = vrot.slane %v328, 2
      %v1984 = vsel %vm1044, %v1982, %v1983
      %v1985 = vrot.slane %v329, 2
      %v1986 = vsel %vm1044, %v1983, %v1985
      %s1987 = scalar_lea.vmem %s1, 40
      %v1988 = vld [vmem:[%s1987] sm:$0xff]
      %v1989 = vsel %vm465, %v1984, 0
      %v1991 = vsel %vm465, %v1986, 0
      %1993 = vmatprep.subr.mxu0 0.0
      %1994 = vmatpush1.msra.mxu0 %v1988
      %1995 = vmatprep.subr.mxu0 0.0
      %1996 = vmatpush1.msra.mxu0 0.0
      %1997 = vmatprep.subr.mxu0 0.0
      %1998 = vmatpush1.msra.mxu0 0.0
      %1999 = vmatprep.subr.mxu0 0.0
      %2000 = vmatpush1.msra.mxu0 0.0
      %2001 = vmatprep.subr.mxu0 0.0
      %2002 = vmatpush1.msra.mxu0 0.0
      %2003 = vmatprep.subr.mxu0 0.0
      %2004 = vmatpush1.msra.mxu0 0.0
      %2005 = vmatprep.subr.mxu0 0.0
      %2006 = vmatpush1.msra.mxu0 0.0
      %2007 = vmatprep.subr.mxu0 0.0
      %2008 = vmatpush1.msra.mxu0 0.0
      %2009 = vmatprep.subr.mxu0 0.0
      %2010 = vmatpush1.msra.mxu0 0.0
      %2011 = vmatprep.subr.mxu0 0.0
      %2012 = vmatpush1.msra.mxu0 0.0
      %2013 = vmatprep.subr.mxu0 0.0
      %2014 = vmatpush1.msra.mxu0 0.0
      %2015 = vmatprep.subr.mxu0 0.0
      %2016 = vmatpush1.msra.mxu0 0.0
      %2017 = vmatprep.subr.mxu0 0.0
      %2018 = vmatpush1.msra.mxu0 0.0
      %2019 = vmatprep.subr.mxu0 0.0
      %2020 = vmatpush1.msra.mxu0 0.0
      %2021 = vmatprep.subr.mxu0 0.0
      %2022 = vmatpush1.msra.mxu0 0.0
      %2023 = vmatprep.subr.mxu0 0.0
      %2024 = vmatpush1.msra.mxu0 0.0
      %2025 = vmatprep.subr.mxu0 0.0
      %2026 = vmatpush1.msra.mxu0 0.0
      %2027 = vmatprep.subr.mxu0 0.0
      %2028 = vmatpush1.msra.mxu0 0.0
      %2029 = vmatprep.subr.mxu0 0.0
      %2030 = vmatpush1.msra.mxu0 0.0
      %2031 = vmatprep.subr.mxu0 0.0
      %2032 = vmatpush1.msra.mxu0 0.0
      %2033 = vmatprep.subr.mxu0 0.0
      %2034 = vmatpush1.msra.mxu0 0.0
      %2035 = vmatprep.subr.mxu0 0.0
      %2036 = vmatpush1.msra.mxu0 0.0
      %2037 = vmatprep.subr.mxu0 0.0
      %2038 = vmatpush1.msra.mxu0 0.0
      %2039 = vmatprep.subr.mxu0 0.0
      %2040 = vmatpush1.msra.mxu0 0.0
      %2041 = vmatprep.subr.mxu0 0.0
      %2042 = vmatpush1.msra.mxu0 0.0
      %2043 = vmatprep.subr.mxu0 0.0
      %2044 = vmatpush1.msra.mxu0 0.0
      %2045 = vmatprep.subr.mxu0 0.0
      %2046 = vmatpush1.msra.mxu0 0.0
      %2047 = vmatprep.subr.mxu0 0.0
      %2048 = vmatpush1.msra.mxu0 0.0
      %2049 = vmatprep.subr.mxu0 0.0
      %2050 = vmatpush1.msra.mxu0 0.0
      %2051 = vmatprep.subr.mxu0 0.0
      %2052 = vmatpush1.msra.mxu0 0.0
      %2053 = vmatprep.subr.mxu0 0.0
      %2054 = vmatpush1.msra.mxu0 0.0
      %2055 = vmatprep.subr.mxu0 0.0
      %2056 = vmatpush1.msra.mxu0 0.0
      %2057 = vmatprep.mubr.f32.mxu0 0.0
      %2058 = vmatmul.mubr.f32.gmra.mrb[0].mxu0 %v1131
      %v2059 = vpop.f32.mrb[0].mxu0
      %v2060 = vadd.f32 0.0, %v2059
      %v2061 = vpop.f32.mrb[0].mxu0
      %2062 = vmatprep.mubr.f32.mxu0 0.0
      %2063 = vmatmul.mubr.f32.gmra.mrb[0].mxu0 %v1133
      %v2064 = vpop.f32.mrb[0].mxu0
      %v2065 = vadd.f32 0.0, %v2064
      %v2066 = vpop.f32.mrb[0].mxu0
      %2067 = vmatprep.mubr.f32.mxu0 0.0
      %2068 = vmatmul.mubr.f32.gmra.mrb[0].mxu0 %v1135
      %v2069 = vpop.f32.mrb[0].mxu0
      %v2070 = vadd.f32 0.0, %v2069
      %v2071 = vpop.f32.mrb[0].mxu0
      %2072 = vmatprep.mubr.f32.mxu0 0.0
      %2073 = vmatmul.mubr.f32.gmra.mrb[0].mxu0 %v1137
      %v2074 = vpop.f32.mrb[0].mxu0
      %v2075 = vadd.f32 0.0, %v2074
      %v2076 = vpop.f32.mrb[0].mxu0
      %2077 = vmatprep.mubr.f32.mxu0 0.0
      %2078 = vmatmul.mubr.f32.gmra.mrb[0].mxu0 %v1139
      %v2079 = vpop.f32.mrb[0].mxu0
      %v2080 = vadd.f32 0.0, %v2079
      %v2081 = vpop.f32.mrb[0].mxu0
      %2082 = vmatprep.mubr.f32.mxu0 0.0
      %2083 = vmatmul.mubr.f32.gmra.mrb[0].mxu0 %v1141
      %v2084 = vpop.f32.mrb[0].mxu0
      %v2085 = vadd.f32 0.0, %v2084
      %v2086 = vpop.f32.mrb[0].mxu0
      %2087 = vmatprep.mubr.f32.mxu0 0.0
      %2088 = vmatmul.mubr.f32.gmra.mrb[0].mxu0 %v1143
      %v2089 = vpop.f32.mrb[0].mxu0
      %v2090 = vadd.f32 0.0, %v2089
      %v2091 = vpop.f32.mrb[0].mxu0
      %2092 = vmatprep.mubr.f32.mxu0 0.0
      %2093 = vmatmul.mubr.f32.gmra.mrb[0].mxu0 %v1145
      %v2094 = vpop.f32.mrb[0].mxu0
      %v2095 = vadd.f32 0.0, %v2094
      %v2096 = vpop.f32.mrb[0].mxu0
      %2097 = vmatprep.mubr.f32.mxu0 0.0
      %2098 = vmatmul.mubr.f32.gmra.mrb[0].mxu0 %v1147
      %v2099 = vpop.f32.mrb[0].mxu0
      %v2100 = vadd.f32 0.0, %v2099
      %v2101 = vpop.f32.mrb[0].mxu0
      %2102 = vmatprep.mubr.f32.mxu0 0.0
      %2103 = vmatmul.mubr.f32.gmra.mrb[0].mxu0 %v1149
      %v2104 = vpop.f32.mrb[0].mxu0
      %v2105 = vadd.f32 0.0, %v2104
      %v2106 = vpop.f32.mrb[0].mxu0
      %2107 = vmatprep.mubr.f32.mxu0 0.0
      %2108 = vmatmul.mubr.f32.gmra.mrb[0].mxu0 %v1151
      %v2109 = vpop.f32.mrb[0].mxu0
      %v2110 = vadd.f32 0.0, %v2109
      %v2111 = vpop.f32.mrb[0].mxu0
      %2112 = vmatprep.mubr.f32.mxu0 0.0
      %2113 = vmatmul.mubr.f32.gmra.mrb[0].mxu0 %v1153
      %v2114 = vpop.f32.mrb[0].mxu0
      %v2115 = vadd.f32 0.0, %v2114
      %v2116 = vpop.f32.mrb[0].mxu0
      %2117 = vmatprep.mubr.f32.mxu0 0.0
      %2118 = vmatmul.mubr.f32.gmra.mrb[0].mxu0 %v1155
      %v2119 = vpop.f32.mrb[0].mxu0
      %v2120 = vadd.f32 0.0, %v2119
      %v2121 = vpop.f32.mrb[0].mxu0
      %2122 = vmatprep.mubr.f32.mxu0 0.0
      %2123 = vmatmul.mubr.f32.gmra.mrb[0].mxu0 %v1157
      %v2124 = vpop.f32.mrb[0].mxu0
      %v2125 = vadd.f32 0.0, %v2124
      %v2126 = vpop.f32.mrb[0].mxu0
      %2127 = vmatprep.mubr.f32.mxu0 0.0
      %2128 = vmatmul.mubr.f32.gmra.mrb[0].mxu0 %v1159
      %v2129 = vpop.f32.mrb[0].mxu0
      %v2130 = vadd.f32 0.0, %v2129
      %v2131 = vpop.f32.mrb[0].mxu0
      %2132 = vmatprep.mubr.f32.mxu0 0.0
      %2133 = vmatmul.mubr.f32.gmra.mrb[0].mxu0 %v1161
      %v2134 = vpop.f32.mrb[0].mxu0
      %v2135 = vadd.f32 0.0, %v2134
      %v2136 = vpop.f32.mrb[0].mxu0
      %2137 = vmatprep.mubr.f32.mxu0 0.0
      %2138 = vmatmul.mubr.f32.gmra.mrb[0].mxu0 %v1163
      %v2139 = vpop.f32.mrb[0].mxu0
      %v2140 = vadd.f32 0.0, %v2139
      %v2141 = vpop.f32.mrb[0].mxu0
      %2142 = vmatprep.mubr.f32.mxu0 0.0
      %2143 = vmatmul.mubr.f32.gmra.mrb[0].mxu0 %v1165
      %v2144 = vpop.f32.mrb[0].mxu0
      %v2145 = vadd.f32 0.0, %v2144
      %v2146 = vpop.f32.mrb[0].mxu0
      %2147 = vmatprep.mubr.f32.mxu0 0.0
      %2148 = vmatmul.mubr.f32.gmra.mrb[0].mxu0 %v1167
      %v2149 = vpop.f32.mrb[0].mxu0
      %v2150 = vadd.f32 0.0, %v2149
      %v2151 = vpop.f32.mrb[0].mxu0
      %2152 = vmatprep.mubr.f32.mxu0 0.0
      %2153 = vmatmul.mubr.f32.gmra.mrb[0].mxu0 %v1169
      %v2154 = vpop.f32.mrb[0].mxu0
      %v2155 = vadd.f32 0.0, %v2154
      %v2156 = vpop.f32.mrb[0].mxu0
      %2157 = vmatprep.mubr.f32.mxu0 0.0
      %2158 = vmatmul.mubr.f32.gmra.mrb[0].mxu0 %v1171
      %v2159 = vpop.f32.mrb[0].mxu0
      %v2160 = vadd.f32 0.0, %v2159
      %v2161 = vpop.f32.mrb[0].mxu0
      %2162 = vmatprep.mubr.f32.mxu0 0.0
      %2163 = vmatmul.mubr.f32.gmra.mrb[0].mxu0 %v1173
      %v2164 = vpop.f32.mrb[0].mxu0
      %v2165 = vadd.f32 0.0, %v2164
      %v2166 = vpop.f32.mrb[0].mxu0
      %2167 = vmatprep.mubr.f32.mxu0 0.0
      %2168 = vmatmul.mubr.f32.gmra.mrb[0].mxu0 %v1175
      %v2169 = vpop.f32.mrb[0].mxu0
      %v2170 = vadd.f32 0.0, %v2169
      %v2171 = vpop.f32.mrb[0].mxu0
      %2172 = vmatprep.mubr.f32.mxu0 0.0
      %2173 = vmatmul.mubr.f32.gmra.mrb[0].mxu0 %v1177
      %v2174 = vpop.f32.mrb[0].mxu0
      %v2175 = vadd.f32 0.0, %v2174
      %v2176 = vpop.f32.mrb[0].mxu0
      %2177 = vmatprep.mubr.f32.mxu0 0.0
      %2178 = vmatmul.mubr.f32.gmra.mrb[0].mxu0 %v1179
      %v2179 = vpop.f32.mrb[0].mxu0
      %v2180 = vadd.f32 0.0, %v2179
      %v2181 = vpop.f32.mrb[0].mxu0
      %2182 = vmatprep.mubr.f32.mxu0 0.0
      %2183 = vmatmul.mubr.f32.gmra.mrb[0].mxu0 %v1181
      %v2184 = vpop.f32.mrb[0].mxu0
      %v2185 = vadd.f32 0.0, %v2184
      %v2186 = vpop.f32.mrb[0].mxu0
      %2187 = vmatprep.mubr.f32.mxu0 0.0
      %2188 = vmatmul.mubr.f32.gmra.mrb[0].mxu0 %v1183
      %v2189 = vpop.f32.mrb[0].mxu0
      %v2190 = vadd.f32 0.0, %v2189
      %v2191 = vpop.f32.mrb[0].mxu0
      %2192 = vmatprep.mubr.f32.mxu0 0.0
      %2193 = vmatmul.mubr.f32.gmra.mrb[0].mxu0 %v1185
      %v2194 = vpop.f32.mrb[0].mxu0
      %v2195 = vadd.f32 0.0, %v2194
      %v2196 = vpop.f32.mrb[0].mxu0
      %2197 = vmatprep.mubr.f32.mxu0 0.0
      %2198 = vmatmul.mubr.f32.gmra.mrb[0].mxu0 %v1187
      %v2199 = vpop.f32.mrb[0].mxu0
      %v2200 = vadd.f32 0.0, %v2199
      %v2201 = vpop.f32.mrb[0].mxu0
      %2202 = vmatprep.mubr.f32.mxu0 0.0
      %2203 = vmatmul.mubr.f32.gmra.mrb[0].mxu0 %v1189
      %v2204 = vpop.f32.mrb[0].mxu0
      %v2205 = vadd.f32 0.0, %v2204
      %v2206 = vpop.f32.mrb[0].mxu0
      %2207 = vmatprep.mubr.f32.mxu0 0.0
      %2208 = vmatmul.mubr.f32.gmra.mrb[0].mxu0 %v1989
      %v2209 = vpop.f32.mrb[0].mxu0
      %v2210 = vadd.f32 0.0, %v2209
      %v2211 = vpop.f32.mrb[0].mxu0
      %2212 = vmatprep.mubr.f32.mxu0 0.0
      %2213 = vmatmul.mubr.f32.gmra.mrb[0].mxu0 %v1991
      %v2214 = vpop.f32.mrb[0].mxu0
      %v2215 = vadd.f32 0.0, %v2214
      %v2216 = vpop.f32.mrb[0].mxu0
      %2217 = vdwg.mxu0
      %v2218 = vadd.f32 %v1950, %v2060
      %v2219 = vadd.f32 %v1951, %v2065
      %v2220 = vadd.f32 %v1952, %v2070
      %v2221 = vadd.f32 %v1953, %v2075
      %v2222 = vadd.f32 %v1954, %v2080
      %v2223 = vadd.f32 %v1955, %v2085
      %v2224 = vadd.f32 %v1956, %v2090
      %v2225 = vadd.f32 %v1957, %v2095
      %v2226 = vadd.f32 %v1958, %v2100
      %v2227 = vadd.f32 %v1959, %v2105
      %v2228 = vadd.f32 %v1960, %v2110
      %v2229 = vadd.f32 %v1961, %v2115
      %v2230 = vadd.f32 %v1962, %v2120
      %v2231 = vadd.f32 %v1963, %v2125
      %v2232 = vadd.f32 %v1964, %v2130
      %v2233 = vadd.f32 %v1965, %v2135
      %v2234 = vadd.f32 %v1966, %v2140
      %v2235 = vadd.f32 %v1967, %v2145
      %v2236 = vadd.f32 %v1968, %v2150
      %v2237 = vadd.f32 %v1969, %v2155
      %v2238 = vadd.f32 %v1970, %v2160
      %v2239 = vadd.f32 %v1971, %v2165
      %v2240 = vadd.f32 %v1972, %v2170
      %v2241 = vadd.f32 %v1973, %v2175
      %v2242 = vadd.f32 %v1974, %v2180
      %v2243 = vadd.f32 %v1975, %v2185
      %v2244 = vadd.f32 %v1976, %v2190
      %v2245 = vadd.f32 %v1977, %v2195
      %v2246 = vadd.f32 %v1978, %v2200
      %v2247 = vadd.f32 %v1979, %v2205
      %v2248 = vadd.f32 %v1980, %v2210
      %v2249 = vadd.f32 %v1981, %v2215
      %s2250 = scalar_lea.vmem %s1, 48
      %v2251 = vld [vmem:[%s2250] sm:$0xff]
      %v2253 = vsel %vm465, %v330, 0
      %v2256 = vsel %vm465, %v331, 0
      %2258 = vmatprep.subr.mxu0 0.0
      %2259 = vmatpush1.msra.mxu0 %v2251
      %2260 = vmatprep.subr.mxu0 0.0
      %2261 = vmatpush1.msra.mxu0 0.0
      %2262 = vmatprep.subr.mxu0 0.0
      %2263 = vmatpush1.msra.mxu0 0.0
      %2264 = vmatprep.subr.mxu0 0.0
      %2265 = vmatpush1.msra.mxu0 0.0
      %2266 = vmatprep.subr.mxu0 0.0
      %2267 = vmatpush1.msra.mxu0 0.0
      %2268 = vmatprep.subr.mxu0 0.0
      %2269 = vmatpush1.msra.mxu0 0.0
      %2270 = vmatprep.subr.mxu0 0.0
      %2271 = vmatpush1.msra.mxu0 0.0
      %2272 = vmatprep.subr.mxu0 0.0
      %2273 = vmatpush1.msra.mxu0 0.0
      %2274 = vmatprep.subr.mxu0 0.0
      %2275 = vmatpush1.msra.mxu0 0.0
      %2276 = vmatprep.subr.mxu0 0.0
      %2277 = vmatpush1.msra.mxu0 0.0
      %2278 = vmatprep.subr.mxu0 0.0
      %2279 = vmatpush1.msra.mxu0 0.0
      %2280 = vmatprep.subr.mxu0 0.0
      %2281 = vmatpush1.msra.mxu0 0.0
      %2282 = vmatprep.subr.mxu0 0.0
      %2283 = vmatpush1.msra.mxu0 0.0
      %2284 = vmatprep.subr.mxu0 0.0
      %2285 = vmatpush1.msra.mxu0 0.0
      %2286 = vmatprep.subr.mxu0 0.0
      %2287 = vmatpush1.msra.mxu0 0.0
      %2288 = vmatprep.subr.mxu0 0.0
      %2289 = vmatpush1.msra.mxu0 0.0
      %2290 = vmatprep.subr.mxu0 0.0
      %2291 = vmatpush1.msra.mxu0 0.0
      %2292 = vmatprep.subr.mxu0 0.0
      %2293 = vmatpush1.msra.mxu0 0.0
      %2294 = vmatprep.subr.mxu0 0.0
      %2295 = vmatpush1.msra.mxu0 0.0
      %2296 = vmatprep.subr.mxu0 0.0
      %2297 = vmatpush1.msra.mxu0 0.0
      %2298 = vmatprep.subr.mxu0 0.0
      %2299 = vmatpush1.msra.mxu0 0.0
      %2300 = vmatprep.subr.mxu0 0.0
      %2301 = vmatpush1.msra.mxu0 0.0
      %2302 = vmatprep.subr.mxu0 0.0
      %2303 = vmatpush1.msra.mxu0 0.0
      %2304 = vmatprep.subr.mxu0 0.0
      %2305 = vmatpush1.msra.mxu0 0.0
      %2306 = vmatprep.subr.mxu0 0.0
      %2307 = vmatpush1.msra.mxu0 0.0
      %2308 = vmatprep.subr.mxu0 0.0
      %2309 = vmatpush1.msra.mxu0 0.0
      %2310 = vmatprep.subr.mxu0 0.0
      %2311 = vmatpush1.msra.mxu0 0.0
      %2312 = vmatprep.subr.mxu0 0.0
      %2313 = vmatpush1.msra.mxu0 0.0
      %2314 = vmatprep.subr.mxu0 0.0
      %2315 = vmatpush1.msra.mxu0 0.0
      %2316 = vmatprep.subr.mxu0 0.0
      %2317 = vmatpush1.msra.mxu0 0.0
      %2318 = vmatprep.subr.mxu0 0.0
      %2319 = vmatpush1.msra.mxu0 0.0
      %2320 = vmatprep.subr.mxu0 0.0
      %2321 = vmatpush1.msra.mxu0 0.0
      %2322 = vmatprep.mubr.f32.mxu0 0.0
      %2323 = vmatmul.mubr.f32.gmra.mrb[0].mxu0 %v763
      %v2324 = vpop.f32.mrb[0].mxu0
      %v2325 = vadd.f32 0.0, %v2324
      %v2326 = vpop.f32.mrb[0].mxu0
      %2327 = vmatprep.mubr.f32.mxu0 0.0
      %2328 = vmatmul.mubr.f32.gmra.mrb[0].mxu0 %v765
      %v2329 = vpop.f32.mrb[0].mxu0
      %v2330 = vadd.f32 0.0, %v2329
      %v2331 = vpop.f32.mrb[0].mxu0
      %2332 = vmatprep.mubr.f32.mxu0 0.0
      %2333 = vmatmul.mubr.f32.gmra.mrb[0].mxu0 %v767
      %v2334 = vpop.f32.mrb[0].mxu0
      %v2335 = vadd.f32 0.0, %v2334
      %v2336 = vpop.f32.mrb[0].mxu0
      %2337 = vmatprep.mubr.f32.mxu0 0.0
      %2338 = vmatmul.mubr.f32.gmra.mrb[0].mxu0 %v769
      %v2339 = vpop.f32.mrb[0].mxu0
      %v2340 = vadd.f32 0.0, %v2339
      %v2341 = vpop.f32.mrb[0].mxu0
      %2342 = vmatprep.mubr.f32.mxu0 0.0
      %2343 = vmatmul.mubr.f32.gmra.mrb[0].mxu0 %v771
      %v2344 = vpop.f32.mrb[0].mxu0
      %v2345 = vadd.f32 0.0, %v2344
      %v2346 = vpop.f32.mrb[0].mxu0
      %2347 = vmatprep.mubr.f32.mxu0 0.0
      %2348 = vmatmul.mubr.f32.gmra.mrb[0].mxu0 %v773
      %v2349 = vpop.f32.mrb[0].mxu0
      %v2350 = vadd.f32 0.0, %v2349
      %v2351 = vpop.f32.mrb[0].mxu0
      %2352 = vmatprep.mubr.f32.mxu0 0.0
      %2353 = vmatmul.mubr.f32.gmra.mrb[0].mxu0 %v775
      %v2354 = vpop.f32.mrb[0].mxu0
      %v2355 = vadd.f32 0.0, %v2354
      %v2356 = vpop.f32.mrb[0].mxu0
      %2357 = vmatprep.mubr.f32.mxu0 0.0
      %2358 = vmatmul.mubr.f32.gmra.mrb[0].mxu0 %v777
      %v2359 = vpop.f32.mrb[0].mxu0
      %v2360 = vadd.f32 0.0, %v2359
      %v2361 = vpop.f32.mrb[0].mxu0
      %2362 = vmatprep.mubr.f32.mxu0 0.0
      %2363 = vmatmul.mubr.f32.gmra.mrb[0].mxu0 %v779
      %v2364 = vpop.f32.mrb[0].mxu0
      %v2365 = vadd.f32 0.0, %v2364
      %v2366 = vpop.f32.mrb[0].mxu0
      %2367 = vmatprep.mubr.f32.mxu0 0.0
      %2368 = vmatmul.mubr.f32.gmra.mrb[0].mxu0 %v781
      %v2369 = vpop.f32.mrb[0].mxu0
      %v2370 = vadd.f32 0.0, %v2369
      %v2371 = vpop.f32.mrb[0].mxu0
      %2372 = vmatprep.mubr.f32.mxu0 0.0
      %2373 = vmatmul.mubr.f32.gmra.mrb[0].mxu0 %v783
      %v2374 = vpop.f32.mrb[0].mxu0
      %v2375 = vadd.f32 0.0, %v2374
      %v2376 = vpop.f32.mrb[0].mxu0
      %2377 = vmatprep.mubr.f32.mxu0 0.0
      %2378 = vmatmul.mubr.f32.gmra.mrb[0].mxu0 %v785
      %v2379 = vpop.f32.mrb[0].mxu0
      %v2380 = vadd.f32 0.0, %v2379
      %v2381 = vpop.f32.mrb[0].mxu0
      %2382 = vmatprep.mubr.f32.mxu0 0.0
      %2383 = vmatmul.mubr.f32.gmra.mrb[0].mxu0 %v787
      %v2384 = vpop.f32.mrb[0].mxu0
      %v2385 = vadd.f32 0.0, %v2384
      %v2386 = vpop.f32.mrb[0].mxu0
      %2387 = vmatprep.mubr.f32.mxu0 0.0
      %2388 = vmatmul.mubr.f32.gmra.mrb[0].mxu0 %v789
      %v2389 = vpop.f32.mrb[0].mxu0
      %v2390 = vadd.f32 0.0, %v2389
      %v2391 = vpop.f32.mrb[0].mxu0
      %2392 = vmatprep.mubr.f32.mxu0 0.0
      %2393 = vmatmul.mubr.f32.gmra.mrb[0].mxu0 %v791
      %v2394 = vpop.f32.mrb[0].mxu0
      %v2395 = vadd.f32 0.0, %v2394
      %v2396 = vpop.f32.mrb[0].mxu0
      %2397 = vmatprep.mubr.f32.mxu0 0.0
      %2398 = vmatmul.mubr.f32.gmra.mrb[0].mxu0 %v793
      %v2399 = vpop.f32.mrb[0].mxu0
      %v2400 = vadd.f32 0.0, %v2399
      %v2401 = vpop.f32.mrb[0].mxu0
      %2402 = vmatprep.mubr.f32.mxu0 0.0
      %2403 = vmatmul.mubr.f32.gmra.mrb[0].mxu0 %v795
      %v2404 = vpop.f32.mrb[0].mxu0
      %v2405 = vadd.f32 0.0, %v2404
      %v2406 = vpop.f32.mrb[0].mxu0
      %2407 = vmatprep.mubr.f32.mxu0 0.0
      %2408 = vmatmul.mubr.f32.gmra.mrb[0].mxu0 %v797
      %v2409 = vpop.f32.mrb[0].mxu0
      %v2410 = vadd.f32 0.0, %v2409
      %v2411 = vpop.f32.mrb[0].mxu0
      %2412 = vmatprep.mubr.f32.mxu0 0.0
      %2413 = vmatmul.mubr.f32.gmra.mrb[0].mxu0 %v799
      %v2414 = vpop.f32.mrb[0].mxu0
      %v2415 = vadd.f32 0.0, %v2414
      %v2416 = vpop.f32.mrb[0].mxu0
      %2417 = vmatprep.mubr.f32.mxu0 0.0
      %2418 = vmatmul.mubr.f32.gmra.mrb[0].mxu0 %v801
      %v2419 = vpop.f32.mrb[0].mxu0
      %v2420 = vadd.f32 0.0, %v2419
      %v2421 = vpop.f32.mrb[0].mxu0
      %2422 = vmatprep.mubr.f32.mxu0 0.0
      %2423 = vmatmul.mubr.f32.gmra.mrb[0].mxu0 %v803
      %v2424 = vpop.f32.mrb[0].mxu0
      %v2425 = vadd.f32 0.0, %v2424
      %v2426 = vpop.f32.mrb[0].mxu0
      %2427 = vmatprep.mubr.f32.mxu0 0.0
      %2428 = vmatmul.mubr.f32.gmra.mrb[0].mxu0 %v805
      %v2429 = vpop.f32.mrb[0].mxu0
      %v2430 = vadd.f32 0.0, %v2429
      %v2431 = vpop.f32.mrb[0].mxu0
      %2432 = vmatprep.mubr.f32.mxu0 0.0
      %2433 = vmatmul.mubr.f32.gmra.mrb[0].mxu0 %v807
      %v2434 = vpop.f32.mrb[0].mxu0
      %v2435 = vadd.f32 0.0, %v2434
      %v2436 = vpop.f32.mrb[0].mxu0
      %2437 = vmatprep.mubr.f32.mxu0 0.0
      %2438 = vmatmul.mubr.f32.gmra.mrb[0].mxu0 %v809
      %v2439 = vpop.f32.mrb[0].mxu0
      %v2440 = vadd.f32 0.0, %v2439
      %v2441 = vpop.f32.mrb[0].mxu0
      %2442 = vmatprep.mubr.f32.mxu0 0.0
      %2443 = vmatmul.mubr.f32.gmra.mrb[0].mxu0 %v811
      %v2444 = vpop.f32.mrb[0].mxu0
      %v2445 = vadd.f32 0.0, %v2444
      %v2446 = vpop.f32.mrb[0].mxu0
      %2447 = vmatprep.mubr.f32.mxu0 0.0
      %2448 = vmatmul.mubr.f32.gmra.mrb[0].mxu0 %v813
      %v2449 = vpop.f32.mrb[0].mxu0
      %v2450 = vadd.f32 0.0, %v2449
      %v2451 = vpop.f32.mrb[0].mxu0
      %2452 = vmatprep.mubr.f32.mxu0 0.0
      %2453 = vmatmul.mubr.f32.gmra.mrb[0].mxu0 %v815
      %v2454 = vpop.f32.mrb[0].mxu0
      %v2455 = vadd.f32 0.0, %v2454
      %v2456 = vpop.f32.mrb[0].mxu0
      %2457 = vmatprep.mubr.f32.mxu0 0.0
      %2458 = vmatmul.mubr.f32.gmra.mrb[0].mxu0 %v817
      %v2459 = vpop.f32.mrb[0].mxu0
      %v2460 = vadd.f32 0.0, %v2459
      %v2461 = vpop.f32.mrb[0].mxu0
      %2462 = vmatprep.mubr.f32.mxu0 0.0
      %2463 = vmatmul.mubr.f32.gmra.mrb[0].mxu0 %v1451
      %v2464 = vpop.f32.mrb[0].mxu0
      %v2465 = vadd.f32 0.0, %v2464
      %v2466 = vpop.f32.mrb[0].mxu0
      %2467 = vmatprep.mubr.f32.mxu0 0.0
      %2468 = vmatmul.mubr.f32.gmra.mrb[0].mxu0 %v1454
      %v2469 = vpop.f32.mrb[0].mxu0
      %v2470 = vadd.f32 0.0, %v2469
      %v2471 = vpop.f32.mrb[0].mxu0
      %2472 = vmatprep.mubr.f32.mxu0 0.0
      %2473 = vmatmul.mubr.f32.gmra.mrb[0].mxu0 %v2253
      %v2474 = vpop.f32.mrb[0].mxu0
      %v2475 = vadd.f32 0.0, %v2474
      %v2476 = vpop.f32.mrb[0].mxu0
      %2477 = vmatprep.mubr.f32.mxu0 0.0
      %2478 = vmatmul.mubr.f32.gmra.mrb[0].mxu0 %v2256
      %v2479 = vpop.f32.mrb[0].mxu0
      %v2480 = vadd.f32 0.0, %v2479
      %v2481 = vpop.f32.mrb[0].mxu0
      %2482 = vdwg.mxu0
      %v2483 = vadd.f32 %v2218, %v2325
      %v2484 = vadd.f32 %v2219, %v2330
      %v2485 = vadd.f32 %v2220, %v2335
      %v2486 = vadd.f32 %v2221, %v2340
      %v2487 = vadd.f32 %v2222, %v2345
      %v2488 = vadd.f32 %v2223, %v2350
      %v2489 = vadd.f32 %v2224, %v2355
      %v2490 = vadd.f32 %v2225, %v2360
      %v2491 = vadd.f32 %v2226, %v2365
      %v2492 = vadd.f32 %v2227, %v2370
      %v2493 = vadd.f32 %v2228, %v2375
      %v2494 = vadd.f32 %v2229, %v2380
      %v2495 = vadd.f32 %v2230, %v2385
      %v2496 = vadd.f32 %v2231, %v2390
      %v2497 = vadd.f32 %v2232, %v2395
      %v2498 = vadd.f32 %v2233, %v2400
      %v2499 = vadd.f32 %v2234, %v2405
      %v2500 = vadd.f32 %v2235, %v2410
      %v2501 = vadd.f32 %v2236, %v2415
      %v2502 = vadd.f32 %v2237, %v2420
      %v2503 = vadd.f32 %v2238, %v2425
      %v2504 = vadd.f32 %v2239, %v2430
      %v2505 = vadd.f32 %v2240, %v2435
      %v2506 = vadd.f32 %v2241, %v2440
      %v2507 = vadd.f32 %v2242, %v2445
      %v2508 = vadd.f32 %v2243, %v2450
      %v2509 = vadd.f32 %v2244, %v2455
      %v2510 = vadd.f32 %v2245, %v2460
      %v2511 = vadd.f32 %v2246, %v2465
      %v2512 = vadd.f32 %v2247, %v2470
      %v2513 = vadd.f32 %v2248, %v2475
      %v2514 = vadd.f32 %v2249, %v2480
      %v2516 = vrot.slane %v330, 1
      %v2517 = vrot.slane %v331, 1
      %v2518 = vsel %vm382, %v2516, %v2517
      %v2519 = vrot.slane %v332, 1
      %v2520 = vsel %vm382, %v2517, %v2519
      %s2521 = scalar_lea.vmem %s1, 56
      %v2522 = vld [vmem:[%s2521] sm:$0xff]
      %v2523 = vsel %vm465, %v2518, 0
      %v2525 = vsel %vm465, %v2520, 0
      %2527 = vmatprep.subr.mxu0 0.0
      %2528 = vmatpush1.msra.mxu0 %v2522
      %2529 = vmatprep.subr.mxu0 0.0
      %2530 = vmatpush1.msra.mxu0 0.0
      %2531 = vmatprep.subr.mxu0 0.0
      %2532 = vmatpush1.msra.mxu0 0.0
      %2533 = vmatprep.subr.mxu0 0.0
      %2534 = vmatpush1.msra.mxu0 0.0
      %2535 = vmatprep.subr.mxu0 0.0
      %2536 = vmatpush1.msra.mxu0 0.0
      %2537 = vmatprep.subr.mxu0 0.0
      %2538 = vmatpush1.msra.mxu0 0.0
      %2539 = vmatprep.subr.mxu0 0.0
      %2540 = vmatpush1.msra.mxu0 0.0
      %2541 = vmatprep.subr.mxu0 0.0
      %2542 = vmatpush1.msra.mxu0 0.0
      %2543 = vmatprep.subr.mxu0 0.0
      %2544 = vmatpush1.msra.mxu0 0.0
      %2545 = vmatprep.subr.mxu0 0.0
      %2546 = vmatpush1.msra.mxu0 0.0
      %2547 = vmatprep.subr.mxu0 0.0
      %2548 = vmatpush1.msra.mxu0 0.0
      %2549 = vmatprep.subr.mxu0 0.0
      %2550 = vmatpush1.msra.mxu0 0.0
      %2551 = vmatprep.subr.mxu0 0.0
      %2552 = vmatpush1.msra.mxu0 0.0
      %2553 = vmatprep.subr.mxu0 0.0
      %2554 = vmatpush1.msra.mxu0 0.0
      %2555 = vmatprep.subr.mxu0 0.0
      %2556 = vmatpush1.msra.mxu0 0.0
      %2557 = vmatprep.subr.mxu0 0.0
      %2558 = vmatpush1.msra.mxu0 0.0
      %2559 = vmatprep.subr.mxu0 0.0
      %2560 = vmatpush1.msra.mxu0 0.0
      %2561 = vmatprep.subr.mxu0 0.0
      %2562 = vmatpush1.msra.mxu0 0.0
      %2563 = vmatprep.subr.mxu0 0.0
      %2564 = vmatpush1.msra.mxu0 0.0
      %2565 = vmatprep.subr.mxu0 0.0
      %2566 = vmatpush1.msra.mxu0 0.0
      %2567 = vmatprep.subr.mxu0 0.0
      %2568 = vmatpush1.msra.mxu0 0.0
      %2569 = vmatprep.subr.mxu0 0.0
      %2570 = vmatpush1.msra.mxu0 0.0
      %2571 = vmatprep.subr.mxu0 0.0
      %2572 = vmatpush1.msra.mxu0 0.0
      %2573 = vmatprep.subr.mxu0 0.0
      %2574 = vmatpush1.msra.mxu0 0.0
      %2575 = vmatprep.subr.mxu0 0.0
      %2576 = vmatpush1.msra.mxu0 0.0
      %2577 = vmatprep.subr.mxu0 0.0
      %2578 = vmatpush1.msra.mxu0 0.0
      %2579 = vmatprep.subr.mxu0 0.0
      %2580 = vmatpush1.msra.mxu0 0.0
      %2581 = vmatprep.subr.mxu0 0.0
      %2582 = vmatpush1.msra.mxu0 0.0
      %2583 = vmatprep.subr.mxu0 0.0
      %2584 = vmatpush1.msra.mxu0 0.0
      %2585 = vmatprep.subr.mxu0 0.0
      %2586 = vmatpush1.msra.mxu0 0.0
      %2587 = vmatprep.subr.mxu0 0.0
      %2588 = vmatpush1.msra.mxu0 0.0
      %2589 = vmatprep.subr.mxu0 0.0
      %2590 = vmatpush1.msra.mxu0 0.0
      %2591 = vmatprep.mubr.f32.mxu0 0.0
      %2592 = vmatmul.mubr.f32.gmra.mrb[0].mxu0 %v474
      %v2593 = vpop.f32.mrb[0].mxu0
      %v2594 = vadd.f32 0.0, %v2593
      %v2595 = vpop.f32.mrb[0].mxu0
      %2596 = vmatprep.mubr.f32.mxu0 0.0
      %2597 = vmatmul.mubr.f32.gmra.mrb[0].mxu0 %v476
      %v2598 = vpop.f32.mrb[0].mxu0
      %v2599 = vadd.f32 0.0, %v2598
      %v2600 = vpop.f32.mrb[0].mxu0
      %2601 = vmatprep.mubr.f32.mxu0 0.0
      %2602 = vmatmul.mubr.f32.gmra.mrb[0].mxu0 %v478
      %v2603 = vpop.f32.mrb[0].mxu0
      %v2604 = vadd.f32 0.0, %v2603
      %v2605 = vpop.f32.mrb[0].mxu0
      %2606 = vmatprep.mubr.f32.mxu0 0.0
      %2607 = vmatmul.mubr.f32.gmra.mrb[0].mxu0 %v480
      %v2608 = vpop.f32.mrb[0].mxu0
      %v2609 = vadd.f32 0.0, %v2608
      %v2610 = vpop.f32.mrb[0].mxu0
      %2611 = vmatprep.mubr.f32.mxu0 0.0
      %2612 = vmatmul.mubr.f32.gmra.mrb[0].mxu0 %v482
      %v2613 = vpop.f32.mrb[0].mxu0
      %v2614 = vadd.f32 0.0, %v2613
      %v2615 = vpop.f32.mrb[0].mxu0
      %2616 = vmatprep.mubr.f32.mxu0 0.0
      %2617 = vmatmul.mubr.f32.gmra.mrb[0].mxu0 %v484
      %v2618 = vpop.f32.mrb[0].mxu0
      %v2619 = vadd.f32 0.0, %v2618
      %v2620 = vpop.f32.mrb[0].mxu0
      %2621 = vmatprep.mubr.f32.mxu0 0.0
      %2622 = vmatmul.mubr.f32.gmra.mrb[0].mxu0 %v486
      %v2623 = vpop.f32.mrb[0].mxu0
      %v2624 = vadd.f32 0.0, %v2623
      %v2625 = vpop.f32.mrb[0].mxu0
      %2626 = vmatprep.mubr.f32.mxu0 0.0
      %2627 = vmatmul.mubr.f32.gmra.mrb[0].mxu0 %v488
      %v2628 = vpop.f32.mrb[0].mxu0
      %v2629 = vadd.f32 0.0, %v2628
      %v2630 = vpop.f32.mrb[0].mxu0
      %2631 = vmatprep.mubr.f32.mxu0 0.0
      %2632 = vmatmul.mubr.f32.gmra.mrb[0].mxu0 %v490
      %v2633 = vpop.f32.mrb[0].mxu0
      %v2634 = vadd.f32 0.0, %v2633
      %v2635 = vpop.f32.mrb[0].mxu0
      %2636 = vmatprep.mubr.f32.mxu0 0.0
      %2637 = vmatmul.mubr.f32.gmra.mrb[0].mxu0 %v492
      %v2638 = vpop.f32.mrb[0].mxu0
      %v2639 = vadd.f32 0.0, %v2638
      %v2640 = vpop.f32.mrb[0].mxu0
      %2641 = vmatprep.mubr.f32.mxu0 0.0
      %2642 = vmatmul.mubr.f32.gmra.mrb[0].mxu0 %v494
      %v2643 = vpop.f32.mrb[0].mxu0
      %v2644 = vadd.f32 0.0, %v2643
      %v2645 = vpop.f32.mrb[0].mxu0
      %2646 = vmatprep.mubr.f32.mxu0 0.0
      %2647 = vmatmul.mubr.f32.gmra.mrb[0].mxu0 %v496
      %v2648 = vpop.f32.mrb[0].mxu0
      %v2649 = vadd.f32 0.0, %v2648
      %v2650 = vpop.f32.mrb[0].mxu0
      %2651 = vmatprep.mubr.f32.mxu0 0.0
      %2652 = vmatmul.mubr.f32.gmra.mrb[0].mxu0 %v498
      %v2653 = vpop.f32.mrb[0].mxu0
      %v2654 = vadd.f32 0.0, %v2653
      %v2655 = vpop.f32.mrb[0].mxu0
      %2656 = vmatprep.mubr.f32.mxu0 0.0
      %2657 = vmatmul.mubr.f32.gmra.mrb[0].mxu0 %v500
      %v2658 = vpop.f32.mrb[0].mxu0
      %v2659 = vadd.f32 0.0, %v2658
      %v2660 = vpop.f32.mrb[0].mxu0
      %2661 = vmatprep.mubr.f32.mxu0 0.0
      %2662 = vmatmul.mubr.f32.gmra.mrb[0].mxu0 %v502
      %v2663 = vpop.f32.mrb[0].mxu0
      %v2664 = vadd.f32 0.0, %v2663
      %v2665 = vpop.f32.mrb[0].mxu0
      %2666 = vmatprep.mubr.f32.mxu0 0.0
      %2667 = vmatmul.mubr.f32.gmra.mrb[0].mxu0 %v504
      %v2668 = vpop.f32.mrb[0].mxu0
      %v2669 = vadd.f32 0.0, %v2668
      %v2670 = vpop.f32.mrb[0].mxu0
      %2671 = vmatprep.mubr.f32.mxu0 0.0
      %2672 = vmatmul.mubr.f32.gmra.mrb[0].mxu0 %v506
      %v2673 = vpop.f32.mrb[0].mxu0
      %v2674 = vadd.f32 0.0, %v2673
      %v2675 = vpop.f32.mrb[0].mxu0
      %2676 = vmatprep.mubr.f32.mxu0 0.0
      %2677 = vmatmul.mubr.f32.gmra.mrb[0].mxu0 %v508
      %v2678 = vpop.f32.mrb[0].mxu0
      %v2679 = vadd.f32 0.0, %v2678
      %v2680 = vpop.f32.mrb[0].mxu0
      %2681 = vmatprep.mubr.f32.mxu0 0.0
      %2682 = vmatmul.mubr.f32.gmra.mrb[0].mxu0 %v510
      %v2683 = vpop.f32.mrb[0].mxu0
      %v2684 = vadd.f32 0.0, %v2683
      %v2685 = vpop.f32.mrb[0].mxu0
      %2686 = vmatprep.mubr.f32.mxu0 0.0
      %2687 = vmatmul.mubr.f32.gmra.mrb[0].mxu0 %v512
      %v2688 = vpop.f32.mrb[0].mxu0
      %v2689 = vadd.f32 0.0, %v2688
      %v2690 = vpop.f32.mrb[0].mxu0
      %2691 = vmatprep.mubr.f32.mxu0 0.0
      %2692 = vmatmul.mubr.f32.gmra.mrb[0].mxu0 %v514
      %v2693 = vpop.f32.mrb[0].mxu0
      %v2694 = vadd.f32 0.0, %v2693
      %v2695 = vpop.f32.mrb[0].mxu0
      %2696 = vmatprep.mubr.f32.mxu0 0.0
      %2697 = vmatmul.mubr.f32.gmra.mrb[0].mxu0 %v516
      %v2698 = vpop.f32.mrb[0].mxu0
      %v2699 = vadd.f32 0.0, %v2698
      %v2700 = vpop.f32.mrb[0].mxu0
      %2701 = vmatprep.mubr.f32.mxu0 0.0
      %2702 = vmatmul.mubr.f32.gmra.mrb[0].mxu0 %v518
      %v2703 = vpop.f32.mrb[0].mxu0
      %v2704 = vadd.f32 0.0, %v2703
      %v2705 = vpop.f32.mrb[0].mxu0
      %2706 = vmatprep.mubr.f32.mxu0 0.0
      %2707 = vmatmul.mubr.f32.gmra.mrb[0].mxu0 %v520
      %v2708 = vpop.f32.mrb[0].mxu0
      %v2709 = vadd.f32 0.0, %v2708
      %v2710 = vpop.f32.mrb[0].mxu0
      %2711 = vmatprep.mubr.f32.mxu0 0.0
      %2712 = vmatmul.mubr.f32.gmra.mrb[0].mxu0 %v522
      %v2713 = vpop.f32.mrb[0].mxu0
      %v2714 = vadd.f32 0.0, %v2713
      %v2715 = vpop.f32.mrb[0].mxu0
      %2716 = vmatprep.mubr.f32.mxu0 0.0
      %2717 = vmatmul.mubr.f32.gmra.mrb[0].mxu0 %v524
      %v2718 = vpop.f32.mrb[0].mxu0
      %v2719 = vadd.f32 0.0, %v2718
      %v2720 = vpop.f32.mrb[0].mxu0
      %2721 = vmatprep.mubr.f32.mxu0 0.0
      %2722 = vmatmul.mubr.f32.gmra.mrb[0].mxu0 %v526
      %v2723 = vpop.f32.mrb[0].mxu0
      %v2724 = vadd.f32 0.0, %v2723
      %v2725 = vpop.f32.mrb[0].mxu0
      %2726 = vmatprep.mubr.f32.mxu0 0.0
      %2727 = vmatmul.mubr.f32.gmra.mrb[0].mxu0 %v528
      %v2728 = vpop.f32.mrb[0].mxu0
      %v2729 = vadd.f32 0.0, %v2728
      %v2730 = vpop.f32.mrb[0].mxu0
      %2731 = vmatprep.mubr.f32.mxu0 0.0
      %2732 = vmatmul.mubr.f32.gmra.mrb[0].mxu0 %v1721
      %v2733 = vpop.f32.mrb[0].mxu0
      %v2734 = vadd.f32 0.0, %v2733
      %v2735 = vpop.f32.mrb[0].mxu0
      %2736 = vmatprep.mubr.f32.mxu0 0.0
      %2737 = vmatmul.mubr.f32.gmra.mrb[0].mxu0 %v1723
      %v2738 = vpop.f32.mrb[0].mxu0
      %v2739 = vadd.f32 0.0, %v2738
      %v2740 = vpop.f32.mrb[0].mxu0
      %2741 = vmatprep.mubr.f32.mxu0 0.0
      %2742 = vmatmul.mubr.f32.gmra.mrb[0].mxu0 %v2523
      %v2743 = vpop.f32.mrb[0].mxu0
      %v2744 = vadd.f32 0.0, %v2743
      %v2745 = vpop.f32.mrb[0].mxu0
      %2746 = vmatprep.mubr.f32.mxu0 0.0
      %2747 = vmatmul.mubr.f32.gmra.mrb[0].mxu0 %v2525
      %v2748 = vpop.f32.mrb[0].mxu0
      %v2749 = vadd.f32 0.0, %v2748
      %v2750 = vpop.f32.mrb[0].mxu0
      %2751 = vdwg.mxu0
      %v2752 = vadd.f32 %v2483, %v2594
      %v2753 = vadd.f32 %v2484, %v2599
      %v2754 = vadd.f32 %v2485, %v2604
      %v2755 = vadd.f32 %v2486, %v2609
      %v2756 = vadd.f32 %v2487, %v2614
      %v2757 = vadd.f32 %v2488, %v2619
      %v2758 = vadd.f32 %v2489, %v2624
      %v2759 = vadd.f32 %v2490, %v2629
      %v2760 = vadd.f32 %v2491, %v2634
      %v2761 = vadd.f32 %v2492, %v2639
      %v2762 = vadd.f32 %v2493, %v2644
      %v2763 = vadd.f32 %v2494, %v2649
      %v2764 = vadd.f32 %v2495, %v2654
      %v2765 = vadd.f32 %v2496, %v2659
      %v2766 = vadd.f32 %v2497, %v2664
      %v2767 = vadd.f32 %v2498, %v2669
      %v2768 = vadd.f32 %v2499, %v2674
      %v2769 = vadd.f32 %v2500, %v2679
      %v2770 = vadd.f32 %v2501, %v2684
      %v2771 = vadd.f32 %v2502, %v2689
      %v2772 = vadd.f32 %v2503, %v2694
      %v2773 = vadd.f32 %v2504, %v2699
      %v2774 = vadd.f32 %v2505, %v2704
      %v2775 = vadd.f32 %v2506, %v2709
      %v2776 = vadd.f32 %v2507, %v2714
      %v2777 = vadd.f32 %v2508, %v2719
      %v2778 = vadd.f32 %v2509, %v2724
      %v2779 = vadd.f32 %v2510, %v2729
      %v2780 = vadd.f32 %v2511, %v2734
      %v2781 = vadd.f32 %v2512, %v2739
      %v2782 = vadd.f32 %v2513, %v2744
      %v2783 = vadd.f32 %v2514, %v2749
      %v2784 = vrot.slane %v330, 2
      %v2785 = vrot.slane %v331, 2
      %v2786 = vsel %vm1044, %v2784, %v2785
      %v2787 = vrot.slane %v332, 2
      %v2788 = vsel %vm1044, %v2785, %v2787
      %s2789 = scalar_lea.vmem %s1, 64
      %v2790 = vld [vmem:[%s2789] sm:$0xff]
      %v2791 = vsel %vm465, %v2786, 0
      %v2793 = vsel %vm465, %v2788, 0
      %2795 = vmatprep.subr.mxu0 0.0
      %2796 = vmatpush1.msra.mxu0 %v2790
      %2797 = vmatprep.subr.mxu0 0.0
      %2798 = vmatpush1.msra.mxu0 0.0
      %2799 = vmatprep.subr.mxu0 0.0
      %2800 = vmatpush1.msra.mxu0 0.0
      %2801 = vmatprep.subr.mxu0 0.0
      %2802 = vmatpush1.msra.mxu0 0.0
      %2803 = vmatprep.subr.mxu0 0.0
      %2804 = vmatpush1.msra.mxu0 0.0
      %2805 = vmatprep.subr.mxu0 0.0
      %2806 = vmatpush1.msra.mxu0 0.0
      %2807 = vmatprep.subr.mxu0 0.0
      %2808 = vmatpush1.msra.mxu0 0.0
      %2809 = vmatprep.subr.mxu0 0.0
      %2810 = vmatpush1.msra.mxu0 0.0
      %2811 = vmatprep.subr.mxu0 0.0
      %2812 = vmatpush1.msra.mxu0 0.0
      %2813 = vmatprep.subr.mxu0 0.0
      %2814 = vmatpush1.msra.mxu0 0.0
      %2815 = vmatprep.subr.mxu0 0.0
      %2816 = vmatpush1.msra.mxu0 0.0
      %2817 = vmatprep.subr.mxu0 0.0
      %2818 = vmatpush1.msra.mxu0 0.0
      %2819 = vmatprep.subr.mxu0 0.0
      %2820 = vmatpush1.msra.mxu0 0.0
      %2821 = vmatprep.subr.mxu0 0.0
      %2822 = vmatpush1.msra.mxu0 0.0
      %2823 = vmatprep.subr.mxu0 0.0
      %2824 = vmatpush1.msra.mxu0 0.0
      %2825 = vmatprep.subr.mxu0 0.0
      %2826 = vmatpush1.msra.mxu0 0.0
      %2827 = vmatprep.subr.mxu0 0.0
      %2828 = vmatpush1.msra.mxu0 0.0
      %2829 = vmatprep.subr.mxu0 0.0
      %2830 = vmatpush1.msra.mxu0 0.0
      %2831 = vmatprep.subr.mxu0 0.0
      %2832 = vmatpush1.msra.mxu0 0.0
      %2833 = vmatprep.subr.mxu0 0.0
      %2834 = vmatpush1.msra.mxu0 0.0
      %2835 = vmatprep.subr.mxu0 0.0
      %2836 = vmatpush1.msra.mxu0 0.0
      %2837 = vmatprep.subr.mxu0 0.0
      %2838 = vmatpush1.msra.mxu0 0.0
      %2839 = vmatprep.subr.mxu0 0.0
      %2840 = vmatpush1.msra.mxu0 0.0
      %2841 = vmatprep.subr.mxu0 0.0
      %2842 = vmatpush1.msra.mxu0 0.0
      %2843 = vmatprep.subr.mxu0 0.0
      %2844 = vmatpush1.msra.mxu0 0.0
      %2845 = vmatprep.subr.mxu0 0.0
      %2846 = vmatpush1.msra.mxu0 0.0
      %2847 = vmatprep.subr.mxu0 0.0
      %2848 = vmatpush1.msra.mxu0 0.0
      %2849 = vmatprep.subr.mxu0 0.0
      %2850 = vmatpush1.msra.mxu0 0.0
      %2851 = vmatprep.subr.mxu0 0.0
      %2852 = vmatpush1.msra.mxu0 0.0
      %2853 = vmatprep.subr.mxu0 0.0
      %2854 = vmatpush1.msra.mxu0 0.0
      %2855 = vmatprep.subr.mxu0 0.0
      %2856 = vmatpush1.msra.mxu0 0.0
      %2857 = vmatprep.subr.mxu0 0.0
      %2858 = vmatpush1.msra.mxu0 0.0
      %2859 = vmatprep.mubr.f32.mxu0 0.0
      %2860 = vmatmul.mubr.f32.gmra.mrb[0].mxu0 %v1135
      %v2861 = vpop.f32.mrb[0].mxu0
      %v2862 = vadd.f32 0.0, %v2861
      %v2863 = vpop.f32.mrb[0].mxu0
      %2864 = vmatprep.mubr.f32.mxu0 0.0
      %2865 = vmatmul.mubr.f32.gmra.mrb[0].mxu0 %v1137
      %v2866 = vpop.f32.mrb[0].mxu0
      %v2867 = vadd.f32 0.0, %v2866
      %v2868 = vpop.f32.mrb[0].mxu0
      %2869 = vmatprep.mubr.f32.mxu0 0.0
      %2870 = vmatmul.mubr.f32.gmra.mrb[0].mxu0 %v1139
      %v2871 = vpop.f32.mrb[0].mxu0
      %v2872 = vadd.f32 0.0, %v2871
      %v2873 = vpop.f32.mrb[0].mxu0
      %2874 = vmatprep.mubr.f32.mxu0 0.0
      %2875 = vmatmul.mubr.f32.gmra.mrb[0].mxu0 %v1141
      %v2876 = vpop.f32.mrb[0].mxu0
      %v2877 = vadd.f32 0.0, %v2876
      %v2878 = vpop.f32.mrb[0].mxu0
      %2879 = vmatprep.mubr.f32.mxu0 0.0
      %2880 = vmatmul.mubr.f32.gmra.mrb[0].mxu0 %v1143
      %v2881 = vpop.f32.mrb[0].mxu0
      %v2882 = vadd.f32 0.0, %v2881
      %v2883 = vpop.f32.mrb[0].mxu0
      %2884 = vmatprep.mubr.f32.mxu0 0.0
      %2885 = vmatmul.mubr.f32.gmra.mrb[0].mxu0 %v1145
      %v2886 = vpop.f32.mrb[0].mxu0
      %v2887 = vadd.f32 0.0, %v2886
      %v2888 = vpop.f32.mrb[0].mxu0
      %2889 = vmatprep.mubr.f32.mxu0 0.0
      %2890 = vmatmul.mubr.f32.gmra.mrb[0].mxu0 %v1147
      %v2891 = vpop.f32.mrb[0].mxu0
      %v2892 = vadd.f32 0.0, %v2891
      %v2893 = vpop.f32.mrb[0].mxu0
      %2894 = vmatprep.mubr.f32.mxu0 0.0
      %2895 = vmatmul.mubr.f32.gmra.mrb[0].mxu0 %v1149
      %v2896 = vpop.f32.mrb[0].mxu0
      %v2897 = vadd.f32 0.0, %v2896
      %v2898 = vpop.f32.mrb[0].mxu0
      %2899 = vmatprep.mubr.f32.mxu0 0.0
      %2900 = vmatmul.mubr.f32.gmra.mrb[0].mxu0 %v1151
      %v2901 = vpop.f32.mrb[0].mxu0
      %v2902 = vadd.f32 0.0, %v2901
      %v2903 = vpop.f32.mrb[0].mxu0
      %2904 = vmatprep.mubr.f32.mxu0 0.0
      %2905 = vmatmul.mubr.f32.gmra.mrb[0].mxu0 %v1153
      %v2906 = vpop.f32.mrb[0].mxu0
      %v2907 = vadd.f32 0.0, %v2906
      %v2908 = vpop.f32.mrb[0].mxu0
      %2909 = vmatprep.mubr.f32.mxu0 0.0
      %2910 = vmatmul.mubr.f32.gmra.mrb[0].mxu0 %v1155
      %v2911 = vpop.f32.mrb[0].mxu0
      %v2912 = vadd.f32 0.0, %v2911
      %v2913 = vpop.f32.mrb[0].mxu0
      %2914 = vmatprep.mubr.f32.mxu0 0.0
      %2915 = vmatmul.mubr.f32.gmra.mrb[0].mxu0 %v1157
      %v2916 = vpop.f32.mrb[0].mxu0
      %v2917 = vadd.f32 0.0, %v2916
      %v2918 = vpop.f32.mrb[0].mxu0
      %2919 = vmatprep.mubr.f32.mxu0 0.0
      %2920 = vmatmul.mubr.f32.gmra.mrb[0].mxu0 %v1159
      %v2921 = vpop.f32.mrb[0].mxu0
      %v2922 = vadd.f32 0.0, %v2921
      %v2923 = vpop.f32.mrb[0].mxu0
      %2924 = vmatprep.mubr.f32.mxu0 0.0
      %2925 = vmatmul.mubr.f32.gmra.mrb[0].mxu0 %v1161
      %v2926 = vpop.f32.mrb[0].mxu0
      %v2927 = vadd.f32 0.0, %v2926
      %v2928 = vpop.f32.mrb[0].mxu0
      %2929 = vmatprep.mubr.f32.mxu0 0.0
      %2930 = vmatmul.mubr.f32.gmra.mrb[0].mxu0 %v1163
      %v2931 = vpop.f32.mrb[0].mxu0
      %v2932 = vadd.f32 0.0, %v2931
      %v2933 = vpop.f32.mrb[0].mxu0
      %2934 = vmatprep.mubr.f32.mxu0 0.0
      %2935 = vmatmul.mubr.f32.gmra.mrb[0].mxu0 %v1165
      %v2936 = vpop.f32.mrb[0].mxu0
      %v2937 = vadd.f32 0.0, %v2936
      %v2938 = vpop.f32.mrb[0].mxu0
      %2939 = vmatprep.mubr.f32.mxu0 0.0
      %2940 = vmatmul.mubr.f32.gmra.mrb[0].mxu0 %v1167
      %v2941 = vpop.f32.mrb[0].mxu0
      %v2942 = vadd.f32 0.0, %v2941
      %v2943 = vpop.f32.mrb[0].mxu0
      %2944 = vmatprep.mubr.f32.mxu0 0.0
      %2945 = vmatmul.mubr.f32.gmra.mrb[0].mxu0 %v1169
      %v2946 = vpop.f32.mrb[0].mxu0
      %v2947 = vadd.f32 0.0, %v2946
      %v2948 = vpop.f32.mrb[0].mxu0
      %2949 = vmatprep.mubr.f32.mxu0 0.0
      %2950 = vmatmul.mubr.f32.gmra.mrb[0].mxu0 %v1171
      %v2951 = vpop.f32.mrb[0].mxu0
      %v2952 = vadd.f32 0.0, %v2951
      %v2953 = vpop.f32.mrb[0].mxu0
      %2954 = vmatprep.mubr.f32.mxu0 0.0
      %2955 = vmatmul.mubr.f32.gmra.mrb[0].mxu0 %v1173
      %v2956 = vpop.f32.mrb[0].mxu0
      %v2957 = vadd.f32 0.0, %v2956
      %v2958 = vpop.f32.mrb[0].mxu0
      %2959 = vmatprep.mubr.f32.mxu0 0.0
      %2960 = vmatmul.mubr.f32.gmra.mrb[0].mxu0 %v1175
      %v2961 = vpop.f32.mrb[0].mxu0
      %v2962 = vadd.f32 0.0, %v2961
      %v2963 = vpop.f32.mrb[0].mxu0
      %2964 = vmatprep.mubr.f32.mxu0 0.0
      %2965 = vmatmul.mubr.f32.gmra.mrb[0].mxu0 %v1177
      %v2966 = vpop.f32.mrb[0].mxu0
      %v2967 = vadd.f32 0.0, %v2966
      %v2968 = vpop.f32.mrb[0].mxu0
      %2969 = vmatprep.mubr.f32.mxu0 0.0
      %2970 = vmatmul.mubr.f32.gmra.mrb[0].mxu0 %v1179
      %v2971 = vpop.f32.mrb[0].mxu0
      %v2972 = vadd.f32 0.0, %v2971
      %v2973 = vpop.f32.mrb[0].mxu0
      %2974 = vmatprep.mubr.f32.mxu0 0.0
      %2975 = vmatmul.mubr.f32.gmra.mrb[0].mxu0 %v1181
      %v2976 = vpop.f32.mrb[0].mxu0
      %v2977 = vadd.f32 0.0, %v2976
      %v2978 = vpop.f32.mrb[0].mxu0
      %2979 = vmatprep.mubr.f32.mxu0 0.0
      %2980 = vmatmul.mubr.f32.gmra.mrb[0].mxu0 %v1183
      %v2981 = vpop.f32.mrb[0].mxu0
      %v2982 = vadd.f32 0.0, %v2981
      %v2983 = vpop.f32.mrb[0].mxu0
      %2984 = vmatprep.mubr.f32.mxu0 0.0
      %2985 = vmatmul.mubr.f32.gmra.mrb[0].mxu0 %v1185
      %v2986 = vpop.f32.mrb[0].mxu0
      %v2987 = vadd.f32 0.0, %v2986
      %v2988 = vpop.f32.mrb[0].mxu0
      %2989 = vmatprep.mubr.f32.mxu0 0.0
      %2990 = vmatmul.mubr.f32.gmra.mrb[0].mxu0 %v1187
      %v2991 = vpop.f32.mrb[0].mxu0
      %v2992 = vadd.f32 0.0, %v2991
      %v2993 = vpop.f32.mrb[0].mxu0
      %2994 = vmatprep.mubr.f32.mxu0 0.0
      %2995 = vmatmul.mubr.f32.gmra.mrb[0].mxu0 %v1189
      %v2996 = vpop.f32.mrb[0].mxu0
      %v2997 = vadd.f32 0.0, %v2996
      %v2998 = vpop.f32.mrb[0].mxu0
      %2999 = vmatprep.mubr.f32.mxu0 0.0
      %3000 = vmatmul.mubr.f32.gmra.mrb[0].mxu0 %v1989
      %v3001 = vpop.f32.mrb[0].mxu0
      %v3002 = vadd.f32 0.0, %v3001
      %v3003 = vpop.f32.mrb[0].mxu0
      %3004 = vmatprep.mubr.f32.mxu0 0.0
      %3005 = vmatmul.mubr.f32.gmra.mrb[0].mxu0 %v1991
      %v3006 = vpop.f32.mrb[0].mxu0
      %v3007 = vadd.f32 0.0, %v3006
      %v3008 = vpop.f32.mrb[0].mxu0
      %3009 = vmatprep.mubr.f32.mxu0 0.0
      %3010 = vmatmul.mubr.f32.gmra.mrb[0].mxu0 %v2791
      %v3011 = vpop.f32.mrb[0].mxu0
      %v3012 = vadd.f32 0.0, %v3011
      %v3013 = vpop.f32.mrb[0].mxu0
      %3014 = vmatprep.mubr.f32.mxu0 0.0
      %3015 = vmatmul.mubr.f32.gmra.mrb[0].mxu0 %v2793
      %v3016 = vpop.f32.mrb[0].mxu0
      %v3017 = vadd.f32 0.0, %v3016
      %v3018 = vpop.f32.mrb[0].mxu0
      %3019 = vdwg.mxu0
      %v3020 = vadd.f32 %v2752, %v2862
      %v3021 = vadd.f32 %v2753, %v2867
      %v3022 = vadd.f32 %v2754, %v2872
      %v3023 = vadd.f32 %v2755, %v2877
      %v3024 = vadd.f32 %v2756, %v2882
      %v3025 = vadd.f32 %v2757, %v2887
      %v3026 = vadd.f32 %v2758, %v2892
      %v3027 = vadd.f32 %v2759, %v2897
      %v3028 = vadd.f32 %v2760, %v2902
      %v3029 = vadd.f32 %v2761, %v2907
      %v3030 = vadd.f32 %v2762, %v2912
      %v3031 = vadd.f32 %v2763, %v2917
      %v3032 = vadd.f32 %v2764, %v2922
      %v3033 = vadd.f32 %v2765, %v2927
      %v3034 = vadd.f32 %v2766, %v2932
      %v3035 = vadd.f32 %v2767, %v2937
      %v3036 = vadd.f32 %v2768, %v2942
      %v3037 = vadd.f32 %v2769, %v2947
      %v3038 = vadd.f32 %v2770, %v2952
      %v3039 = vadd.f32 %v2771, %v2957
      %v3040 = vadd.f32 %v2772, %v2962
      %v3041 = vadd.f32 %v2773, %v2967
      %v3042 = vadd.f32 %v2774, %v2972
      %v3043 = vadd.f32 %v2775, %v2977
      %v3044 = vadd.f32 %v2776, %v2982
      %v3045 = vadd.f32 %v2777, %v2987
      %v3046 = vadd.f32 %v2778, %v2992
      %v3047 = vadd.f32 %v2779, %v2997
      %v3048 = vadd.f32 %v2780, %v3002
      %v3049 = vadd.f32 %v2781, %v3007
      %v3050 = vadd.f32 %v2782, %v3012
      %v3051 = vadd.f32 %v2783, %v3017
      %v3052 = vld [vmem:[%s2] sm:$0x1]
      %v3054 = vlaneseq
      %v3055 = vshrl.u32 %v3054, 7
      %v3056 = vsub.s32 0, %v3055
      %v3057 = vrot.slane %v3052, %v3056
      %v3059 = vadd.f32 %v3020, %v3057
      %v3060 = vadd.f32 %v3021, %v3057
      %v3061 = vadd.f32 %v3022, %v3057
      %v3062 = vadd.f32 %v3023, %v3057
      %v3063 = vadd.f32 %v3024, %v3057
      %v3064 = vadd.f32 %v3025, %v3057
      %v3065 = vadd.f32 %v3026, %v3057
      %v3066 = vadd.f32 %v3027, %v3057
      %v3067 = vadd.f32 %v3028, %v3057
      %v3068 = vadd.f32 %v3029, %v3057
      %v3069 = vadd.f32 %v3030, %v3057
      %v3070 = vadd.f32 %v3031, %v3057
      %v3071 = vadd.f32 %v3032, %v3057
      %v3072 = vadd.f32 %v3033, %v3057
      %v3073 = vadd.f32 %v3034, %v3057
      %v3074 = vadd.f32 %v3035, %v3057
      %v3075 = vadd.f32 %v3036, %v3057
      %v3076 = vadd.f32 %v3037, %v3057
      %v3077 = vadd.f32 %v3038, %v3057
      %v3078 = vadd.f32 %v3039, %v3057
      %v3079 = vadd.f32 %v3040, %v3057
      %v3080 = vadd.f32 %v3041, %v3057
      %v3081 = vadd.f32 %v3042, %v3057
      %v3082 = vadd.f32 %v3043, %v3057
      %v3083 = vadd.f32 %v3044, %v3057
      %v3084 = vadd.f32 %v3045, %v3057
      %v3085 = vadd.f32 %v3046, %v3057
      %v3086 = vadd.f32 %v3047, %v3057
      %v3087 = vadd.f32 %v3048, %v3057
      %v3088 = vadd.f32 %v3049, %v3057
      %v3089 = vadd.f32 %v3050, %v3057
      %v3090 = vadd.f32 %v3051, %v3057
      %vm3091 = vcmp.ge.f32.partialorder %v3059, 0.0
      %vm3092 = vcmp.ge.f32.partialorder %v3060, 0.0
      %vm3093 = vcmp.ge.f32.partialorder %v3061, 0.0
      %vm3094 = vcmp.ge.f32.partialorder %v3062, 0.0
      %vm3095 = vcmp.ge.f32.partialorder %v3063, 0.0
      %vm3096 = vcmp.ge.f32.partialorder %v3064, 0.0
      %vm3097 = vcmp.ge.f32.partialorder %v3065, 0.0
      %vm3098 = vcmp.ge.f32.partialorder %v3066, 0.0
      %vm3099 = vcmp.ge.f32.partialorder %v3067, 0.0
      %vm3100 = vcmp.ge.f32.partialorder %v3068, 0.0
      %vm3101 = vcmp.ge.f32.partialorder %v3069, 0.0
      %vm3102 = vcmp.ge.f32.partialorder %v3070, 0.0
      %vm3103 = vcmp.ge.f32.partialorder %v3071, 0.0
      %vm3104 = vcmp.ge.f32.partialorder %v3072, 0.0
      %vm3105 = vcmp.ge.f32.partialorder %v3073, 0.0
      %vm3106 = vcmp.ge.f32.partialorder %v3074, 0.0
      %vm3107 = vcmp.ge.f32.partialorder %v3075, 0.0
      %vm3108 = vcmp.ge.f32.partialorder %v3076, 0.0
      %vm3109 = vcmp.ge.f32.partialorder %v3077, 0.0
      %vm3110 = vcmp.ge.f32.partialorder %v3078, 0.0
      %vm3111 = vcmp.ge.f32.partialorder %v3079, 0.0
      %vm3112 = vcmp.ge.f32.partialorder %v3080, 0.0
      %vm3113 = vcmp.ge.f32.partialorder %v3081, 0.0
      %vm3114 = vcmp.ge.f32.partialorder %v3082, 0.0
      %vm3115 = vcmp.ge.f32.partialorder %v3083, 0.0
      %vm3116 = vcmp.ge.f32.partialorder %v3084, 0.0
      %vm3117 = vcmp.ge.f32.partialorder %v3085, 0.0
      %vm3118 = vcmp.ge.f32.partialorder %v3086, 0.0
      %vm3119 = vcmp.ge.f32.partialorder %v3087, 0.0
      %vm3120 = vcmp.ge.f32.partialorder %v3088, 0.0
      %vm3121 = vcmp.ge.f32.partialorder %v3089, 0.0
      %vm3122 = vcmp.ge.f32.partialorder %v3090, 0.0
      %v3123 = vmul.f32 %v3059, 0.01
      %v3124 = vmul.f32 %v3060, 0.01
      %v3125 = vmul.f32 %v3061, 0.01
      %v3126 = vmul.f32 %v3062, 0.01
      %v3127 = vmul.f32 %v3063, 0.01
      %v3128 = vmul.f32 %v3064, 0.01
      %v3129 = vmul.f32 %v3065, 0.01
      %v3130 = vmul.f32 %v3066, 0.01
      %v3131 = vmul.f32 %v3067, 0.01
      %v3132 = vmul.f32 %v3068, 0.01
      %v3133 = vmul.f32 %v3069, 0.01
      %v3134 = vmul.f32 %v3070, 0.01
      %v3135 = vmul.f32 %v3071, 0.01
      %v3136 = vmul.f32 %v3072, 0.01
      %v3137 = vmul.f32 %v3073, 0.01
      %v3138 = vmul.f32 %v3074, 0.01
      %v3139 = vmul.f32 %v3075, 0.01
      %v3140 = vmul.f32 %v3076, 0.01
      %v3141 = vmul.f32 %v3077, 0.01
      %v3142 = vmul.f32 %v3078, 0.01
      %v3143 = vmul.f32 %v3079, 0.01
      %v3144 = vmul.f32 %v3080, 0.01
      %v3145 = vmul.f32 %v3081, 0.01
      %v3146 = vmul.f32 %v3082, 0.01
      %v3147 = vmul.f32 %v3083, 0.01
      %v3148 = vmul.f32 %v3084, 0.01
      %v3149 = vmul.f32 %v3085, 0.01
      %v3150 = vmul.f32 %v3086, 0.01
      %v3151 = vmul.f32 %v3087, 0.01
      %v3152 = vmul.f32 %v3088, 0.01
      %v3153 = vmul.f32 %v3089, 0.01
      %v3154 = vmul.f32 %v3090, 0.01
      %v3155 = vsel %vm3091, %v3059, %v3123
      %v3156 = vsel %vm3092, %v3060, %v3124
      %v3157 = vsel %vm3093, %v3061, %v3125
      %v3158 = vsel %vm3094, %v3062, %v3126
      %v3159 = vsel %vm3095, %v3063, %v3127
      %v3160 = vsel %vm3096, %v3064, %v3128
      %v3161 = vsel %vm3097, %v3065, %v3129
      %v3162 = vsel %vm3098, %v3066, %v3130
      %v3163 = vsel %vm3099, %v3067, %v3131
      %v3164 = vsel %vm3100, %v3068, %v3132
      %v3165 = vsel %vm3101, %v3069, %v3133
      %v3166 = vsel %vm3102, %v3070, %v3134
      %v3167 = vsel %vm3103, %v3071, %v3135
      %v3168 = vsel %vm3104, %v3072, %v3136
      %v3169 = vsel %vm3105, %v3073, %v3137
      %v3170 = vsel %vm3106, %v3074, %v3138
      %v3171 = vsel %vm3107, %v3075, %v3139
      %v3172 = vsel %vm3108, %v3076, %v3140
      %v3173 = vsel %vm3109, %v3077, %v3141
      %v3174 = vsel %vm3110, %v3078, %v3142
      %v3175 = vsel %vm3111, %v3079, %v3143
      %v3176 = vsel %vm3112, %v3080, %v3144
      %v3177 = vsel %vm3113, %v3081, %v3145
      %v3178 = vsel %vm3114, %v3082, %v3146
      %v3179 = vsel %vm3115, %v3083, %v3147
      %v3180 = vsel %vm3116, %v3084, %v3148
      %v3181 = vsel %vm3117, %v3085, %v3149
      %v3182 = vsel %vm3118, %v3086, %v3150
      %v3183 = vsel %vm3119, %v3087, %v3151
      %v3184 = vsel %vm3120, %v3088, %v3152
      %v3185 = vsel %vm3121, %v3089, %v3153
      %v3186 = vsel %vm3122, %v3090, %v3154
      %v3187 = vld [vmem:[%s3] sm:$0xff]
      %v3188 = vld [vmem:[%s3 + $0x8] sm:$0xff]
      %v3189 = vld [vmem:[%s4] sm:$0x1]
      %v3191 = vlaneseq
      %v3192 = vshrl.u32 %v3191, 7
      %v3193 = vsub.s32 0, %v3192
      %v3194 = vrot.slane %v3189, %v3193
      %vm3196 = vcmask 130048
      %v3198 = vsel %vm3196, %v3155, 0
      %v3201 = vsel %vm3196, %v3156, 0
      %v3204 = vsel %vm3196, %v3157, 0
      %v3207 = vsel %vm3196, %v3158, 0
      %v3210 = vsel %vm3196, %v3159, 0
      %v3213 = vsel %vm3196, %v3160, 0
      %v3216 = vsel %vm3196, %v3161, 0
      %v3219 = vsel %vm3196, %v3162, 0
      %v3222 = vsel %vm3196, %v3163, 0
      %v3225 = vsel %vm3196, %v3164, 0
      %v3228 = vsel %vm3196, %v3165, 0
      %v3231 = vsel %vm3196, %v3166, 0
      %v3234 = vsel %vm3196, %v3167, 0
      %v3237 = vsel %vm3196, %v3168, 0
      %v3240 = vsel %vm3196, %v3169, 0
      %v3243 = vsel %vm3196, %v3170, 0
      %v3246 = vsel %vm3196, %v3171, 0
      %v3249 = vsel %vm3196, %v3172, 0
      %v3252 = vsel %vm3196, %v3173, 0
      %v3255 = vsel %vm3196, %v3174, 0
      %v3258 = vsel %vm3196, %v3175, 0
      %v3261 = vsel %vm3196, %v3176, 0
      %v3264 = vsel %vm3196, %v3177, 0
      %v3267 = vsel %vm3196, %v3178, 0
      %v3270 = vsel %vm3196, %v3179, 0
      %v3273 = vsel %vm3196, %v3180, 0
      %v3276 = vsel %vm3196, %v3181, 0
      %v3279 = vsel %vm3196, %v3182, 0
      %v3282 = vsel %vm3196, %v3183, 0
      %v3285 = vsel %vm3196, %v3184, 0
      %v3288 = vsel %vm3196, %v3185, 0
      %v3291 = vsel %vm3196, %v3186, 0
      %3293 = vmatprep.subr.mxu0 0.0
      %3294 = vmatpush1.msra.mxu0 %v3187
      %3295 = vmatprep.subr.mxu0 0.0
      %3296 = vmatpush1.msra.mxu0 %v3188
      %3297 = vmatprep.subr.mxu0 0.0
      %3298 = vmatpush1.msra.mxu0 0.0
      %3299 = vmatprep.subr.mxu0 0.0
      %3300 = vmatpush1.msra.mxu0 0.0
      %3301 = vmatprep.subr.mxu0 0.0
      %3302 = vmatpush1.msra.mxu0 0.0
      %3303 = vmatprep.subr.mxu0 0.0
      %3304 = vmatpush1.msra.mxu0 0.0
      %3305 = vmatprep.subr.mxu0 0.0
      %3306 = vmatpush1.msra.mxu0 0.0
      %3307 = vmatprep.subr.mxu0 0.0
      %3308 = vmatpush1.msra.mxu0 0.0
      %3309 = vmatprep.subr.mxu0 0.0
      %3310 = vmatpush1.msra.mxu0 0.0
      %3311 = vmatprep.subr.mxu0 0.0
      %3312 = vmatpush1.msra.mxu0 0.0
      %3313 = vmatprep.subr.mxu0 0.0
      %3314 = vmatpush1.msra.mxu0 0.0
      %3315 = vmatprep.subr.mxu0 0.0
      %3316 = vmatpush1.msra.mxu0 0.0
      %3317 = vmatprep.subr.mxu0 0.0
      %3318 = vmatpush1.msra.mxu0 0.0
      %3319 = vmatprep.subr.mxu0 0.0
      %3320 = vmatpush1.msra.mxu0 0.0
      %3321 = vmatprep.subr.mxu0 0.0
      %3322 = vmatpush1.msra.mxu0 0.0
      %3323 = vmatprep.subr.mxu0 0.0
      %3324 = vmatpush1.msra.mxu0 0.0
      %3325 = vmatprep.subr.mxu0 0.0
      %3326 = vmatpush1.msra.mxu0 0.0
      %3327 = vmatprep.subr.mxu0 0.0
      %3328 = vmatpush1.msra.mxu0 0.0
      %3329 = vmatprep.subr.mxu0 0.0
      %3330 = vmatpush1.msra.mxu0 0.0
      %3331 = vmatprep.subr.mxu0 0.0
      %3332 = vmatpush1.msra.mxu0 0.0
      %3333 = vmatprep.subr.mxu0 0.0
      %3334 = vmatpush1.msra.mxu0 0.0
      %3335 = vmatprep.subr.mxu0 0.0
      %3336 = vmatpush1.msra.mxu0 0.0
      %3337 = vmatprep.subr.mxu0 0.0
      %3338 = vmatpush1.msra.mxu0 0.0
      %3339 = vmatprep.subr.mxu0 0.0
      %3340 = vmatpush1.msra.mxu0 0.0
      %3341 = vmatprep.subr.mxu0 0.0
      %3342 = vmatpush1.msra.mxu0 0.0
      %3343 = vmatprep.subr.mxu0 0.0
      %3344 = vmatpush1.msra.mxu0 0.0
      %3345 = vmatprep.subr.mxu0 0.0
      %3346 = vmatpush1.msra.mxu0 0.0
      %3347 = vmatprep.subr.mxu0 0.0
      %3348 = vmatpush1.msra.mxu0 0.0
      %3349 = vmatprep.subr.mxu0 0.0
      %3350 = vmatpush1.msra.mxu0 0.0
      %3351 = vmatprep.subr.mxu0 0.0
      %3352 = vmatpush1.msra.mxu0 0.0
      %3353 = vmatprep.subr.mxu0 0.0
      %3354 = vmatpush1.msra.mxu0 0.0
      %3355 = vmatprep.subr.mxu0 0.0
      %3356 = vmatpush1.msra.mxu0 0.0
      %3357 = vmatprep.mubr.f32.mxu0 0.0
      %3358 = vmatmul.mubr.f32.gmra.mrb[0].mxu0 %v3198
      %v3359 = vpop.f32.mrb[0].mxu0
      %v3360 = vadd.f32 %v3194, %v3359
      %v3361 = vpop.f32.mrb[0].mxu0
      %3362 = vmatprep.mubr.f32.mxu0 0.0
      %3363 = vmatmul.mubr.f32.gmra.mrb[0].mxu0 %v3201
      %v3364 = vpop.f32.mrb[0].mxu0
      %v3365 = vadd.f32 %v3194, %v3364
      %v3366 = vpop.f32.mrb[0].mxu0
      %3367 = vmatprep.mubr.f32.mxu0 0.0
      %3368 = vmatmul.mubr.f32.gmra.mrb[0].mxu0 %v3204
      %v3369 = vpop.f32.mrb[0].mxu0
      %v3370 = vadd.f32 %v3194, %v3369
      %v3371 = vpop.f32.mrb[0].mxu0
      %3372 = vmatprep.mubr.f32.mxu0 0.0
      %3373 = vmatmul.mubr.f32.gmra.mrb[0].mxu0 %v3207
      %v3374 = vpop.f32.mrb[0].mxu0
      %v3375 = vadd.f32 %v3194, %v3374
      %v3376 = vpop.f32.mrb[0].mxu0
      %3377 = vmatprep.mubr.f32.mxu0 0.0
      %3378 = vmatmul.mubr.f32.gmra.mrb[0].mxu0 %v3210
      %v3379 = vpop.f32.mrb[0].mxu0
      %v3380 = vadd.f32 %v3194, %v3379
      %v3381 = vpop.f32.mrb[0].mxu0
      %3382 = vmatprep.mubr.f32.mxu0 0.0
      %3383 = vmatmul.mubr.f32.gmra.mrb[0].mxu0 %v3213
      %v3384 = vpop.f32.mrb[0].mxu0
      %v3385 = vadd.f32 %v3194, %v3384
      %v3386 = vpop.f32.mrb[0].mxu0
      %3387 = vmatprep.mubr.f32.mxu0 0.0
      %3388 = vmatmul.mubr.f32.gmra.mrb[0].mxu0 %v3216
      %v3389 = vpop.f32.mrb[0].mxu0
      %v3390 = vadd.f32 %v3194, %v3389
      %v3391 = vpop.f32.mrb[0].mxu0
      %3392 = vmatprep.mubr.f32.mxu0 0.0
      %3393 = vmatmul.mubr.f32.gmra.mrb[0].mxu0 %v3219
      %v3394 = vpop.f32.mrb[0].mxu0
      %v3395 = vadd.f32 %v3194, %v3394
      %v3396 = vpop.f32.mrb[0].mxu0
      %3397 = vmatprep.mubr.f32.mxu0 0.0
      %3398 = vmatmul.mubr.f32.gmra.mrb[0].mxu0 %v3222
      %v3399 = vpop.f32.mrb[0].mxu0
      %v3400 = vadd.f32 %v3194, %v3399
      %v3401 = vpop.f32.mrb[0].mxu0
      %3402 = vmatprep.mubr.f32.mxu0 0.0
      %3403 = vmatmul.mubr.f32.gmra.mrb[0].mxu0 %v3225
      %v3404 = vpop.f32.mrb[0].mxu0
      %v3405 = vadd.f32 %v3194, %v3404
      %v3406 = vpop.f32.mrb[0].mxu0
      %3407 = vmatprep.mubr.f32.mxu0 0.0
      %3408 = vmatmul.mubr.f32.gmra.mrb[0].mxu0 %v3228
      %v3409 = vpop.f32.mrb[0].mxu0
      %v3410 = vadd.f32 %v3194, %v3409
      %v3411 = vpop.f32.mrb[0].mxu0
      %3412 = vmatprep.mubr.f32.mxu0 0.0
      %3413 = vmatmul.mubr.f32.gmra.mrb[0].mxu0 %v3231
      %v3414 = vpop.f32.mrb[0].mxu0
      %v3415 = vadd.f32 %v3194, %v3414
      %v3416 = vpop.f32.mrb[0].mxu0
      %3417 = vmatprep.mubr.f32.mxu0 0.0
      %3418 = vmatmul.mubr.f32.gmra.mrb[0].mxu0 %v3234
      %v3419 = vpop.f32.mrb[0].mxu0
      %v3420 = vadd.f32 %v3194, %v3419
      %v3421 = vpop.f32.mrb[0].mxu0
      %3422 = vmatprep.mubr.f32.mxu0 0.0
      %3423 = vmatmul.mubr.f32.gmra.mrb[0].mxu0 %v3237
      %v3424 = vpop.f32.mrb[0].mxu0
      %v3425 = vadd.f32 %v3194, %v3424
      %v3426 = vpop.f32.mrb[0].mxu0
      %3427 = vmatprep.mubr.f32.mxu0 0.0
      %3428 = vmatmul.mubr.f32.gmra.mrb[0].mxu0 %v3240
      %v3429 = vpop.f32.mrb[0].mxu0
      %v3430 = vadd.f32 %v3194, %v3429
      %v3431 = vpop.f32.mrb[0].mxu0
      %3432 = vmatprep.mubr.f32.mxu0 0.0
      %3433 = vmatmul.mubr.f32.gmra.mrb[0].mxu0 %v3243
      %v3434 = vpop.f32.mrb[0].mxu0
      %v3435 = vadd.f32 %v3194, %v3434
      %v3436 = vpop.f32.mrb[0].mxu0
      %3437 = vmatprep.mubr.f32.mxu0 0.0
      %3438 = vmatmul.mubr.f32.gmra.mrb[0].mxu0 %v3246
      %v3439 = vpop.f32.mrb[0].mxu0
      %v3440 = vadd.f32 %v3194, %v3439
      %v3441 = vpop.f32.mrb[0].mxu0
      %3442 = vmatprep.mubr.f32.mxu0 0.0
      %3443 = vmatmul.mubr.f32.gmra.mrb[0].mxu0 %v3249
      %v3444 = vpop.f32.mrb[0].mxu0
      %v3445 = vadd.f32 %v3194, %v3444
      %v3446 = vpop.f32.mrb[0].mxu0
      %3447 = vmatprep.mubr.f32.mxu0 0.0
      %3448 = vmatmul.mubr.f32.gmra.mrb[0].mxu0 %v3252
      %v3449 = vpop.f32.mrb[0].mxu0
      %v3450 = vadd.f32 %v3194, %v3449
      %v3451 = vpop.f32.mrb[0].mxu0
      %3452 = vmatprep.mubr.f32.mxu0 0.0
      %3453 = vmatmul.mubr.f32.gmra.mrb[0].mxu0 %v3255
      %v3454 = vpop.f32.mrb[0].mxu0
      %v3455 = vadd.f32 %v3194, %v3454
      %v3456 = vpop.f32.mrb[0].mxu0
      %3457 = vmatprep.mubr.f32.mxu0 0.0
      %3458 = vmatmul.mubr.f32.gmra.mrb[0].mxu0 %v3258
      %v3459 = vpop.f32.mrb[0].mxu0
      %v3460 = vadd.f32 %v3194, %v3459
      %v3461 = vpop.f32.mrb[0].mxu0
      %3462 = vmatprep.mubr.f32.mxu0 0.0
      %3463 = vmatmul.mubr.f32.gmra.mrb[0].mxu0 %v3261
      %v3464 = vpop.f32.mrb[0].mxu0
      %v3465 = vadd.f32 %v3194, %v3464
      %v3466 = vpop.f32.mrb[0].mxu0
      %3467 = vmatprep.mubr.f32.mxu0 0.0
      %3468 = vmatmul.mubr.f32.gmra.mrb[0].mxu0 %v3264
      %v3469 = vpop.f32.mrb[0].mxu0
      %v3470 = vadd.f32 %v3194, %v3469
      %v3471 = vpop.f32.mrb[0].mxu0
      %3472 = vmatprep.mubr.f32.mxu0 0.0
      %3473 = vmatmul.mubr.f32.gmra.mrb[0].mxu0 %v3267
      %v3474 = vpop.f32.mrb[0].mxu0
      %v3475 = vadd.f32 %v3194, %v3474
      %v3476 = vpop.f32.mrb[0].mxu0
      %3477 = vmatprep.mubr.f32.mxu0 0.0
      %3478 = vmatmul.mubr.f32.gmra.mrb[0].mxu0 %v3270
      %v3479 = vpop.f32.mrb[0].mxu0
      %v3480 = vadd.f32 %v3194, %v3479
      %v3481 = vpop.f32.mrb[0].mxu0
      %3482 = vmatprep.mubr.f32.mxu0 0.0
      %3483 = vmatmul.mubr.f32.gmra.mrb[0].mxu0 %v3273
      %v3484 = vpop.f32.mrb[0].mxu0
      %v3485 = vadd.f32 %v3194, %v3484
      %v3486 = vpop.f32.mrb[0].mxu0
      %3487 = vmatprep.mubr.f32.mxu0 0.0
      %3488 = vmatmul.mubr.f32.gmra.mrb[0].mxu0 %v3276
      %v3489 = vpop.f32.mrb[0].mxu0
      %v3490 = vadd.f32 %v3194, %v3489
      %v3491 = vpop.f32.mrb[0].mxu0
      %3492 = vmatprep.mubr.f32.mxu0 0.0
      %3493 = vmatmul.mubr.f32.gmra.mrb[0].mxu0 %v3279
      %v3494 = vpop.f32.mrb[0].mxu0
      %v3495 = vadd.f32 %v3194, %v3494
      %v3496 = vpop.f32.mrb[0].mxu0
      %3497 = vmatprep.mubr.f32.mxu0 0.0
      %3498 = vmatmul.mubr.f32.gmra.mrb[0].mxu0 %v3282
      %v3499 = vpop.f32.mrb[0].mxu0
      %v3500 = vadd.f32 %v3194, %v3499
      %v3501 = vpop.f32.mrb[0].mxu0
      %3502 = vmatprep.mubr.f32.mxu0 0.0
      %3503 = vmatmul.mubr.f32.gmra.mrb[0].mxu0 %v3285
      %v3504 = vpop.f32.mrb[0].mxu0
      %v3505 = vadd.f32 %v3194, %v3504
      %v3506 = vpop.f32.mrb[0].mxu0
      %3507 = vmatprep.mubr.f32.mxu0 0.0
      %3508 = vmatmul.mubr.f32.gmra.mrb[0].mxu0 %v3288
      %v3509 = vpop.f32.mrb[0].mxu0
      %v3510 = vadd.f32 %v3194, %v3509
      %v3511 = vpop.f32.mrb[0].mxu0
      %3512 = vmatprep.mubr.f32.mxu0 0.0
      %3513 = vmatmul.mubr.f32.gmra.mrb[0].mxu0 %v3291
      %v3514 = vpop.f32.mrb[0].mxu0
      %v3515 = vadd.f32 %v3194, %v3514
      %v3516 = vpop.f32.mrb[0].mxu0
      %3517 = vdwg.mxu0
      %v3518 = vmul.f32 %v3360, %v3360
      %v3519 = vmul.f32 %v3365, %v3365
      %v3520 = vmul.f32 %v3370, %v3370
      %v3521 = vmul.f32 %v3375, %v3375
      %v3522 = vmul.f32 %v3380, %v3380
      %v3523 = vmul.f32 %v3385, %v3385
      %v3524 = vmul.f32 %v3390, %v3390
      %v3525 = vmul.f32 %v3395, %v3395
      %v3526 = vmul.f32 %v3400, %v3400
      %v3527 = vmul.f32 %v3405, %v3405
      %v3528 = vmul.f32 %v3410, %v3410
      %v3529 = vmul.f32 %v3415, %v3415
      %v3530 = vmul.f32 %v3420, %v3420
      %v3531 = vmul.f32 %v3425, %v3425
      %v3532 = vmul.f32 %v3430, %v3430
      %v3533 = vmul.f32 %v3435, %v3435
      %v3534 = vmul.f32 %v3440, %v3440
      %v3535 = vmul.f32 %v3445, %v3445
      %v3536 = vmul.f32 %v3450, %v3450
      %v3537 = vmul.f32 %v3455, %v3455
      %v3538 = vmul.f32 %v3460, %v3460
      %v3539 = vmul.f32 %v3465, %v3465
      %v3540 = vmul.f32 %v3470, %v3470
      %v3541 = vmul.f32 %v3475, %v3475
      %v3542 = vmul.f32 %v3480, %v3480
      %v3543 = vmul.f32 %v3485, %v3485
      %v3544 = vmul.f32 %v3490, %v3490
      %v3545 = vmul.f32 %v3495, %v3495
      %v3546 = vmul.f32 %v3500, %v3500
      %v3547 = vmul.f32 %v3505, %v3505
      %v3548 = vmul.f32 %v3510, %v3510
      %v3549 = vmul.f32 %v3515, %v3515
      %v3550 = vmul.f32 %v3360, %v3518
      %v3551 = vmul.f32 %v3365, %v3519
      %v3552 = vmul.f32 %v3370, %v3520
      %v3553 = vmul.f32 %v3375, %v3521
      %v3554 = vmul.f32 %v3380, %v3522
      %v3555 = vmul.f32 %v3385, %v3523
      %v3556 = vmul.f32 %v3390, %v3524
      %v3557 = vmul.f32 %v3395, %v3525
      %v3558 = vmul.f32 %v3400, %v3526
      %v3559 = vmul.f32 %v3405, %v3527
      %v3560 = vmul.f32 %v3410, %v3528
      %v3561 = vmul.f32 %v3415, %v3529
      %v3562 = vmul.f32 %v3420, %v3530
      %v3563 = vmul.f32 %v3425, %v3531
      %v3564 = vmul.f32 %v3430, %v3532
      %v3565 = vmul.f32 %v3435, %v3533
      %v3566 = vmul.f32 %v3440, %v3534
      %v3567 = vmul.f32 %v3445, %v3535
      %v3568 = vmul.f32 %v3450, %v3536
      %v3569 = vmul.f32 %v3455, %v3537
      %v3570 = vmul.f32 %v3460, %v3538
      %v3571 = vmul.f32 %v3465, %v3539
      %v3572 = vmul.f32 %v3470, %v3540
      %v3573 = vmul.f32 %v3475, %v3541
      %v3574 = vmul.f32 %v3480, %v3542
      %v3575 = vmul.f32 %v3485, %v3543
      %v3576 = vmul.f32 %v3490, %v3544
      %v3577 = vmul.f32 %v3495, %v3545
      %v3578 = vmul.f32 %v3500, %v3546
      %v3579 = vmul.f32 %v3505, %v3547
      %v3580 = vmul.f32 %v3510, %v3548
      %v3581 = vmul.f32 %v3515, %v3549
      %v3582 = vmul.f32 %v3550, 0.044715
      %v3583 = vmul.f32 %v3551, 0.044715
      %v3584 = vmul.f32 %v3552, 0.044715
      %v3585 = vmul.f32 %v3553, 0.044715
      %v3586 = vmul.f32 %v3554, 0.044715
      %v3587 = vmul.f32 %v3555, 0.044715
      %v3588 = vmul.f32 %v3556, 0.044715
      %v3589 = vmul.f32 %v3557, 0.044715
      %v3590 = vmul.f32 %v3558, 0.044715
      %v3591 = vmul.f32 %v3559, 0.044715
      %v3592 = vmul.f32 %v3560, 0.044715
      %v3593 = vmul.f32 %v3561, 0.044715
      %v3594 = vmul.f32 %v3562, 0.044715
      %v3595 = vmul.f32 %v3563, 0.044715
      %v3596 = vmul.f32 %v3564, 0.044715
      %v3597 = vmul.f32 %v3565, 0.044715
      %v3598 = vmul.f32 %v3566, 0.044715
      %v3599 = vmul.f32 %v3567, 0.044715
      %v3600 = vmul.f32 %v3568, 0.044715
      %v3601 = vmul.f32 %v3569, 0.044715
      %v3602 = vmul.f32 %v3570, 0.044715
      %v3603 = vmul.f32 %v3571, 0.044715
      %v3604 = vmul.f32 %v3572, 0.044715
      %v3605 = vmul.f32 %v3573, 0.044715
      %v3606 = vmul.f32 %v3574, 0.044715
      %v3607 = vmul.f32 %v3575, 0.044715
      %v3608 = vmul.f32 %v3576, 0.044715
      %v3609 = vmul.f32 %v3577, 0.044715
      %v3610 = vmul.f32 %v3578, 0.044715
      %v3611 = vmul.f32 %v3579, 0.044715
      %v3612 = vmul.f32 %v3580, 0.044715
      %v3613 = vmul.f32 %v3581, 0.044715
      %v3614 = vadd.f32 %v3360, %v3582
      %v3615 = vadd.f32 %v3365, %v3583
      %v3616 = vadd.f32 %v3370, %v3584
      %v3617 = vadd.f32 %v3375, %v3585
      %v3618 = vadd.f32 %v3380, %v3586
      %v3619 = vadd.f32 %v3385, %v3587
      %v3620 = vadd.f32 %v3390, %v3588
      %v3621 = vadd.f32 %v3395, %v3589
      %v3622 = vadd.f32 %v3400, %v3590
      %v3623 = vadd.f32 %v3405, %v3591
      %v3624 = vadd.f32 %v3410, %v3592
      %v3625 = vadd.f32 %v3415, %v3593
      %v3626 = vadd.f32 %v3420, %v3594
      %v3627 = vadd.f32 %v3425, %v3595
      %v3628 = vadd.f32 %v3430, %v3596
      %v3629 = vadd.f32 %v3435, %v3597
      %v3630 = vadd.f32 %v3440, %v3598
      %v3631 = vadd.f32 %v3445, %v3599
      %v3632 = vadd.f32 %v3450, %v3600
      %v3633 = vadd.f32 %v3455, %v3601
      %v3634 = vadd.f32 %v3460, %v3602
      %v3635 = vadd.f32 %v3465, %v3603
      %v3636 = vadd.f32 %v3470, %v3604
      %v3637 = vadd.f32 %v3475, %v3605
      %v3638 = vadd.f32 %v3480, %v3606
      %v3639 = vadd.f32 %v3485, %v3607
      %v3640 = vadd.f32 %v3490, %v3608
      %v3641 = vadd.f32 %v3495, %v3609
      %v3642 = vadd.f32 %v3500, %v3610
      %v3643 = vadd.f32 %v3505, %v3611
      %v3644 = vadd.f32 %v3510, %v3612
      %v3645 = vadd.f32 %v3515, %v3613
      %v3646 = vmul.f32 %v3614, 0.7978846
      %v3647 = vmul.f32 %v3615, 0.7978846
      %v3648 = vmul.f32 %v3616, 0.7978846
      %v3649 = vmul.f32 %v3617, 0.7978846
      %v3650 = vmul.f32 %v3618, 0.7978846
      %v3651 = vmul.f32 %v3619, 0.7978846
      %v3652 = vmul.f32 %v3620, 0.7978846
      %v3653 = vmul.f32 %v3621, 0.7978846
      %v3654 = vmul.f32 %v3622, 0.7978846
      %v3655 = vmul.f32 %v3623, 0.7978846
      %v3656 = vmul.f32 %v3624, 0.7978846
      %v3657 = vmul.f32 %v3625, 0.7978846
      %v3658 = vmul.f32 %v3626, 0.7978846
      %v3659 = vmul.f32 %v3627, 0.7978846
      %v3660 = vmul.f32 %v3628, 0.7978846
      %v3661 = vmul.f32 %v3629, 0.7978846
      %v3662 = vmul.f32 %v3630, 0.7978846
      %v3663 = vmul.f32 %v3631, 0.7978846
      %v3664 = vmul.f32 %v3632, 0.7978846
      %v3665 = vmul.f32 %v3633, 0.7978846
      %v3666 = vmul.f32 %v3634, 0.7978846
      %v3667 = vmul.f32 %v3635, 0.7978846
      %v3668 = vmul.f32 %v3636, 0.7978846
      %v3669 = vmul.f32 %v3637, 0.7978846
      %v3670 = vmul.f32 %v3638, 0.7978846
      %v3671 = vmul.f32 %v3639, 0.7978846
      %v3672 = vmul.f32 %v3640, 0.7978846
      %v3673 = vmul.f32 %v3641, 0.7978846
      %v3674 = vmul.f32 %v3642, 0.7978846
      %v3675 = vmul.f32 %v3643, 0.7978846
      %v3676 = vmul.f32 %v3644, 0.7978846
      %v3677 = vmul.f32 %v3645, 0.7978846
      %v3678 = vtanh.pop %v3646
      %v3679 = vtanh.pop %v3647
      %v3680 = vtanh.pop %v3648
      %v3681 = vtanh.pop %v3649
      %v3682 = vtanh.pop %v3650
      %v3683 = vtanh.pop %v3651
      %v3684 = vtanh.pop %v3652
      %v3685 = vtanh.pop %v3653
      %v3686 = vtanh.pop %v3654
      %v3687 = vtanh.pop %v3655
      %v3688 = vtanh.pop %v3656
      %v3689 = vtanh.pop %v3657
      %v3690 = vtanh.pop %v3658
      %v3691 = vtanh.pop %v3659
      %v3692 = vtanh.pop %v3660
      %v3693 = vtanh.pop %v3661
      %v3694 = vtanh.pop %v3662
      %v3695 = vtanh.pop %v3663
      %v3696 = vtanh.pop %v3664
      %v3697 = vtanh.pop %v3665
      %v3698 = vtanh.pop %v3666
      %v3699 = vtanh.pop %v3667
      %v3700 = vtanh.pop %v3668
      %v3701 = vtanh.pop %v3669
      %v3702 = vtanh.pop %v3670
      %v3703 = vtanh.pop %v3671
      %v3704 = vtanh.pop %v3672
      %v3705 = vtanh.pop %v3673
      %v3706 = vtanh.pop %v3674
      %v3707 = vtanh.pop %v3675
      %v3708 = vtanh.pop %v3676
      %v3709 = vtanh.pop %v3677
      %v3710 = vadd.f32 %v3678, 1.0
      %v3711 = vadd.f32 %v3679, 1.0
      %v3712 = vadd.f32 %v3680, 1.0
      %v3713 = vadd.f32 %v3681, 1.0
      %v3714 = vadd.f32 %v3682, 1.0
      %v3715 = vadd.f32 %v3683, 1.0
      %v3716 = vadd.f32 %v3684, 1.0
      %v3717 = vadd.f32 %v3685, 1.0
      %v3718 = vadd.f32 %v3686, 1.0
      %v3719 = vadd.f32 %v3687, 1.0
      %v3720 = vadd.f32 %v3688, 1.0
      %v3721 = vadd.f32 %v3689, 1.0
      %v3722 = vadd.f32 %v3690, 1.0
      %v3723 = vadd.f32 %v3691, 1.0
      %v3724 = vadd.f32 %v3692, 1.0
      %v3725 = vadd.f32 %v3693, 1.0
      %v3726 = vadd.f32 %v3694, 1.0
      %v3727 = vadd.f32 %v3695, 1.0
      %v3728 = vadd.f32 %v3696, 1.0
      %v3729 = vadd.f32 %v3697, 1.0
      %v3730 = vadd.f32 %v3698, 1.0
      %v3731 = vadd.f32 %v3699, 1.0
      %v3732 = vadd.f32 %v3700, 1.0
      %v3733 = vadd.f32 %v3701, 1.0
      %v3734 = vadd.f32 %v3702, 1.0
      %v3735 = vadd.f32 %v3703, 1.0
      %v3736 = vadd.f32 %v3704, 1.0
      %v3737 = vadd.f32 %v3705, 1.0
      %v3738 = vadd.f32 %v3706, 1.0
      %v3739 = vadd.f32 %v3707, 1.0
      %v3740 = vadd.f32 %v3708, 1.0
      %v3741 = vadd.f32 %v3709, 1.0
      %v3742 = vmul.f32 %v3710, 0.5
      %v3743 = vmul.f32 %v3711, 0.5
      %v3744 = vmul.f32 %v3712, 0.5
      %v3745 = vmul.f32 %v3713, 0.5
      %v3746 = vmul.f32 %v3714, 0.5
      %v3747 = vmul.f32 %v3715, 0.5
      %v3748 = vmul.f32 %v3716, 0.5
      %v3749 = vmul.f32 %v3717, 0.5
      %v3750 = vmul.f32 %v3718, 0.5
      %v3751 = vmul.f32 %v3719, 0.5
      %v3752 = vmul.f32 %v3720, 0.5
      %v3753 = vmul.f32 %v3721, 0.5
      %v3754 = vmul.f32 %v3722, 0.5
      %v3755 = vmul.f32 %v3723, 0.5
      %v3756 = vmul.f32 %v3724, 0.5
      %v3757 = vmul.f32 %v3725, 0.5
      %v3758 = vmul.f32 %v3726, 0.5
      %v3759 = vmul.f32 %v3727, 0.5
      %v3760 = vmul.f32 %v3728, 0.5
      %v3761 = vmul.f32 %v3729, 0.5
      %v3762 = vmul.f32 %v3730, 0.5
      %v3763 = vmul.f32 %v3731, 0.5
      %v3764 = vmul.f32 %v3732, 0.5
      %v3765 = vmul.f32 %v3733, 0.5
      %v3766 = vmul.f32 %v3734, 0.5
      %v3767 = vmul.f32 %v3735, 0.5
      %v3768 = vmul.f32 %v3736, 0.5
      %v3769 = vmul.f32 %v3737, 0.5
      %v3770 = vmul.f32 %v3738, 0.5
      %v3771 = vmul.f32 %v3739, 0.5
      %v3772 = vmul.f32 %v3740, 0.5
      %v3773 = vmul.f32 %v3741, 0.5
      %v3774 = vmul.f32 %v3360, %v3742
      %v3775 = vmul.f32 %v3365, %v3743
      %v3776 = vmul.f32 %v3370, %v3744
      %v3777 = vmul.f32 %v3375, %v3745
      %v3778 = vmul.f32 %v3380, %v3746
      %v3779 = vmul.f32 %v3385, %v3747
      %v3780 = vmul.f32 %v3390, %v3748
      %v3781 = vmul.f32 %v3395, %v3749
      %v3782 = vmul.f32 %v3400, %v3750
      %v3783 = vmul.f32 %v3405, %v3751
      %v3784 = vmul.f32 %v3410, %v3752
      %v3785 = vmul.f32 %v3415, %v3753
      %v3786 = vmul.f32 %v3420, %v3754
      %v3787 = vmul.f32 %v3425, %v3755
      %v3788 = vmul.f32 %v3430, %v3756
      %v3789 = vmul.f32 %v3435, %v3757
      %v3790 = vmul.f32 %v3440, %v3758
      %v3791 = vmul.f32 %v3445, %v3759
      %v3792 = vmul.f32 %v3450, %v3760
      %v3793 = vmul.f32 %v3455, %v3761
      %v3794 = vmul.f32 %v3460, %v3762
      %v3795 = vmul.f32 %v3465, %v3763
      %v3796 = vmul.f32 %v3470, %v3764
      %v3797 = vmul.f32 %v3475, %v3765
      %v3798 = vmul.f32 %v3480, %v3766
      %v3799 = vmul.f32 %v3485, %v3767
      %v3800 = vmul.f32 %v3490, %v3768
      %v3801 = vmul.f32 %v3495, %v3769
      %v3802 = vmul.f32 %v3500, %v3770
      %v3803 = vmul.f32 %v3505, %v3771
      %v3804 = vmul.f32 %v3510, %v3772
      %v3805 = vmul.f32 %v3515, %v3773
      %v3806 = vld [vmem:[%s5] sm:$0xff]
      %v3807 = vld [vmem:[%s5 + $0x8] sm:$0xff]
      %v3808 = vld [vmem:[%s5 + $0x10] sm:$0xff]
      %v3809 = vld [vmem:[%s5 + $0x18] sm:$0xff]
      %v3810 = vld [vmem:[%s5 + $0x20] sm:$0xff]
      %v3811 = vld [vmem:[%s5 + $0x28] sm:$0xff]
      %v3812 = vld [vmem:[%s5 + $0x30] sm:$0xff]
      %v3813 = vld [vmem:[%s5 + $0x38] sm:$0xff]
      %v3814 = vld [vmem:[%s6] sm:$0x1]
      %v3816 = vlaneseq
      %v3817 = vshrl.u32 %v3816, 7
      %v3818 = vsub.s32 0, %v3817
      %v3819 = vrot.slane %v3814, %v3818
      %vm3821 = vcmask 523264
      %v3823 = vsel %vm3821, %v3774, 0
      %v3826 = vsel %vm3821, %v3775, 0
      %v3829 = vsel %vm3821, %v3776, 0
      %v3832 = vsel %vm3821, %v3777, 0
      %v3835 = vsel %vm3821, %v3778, 0
      %v3838 = vsel %vm3821, %v3779, 0
      %v3841 = vsel %vm3821, %v3780, 0
      %v3844 = vsel %vm3821, %v3781, 0
      %v3847 = vsel %vm3821, %v3782, 0
      %v3850 = vsel %vm3821, %v3783, 0
      %v3853 = vsel %vm3821, %v3784, 0
      %v3856 = vsel %vm3821, %v3785, 0
      %v3859 = vsel %vm3821, %v3786, 0
      %v3862 = vsel %vm3821, %v3787, 0
      %v3865 = vsel %vm3821, %v3788, 0
      %v3868 = vsel %vm3821, %v3789, 0
      %v3871 = vsel %vm3821, %v3790, 0
      %v3874 = vsel %vm3821, %v3791, 0
      %v3877 = vsel %vm3821, %v3792, 0
      %v3880 = vsel %vm3821, %v3793, 0
      %v3883 = vsel %vm3821, %v3794, 0
      %v3886 = vsel %vm3821, %v3795, 0
      %v3889 = vsel %vm3821, %v3796, 0
      %v3892 = vsel %vm3821, %v3797, 0
      %v3895 = vsel %vm3821, %v3798, 0
      %v3898 = vsel %vm3821, %v3799, 0
      %v3901 = vsel %vm3821, %v3800, 0
      %v3904 = vsel %vm3821, %v3801, 0
      %v3907 = vsel %vm3821, %v3802, 0
      %v3910 = vsel %vm3821, %v3803, 0
      %v3913 = vsel %vm3821, %v3804, 0
      %v3916 = vsel %vm3821, %v3805, 0
      %3918 = vmatprep.subr.mxu0 0.0
      %3919 = vmatpush1.msra.mxu0 %v3806
      %3920 = vmatprep.subr.mxu0 0.0
      %3921 = vmatpush1.msra.mxu0 %v3807
      %3922 = vmatprep.subr.mxu0 0.0
      %3923 = vmatpush1.msra.mxu0 %v3808
      %3924 = vmatprep.subr.mxu0 0.0
      %3925 = vmatpush1.msra.mxu0 %v3809
      %3926 = vmatprep.subr.mxu0 0.0
      %3927 = vmatpush1.msra.mxu0 %v3810
      %3928 = vmatprep.subr.mxu0 0.0
      %3929 = vmatpush1.msra.mxu0 %v3811
      %3930 = vmatprep.subr.mxu0 0.0
      %3931 = vmatpush1.msra.mxu0 %v3812
      %3932 = vmatprep.subr.mxu0 0.0
      %3933 = vmatpush1.msra.mxu0 %v3813
      %3934 = vmatprep.subr.mxu0 0.0
      %3935 = vmatpush1.msra.mxu0 0.0
      %3936 = vmatprep.subr.mxu0 0.0
      %3937 = vmatpush1.msra.mxu0 0.0
      %3938 = vmatprep.subr.mxu0 0.0
      %3939 = vmatpush1.msra.mxu0 0.0
      %3940 = vmatprep.subr.mxu0 0.0
      %3941 = vmatpush1.msra.mxu0 0.0
      %3942 = vmatprep.subr.mxu0 0.0
      %3943 = vmatpush1.msra.mxu0 0.0
      %3944 = vmatprep.subr.mxu0 0.0
      %3945 = vmatpush1.msra.mxu0 0.0
      %3946 = vmatprep.subr.mxu0 0.0
      %3947 = vmatpush1.msra.mxu0 0.0
      %3948 = vmatprep.subr.mxu0 0.0
      %3949 = vmatpush1.msra.mxu0 0.0
      %3950 = vmatprep.subr.mxu0 0.0
      %3951 = vmatpush1.msra.mxu0 0.0
      %3952 = vmatprep.subr.mxu0 0.0
      %3953 = vmatpush1.msra.mxu0 0.0
      %3954 = vmatprep.subr.mxu0 0.0
      %3955 = vmatpush1.msra.mxu0 0.0
      %3956 = vmatprep.subr.mxu0 0.0
      %3957 = vmatpush1.msra.mxu0 0.0
      %3958 = vmatprep.subr.mxu0 0.0
      %3959 = vmatpush1.msra.mxu0 0.0
      %3960 = vmatprep.subr.mxu0 0.0
      %3961 = vmatpush1.msra.mxu0 0.0
      %3962 = vmatprep.subr.mxu0 0.0
      %3963 = vmatpush1.msra.mxu0 0.0
      %3964 = vmatprep.subr.mxu0 0.0
      %3965 = vmatpush1.msra.mxu0 0.0
      %3966 = vmatprep.subr.mxu0 0.0
      %3967 = vmatpush1.msra.mxu0 0.0
      %3968 = vmatprep.subr.mxu0 0.0
      %3969 = vmatpush1.msra.mxu0 0.0
      %3970 = vmatprep.subr.mxu0 0.0
      %3971 = vmatpush1.msra.mxu0 0.0
      %3972 = vmatprep.subr.mxu0 0.0
      %3973 = vmatpush1.msra.mxu0 0.0
      %3974 = vmatprep.subr.mxu0 0.0
      %3975 = vmatpush1.msra.mxu0 0.0
      %3976 = vmatprep.subr.mxu0 0.0
      %3977 = vmatpush1.msra.mxu0 0.0
      %3978 = vmatprep.subr.mxu0 0.0
      %3979 = vmatpush1.msra.mxu0 0.0
      %3980 = vmatprep.subr.mxu0 0.0
      %3981 = vmatpush1.msra.mxu0 0.0
      %3982 = vmatprep.mubr.f32.mxu0 0.0
      %3983 = vmatmul.mubr.f32.gmra.mrb[0].mxu0 %v3823
      %v3984 = vpop.f32.mrb[0].mxu0
      %v3985 = vadd.f32 %v3819, %v3984
      %v3986 = vpop.f32.mrb[0].mxu0
      %3987 = vmatprep.mubr.f32.mxu0 0.0
      %3988 = vmatmul.mubr.f32.gmra.mrb[0].mxu0 %v3826
      %v3989 = vpop.f32.mrb[0].mxu0
      %v3990 = vadd.f32 %v3819, %v3989
      %v3991 = vpop.f32.mrb[0].mxu0
      %3992 = vmatprep.mubr.f32.mxu0 0.0
      %3993 = vmatmul.mubr.f32.gmra.mrb[0].mxu0 %v3829
      %v3994 = vpop.f32.mrb[0].mxu0
      %v3995 = vadd.f32 %v3819, %v3994
      %v3996 = vpop.f32.mrb[0].mxu0
      %3997 = vmatprep.mubr.f32.mxu0 0.0
      %3998 = vmatmul.mubr.f32.gmra.mrb[0].mxu0 %v3832
      %v3999 = vpop.f32.mrb[0].mxu0
      %v4000 = vadd.f32 %v3819, %v3999
      %v4001 = vpop.f32.mrb[0].mxu0
      %4002 = vmatprep.mubr.f32.mxu0 0.0
      %4003 = vmatmul.mubr.f32.gmra.mrb[0].mxu0 %v3835
      %v4004 = vpop.f32.mrb[0].mxu0
      %v4005 = vadd.f32 %v3819, %v4004
      %v4006 = vpop.f32.mrb[0].mxu0
      %4007 = vmatprep.mubr.f32.mxu0 0.0
      %4008 = vmatmul.mubr.f32.gmra.mrb[0].mxu0 %v3838
      %v4009 = vpop.f32.mrb[0].mxu0
      %v4010 = vadd.f32 %v3819, %v4009
      %v4011 = vpop.f32.mrb[0].mxu0
      %4012 = vmatprep.mubr.f32.mxu0 0.0
      %4013 = vmatmul.mubr.f32.gmra.mrb[0].mxu0 %v3841
      %v4014 = vpop.f32.mrb[0].mxu0
      %v4015 = vadd.f32 %v3819, %v4014
      %v4016 = vpop.f32.mrb[0].mxu0
      %4017 = vmatprep.mubr.f32.mxu0 0.0
      %4018 = vmatmul.mubr.f32.gmra.mrb[0].mxu0 %v3844
      %v4019 = vpop.f32.mrb[0].mxu0
      %v4020 = vadd.f32 %v3819, %v4019
      %v4021 = vpop.f32.mrb[0].mxu0
      %4022 = vmatprep.mubr.f32.mxu0 0.0
      %4023 = vmatmul.mubr.f32.gmra.mrb[0].mxu0 %v3847
      %v4024 = vpop.f32.mrb[0].mxu0
      %v4025 = vadd.f32 %v3819, %v4024
      %v4026 = vpop.f32.mrb[0].mxu0
      %4027 = vmatprep.mubr.f32.mxu0 0.0
      %4028 = vmatmul.mubr.f32.gmra.mrb[0].mxu0 %v3850
      %v4029 = vpop.f32.mrb[0].mxu0
      %v4030 = vadd.f32 %v3819, %v4029
      %v4031 = vpop.f32.mrb[0].mxu0
      %4032 = vmatprep.mubr.f32.mxu0 0.0
      %4033 = vmatmul.mubr.f32.gmra.mrb[0].mxu0 %v3853
      %v4034 = vpop.f32.mrb[0].mxu0
      %v4035 = vadd.f32 %v3819, %v4034
      %v4036 = vpop.f32.mrb[0].mxu0
      %4037 = vmatprep.mubr.f32.mxu0 0.0
      %4038 = vmatmul.mubr.f32.gmra.mrb[0].mxu0 %v3856
      %v4039 = vpop.f32.mrb[0].mxu0
      %v4040 = vadd.f32 %v3819, %v4039
      %v4041 = vpop.f32.mrb[0].mxu0
      %4042 = vmatprep.mubr.f32.mxu0 0.0
      %4043 = vmatmul.mubr.f32.gmra.mrb[0].mxu0 %v3859
      %v4044 = vpop.f32.mrb[0].mxu0
      %v4045 = vadd.f32 %v3819, %v4044
      %v4046 = vpop.f32.mrb[0].mxu0
      %4047 = vmatprep.mubr.f32.mxu0 0.0
      %4048 = vmatmul.mubr.f32.gmra.mrb[0].mxu0 %v3862
      %v4049 = vpop.f32.mrb[0].mxu0
      %v4050 = vadd.f32 %v3819, %v4049
      %v4051 = vpop.f32.mrb[0].mxu0
      %4052 = vmatprep.mubr.f32.mxu0 0.0
      %4053 = vmatmul.mubr.f32.gmra.mrb[0].mxu0 %v3865
      %v4054 = vpop.f32.mrb[0].mxu0
      %v4055 = vadd.f32 %v3819, %v4054
      %v4056 = vpop.f32.mrb[0].mxu0
      %4057 = vmatprep.mubr.f32.mxu0 0.0
      %4058 = vmatmul.mubr.f32.gmra.mrb[0].mxu0 %v3868
      %v4059 = vpop.f32.mrb[0].mxu0
      %v4060 = vadd.f32 %v3819, %v4059
      %v4061 = vpop.f32.mrb[0].mxu0
      %4062 = vmatprep.mubr.f32.mxu0 0.0
      %4063 = vmatmul.mubr.f32.gmra.mrb[0].mxu0 %v3871
      %v4064 = vpop.f32.mrb[0].mxu0
      %v4065 = vadd.f32 %v3819, %v4064
      %v4066 = vpop.f32.mrb[0].mxu0
      %4067 = vmatprep.mubr.f32.mxu0 0.0
      %4068 = vmatmul.mubr.f32.gmra.mrb[0].mxu0 %v3874
      %v4069 = vpop.f32.mrb[0].mxu0
      %v4070 = vadd.f32 %v3819, %v4069
      %v4071 = vpop.f32.mrb[0].mxu0
      %4072 = vmatprep.mubr.f32.mxu0 0.0
      %4073 = vmatmul.mubr.f32.gmra.mrb[0].mxu0 %v3877
      %v4074 = vpop.f32.mrb[0].mxu0
      %v4075 = vadd.f32 %v3819, %v4074
      %v4076 = vpop.f32.mrb[0].mxu0
      %4077 = vmatprep.mubr.f32.mxu0 0.0
      %4078 = vmatmul.mubr.f32.gmra.mrb[0].mxu0 %v3880
      %v4079 = vpop.f32.mrb[0].mxu0
      %v4080 = vadd.f32 %v3819, %v4079
      %v4081 = vpop.f32.mrb[0].mxu0
      %4082 = vmatprep.mubr.f32.mxu0 0.0
      %4083 = vmatmul.mubr.f32.gmra.mrb[0].mxu0 %v3883
      %v4084 = vpop.f32.mrb[0].mxu0
      %v4085 = vadd.f32 %v3819, %v4084
      %v4086 = vpop.f32.mrb[0].mxu0
      %4087 = vmatprep.mubr.f32.mxu0 0.0
      %4088 = vmatmul.mubr.f32.gmra.mrb[0].mxu0 %v3886
      %v4089 = vpop.f32.mrb[0].mxu0
      %v4090 = vadd.f32 %v3819, %v4089
      %v4091 = vpop.f32.mrb[0].mxu0
      %4092 = vmatprep.mubr.f32.mxu0 0.0
      %4093 = vmatmul.mubr.f32.gmra.mrb[0].mxu0 %v3889
      %v4094 = vpop.f32.mrb[0].mxu0
      %v4095 = vadd.f32 %v3819, %v4094
      %v4096 = vpop.f32.mrb[0].mxu0
      %4097 = vmatprep.mubr.f32.mxu0 0.0
      %4098 = vmatmul.mubr.f32.gmra.mrb[0].mxu0 %v3892
      %v4099 = vpop.f32.mrb[0].mxu0
      %v4100 = vadd.f32 %v3819, %v4099
      %v4101 = vpop.f32.mrb[0].mxu0
      %4102 = vmatprep.mubr.f32.mxu0 0.0
      %4103 = vmatmul.mubr.f32.gmra.mrb[0].mxu0 %v3895
      %v4104 = vpop.f32.mrb[0].mxu0
      %v4105 = vadd.f32 %v3819, %v4104
      %v4106 = vpop.f32.mrb[0].mxu0
      %4107 = vmatprep.mubr.f32.mxu0 0.0
      %4108 = vmatmul.mubr.f32.gmra.mrb[0].mxu0 %v3898
      %v4109 = vpop.f32.mrb[0].mxu0
      %v4110 = vadd.f32 %v3819, %v4109
      %v4111 = vpop.f32.mrb[0].mxu0
      %4112 = vmatprep.mubr.f32.mxu0 0.0
      %4113 = vmatmul.mubr.f32.gmra.mrb[0].mxu0 %v3901
      %v4114 = vpop.f32.mrb[0].mxu0
      %v4115 = vadd.f32 %v3819, %v4114
      %v4116 = vpop.f32.mrb[0].mxu0
      %4117 = vmatprep.mubr.f32.mxu0 0.0
      %4118 = vmatmul.mubr.f32.gmra.mrb[0].mxu0 %v3904
      %v4119 = vpop.f32.mrb[0].mxu0
      %v4120 = vadd.f32 %v3819, %v4119
      %v4121 = vpop.f32.mrb[0].mxu0
      %4122 = vmatprep.mubr.f32.mxu0 0.0
      %4123 = vmatmul.mubr.f32.gmra.mrb[0].mxu0 %v3907
      %v4124 = vpop.f32.mrb[0].mxu0
      %v4125 = vadd.f32 %v3819, %v4124
      %v4126 = vpop.f32.mrb[0].mxu0
      %4127 = vmatprep.mubr.f32.mxu0 0.0
      %4128 = vmatmul.mubr.f32.gmra.mrb[0].mxu0 %v3910
      %v4129 = vpop.f32.mrb[0].mxu0
      %v4130 = vadd.f32 %v3819, %v4129
      %v4131 = vpop.f32.mrb[0].mxu0
      %4132 = vmatprep.mubr.f32.mxu0 0.0
      %4133 = vmatmul.mubr.f32.gmra.mrb[0].mxu0 %v3913
      %v4134 = vpop.f32.mrb[0].mxu0
      %v4135 = vadd.f32 %v3819, %v4134
      %v4136 = vpop.f32.mrb[0].mxu0
      %4137 = vmatprep.mubr.f32.mxu0 0.0
      %4138 = vmatmul.mubr.f32.gmra.mrb[0].mxu0 %v3916
      %v4139 = vpop.f32.mrb[0].mxu0
      %v4140 = vadd.f32 %v3819, %v4139
      %v4141 = vpop.f32.mrb[0].mxu0
      %4142 = vdwg.mxu0
      %v4143 = vadd.f32 %v3155, %v3985
      %v4144 = vadd.f32 %v3156, %v3990
      %v4145 = vadd.f32 %v3157, %v3995
      %v4146 = vadd.f32 %v3158, %v4000
      %v4147 = vadd.f32 %v3159, %v4005
      %v4148 = vadd.f32 %v3160, %v4010
      %v4149 = vadd.f32 %v3161, %v4015
      %v4150 = vadd.f32 %v3162, %v4020
      %v4151 = vadd.f32 %v3163, %v4025
      %v4152 = vadd.f32 %v3164, %v4030
      %v4153 = vadd.f32 %v3165, %v4035
      %v4154 = vadd.f32 %v3166, %v4040
      %v4155 = vadd.f32 %v3167, %v4045
      %v4156 = vadd.f32 %v3168, %v4050
      %v4157 = vadd.f32 %v3169, %v4055
      %v4158 = vadd.f32 %v3170, %v4060
      %v4159 = vadd.f32 %v3171, %v4065
      %v4160 = vadd.f32 %v3172, %v4070
      %v4161 = vadd.f32 %v3173, %v4075
      %v4162 = vadd.f32 %v3174, %v4080
      %v4163 = vadd.f32 %v3175, %v4085
      %v4164 = vadd.f32 %v3176, %v4090
      %v4165 = vadd.f32 %v3177, %v4095
      %v4166 = vadd.f32 %v3178, %v4100
      %v4167 = vadd.f32 %v3179, %v4105
      %v4168 = vadd.f32 %v3180, %v4110
      %v4169 = vadd.f32 %v3181, %v4115
      %v4170 = vadd.f32 %v3182, %v4120
      %v4171 = vadd.f32 %v3183, %v4125
      %v4172 = vadd.f32 %v3184, %v4130
      %v4173 = vadd.f32 %v3185, %v4135
      %v4174 = vadd.f32 %v3186, %v4140
      %4175 = vst.msk [vmem:[%s278] sm:$0xff] %vm3196, %v4143
      %4176 = vst.msk [vmem:[%s278 + $0x8] sm:$0xff] %vm3196, %v4144
      %4177 = vst.msk [vmem:[%s278 + $0x10] sm:$0xff] %vm3196, %v4145
      %4178 = vst.msk [vmem:[%s278 + $0x18] sm:$0xff] %vm3196, %v4146
      %4179 = vst.msk [vmem:[%s278 + $0x20] sm:$0xff] %vm3196, %v4147
      %4180 = vst.msk [vmem:[%s278 + $0x28] sm:$0xff] %vm3196, %v4148
      %4181 = vst.msk [vmem:[%s278 + $0x30] sm:$0xff] %vm3196, %v4149
      %4182 = vst.msk [vmem:[%s278 + $0x38] sm:$0xff] %vm3196, %v4150
      %4183 = vst.msk [vmem:[%s278 + $0x40] sm:$0xff] %vm3196, %v4151
      %4184 = vst.msk [vmem:[%s278 + $0x48] sm:$0xff] %vm3196, %v4152
      %4185 = vst.msk [vmem:[%s278 + $0x50] sm:$0xff] %vm3196, %v4153
      %4186 = vst.msk [vmem:[%s278 + $0x58] sm:$0xff] %vm3196, %v4154
      %4187 = vst.msk [vmem:[%s278 + $0x60] sm:$0xff] %vm3196, %v4155
      %4188 = vst.msk [vmem:[%s278 + $0x68] sm:$0xff] %vm3196, %v4156
      %4189 = vst.msk [vmem:[%s278 + $0x70] sm:$0xff] %vm3196, %v4157
      %4190 = vst.msk [vmem:[%s278 + $0x78] sm:$0xff] %vm3196, %v4158
      %4191 = vst.msk [vmem:[%s278 + $0x80] sm:$0xff] %vm3196, %v4159
      %4192 = vst.msk [vmem:[%s278 + $0x88] sm:$0xff] %vm3196, %v4160
      %4193 = vst.msk [vmem:[%s278 + $0x90] sm:$0xff] %vm3196, %v4161
      %4194 = vst.msk [vmem:[%s278 + $0x98] sm:$0xff] %vm3196, %v4162
      %4195 = vst.msk [vmem:[%s278 + $0xa0] sm:$0xff] %vm3196, %v4163
      %4196 = vst.msk [vmem:[%s278 + $0xa8] sm:$0xff] %vm3196, %v4164
      %4197 = vst.msk [vmem:[%s278 + $0xb0] sm:$0xff] %vm3196, %v4165
      %4198 = vst.msk [vmem:[%s278 + $0xb8] sm:$0xff] %vm3196, %v4166
      %4199 = vst.msk [vmem:[%s278 + $0xc0] sm:$0xff] %vm3196, %v4167
      %4200 = vst.msk [vmem:[%s278 + $0xc8] sm:$0xff] %vm3196, %v4168
      %4201 = vst.msk [vmem:[%s278 + $0xd0] sm:$0xff] %vm3196, %v4169
      %4202 = vst.msk [vmem:[%s278 + $0xd8] sm:$0xff] %vm3196, %v4170
      %4203 = vst.msk [vmem:[%s278 + $0xe0] sm:$0xff] %vm3196, %v4171
      %4204 = vst.msk [vmem:[%s278 + $0xe8] sm:$0xff] %vm3196, %v4172
      %4205 = vst.msk [vmem:[%s278 + $0xf0] sm:$0xff] %vm3196, %v4173
      %4206 = vst.msk [vmem:[%s278 + $0xf8] sm:$0xff] %vm3196, %v4174
      %p4207 = scmp.lt.s32.totalorder %s18, 1
      %s4208 = scalar_select %p4207, %s18, 1
      %s4209 = smul.addr %s4208, 32
      %s4210 = smul.addr %s4209, 8
      %s4211 = scalar_lea.vmem %s7, %s4210
      // Predicated region
      $region49: #{degae_forward.3} parent=47 // pred_check
        %p4212 = pneg %p188
      $region50: #{degae_forward.3} parent=47 // pred_check_branch
        %4214 = sbr.rel (%p4212) target = $region52
      $region51: #{degae_forward.3} parent=47 // pred_region
        _
      $region52: #{degae_forward.3} parent=47 // pred_fallthru
        _
    $region48: #{degae_forward.3} parent=5 // pred_fallthru
      _
    %p4215 = scmp.le.s32.totalorder 2, %s13
    // Predicated region
    $region53: #{degae_forward.3} parent=5 // pred_check
      %p4216 = pneg %p4215
    $region54: #{degae_forward.3} parent=5 // pred_check_branch
      %4218 = sbr.rel (%p4216) target = $region56
    $region55: #{degae_forward.3} parent=5 // pred_region
      %s4219 = ssub.s32 %s13, 2
      // Predicated region
      $region57: #{degae_forward.3} parent=55 // pred_check
        %p4220 = pneg %p194
      $region58: #{degae_forward.3} parent=55 // pred_check_branch
        %4222 = sbr.rel (%p4220) target = $region60
      $region59: #{degae_forward.3} parent=55 // pred_region
        %p4223 = scmp.lt.s32.totalorder %s19, 1
        %s4224 = scalar_select %p4223, %s19, 1
        %s4225 = smul.addr %s4224, 32
        %s4226 = smul.addr %s4225, 8
        %s4227 = scalar_lea.vmem %s7, %s4226
      $region60: #{degae_forward.3} parent=55 // pred_fallthru
        _
    $region56: #{degae_forward.3} parent=5 // pred_fallthru
      _
  $region6: #{degae_forward.3} parent=0 // loop_footer
    %s17 = sadd.s32 1, %s13
  $region7: #{degae_forward.3} parent=0 // loop_footer_branch
    %12 = sbr.rel target = $region3
  $region8: #{degae_forward.3} parent=0 // loop_exit
    _

// kernel: degae_forward.4
$region0: #{degae_forward.4}
  #allocation0 [shape = 'u32[]', space=smem, size = 0x4, offset = 0x4, fixed_abs, tag = 'smem constant byte address 0x4 - core index']
  #allocation1 [shape = 'u32[144,128]{1,0:T(1,128)}', space=vmem, size = 0x12000, scoped, tag = 'internal scratch']
  %s0 = inlined_call_operand.vmem [shape: f32[2,18,18,8], index: 0, kind: input, shape index: {}]
  %s1 = inlined_call_operand.vmem [shape: f32[2,1,1], index: 1, kind: input, shape index: {}]
  %s2 = inlined_call_operand.vmem [shape: f32[9,8,16], index: 2, kind: input, shape index: {}]
  %s3 = inlined_call_operand.vmem [shape: f32[1,16], index: 3, kind: input, shape index: {}]
  %s4 = inlined_call_operand.vmem [shape: f32[17,32], index: 4, kind: input, shape index: {}]
  %s5 = inlined_call_operand.vmem [shape: f32[1,32], index: 5, kind: input, shape index: {}]
  %s6 = inlined_call_operand.vmem [shape: f32[2,1,32], index: 6, kind: output, shape index: {}]
  %s7 = sld [smem:[#allocation0]]
  $region57: #{degae_forward.4} parent=0
    _
  %s9 = ssub.s32 1, %s7
  %s10 = scalar_select 0, %s9, %s7
  loop: start=0, step=1, limit=4
  $region2: #{degae_forward.4} parent=0 // loop_pre_header
    _
  $region3: #{degae_forward.4} parent=0 // loop_header
    %s12 = sphi 0, %s16
    %p13 = scmp.ge.s32.totalorder %s12, 4
    %s22 = sphi 0, %s24
    %s25 = sphi 0, %s22
    %s26 = sphi 0, %s25
    %s42 = sphi 0, %s26
    %s48 = sphi 0, %s50
    %s51 = sphi 0, %s48
    %s52 = sphi 0, %s51
    %s68 = sphi 0, %s52
    %s72 = sphi 0, %s72
    %s74 = sphi 0, %s72
    %s75 = sphi 0, %s74
    %s89 = sphi 0, %s75
    %s93 = sphi 0, %s93
    %s95 = sphi 0, %s93
    %s96 = sphi 0, %s95
    %s110 = sphi 0, %s96
    %s114 = sphi 0, %s114
    %s116 = sphi 0, %s114
    %s117 = sphi 0, %s116
    %s131 = sphi 0, %s117
    %s135 = sphi 0, %s135
    %s137 = sphi 0, %s135
    %s138 = sphi 0, %s137
    %s152 = sphi 0, %s138
    %s158 = sphi 0, %s160
    %s161 = sphi 0, %s158
    %s162 = sphi 0, %s161
    %s178 = sphi 0, %s162
  $region4: #{degae_forward.4} parent=0 // loop_header_branch
    %15 = sbr.rel (%p13) target = $region8
  $region5: #{degae_forward.4} parent=0 // loop_body
    %s17 = ssub.s32 %s12, 1
    %s18 = ssub.s32 %s12, 2
    %s19 = sadd.s32 %s12, 1
    %s20 = ssub.s32 %s12, %s19
    %p21 = scmp.eq.s32.totalorder %s20, 0
    %s23 = sadd.s32 %s22, 1
    %s24 = scalar_select %p21, %s22, %s23
    %p27 = pneg %p21
    %p28 = scmp.eq.s32.totalorder %s12, 1
    %p29 = por %p27, %p28
    %p30 = scmp.ne.s32.totalorder %s22, %s25
    %p31 = scmp.eq.s32.totalorder %s12, 0
    %p32 = por %p30, %p31
    %p33 = scmp.ne.s32.totalorder %s22, %s25
    %p34 = scmp.eq.s32.totalorder %s17, 1
    %p35 = por %p33, %p34
    %p36 = scmp.ne.s32.totalorder %s25, %s26
    %p37 = scmp.eq.s32.totalorder %s17, 0
    %p38 = por %p36, %p37
    %p39 = scmp.ne.s32.totalorder %s25, %s26
    %p40 = scmp.eq.s32.totalorder %s18, 1
    %p41 = por %p39, %p40
    %p43 = scmp.ne.s32.totalorder %s26, %s42
    %p44 = scmp.eq.s32.totalorder %s18, 0
    %p45 = por %p43, %p44
    %s46 = ssub.s32 %s12, %s19
    %p47 = scmp.eq.s32.totalorder %s46, 0
    %s49 = sadd.s32 %s48, 1
    %s50 = scalar_select %p47, %s48, %s49
    %p53 = pneg %p47
    %p54 = scmp.eq.s32.totalorder %s12, 1
    %p55 = por %p53, %p54
    %p56 = scmp.ne.s32.totalorder %s48, %s51
    %p57 = scmp.eq.s32.totalorder %s12, 0
    %p58 = por %p56, %p57
    %p59 = scmp.ne.s32.totalorder %s48, %s51
    %p60 = scmp.eq.s32.totalorder %s17, 1
    %p61 = por %p59, %p60
    %p62 = scmp.ne.s32.totalorder %s51, %s52
    %p63 = scmp.eq.s32.totalorder %s17, 0
    %p64 = por %p62, %p63
    %p65 = scmp.ne.s32.totalorder %s51, %s52
    %p66 = scmp.eq.s32.totalorder %s18, 1
    %p67 = por %p65, %p66
    %p69 = scmp.ne.s32.totalorder %s52, %s68
    %p70 = scmp.eq.s32.totalorder %s18, 0
    %p71 = por %p69, %p70
    %s73 = sadd.s32 %s72, 1
    %p76 = scmp.eq.s32.totalorder %s12, 1
    %p77 = scmp.ne.s32.totalorder %s72, %s74
    %p78 = scmp.eq.s32.totalorder %s12, 0
    %p79 = por %p77, %p78
    %p80 = scmp.ne.s32.totalorder %s72, %s74
    %p81 = scmp.eq.s32.totalorder %s17, 1
    %p82 = por %p80, %p81
    %p83 = scmp.ne.s32.totalorder %s74, %s75
    %p84 = scmp.eq.s32.totalorder %s17, 0
    %p85 = por %p83, %p84
    %p86 = scmp.ne.s32.totalorder %s74, %s75
    %p87 = scmp.eq.s32.totalorder %s18, 1
    %p88 = por %p86, %p87
    %p90 = scmp.ne.s32.totalorder %s75, %s89
    %p91 = scmp.eq.s32.totalorder %s18, 0
    %p92 = por %p90, %p91
    %s94 = sadd.s32 %s93, 1
    %p97 = scmp.eq.s32.totalorder %s12, 1
    %p98 = scmp.ne.s32.totalorder %s93, %s95
    %p99 = scmp.eq.s32.totalorder %s12, 0
    %p100 = por %p98, %p99
    %p101 = scmp.ne.s32.totalorder %s93, %s95
    %p102 = scmp.eq.s32.totalorder %s17, 1
    %p103 = por %p101, %p102
    %p104 = scmp.ne.s32.totalorder %s95, %s96
    %p105 = scmp.eq.s32.totalorder %s17, 0
    %p106 = por %p104, %p105
    %p107 = scmp.ne.s32.totalorder %s95, %s96
    %p108 = scmp.eq.s32.totalorder %s18, 1
    %p109 = por %p107, %p108
    %p111 = scmp.ne.s32.totalorder %s96, %s110
    %p112 = scmp.eq.s32.totalorder %s18, 0
    %p113 = por %p111, %p112
    %s115 = sadd.s32 %s114, 1
    %p118 = scmp.eq.s32.totalorder %s12, 1
    %p119 = scmp.ne.s32.totalorder %s114, %s116
    %p120 = scmp.eq.s32.totalorder %s12, 0
    %p121 = por %p119, %p120
    %p122 = scmp.ne.s32.totalorder %s114, %s116
    %p123 = scmp.eq.s32.totalorder %s17, 1
    %p124 = por %p122, %p123
    %p125 = scmp.ne.s32.totalorder %s116, %s117
    %p126 = scmp.eq.s32.totalorder %s17, 0
    %p127 = por %p125, %p126
    %p128 = scmp.ne.s32.totalorder %s116, %s117
    %p129 = scmp.eq.s32.totalorder %s18, 1
    %p130 = por %p128, %p129
    %p132 = scmp.ne.s32.totalorder %s117, %s131
    %p133 = scmp.eq.s32.totalorder %s18, 0
    %p134 = por %p132, %p133
    %s136 = sadd.s32 %s135, 1
    %p139 = scmp.eq.s32.totalorder %s12, 1
    %p140 = scmp.ne.s32.totalorder %s135, %s137
    %p141 = scmp.eq.s32.totalorder %s12, 0
    %p142 = por %p140, %p141
    %p143 = scmp.ne.s32.totalorder %s135, %s137
    %p144 = scmp.eq.s32.totalorder %s17, 1
    %p145 = por %p143, %p144
    %p146 = scmp.ne.s32.totalorder %s137, %s138
    %p147 = scmp.eq.s32.totalorder %s17, 0
    %p148 = por %p146, %p147
    %p149 = scmp.ne.s32.totalorder %s137, %s138
    %p150 = scmp.eq.s32.totalorder %s18, 1
    %p151 = por %p149, %p150
    %p153 = scmp.ne.s32.totalorder %s138, %s152
    %p154 = scmp.eq.s32.totalorder %s18, 0
    %p155 = por %p153, %p154
    %s156 = ssub.s32 %s12, %s19
    %p157 = scmp.eq.s32.totalorder %s156, 0
    %s159 = sadd.s32 %s158, 1
    %s160 = scalar_select %p157, %s158, %s159
    %p163 = pneg %p157
    %p164 = scmp.eq.s32.totalorder %s12, 1
    %p165 = por %p163, %p164
    %p166 = scmp.ne.s32.totalorder %s158, %s161
    %p167 = scmp.eq.s32.totalorder %s12, 0
    %p168 = por %p166, %p167
    %p169 = scmp.ne.s32.totalorder %s158, %s161
    %p170 = scmp.eq.s32.totalorder %s17, 1
    %p171 = por %p169, %p170
    %p172 = scmp.ne.s32.totalorder %s161, %s162
    %p173 = scmp.eq.s32.totalorder %s17, 0
    %p174 = por %p172, %p173
    %p175 = scmp.ne.s32.totalorder %s161, %s162
    %p176 = scmp.eq.s32.totalorder %s18, 1
    %p177 = por %p175, %p176
    %p179 = scmp.ne.s32.totalorder %s162, %s178
    %p180 = scmp.eq.s32.totalorder %s18, 0
    %p181 = por %p179, %p180
    %p182 = scmp.le.s32.totalorder 1, %s12
    %p183 = scmp.lt.s32.totalorder %s12, 3
    %p184 = pnand %p182, %p183
    %p185 = pneg %p184
    // Predicated region
    $region9: #{degae_forward.4} parent=5 // pred_check
      _
    $region10: #{degae_forward.4} parent=5 // pred_check_branch
      %187 = sbr.rel (%p184) target = $region12
    $region11: #{degae_forward.4} parent=5 // pred_region
      %s188 = ssub.s32 %s12, 1
      // Predicated region
      $region13: #{degae_forward.4} parent=11 // pred_check
        %p189 = pneg %p85
      $region14: #{degae_forward.4} parent=11 // pred_check_branch
        %191 = sbr.rel (%p189) target = $region16
      $region15: #{degae_forward.4} parent=11 // pred_region
        _
      $region16: #{degae_forward.4} parent=11 // pred_fallthru
        _
      // Predicated region
      $region17: #{degae_forward.4} parent=11 // pred_check
        %p192 = pneg %p106
      $region18: #{degae_forward.4} parent=11 // pred_check_branch
        %194 = sbr.rel (%p192) target = $region20
      $region19: #{degae_forward.4} parent=11 // pred_region
        _
      $region20: #{degae_forward.4} parent=11 // pred_fallthru
        _
      // Predicated region
      $region21: #{degae_forward.4} parent=11 // pred_check
        %p195 = pneg %p127
      $region22: #{degae_forward.4} parent=11 // pred_check_branch
        %197 = sbr.rel (%p195) target = $region24
      $region23: #{degae_forward.4} parent=11 // pred_region
        _
      $region24: #{degae_forward.4} parent=11 // pred_fallthru
        _
      // Predicated region
      $region25: #{degae_forward.4} parent=11 // pred_check
        %p198 = pneg %p148
      $region26: #{degae_forward.4} parent=11 // pred_check_branch
        %200 = sbr.rel (%p198) target = $region28
      $region27: #{degae_forward.4} parent=11 // pred_region
        _
      $region28: #{degae_forward.4} parent=11 // pred_fallthru
        _
    $region12: #{degae_forward.4} parent=5 // pred_fallthru
      _
    %p201 = scmp.lt.s32.totalorder %s12, 2
    // Predicated region
    $region29: #{degae_forward.4} parent=5 // pred_check
      %p202 = pneg %p201
    $region30: #{degae_forward.4} parent=5 // pred_check_branch
      %204 = sbr.rel (%p202) target = $region32
    $region31: #{degae_forward.4} parent=5 // pred_region
      // Predicated region
      $region33: #{degae_forward.4} parent=31 // pred_check
        %p205 = pneg %p32
      $region34: #{degae_forward.4} parent=31 // pred_check_branch
        %207 = sbr.rel (%p205) target = $region36
      $region35: #{degae_forward.4} parent=31 // pred_region
        %p208 = scmp.lt.s32.totalorder %s12, 1
        %s209 = scalar_select %p208, %s12, 1
        %s210 = smul.addr %s209, 54
        %s211 = smul.addr %s210, 8
        %s212 = scalar_lea.vmem %s0, %s211
      $region36: #{degae_forward.4} parent=31 // pred_fallthru
        _
      // Predicated region
      $region37: #{degae_forward.4} parent=31 // pred_check
        %p213 = pneg %p58
      $region38: #{degae_forward.4} parent=31 // pred_check_branch
        %215 = sbr.rel (%p213) target = $region40
      $region39: #{degae_forward.4} parent=31 // pred_region
        %p216 = scmp.lt.s32.totalorder %s12, 1
        %s217 = scalar_select %p216, %s12, 1
        %s218 = scalar_lea.vmem %s1, %s217
      $region40: #{degae_forward.4} parent=31 // pred_fallthru
        _
    $region32: #{degae_forward.4} parent=5 // pred_fallthru
      _
    %p219 = scmp.le.s32.totalorder 1, %s12
    %p220 = scmp.lt.s32.totalorder %s12, 3
    %p221 = pnand %p219, %p220
    %p222 = pneg %p221
    // Predicated region
    $region41: #{degae_forward.4} parent=5 // pred_check
      _
    $region42: #{degae_forward.4} parent=5 // pred_check_branch
      %224 = sbr.rel (%p221) target = $region44
    $region43: #{degae_forward.4} parent=5 // pred_region
      %s225 = ssub.s32 %s12, 1
      %p226 = scmp.lt.s32.totalorder %s17, 1
      %s227 = scalar_select %p226, %s17, 1
      %s228 = smul.addr %s227, 54
      %s229 = smul.addr %s228, 8
      %s230 = scalar_lea.vmem %s0, %s229
      %p231 = pneg %p38
      %p232 = pneg %p35
      %p233 = scmp.lt.s32.totalorder %s17, 1
      %s234 = scalar_select %p233, %s17, 1
      %s235 = scalar_lea.vmem %s1, %s234
      %p236 = pneg %p64
      %p237 = pneg %p61
      %p238 = pneg %p85
      %p239 = pneg %p82
      %p240 = pneg %p106
      %p241 = pneg %p103
      %p242 = pneg %p127
      %p243 = pneg %p124
      %p244 = pneg %p148
      %p245 = pneg %p145
      %p246 = pneg %p174
      %p247 = pneg %p171
      %p248 = scmp.lt.s32.totalorder %s17, 1
      %s249 = scalar_select %p248, %s17, 1
      %s250 = scalar_lea.vmem %s6, %s249
      %p251 = scmp.lt.s32.totalorder %s17, 1
      %s252 = scalar_select %p251, %s17, 1
      %s253 = smul.addr %s252, 54
      %s254 = smul.addr %s253, 8
      %s255 = scalar_lea.vmem %s0, %s254
      %p256 = scmp.lt.s32.totalorder %s17, 1
      %s257 = scalar_select %p256, %s17, 1
      %s258 = scalar_lea.vmem %s1, %s257
      %p259 = scmp.lt.s32.totalorder %s17, 1
      %s260 = scalar_select %p259, %s17, 1
      %s261 = scalar_lea.vmem %s6, %s260
      %v262 = vld [vmem:[%s255] sm:$0xff]
      %v263 = vld [vmem:[%s255 + $0x8] sm:$0xff]
      %v264 = vld [vmem:[%s255 + $0x10] sm:$0x3]
      %v265 = vld [vmem:[%s255 + $0x18] sm:$0xff]
      %v266 = vld [vmem:[%s255 + $0x20] sm:$0xff]
      %v267 = vld [vmem:[%s255 + $0x28] sm:$0x3]
      %v268 = vld [vmem:[%s255 + $0x30] sm:$0xff]
      %v269 = vld [vmem:[%s255 + $0x38] sm:$0xff]
      %v270 = vld [vmem:[%s255 + $0x40] sm:$0x3]
      %v271 = vld [vmem:[%s255 + $0x48] sm:$0xff]
      %v272 = vld [vmem:[%s255 + $0x50] sm:$0xff]
      %v273 = vld [vmem:[%s255 + $0x58] sm:$0x3]
      %v274 = vld [vmem:[%s255 + $0x60] sm:$0xff]
      %v275 = vld [vmem:[%s255 + $0x68] sm:$0xff]
      %v276 = vld [vmem:[%s255 + $0x70] sm:$0x3]
      %v277 = vld [vmem:[%s255 + $0x78] sm:$0xff]
      %v278 = vld [vmem:[%s255 + $0x80] sm:$0xff]
      %v279 = vld [vmem:[%s255 + $0x88] sm:$0x3]
      %v280 = vld [vmem:[%s255 + $0x90] sm:$0xff]
      %v281 = vld [vmem:[%s255 + $0x98] sm:$0xff]
      %v282 = vld [vmem:[%s255 + $0xa0] sm:$0x3]
      %v283 = vld [vmem:[%s255 + $0xa8] sm:$0xff]
      %v284 = vld [vmem:[%s255 + $0xb0] sm:$0xff]
      %v285 = vld [vmem:[%s255 + $0xb8] sm:$0x3]
      %v286 = vld [vmem:[%s255 + $0xc0] sm:$0xff]
      %v287 = vld [vmem:[%s255 + $0xc8] sm:$0xff]
      %v288 = vld [vmem:[%s255 + $0xd0] sm:$0x3]
      %v289 = vld [vmem:[%s255 + $0xd8] sm:$0xff]
      %v290 = vld [vmem:[%s255 + $0xe0] sm:$0xff]
      %v291 = vld [vmem:[%s255 + $0xe8] sm:$0x3]
      %v292 = vld [vmem:[%s255 + $0xf0] sm:$0xff]
      %v293 = vld [vmem:[%s255 + $0xf8] sm:$0xff]
      %v294 = vld [vmem:[%s255 + $0x100] sm:$0x3]
      %v295 = vld [vmem:[%s255 + $0x108] sm:$0xff]
      %v296 = vld [vmem:[%s255 + $0x110] sm:$0xff]
      %v297 = vld [vmem:[%s255 + $0x118] sm:$0x3]
      %v298 = vld [vmem:[%s255 + $0x120] sm:$0xff]
      %v299 = vld [vmem:[%s255 + $0x128] sm:$0xff]
      %v300 = vld [vmem:[%s255 + $0x130] sm:$0x3]
      %v301 = vld [vmem:[%s255 + $0x138] sm:$0xff]
      %v302 = vld [vmem:[%s255 + $0x140] sm:$0xff]
      %v303 = vld [vmem:[%s255 + $0x148] sm:$0x3]
      %v304 = vld [vmem:[%s255 + $0x150] sm:$0xff]
      %v305 = vld [vmem:[%s255 + $0x158] sm:$0xff]
      %v306 = vld [vmem:[%s255 + $0x160] sm:$0x3]
      %v307 = vld [vmem:[%s255 + $0x168] sm:$0xff]
      %v308 = vld [vmem:[%s255 + $0x170] sm:$0xff]
      %v309 = vld [vmem:[%s255 + $0x178] sm:$0x3]
      %v310 = vld [vmem:[%s255 + $0x180] sm:$0xff]
      %v311 = vld [vmem:[%s255 + $0x188] sm:$0xff]
      %v312 = vld [vmem:[%s255 + $0x190] sm:$0x3]
      %v313 = vld [vmem:[%s255 + $0x198] sm:$0xff]
      %v314 = vld [vmem:[%s255 + $0x1a0] sm:$0xff]
      %v315 = vld [vmem:[%s255 + $0x1a8] sm:$0x3]
      %v316 = vld [vmem:[%s2] sm:$0xff]
      %vm365 = vcmask 1046528
      %v366 = vrot.slane %v262, 1
      %v367 = vrot.slane %v263, 1
      %v368 = vsel %vm365, %v366, %v367
      %v369 = vrot.slane %v264, 1
      %v370 = vsel %vm365, %v367, %v369
      %v371 = vrot.slane %v265, 1
      %v372 = vrot.slane %v266, 1
      %v373 = vsel %vm365, %v371, %v372
      %v374 = vrot.slane %v267, 1
      %v375 = vsel %vm365, %v372, %v374
      %v376 = vrot.slane %v268, 1
      %v377 = vrot.slane %v269, 1
      %v378 = vsel %vm365, %v376, %v377
      %v379 = vrot.slane %v270, 1
      %v380 = vsel %vm365, %v377, %v379
      %v381 = vrot.slane %v271, 1
      %v382 = vrot.slane %v272, 1
      %v383 = vsel %vm365, %v381, %v382
      %v384 = vrot.slane %v273, 1
      %v385 = vsel %vm365, %v382, %v384
      %v386 = vrot.slane %v274, 1
      %v387 = vrot.slane %v275, 1
      %v388 = vsel %vm365, %v386, %v387
      %v389 = vrot.slane %v276, 1
      %v390 = vsel %vm365, %v387, %v389
      %v391 = vrot.slane %v277, 1
      %v392 = vrot.slane %v278, 1
      %v393 = vsel %vm365, %v391, %v392
      %v394 = vrot.slane %v279, 1
      %v395 = vsel %vm365, %v392, %v394
      %v396 = vrot.slane %v280, 1
      %v397 = vrot.slane %v281, 1
      %v398 = vsel %vm365, %v396, %v397
      %v399 = vrot.slane %v282, 1
      %v400 = vsel %vm365, %v397, %v399
      %v401 = vrot.slane %v283, 1
      %v402 = vrot.slane %v284, 1
      %v403 = vsel %vm365, %v401, %v402
      %v404 = vrot.slane %v285, 1
      %v405 = vsel %vm365, %v402, %v404
      %v406 = vrot.slane %v286, 1
      %v407 = vrot.slane %v287, 1
      %v408 = vsel %vm365, %v406, %v407
      %v409 = vrot.slane %v288, 1
      %v410 = vsel %vm365, %v407, %v409
      %v411 = vrot.slane %v289, 1
      %v412 = vrot.slane %v290, 1
      %v413 = vsel %vm365, %v411, %v412
      %v414 = vrot.slane %v291, 1
      %v415 = vsel %vm365, %v412, %v414
      %v416 = vrot.slane %v292, 1
      %v417 = vrot.slane %v293, 1
      %v418 = vsel %vm365, %v416, %v417
      %v419 = vrot.slane %v294, 1
      %v420 = vsel %vm365, %v417, %v419
      %v421 = vrot.slane %v295, 1
      %v422 = vrot.slane %v296, 1
      %v423 = vsel %vm365, %v421, %v422
      %v424 = vrot.slane %v297, 1
      %v425 = vsel %vm365, %v422, %v424
      %v426 = vrot.slane %v298, 1
      %v427 = vrot.slane %v299, 1
      %v428 = vsel %vm365, %v426, %v427
      %v429 = vrot.slane %v300, 1
      %v430 = vsel %vm365, %v427, %v429
      %v431 = vrot.slane %v301, 1
      %v432 = vrot.slane %v302, 1
      %v433 = vsel %vm365, %v431, %v432
      %v434 = vrot.slane %v303, 1
      %v435 = vsel %vm365, %v432, %v434
      %v436 = vrot.slane %v304, 1
      %v437 = vrot.slane %v305, 1
      %v438 = vsel %vm365, %v436, %v437
      %v439 = vrot.slane %v306, 1
      %v440 = vsel %vm365, %v437, %v439
      %v441 = vrot.slane %v307, 1
      %v442 = vrot.slane %v308, 1
      %v443 = vsel %vm365, %v441, %v442
      %v444 = vrot.slane %v309, 1
      %v445 = vsel %vm365, %v442, %v444
      %s446 = scalar_lea.vmem %s2, 8
      %v447 = vld [vmem:[%s446] sm:$0xff]
      %vm448 = vcmask 64512
      %v449 = vsel %vm448, %v368, 0
      %v451 = vsel %vm448, %v370, 0
      %v453 = vsel %vm448, %v373, 0
      %v455 = vsel %vm448, %v375, 0
      %v457 = vsel %vm448, %v378, 0
      %v459 = vsel %vm448, %v380, 0
      %v461 = vsel %vm448, %v383, 0
      %v463 = vsel %vm448, %v385, 0
      %v465 = vsel %vm448, %v388, 0
      %v467 = vsel %vm448, %v390, 0
      %v469 = vsel %vm448, %v393, 0
      %v471 = vsel %vm448, %v395, 0
      %v473 = vsel %vm448, %v398, 0
      %v475 = vsel %vm448, %v400, 0
      %v477 = vsel %vm448, %v403, 0
      %v479 = vsel %vm448, %v405, 0
      %v481 = vsel %vm448, %v408, 0
      %v483 = vsel %vm448, %v410, 0
      %v485 = vsel %vm448, %v413, 0
      %v487 = vsel %vm448, %v415, 0
      %v489 = vsel %vm448, %v418, 0
      %v491 = vsel %vm448, %v420, 0
      %v493 = vsel %vm448, %v423, 0
      %v495 = vsel %vm448, %v425, 0
      %v497 = vsel %vm448, %v428, 0
      %v499 = vsel %vm448, %v430, 0
      %v501 = vsel %vm448, %v433, 0
      %v503 = vsel %vm448, %v435, 0
      %v505 = vsel %vm448, %v438, 0
      %v507 = vsel %vm448, %v440, 0
      %v509 = vsel %vm448, %v443, 0
      %v511 = vsel %vm448, %v445, 0
      %513 = vmatprep.subr.mxu0 0.0
      %514 = vmatpush1.msra.mxu0 %v447
      %515 = vmatprep.subr.mxu0 0.0
      %516 = vmatpush1.msra.mxu0 0.0
      %517 = vmatprep.subr.mxu0 0.0
      %518 = vmatpush1.msra.mxu0 0.0
      %519 = vmatprep.subr.mxu0 0.0
      %520 = vmatpush1.msra.mxu0 0.0
      %521 = vmatprep.subr.mxu0 0.0
      %522 = vmatpush1.msra.mxu0 0.0
      %523 = vmatprep.subr.mxu0 0.0
      %524 = vmatpush1.msra.mxu0 0.0
      %525 = vmatprep.subr.mxu0 0.0
      %526 = vmatpush1.msra.mxu0 0.0
      %527 = vmatprep.subr.mxu0 0.0
      %528 = vmatpush1.msra.mxu0 0.0
      %529 = vmatprep.subr.mxu0 0.0
      %530 = vmatpush1.msra.mxu0 0.0
      %531 = vmatprep.subr.mxu0 0.0
      %532 = vmatpush1.msra.mxu0 0.0
      %533 = vmatprep.subr.mxu0 0.0
      %534 = vmatpush1.msra.mxu0 0.0
      %535 = vmatprep.subr.mxu0 0.0
      %536 = vmatpush1.msra.mxu0 0.0
      %537 = vmatprep.subr.mxu0 0.0
      %538 = vmatpush1.msra.mxu0 0.0
      %539 = vmatprep.subr.mxu0 0.0
      %540 = vmatpush1.msra.mxu0 0.0
      %541 = vmatprep.subr.mxu0 0.0
      %542 = vmatpush1.msra.mxu0 0.0
      %543 = vmatprep.subr.mxu0 0.0
      %544 = vmatpush1.msra.mxu0 0.0
      %545 = vmatprep.subr.mxu0 0.0
      %546 = vmatpush1.msra.mxu0 0.0
      %547 = vmatprep.subr.mxu0 0.0
      %548 = vmatpush1.msra.mxu0 0.0
      %549 = vmatprep.subr.mxu0 0.0
      %550 = vmatpush1.msra.mxu0 0.0
      %551 = vmatprep.subr.mxu0 0.0
      %552 = vmatpush1.msra.mxu0 0.0
      %553 = vmatprep.subr.mxu0 0.0
      %554 = vmatpush1.msra.mxu0 0.0
      %555 = vmatprep.subr.mxu0 0.0
      %556 = vmatpush1.msra.mxu0 0.0
      %557 = vmatprep.subr.mxu0 0.0
      %558 = vmatpush1.msra.mxu0 0.0
      %559 = vmatprep.subr.mxu0 0.0
      %560 = vmatpush1.msra.mxu0 0.0
      %561 = vmatprep.subr.mxu0 0.0
      %562 = vmatpush1.msra.mxu0 0.0
      %563 = vmatprep.subr.mxu0 0.0
      %564 = vmatpush1.msra.mxu0 0.0
      %565 = vmatprep.subr.mxu0 0.0
      %566 = vmatpush1.msra.mxu0 0.0
      %567 = vmatprep.subr.mxu0 0.0
      %568 = vmatpush1.msra.mxu0 0.0
      %569 = vmatprep.subr.mxu0 0.0
      %570 = vmatpush1.msra.mxu0 0.0
      %571 = vmatprep.subr.mxu0 0.0
      %572 = vmatpush1.msra.mxu0 0.0
      %573 = vmatprep.subr.mxu0 0.0
      %574 = vmatpush1.msra.mxu0 0.0
      %575 = vmatprep.subr.mxu0 0.0
      %576 = vmatpush1.msra.mxu0 0.0
      %577 = vmatprep.mubr.f32.mxu0 0.0
      %578 = vmatmul.mubr.f32.gmra.mrb[0].mxu0 %v449
      %v579 = vpop.f32.mrb[0].mxu0
      %v580 = vadd.f32 0.0, %v579
      %v581 = vpop.f32.mrb[0].mxu0
      %582 = vmatprep.mubr.f32.mxu0 0.0
      %583 = vmatmul.mubr.f32.gmra.mrb[0].mxu0 %v451
      %v584 = vpop.f32.mrb[0].mxu0
      %v585 = vadd.f32 0.0, %v584
      %v586 = vpop.f32.mrb[0].mxu0
      %587 = vmatprep.mubr.f32.mxu0 0.0
      %588 = vmatmul.mubr.f32.gmra.mrb[0].mxu0 %v453
      %v589 = vpop.f32.mrb[0].mxu0
      %v590 = vadd.f32 0.0, %v589
      %v591 = vpop.f32.mrb[0].mxu0
      %592 = vmatprep.mubr.f32.mxu0 0.0
      %593 = vmatmul.mubr.f32.gmra.mrb[0].mxu0 %v455
      %v594 = vpop.f32.mrb[0].mxu0
      %v595 = vadd.f32 0.0, %v594
      %v596 = vpop.f32.mrb[0].mxu0
      %597 = vmatprep.mubr.f32.mxu0 0.0
      %598 = vmatmul.mubr.f32.gmra.mrb[0].mxu0 %v457
      %v599 = vpop.f32.mrb[0].mxu0
      %v600 = vadd.f32 0.0, %v599
      %v601 = vpop.f32.mrb[0].mxu0
      %602 = vmatprep.mubr.f32.mxu0 0.0
      %603 = vmatmul.mubr.f32.gmra.mrb[0].mxu0 %v459
      %v604 = vpop.f32.mrb[0].mxu0
      %v605 = vadd.f32 0.0, %v604
      %v606 = vpop.f32.mrb[0].mxu0
      %607 = vmatprep.mubr.f32.mxu0 0.0
      %608 = vmatmul.mubr.f32.gmra.mrb[0].mxu0 %v461
      %v609 = vpop.f32.mrb[0].mxu0
      %v610 = vadd.f32 0.0, %v609
      %v611 = vpop.f32.mrb[0].mxu0
      %612 = vmatprep.mubr.f32.mxu0 0.0
      %613 = vmatmul.mubr.f32.gmra.mrb[0].mxu0 %v463
      %v614 = vpop.f32.mrb[0].mxu0
      %v615 = vadd.f32 0.0, %v614
      %v616 = vpop.f32.mrb[0].mxu0
      %617 = vmatprep.mubr.f32.mxu0 0.0
      %618 = vmatmul.mubr.f32.gmra.mrb[0].mxu0 %v465
      %v619 = vpop.f32.mrb[0].mxu0
      %v620 = vadd.f32 0.0, %v619
      %v621 = vpop.f32.mrb[0].mxu0
      %622 = vmatprep.mubr.f32.mxu0 0.0
      %623 = vmatmul.mubr.f32.gmra.mrb[0].mxu0 %v467
      %v624 = vpop.f32.mrb[0].mxu0
      %v625 = vadd.f32 0.0, %v624
      %v626 = vpop.f32.mrb[0].mxu0
      %627 = vmatprep.mubr.f32.mxu0 0.0
      %628 = vmatmul.mubr.f32.gmra.mrb[0].mxu0 %v469
      %v629 = vpop.f32.mrb[0].mxu0
      %v630 = vadd.f32 0.0, %v629
      %v631 = vpop.f32.mrb[0].mxu0
      %632 = vmatprep.mubr.f32.mxu0 0.0
      %633 = vmatmul.mubr.f32.gmra.mrb[0].mxu0 %v471
      %v634 = vpop.f32.mrb[0].mxu0
      %v635 = vadd.f32 0.0, %v634
      %v636 = vpop.f32.mrb[0].mxu0
      %637 = vmatprep.mubr.f32.mxu0 0.0
      %638 = vmatmul.mubr.f32.gmra.mrb[0].mxu0 %v473
      %v639 = vpop.f32.mrb[0].mxu0
      %v640 = vadd.f32 0.0, %v639
      %v641 = vpop.f32.mrb[0].mxu0
      %642 = vmatprep.mubr.f32.mxu0 0.0
      %643 = vmatmul.mubr.f32.gmra.mrb[0].mxu0 %v475
      %v644 = vpop.f32.mrb[0].mxu0
      %v645 = vadd.f32 0.0, %v644
      %v646 = vpop.f32.mrb[0].mxu0
      %647 = vmatprep.mubr.f32.mxu0 0.0
      %648 = vmatmul.mubr.f32.gmra.mrb[0].mxu0 %v477
      %v649 = vpop.f32.mrb[0].mxu0
      %v650 = vadd.f32 0.0, %v649
      %v651 = vpop.f32.mrb[0].mxu0
      %652 = vmatprep.mubr.f32.mxu0 0.0
      %653 = vmatmul.mubr.f32.gmra.mrb[0].mxu0 %v479
      %v654 = vpop.f32.mrb[0].mxu0
      %v655 = vadd.f32 0.0, %v654
      %v656 = vpop.f32.mrb[0].mxu0
      %657 = vmatprep.mubr.f32.mxu0 0.0
      %658 = vmatmul.mubr.f32.gmra.mrb[0].mxu0 %v481
      %v659 = vpop.f32.mrb[0].mxu0
      %v660 = vadd.f32 0.0, %v659
      %v661 = vpop.f32.mrb[0].mxu0
      %662 = vmatprep.mubr.f32.mxu0 0.0
      %663 = vmatmul.mubr.f32.gmra.mrb[0].mxu0 %v483
      %v664 = vpop.f32.mrb[0].mxu0
      %v665 = vadd.f32 0.0, %v664
      %v666 = vpop.f32.mrb[0].mxu0
      %667 = vmatprep.mubr.f32.mxu0 0.0
      %668 = vmatmul.mubr.f32.gmra.mrb[0].mxu0 %v485
      %v669 = vpop.f32.mrb[0].mxu0
      %v670 = vadd.f32 0.0, %v669
      %v671 = vpop.f32.mrb[0].mxu0
      %672 = vmatprep.mubr.f32.mxu0 0.0
      %673 = vmatmul.mubr.f32.gmra.mrb[0].mxu0 %v487
      %v674 = vpop.f32.mrb[0].mxu0
      %v675 = vadd.f32 0.0, %v674
      %v676 = vpop.f32.mrb[0].mxu0
      %677 = vmatprep.mubr.f32.mxu0 0.0
      %678 = vmatmul.mubr.f32.gmra.mrb[0].mxu0 %v489
      %v679 = vpop.f32.mrb[0].mxu0
      %v680 = vadd.f32 0.0, %v679
      %v681 = vpop.f32.mrb[0].mxu0
      %682 = vmatprep.mubr.f32.mxu0 0.0
      %683 = vmatmul.mubr.f32.gmra.mrb[0].mxu0 %v491
      %v684 = vpop.f32.mrb[0].mxu0
      %v685 = vadd.f32 0.0, %v684
      %v686 = vpop.f32.mrb[0].mxu0
      %687 = vmatprep.mubr.f32.mxu0 0.0
      %688 = vmatmul.mubr.f32.gmra.mrb[0].mxu0 %v493
      %v689 = vpop.f32.mrb[0].mxu0
      %v690 = vadd.f32 0.0, %v689
      %v691 = vpop.f32.mrb[0].mxu0
      %692 = vmatprep.mubr.f32.mxu0 0.0
      %693 = vmatmul.mubr.f32.gmra.mrb[0].mxu0 %v495
      %v694 = vpop.f32.mrb[0].mxu0
      %v695 = vadd.f32 0.0, %v694
      %v696 = vpop.f32.mrb[0].mxu0
      %697 = vmatprep.mubr.f32.mxu0 0.0
      %698 = vmatmul.mubr.f32.gmra.mrb[0].mxu0 %v497
      %v699 = vpop.f32.mrb[0].mxu0
      %v700 = vadd.f32 0.0, %v699
      %v701 = vpop.f32.mrb[0].mxu0
      %702 = vmatprep.mubr.f32.mxu0 0.0
      %703 = vmatmul.mubr.f32.gmra.mrb[0].mxu0 %v499
      %v704 = vpop.f32.mrb[0].mxu0
      %v705 = vadd.f32 0.0, %v704
      %v706 = vpop.f32.mrb[0].mxu0
      %707 = vmatprep.mubr.f32.mxu0 0.0
      %708 = vmatmul.mubr.f32.gmra.mrb[0].mxu0 %v501
      %v709 = vpop.f32.mrb[0].mxu0
      %v710 = vadd.f32 0.0, %v709
      %v711 = vpop.f32.mrb[0].mxu0
      %712 = vmatprep.mubr.f32.mxu0 0.0
      %713 = vmatmul.mubr.f32.gmra.mrb[0].mxu0 %v503
      %v714 = vpop.f32.mrb[0].mxu0
      %v715 = vadd.f32 0.0, %v714
      %v716 = vpop.f32.mrb[0].mxu0
      %717 = vmatprep.mubr.f32.mxu0 0.0
      %718 = vmatmul.mubr.f32.gmra.mrb[0].mxu0 %v505
      %v719 = vpop.f32.mrb[0].mxu0
      %v720 = vadd.f32 0.0, %v719
      %v721 = vpop.f32.mrb[0].mxu0
      %722 = vmatprep.mubr.f32.mxu0 0.0
      %723 = vmatmul.mubr.f32.gmra.mrb[0].mxu0 %v507
      %v724 = vpop.f32.mrb[0].mxu0
      %v725 = vadd.f32 0.0, %v724
      %v726 = vpop.f32.mrb[0].mxu0
      %727 = vmatprep.mubr.f32.mxu0 0.0
      %728 = vmatmul.mubr.f32.gmra.mrb[0].mxu0 %v509
      %v729 = vpop.f32.mrb[0].mxu0
      %v730 = vadd.f32 0.0, %v729
      %v731 = vpop.f32.mrb[0].mxu0
      %732 = vmatprep.mubr.f32.mxu0 0.0
      %733 = vmatmul.mubr.f32.gmra.mrb[0].mxu0 %v511
      %v734 = vpop.f32.mrb[0].mxu0
      %v735 = vadd.f32 0.0, %v734
      %v736 = vpop.f32.mrb[0].mxu0
      %737 = vdwg.mxu0
      %v738 = vsel %vm448, %v262, 0
      %v740 = vsel %vm448, %v263, 0
      %v742 = vsel %vm448, %v265, 0
      %v744 = vsel %vm448, %v266, 0
      %v746 = vsel %vm448, %v268, 0
      %v748 = vsel %vm448, %v269, 0
      %v750 = vsel %vm448, %v271, 0
      %v752 = vsel %vm448, %v272, 0
      %v754 = vsel %vm448, %v274, 0
      %v756 = vsel %vm448, %v275, 0
      %v758 = vsel %vm448, %v277, 0
      %v760 = vsel %vm448, %v278, 0
      %v762 = vsel %vm448, %v280, 0
      %v764 = vsel %vm448, %v281, 0
      %v766 = vsel %vm448, %v283, 0
      %v768 = vsel %vm448, %v284, 0
      %v770 = vsel %vm448, %v286, 0
      %v772 = vsel %vm448, %v287, 0
      %v774 = vsel %vm448, %v289, 0
      %v776 = vsel %vm448, %v290, 0
      %v778 = vsel %vm448, %v292, 0
      %v780 = vsel %vm448, %v293, 0
      %v782 = vsel %vm448, %v295, 0
      %v784 = vsel %vm448, %v296, 0
      %v786 = vsel %vm448, %v298, 0
      %v788 = vsel %vm448, %v299, 0
      %v790 = vsel %vm448, %v301, 0
      %v792 = vsel %vm448, %v302, 0
      %v794 = vsel %vm448, %v304, 0
      %v796 = vsel %vm448, %v305, 0
      %v798 = vsel %vm448, %v307, 0
      %v800 = vsel %vm448, %v308, 0
      %802 = vmatprep.subr.mxu0 0.0
      %803 = vmatpush1.msra.mxu0 %v316
      %804 = vmatprep.subr.mxu0 0.0
      %805 = vmatpush1.msra.mxu0 0.0
      %806 = vmatprep.subr.mxu0 0.0
      %807 = vmatpush1.msra.mxu0 0.0
      %808 = vmatprep.subr.mxu0 0.0
      %809 = vmatpush1.msra.mxu0 0.0
      %810 = vmatprep.subr.mxu0 0.0
      %811 = vmatpush1.msra.mxu0 0.0
      %812 = vmatprep.subr.mxu0 0.0
      %813 = vmatpush1.msra.mxu0 0.0
      %814 = vmatprep.subr.mxu0 0.0
      %815 = vmatpush1.msra.mxu0 0.0
      %816 = vmatprep.subr.mxu0 0.0
      %817 = vmatpush1.msra.mxu0 0.0
      %818 = vmatprep.subr.mxu0 0.0
      %819 = vmatpush1.msra.mxu0 0.0
      %820 = vmatprep.subr.mxu0 0.0
      %821 = vmatpush1.msra.mxu0 0.0
      %822 = vmatprep.subr.mxu0 0.0
      %823 = vmatpush1.msra.mxu0 0.0
      %824 = vmatprep.subr.mxu0 0.0
      %825 = vmatpush1.msra.mxu0 0.0
      %826 = vmatprep.subr.mxu0 0.0
      %827 = vmatpush1.msra.mxu0 0.0
      %828 = vmatprep.subr.mxu0 0.0
      %829 = vmatpush1.msra.mxu0 0.0
      %830 = vmatprep.subr.mxu0 0.0
      %831 = vmatpush1.msra.mxu0 0.0
      %832 = vmatprep.subr.mxu0 0.0
      %833 = vmatpush1.msra.mxu0 0.0
      %834 = vmatprep.subr.mxu0 0.0
      %835 = vmatpush1.msra.mxu0 0.0
      %836 = vmatprep.subr.mxu0 0.0
      %837 = vmatpush1.msra.mxu0 0.0
      %838 = vmatprep.subr.mxu0 0.0
      %839 = vmatpush1.msra.mxu0 0.0
      %840 = vmatprep.subr.mxu0 0.0
      %841 = vmatpush1.msra.mxu0 0.0
      %842 = vmatprep.subr.mxu0 0.0
      %843 = vmatpush1.msra.mxu0 0.0
      %844 = vmatprep.subr.mxu0 0.0
      %845 = vmatpush1.msra.mxu0 0.0
      %846 = vmatprep.subr.mxu0 0.0
      %847 = vmatpush1.msra.mxu0 0.0
      %848 = vmatprep.subr.mxu0 0.0
      %849 = vmatpush1.msra.mxu0 0.0
      %850 = vmatprep.subr.mxu0 0.0
      %851 = vmatpush1.msra.mxu0 0.0
      %852 = vmatprep.subr.mxu0 0.0
      %853 = vmatpush1.msra.mxu0 0.0
      %854 = vmatprep.subr.mxu0 0.0
      %855 = vmatpush1.msra.mxu0 0.0
      %856 = vmatprep.subr.mxu0 0.0
      %857 = vmatpush1.msra.mxu0 0.0
      %858 = vmatprep.subr.mxu0 0.0
      %859 = vmatpush1.msra.mxu0 0.0
      %860 = vmatprep.subr.mxu0 0.0
      %861 = vmatpush1.msra.mxu0 0.0
      %862 = vmatprep.subr.mxu0 0.0
      %863 = vmatpush1.msra.mxu0 0.0
      %864 = vmatprep.subr.mxu0 0.0
      %865 = vmatpush1.msra.mxu0 0.0
      %866 = vmatprep.mubr.f32.mxu0 0.0
      %867 = vmatmul.mubr.f32.gmra.mrb[0].mxu0 %v738
      %v868 = vpop.f32.mrb[0].mxu0
      %v869 = vadd.f32 %v580, %v868
      %v870 = vpop.f32.mrb[0].mxu0
      %871 = vmatprep.mubr.f32.mxu0 0.0
      %872 = vmatmul.mubr.f32.gmra.mrb[0].mxu0 %v740
      %v873 = vpop.f32.mrb[0].mxu0
      %v874 = vadd.f32 %v585, %v873
      %v875 = vpop.f32.mrb[0].mxu0
      %876 = vmatprep.mubr.f32.mxu0 0.0
      %877 = vmatmul.mubr.f32.gmra.mrb[0].mxu0 %v742
      %v878 = vpop.f32.mrb[0].mxu0
      %v879 = vadd.f32 %v590, %v878
      %v880 = vpop.f32.mrb[0].mxu0
      %881 = vmatprep.mubr.f32.mxu0 0.0
      %882 = vmatmul.mubr.f32.gmra.mrb[0].mxu0 %v744
      %v883 = vpop.f32.mrb[0].mxu0
      %v884 = vadd.f32 %v595, %v883
      %v885 = vpop.f32.mrb[0].mxu0
      %886 = vmatprep.mubr.f32.mxu0 0.0
      %887 = vmatmul.mubr.f32.gmra.mrb[0].mxu0 %v746
      %v888 = vpop.f32.mrb[0].mxu0
      %v889 = vadd.f32 %v600, %v888
      %v890 = vpop.f32.mrb[0].mxu0
      %891 = vmatprep.mubr.f32.mxu0 0.0
      %892 = vmatmul.mubr.f32.gmra.mrb[0].mxu0 %v748
      %v893 = vpop.f32.mrb[0].mxu0
      %v894 = vadd.f32 %v605, %v893
      %v895 = vpop.f32.mrb[0].mxu0
      %896 = vmatprep.mubr.f32.mxu0 0.0
      %897 = vmatmul.mubr.f32.gmra.mrb[0].mxu0 %v750
      %v898 = vpop.f32.mrb[0].mxu0
      %v899 = vadd.f32 %v610, %v898
      %v900 = vpop.f32.mrb[0].mxu0
      %901 = vmatprep.mubr.f32.mxu0 0.0
      %902 = vmatmul.mubr.f32.gmra.mrb[0].mxu0 %v752
      %v903 = vpop.f32.mrb[0].mxu0
      %v904 = vadd.f32 %v615, %v903
      %v905 = vpop.f32.mrb[0].mxu0
      %906 = vmatprep.mubr.f32.mxu0 0.0
      %907 = vmatmul.mubr.f32.gmra.mrb[0].mxu0 %v754
      %v908 = vpop.f32.mrb[0].mxu0
      %v909 = vadd.f32 %v620, %v908
      %v910 = vpop.f32.mrb[0].mxu0
      %911 = vmatprep.mubr.f32.mxu0 0.0
      %912 = vmatmul.mubr.f32.gmra.mrb[0].mxu0 %v756
      %v913 = vpop.f32.mrb[0].mxu0
      %v914 = vadd.f32 %v625, %v913
      %v915 = vpop.f32.mrb[0].mxu0
      %916 = vmatprep.mubr.f32.mxu0 0.0
      %917 = vmatmul.mubr.f32.gmra.mrb[0].mxu0 %v758
      %v918 = vpop.f32.mrb[0].mxu0
      %v919 = vadd.f32 %v630, %v918
      %v920 = vpop.f32.mrb[0].mxu0
      %921 = vmatprep.mubr.f32.mxu0 0.0
      %922 = vmatmul.mubr.f32.gmra.mrb[0].mxu0 %v760
      %v923 = vpop.f32.mrb[0].mxu0
      %v924 = vadd.f32 %v635, %v923
      %v925 = vpop.f32.mrb[0].mxu0
      %926 = vmatprep.mubr.f32.mxu0 0.0
      %927 = vmatmul.mubr.f32.gmra.mrb[0].mxu0 %v762
      %v928 = vpop.f32.mrb[0].mxu0
      %v929 = vadd.f32 %v640, %v928
      %v930 = vpop.f32.mrb[0].mxu0
      %931 = vmatprep.mubr.f32.mxu0 0.0
      %932 = vmatmul.mubr.f32.gmra.mrb[0].mxu0 %v764
      %v933 = vpop.f32.mrb[0].mxu0
      %v934 = vadd.f32 %v645, %v933
      %v935 = vpop.f32.mrb[0].mxu0
      %936 = vmatprep.mubr.f32.mxu0 0.0
      %937 = vmatmul.mubr.f32.gmra.mrb[0].mxu0 %v766
      %v938 = vpop.f32.mrb[0].mxu0
      %v939 = vadd.f32 %v650, %v938
      %v940 = vpop.f32.mrb[0].mxu0
      %941 = vmatprep.mubr.f32.mxu0 0.0
      %942 = vmatmul.mubr.f32.gmra.mrb[0].mxu0 %v768
      %v943 = vpop.f32.mrb[0].mxu0
      %v944 = vadd.f32 %v655, %v943
      %v945 = vpop.f32.mrb[0].mxu0
      %946 = vmatprep.mubr.f32.mxu0 0.0
      %947 = vmatmul.mubr.f32.gmra.mrb[0].mxu0 %v770
      %v948 = vpop.f32.mrb[0].mxu0
      %v949 = vadd.f32 %v660, %v948
      %v950 = vpop.f32.mrb[0].mxu0
      %951 = vmatprep.mubr.f32.mxu0 0.0
      %952 = vmatmul.mubr.f32.gmra.mrb[0].mxu0 %v772
      %v953 = vpop.f32.mrb[0].mxu0
      %v954 = vadd.f32 %v665, %v953
      %v955 = vpop.f32.mrb[0].mxu0
      %956 = vmatprep.mubr.f32.mxu0 0.0
      %957 = vmatmul.mubr.f32.gmra.mrb[0].mxu0 %v774
      %v958 = vpop.f32.mrb[0].mxu0
      %v959 = vadd.f32 %v670, %v958
      %v960 = vpop.f32.mrb[0].mxu0
      %961 = vmatprep.mubr.f32.mxu0 0.0
      %962 = vmatmul.mubr.f32.gmra.mrb[0].mxu0 %v776
      %v963 = vpop.f32.mrb[0].mxu0
      %v964 = vadd.f32 %v675, %v963
      %v965 = vpop.f32.mrb[0].mxu0
      %966 = vmatprep.mubr.f32.mxu0 0.0
      %967 = vmatmul.mubr.f32.gmra.mrb[0].mxu0 %v778
      %v968 = vpop.f32.mrb[0].mxu0
      %v969 = vadd.f32 %v680, %v968
      %v970 = vpop.f32.mrb[0].mxu0
      %971 = vmatprep.mubr.f32.mxu0 0.0
      %972 = vmatmul.mubr.f32.gmra.mrb[0].mxu0 %v780
      %v973 = vpop.f32.mrb[0].mxu0
      %v974 = vadd.f32 %v685, %v973
      %v975 = vpop.f32.mrb[0].mxu0
      %976 = vmatprep.mubr.f32.mxu0 0.0
      %977 = vmatmul.mubr.f32.gmra.mrb[0].mxu0 %v782
      %v978 = vpop.f32.mrb[0].mxu0
      %v979 = vadd.f32 %v690, %v978
      %v980 = vpop.f32.mrb[0].mxu0
      %981 = vmatprep.mubr.f32.mxu0 0.0
      %982 = vmatmul.mubr.f32.gmra.mrb[0].mxu0 %v784
      %v983 = vpop.f32.mrb[0].mxu0
      %v984 = vadd.f32 %v695, %v983
      %v985 = vpop.f32.mrb[0].mxu0
      %986 = vmatprep.mubr.f32.mxu0 0.0
      %987 = vmatmul.mubr.f32.gmra.mrb[0].mxu0 %v786
      %v988 = vpop.f32.mrb[0].mxu0
      %v989 = vadd.f32 %v700, %v988
      %v990 = vpop.f32.mrb[0].mxu0
      %991 = vmatprep.mubr.f32.mxu0 0.0
      %992 = vmatmul.mubr.f32.gmra.mrb[0].mxu0 %v788
      %v993 = vpop.f32.mrb[0].mxu0
      %v994 = vadd.f32 %v705, %v993
      %v995 = vpop.f32.mrb[0].mxu0
      %996 = vmatprep.mubr.f32.mxu0 0.0
      %997 = vmatmul.mubr.f32.gmra.mrb[0].mxu0 %v790
      %v998 = vpop.f32.mrb[0].mxu0
      %v999 = vadd.f32 %v710, %v998
      %v1000 = vpop.f32.mrb[0].mxu0
      %1001 = vmatprep.mubr.f32.mxu0 0.0
      %1002 = vmatmul.mubr.f32.gmra.mrb[0].mxu0 %v792
      %v1003 = vpop.f32.mrb[0].mxu0
      %v1004 = vadd.f32 %v715, %v1003
      %v1005 = vpop.f32.mrb[0].mxu0
      %1006 = vmatprep.mubr.f32.mxu0 0.0
      %1007 = vmatmul.mubr.f32.gmra.mrb[0].mxu0 %v794
      %v1008 = vpop.f32.mrb[0].mxu0
      %v1009 = vadd.f32 %v720, %v1008
      %v1010 = vpop.f32.mrb[0].mxu0
      %1011 = vmatprep.mubr.f32.mxu0 0.0
      %1012 = vmatmul.mubr.f32.gmra.mrb[0].mxu0 %v796
      %v1013 = vpop.f32.mrb[0].mxu0
      %v1014 = vadd.f32 %v725, %v1013
      %v1015 = vpop.f32.mrb[0].mxu0
      %1016 = vmatprep.mubr.f32.mxu0 0.0
      %1017 = vmatmul.mubr.f32.gmra.mrb[0].mxu0 %v798
      %v1018 = vpop.f32.mrb[0].mxu0
      %v1019 = vadd.f32 %v730, %v1018
      %v1020 = vpop.f32.mrb[0].mxu0
      %1021 = vmatprep.mubr.f32.mxu0 0.0
      %1022 = vmatmul.mubr.f32.gmra.mrb[0].mxu0 %v800
      %v1023 = vpop.f32.mrb[0].mxu0
      %v1024 = vadd.f32 %v735, %v1023
      %v1025 = vpop.f32.mrb[0].mxu0
      %1026 = vdwg.mxu0
      %vm1027 = vcmask 1045504
      %v1028 = vrot.slane %v262, 2
      %v1029 = vrot.slane %v263, 2
      %v1030 = vsel %vm1027, %v1028, %v1029
      %v1031 = vrot.slane %v264, 2
      %v1032 = vsel %vm1027, %v1029, %v1031
      %v1033 = vrot.slane %v265, 2
      %v1034 = vrot.slane %v266, 2
      %v1035 = vsel %vm1027, %v1033, %v1034
      %v1036 = vrot.slane %v267, 2
      %v1037 = vsel %vm1027, %v1034, %v1036
      %v1038 = vrot.slane %v268, 2
      %v1039 = vrot.slane %v269, 2
      %v1040 = vsel %vm1027, %v1038, %v1039
      %v1041 = vrot.slane %v270, 2
      %v1042 = vsel %vm1027, %v1039, %v1041
      %v1043 = vrot.slane %v271, 2
      %v1044 = vrot.slane %v272, 2
      %v1045 = vsel %vm1027, %v1043, %v1044
      %v1046 = vrot.slane %v273, 2
      %v1047 = vsel %vm1027, %v1044, %v1046
      %v1048 = vrot.slane %v274, 2
      %v1049 = vrot.slane %v275, 2
      %v1050 = vsel %vm1027, %v1048, %v1049
      %v1051 = vrot.slane %v276, 2
      %v1052 = vsel %vm1027, %v1049, %v1051
      %v1053 = vrot.slane %v277, 2
      %v1054 = vrot.slane %v278, 2
      %v1055 = vsel %vm1027, %v1053, %v1054
      %v1056 = vrot.slane %v279, 2
      %v1057 = vsel %vm1027, %v1054, %v1056
      %v1058 = vrot.slane %v280, 2
      %v1059 = vrot.slane %v281, 2
      %v1060 = vsel %vm1027, %v1058, %v1059
      %v1061 = vrot.slane %v282, 2
      %v1062 = vsel %vm1027, %v1059, %v1061
      %v1063 = vrot.slane %v283, 2
      %v1064 = vrot.slane %v284, 2
      %v1065 = vsel %vm1027, %v1063, %v1064
      %v1066 = vrot.slane %v285, 2
      %v1067 = vsel %vm1027, %v1064, %v1066
      %v1068 = vrot.slane %v286, 2
      %v1069 = vrot.slane %v287, 2
      %v1070 = vsel %vm1027, %v1068, %v1069
      %v1071 = vrot.slane %v288, 2
      %v1072 = vsel %vm1027, %v1069, %v1071
      %v1073 = vrot.slane %v289, 2
      %v1074 = vrot.slane %v290, 2
      %v1075 = vsel %vm1027, %v1073, %v1074
      %v1076 = vrot.slane %v291, 2
      %v1077 = vsel %vm1027, %v1074, %v1076
      %v1078 = vrot.slane %v292, 2
      %v1079 = vrot.slane %v293, 2
      %v1080 = vsel %vm1027, %v1078, %v1079
      %v1081 = vrot.slane %v294, 2
      %v1082 = vsel %vm1027, %v1079, %v1081
      %v1083 = vrot.slane %v295, 2
      %v1084 = vrot.slane %v296, 2
      %v1085 = vsel %vm1027, %v1083, %v1084
      %v1086 = vrot.slane %v297, 2
      %v1087 = vsel %vm1027, %v1084, %v1086
      %v1088 = vrot.slane %v298, 2
      %v1089 = vrot.slane %v299, 2
      %v1090 = vsel %vm1027, %v1088, %v1089
      %v1091 = vrot.slane %v300, 2
      %v1092 = vsel %vm1027, %v1089, %v1091
      %v1093 = vrot.slane %v301, 2
      %v1094 = vrot.slane %v302, 2
      %v1095 = vsel %vm1027, %v1093, %v1094
      %v1096 = vrot.slane %v303, 2
      %v1097 = vsel %vm1027, %v1094, %v1096
      %v1098 = vrot.slane %v304, 2
      %v1099 = vrot.slane %v305, 2
      %v1100 = vsel %vm1027, %v1098, %v1099
      %v1101 = vrot.slane %v306, 2
      %v1102 = vsel %vm1027, %v1099, %v1101
      %v1103 = vrot.slane %v307, 2
      %v1104 = vrot.slane %v308, 2
      %v1105 = vsel %vm1027, %v1103, %v1104
      %v1106 = vrot.slane %v309, 2
      %v1107 = vsel %vm1027, %v1104, %v1106
      %s1108 = scalar_lea.vmem %s2, 16
      %v1109 = vld [vmem:[%s1108] sm:$0xff]
      %v1110 = vsel %vm448, %v1030, 0
      %v1112 = vsel %vm448, %v1032, 0
      %v1114 = vsel %vm448, %v1035, 0
      %v1116 = vsel %vm448, %v1037, 0
      %v1118 = vsel %vm448, %v1040, 0
      %v1120 = vsel %vm448, %v1042, 0
      %v1122 = vsel %vm448, %v1045, 0
      %v1124 = vsel %vm448, %v1047, 0
      %v1126 = vsel %vm448, %v1050, 0
      %v1128 = vsel %vm448, %v1052, 0
      %v1130 = vsel %vm448, %v1055, 0
      %v1132 = vsel %vm448, %v1057, 0
      %v1134 = vsel %vm448, %v1060, 0
      %v1136 = vsel %vm448, %v1062, 0
      %v1138 = vsel %vm448, %v1065, 0
      %v1140 = vsel %vm448, %v1067, 0
      %v1142 = vsel %vm448, %v1070, 0
      %v1144 = vsel %vm448, %v1072, 0
      %v1146 = vsel %vm448, %v1075, 0
      %v1148 = vsel %vm448, %v1077, 0
      %v1150 = vsel %vm448, %v1080, 0
      %v1152 = vsel %vm448, %v1082, 0
      %v1154 = vsel %vm448, %v1085, 0
      %v1156 = vsel %vm448, %v1087, 0
      %v1158 = vsel %vm448, %v1090, 0
      %v1160 = vsel %vm448, %v1092, 0
      %v1162 = vsel %vm448, %v1095, 0
      %v1164 = vsel %vm448, %v1097, 0
      %v1166 = vsel %vm448, %v1100, 0
      %v1168 = vsel %vm448, %v1102, 0
      %v1170 = vsel %vm448, %v1105, 0
      %v1172 = vsel %vm448, %v1107, 0
      %1174 = vmatprep.subr.mxu0 0.0
      %1175 = vmatpush1.msra.mxu0 %v1109
      %1176 = vmatprep.subr.mxu0 0.0
      %1177 = vmatpush1.msra.mxu0 0.0
      %1178 = vmatprep.subr.mxu0 0.0
      %1179 = vmatpush1.msra.mxu0 0.0
      %1180 = vmatprep.subr.mxu0 0.0
      %1181 = vmatpush1.msra.mxu0 0.0
      %1182 = vmatprep.subr.mxu0 0.0
      %1183 = vmatpush1.msra.mxu0 0.0
      %1184 = vmatprep.subr.mxu0 0.0
      %1185 = vmatpush1.msra.mxu0 0.0
      %1186 = vmatprep.subr.mxu0 0.0
      %1187 = vmatpush1.msra.mxu0 0.0
      %1188 = vmatprep.subr.mxu0 0.0
      %1189 = vmatpush1.msra.mxu0 0.0
      %1190 = vmatprep.subr.mxu0 0.0
      %1191 = vmatpush1.msra.mxu0 0.0
      %1192 = vmatprep.subr.mxu0 0.0
      %1193 = vmatpush1.msra.mxu0 0.0
      %1194 = vmatprep.subr.mxu0 0.0
      %1195 = vmatpush1.msra.mxu0 0.0
      %1196 = vmatprep.subr.mxu0 0.0
      %1197 = vmatpush1.msra.mxu0 0.0
      %1198 = vmatprep.subr.mxu0 0.0
      %1199 = vmatpush1.msra.mxu0 0.0
      %1200 = vmatprep.subr.mxu0 0.0
      %1201 = vmatpush1.msra.mxu0 0.0
      %1202 = vmatprep.subr.mxu0 0.0
      %1203 = vmatpush1.msra.mxu0 0.0
      %1204 = vmatprep.subr.mxu0 0.0
      %1205 = vmatpush1.msra.mxu0 0.0
      %1206 = vmatprep.subr.mxu0 0.0
      %1207 = vmatpush1.msra.mxu0 0.0
      %1208 = vmatprep.subr.mxu0 0.0
      %1209 = vmatpush1.msra.mxu0 0.0
      %1210 = vmatprep.subr.mxu0 0.0
      %1211 = vmatpush1.msra.mxu0 0.0
      %1212 = vmatprep.subr.mxu0 0.0
      %1213 = vmatpush1.msra.mxu0 0.0
      %1214 = vmatprep.subr.mxu0 0.0
      %1215 = vmatpush1.msra.mxu0 0.0
      %1216 = vmatprep.subr.mxu0 0.0
      %1217 = vmatpush1.msra.mxu0 0.0
      %1218 = vmatprep.subr.mxu0 0.0
      %1219 = vmatpush1.msra.mxu0 0.0
      %1220 = vmatprep.subr.mxu0 0.0
      %1221 = vmatpush1.msra.mxu0 0.0
      %1222 = vmatprep.subr.mxu0 0.0
      %1223 = vmatpush1.msra.mxu0 0.0
      %1224 = vmatprep.subr.mxu0 0.0
      %1225 = vmatpush1.msra.mxu0 0.0
      %1226 = vmatprep.subr.mxu0 0.0
      %1227 = vmatpush1.msra.mxu0 0.0
      %1228 = vmatprep.subr.mxu0 0.0
      %1229 = vmatpush1.msra.mxu0 0.0
      %1230 = vmatprep.subr.mxu0 0.0
      %1231 = vmatpush1.msra.mxu0 0.0
      %1232 = vmatprep.subr.mxu0 0.0
      %1233 = vmatpush1.msra.mxu0 0.0
      %1234 = vmatprep.subr.mxu0 0.0
      %1235 = vmatpush1.msra.mxu0 0.0
      %1236 = vmatprep.subr.mxu0 0.0
      %1237 = vmatpush1.msra.mxu0 0.0
      %1238 = vmatprep.mubr.f32.mxu0 0.0
      %1239 = vmatmul.mubr.f32.gmra.mrb[0].mxu0 %v1110
      %v1240 = vpop.f32.mrb[0].mxu0
      %v1241 = vadd.f32 0.0, %v1240
      %v1242 = vpop.f32.mrb[0].mxu0
      %1243 = vmatprep.mubr.f32.mxu0 0.0
      %1244 = vmatmul.mubr.f32.gmra.mrb[0].mxu0 %v1112
      %v1245 = vpop.f32.mrb[0].mxu0
      %v1246 = vadd.f32 0.0, %v1245
      %v1247 = vpop.f32.mrb[0].mxu0
      %1248 = vmatprep.mubr.f32.mxu0 0.0
      %1249 = vmatmul.mubr.f32.gmra.mrb[0].mxu0 %v1114
      %v1250 = vpop.f32.mrb[0].mxu0
      %v1251 = vadd.f32 0.0, %v1250
      %v1252 = vpop.f32.mrb[0].mxu0
      %1253 = vmatprep.mubr.f32.mxu0 0.0
      %1254 = vmatmul.mubr.f32.gmra.mrb[0].mxu0 %v1116
      %v1255 = vpop.f32.mrb[0].mxu0
      %v1256 = vadd.f32 0.0, %v1255
      %v1257 = vpop.f32.mrb[0].mxu0
      %1258 = vmatprep.mubr.f32.mxu0 0.0
      %1259 = vmatmul.mubr.f32.gmra.mrb[0].mxu0 %v1118
      %v1260 = vpop.f32.mrb[0].mxu0
      %v1261 = vadd.f32 0.0, %v1260
      %v1262 = vpop.f32.mrb[0].mxu0
      %1263 = vmatprep.mubr.f32.mxu0 0.0
      %1264 = vmatmul.mubr.f32.gmra.mrb[0].mxu0 %v1120
      %v1265 = vpop.f32.mrb[0].mxu0
      %v1266 = vadd.f32 0.0, %v1265
      %v1267 = vpop.f32.mrb[0].mxu0
      %1268 = vmatprep.mubr.f32.mxu0 0.0
      %1269 = vmatmul.mubr.f32.gmra.mrb[0].mxu0 %v1122
      %v1270 = vpop.f32.mrb[0].mxu0
      %v1271 = vadd.f32 0.0, %v1270
      %v1272 = vpop.f32.mrb[0].mxu0
      %1273 = vmatprep.mubr.f32.mxu0 0.0
      %1274 = vmatmul.mubr.f32.gmra.mrb[0].mxu0 %v1124
      %v1275 = vpop.f32.mrb[0].mxu0
      %v1276 = vadd.f32 0.0, %v1275
      %v1277 = vpop.f32.mrb[0].mxu0
      %1278 = vmatprep.mubr.f32.mxu0 0.0
      %1279 = vmatmul.mubr.f32.gmra.mrb[0].mxu0 %v1126
      %v1280 = vpop.f32.mrb[0].mxu0
      %v1281 = vadd.f32 0.0, %v1280
      %v1282 = vpop.f32.mrb[0].mxu0
      %1283 = vmatprep.mubr.f32.mxu0 0.0
      %1284 = vmatmul.mubr.f32.gmra.mrb[0].mxu0 %v1128
      %v1285 = vpop.f32.mrb[0].mxu0
      %v1286 = vadd.f32 0.0, %v1285
      %v1287 = vpop.f32.mrb[0].mxu0
      %1288 = vmatprep.mubr.f32.mxu0 0.0
      %1289 = vmatmul.mubr.f32.gmra.mrb[0].mxu0 %v1130
      %v1290 = vpop.f32.mrb[0].mxu0
      %v1291 = vadd.f32 0.0, %v1290
      %v1292 = vpop.f32.mrb[0].mxu0
      %1293 = vmatprep.mubr.f32.mxu0 0.0
      %1294 = vmatmul.mubr.f32.gmra.mrb[0].mxu0 %v1132
      %v1295 = vpop.f32.mrb[0].mxu0
      %v1296 = vadd.f32 0.0, %v1295
      %v1297 = vpop.f32.mrb[0].mxu0
      %1298 = vmatprep.mubr.f32.mxu0 0.0
      %1299 = vmatmul.mubr.f32.gmra.mrb[0].mxu0 %v1134
      %v1300 = vpop.f32.mrb[0].mxu0
      %v1301 = vadd.f32 0.0, %v1300
      %v1302 = vpop.f32.mrb[0].mxu0
      %1303 = vmatprep.mubr.f32.mxu0 0.0
      %1304 = vmatmul.mubr.f32.gmra.mrb[0].mxu0 %v1136
      %v1305 = vpop.f32.mrb[0].mxu0
      %v1306 = vadd.f32 0.0, %v1305
      %v1307 = vpop.f32.mrb[0].mxu0
      %1308 = vmatprep.mubr.f32.mxu0 0.0
      %1309 = vmatmul.mubr.f32.gmra.mrb[0].mxu0 %v1138
      %v1310 = vpop.f32.mrb[0].mxu0
      %v1311 = vadd.f32 0.0, %v1310
      %v1312 = vpop.f32.mrb[0].mxu0
      %1313 = vmatprep.mubr.f32.mxu0 0.0
      %1314 = vmatmul.mubr.f32.gmra.mrb[0].mxu0 %v1140
      %v1315 = vpop.f32.mrb[0].mxu0
      %v1316 = vadd.f32 0.0, %v1315
      %v1317 = vpop.f32.mrb[0].mxu0
      %1318 = vmatprep.mubr.f32.mxu0 0.0
      %1319 = vmatmul.mubr.f32.gmra.mrb[0].mxu0 %v1142
      %v1320 = vpop.f32.mrb[0].mxu0
      %v1321 = vadd.f32 0.0, %v1320
      %v1322 = vpop.f32.mrb[0].mxu0
      %1323 = vmatprep.mubr.f32.mxu0 0.0
      %1324 = vmatmul.mubr.f32.gmra.mrb[0].mxu0 %v1144
      %v1325 = vpop.f32.mrb[0].mxu0
      %v1326 = vadd.f32 0.0, %v1325
      %v1327 = vpop.f32.mrb[0].mxu0
      %1328 = vmatprep.mubr.f32.mxu0 0.0
      %1329 = vmatmul.mubr.f32.gmra.mrb[0].mxu0 %v1146
      %v1330 = vpop.f32.mrb[0].mxu0
      %v1331 = vadd.f32 0.0, %v1330
      %v1332 = vpop.f32.mrb[0].mxu0
      %1333 = vmatprep.mubr.f32.mxu0 0.0
      %1334 = vmatmul.mubr.f32.gmra.mrb[0].mxu0 %v1148
      %v1335 = vpop.f32.mrb[0].mxu0
      %v1336 = vadd.f32 0.0, %v1335
      %v1337 = vpop.f32.mrb[0].mxu0
      %1338 = vmatprep.mubr.f32.mxu0 0.0
      %1339 = vmatmul.mubr.f32.gmra.mrb[0].mxu0 %v1150
      %v1340 = vpop.f32.mrb[0].mxu0
      %v1341 = vadd.f32 0.0, %v1340
      %v1342 = vpop.f32.mrb[0].mxu0
      %1343 = vmatprep.mubr.f32.mxu0 0.0
      %1344 = vmatmul.mubr.f32.gmra.mrb[0].mxu0 %v1152
      %v1345 = vpop.f32.mrb[0].mxu0
      %v1346 = vadd.f32 0.0, %v1345
      %v1347 = vpop.f32.mrb[0].mxu0
      %1348 = vmatprep.mubr.f32.mxu0 0.0
      %1349 = vmatmul.mubr.f32.gmra.mrb[0].mxu0 %v1154
      %v1350 = vpop.f32.mrb[0].mxu0
      %v1351 = vadd.f32 0.0, %v1350
      %v1352 = vpop.f32.mrb[0].mxu0
      %1353 = vmatprep.mubr.f32.mxu0 0.0
      %1354 = vmatmul.mubr.f32.gmra.mrb[0].mxu0 %v1156
      %v1355 = vpop.f32.mrb[0].mxu0
      %v1356 = vadd.f32 0.0, %v1355
      %v1357 = vpop.f32.mrb[0].mxu0
      %1358 = vmatprep.mubr.f32.mxu0 0.0
      %1359 = vmatmul.mubr.f32.gmra.mrb[0].mxu0 %v1158
      %v1360 = vpop.f32.mrb[0].mxu0
      %v1361 = vadd.f32 0.0, %v1360
      %v1362 = vpop.f32.mrb[0].mxu0
      %1363 = vmatprep.mubr.f32.mxu0 0.0
      %1364 = vmatmul.mubr.f32.gmra.mrb[0].mxu0 %v1160
      %v1365 = vpop.f32.mrb[0].mxu0
      %v1366 = vadd.f32 0.0, %v1365
      %v1367 = vpop.f32.mrb[0].mxu0
      %1368 = vmatprep.mubr.f32.mxu0 0.0
      %1369 = vmatmul.mubr.f32.gmra.mrb[0].mxu0 %v1162
      %v1370 = vpop.f32.mrb[0].mxu0
      %v1371 = vadd.f32 0.0, %v1370
      %v1372 = vpop.f32.mrb[0].mxu0
      %1373 = vmatprep.mubr.f32.mxu0 0.0
      %1374 = vmatmul.mubr.f32.gmra.mrb[0].mxu0 %v1164
      %v1375 = vpop.f32.mrb[0].mxu0
      %v1376 = vadd.f32 0.0, %v1375
      %v1377 = vpop.f32.mrb[0].mxu0
      %1378 = vmatprep.mubr.f32.mxu0 0.0
      %1379 = vmatmul.mubr.f32.gmra.mrb[0].mxu0 %v1166
      %v1380 = vpop.f32.mrb[0].mxu0
      %v1381 = vadd.f32 0.0, %v1380
      %v1382 = vpop.f32.mrb[0].mxu0
      %1383 = vmatprep.mubr.f32.mxu0 0.0
      %1384 = vmatmul.mubr.f32.gmra.mrb[0].mxu0 %v1168
      %v1385 = vpop.f32.mrb[0].mxu0
      %v1386 = vadd.f32 0.0, %v1385
      %v1387 = vpop.f32.mrb[0].mxu0
      %1388 = vmatprep.mubr.f32.mxu0 0.0
      %1389 = vmatmul.mubr.f32.gmra.mrb[0].mxu0 %v1170
      %v1390 = vpop.f32.mrb[0].mxu0
      %v1391 = vadd.f32 0.0, %v1390
      %v1392 = vpop.f32.mrb[0].mxu0
      %1393 = vmatprep.mubr.f32.mxu0 0.0
      %1394 = vmatmul.mubr.f32.gmra.mrb[0].mxu0 %v1172
      %v1395 = vpop.f32.mrb[0].mxu0
      %v1396 = vadd.f32 0.0, %v1395
      %v1397 = vpop.f32.mrb[0].mxu0
      %1398 = vdwg.mxu0
      %v1399 = vadd.f32 %v869, %v1241
      %v1400 = vadd.f32 %v874, %v1246
      %v1401 = vadd.f32 %v879, %v1251
      %v1402 = vadd.f32 %v884, %v1256
      %v1403 = vadd.f32 %v889, %v1261
      %v1404 = vadd.f32 %v894, %v1266
      %v1405 = vadd.f32 %v899, %v1271
      %v1406 = vadd.f32 %v904, %v1276
      %v1407 = vadd.f32 %v909, %v1281
      %v1408 = vadd.f32 %v914, %v1286
      %v1409 = vadd.f32 %v919, %v1291
      %v1410 = vadd.f32 %v924, %v1296
      %v1411 = vadd.f32 %v929, %v1301
      %v1412 = vadd.f32 %v934, %v1306
      %v1413 = vadd.f32 %v939, %v1311
      %v1414 = vadd.f32 %v944, %v1316
      %v1415 = vadd.f32 %v949, %v1321
      %v1416 = vadd.f32 %v954, %v1326
      %v1417 = vadd.f32 %v959, %v1331
      %v1418 = vadd.f32 %v964, %v1336
      %v1419 = vadd.f32 %v969, %v1341
      %v1420 = vadd.f32 %v974, %v1346
      %v1421 = vadd.f32 %v979, %v1351
      %v1422 = vadd.f32 %v984, %v1356
      %v1423 = vadd.f32 %v989, %v1361
      %v1424 = vadd.f32 %v994, %v1366
      %v1425 = vadd.f32 %v999, %v1371
      %v1426 = vadd.f32 %v1004, %v1376
      %v1427 = vadd.f32 %v1009, %v1381
      %v1428 = vadd.f32 %v1014, %v1386
      %v1429 = vadd.f32 %v1019, %v1391
      %v1430 = vadd.f32 %v1024, %v1396
      %s1431 = scalar_lea.vmem %s2, 24
      %v1432 = vld [vmem:[%s1431] sm:$0xff]
      %v1434 = vsel %vm448, %v310, 0
      %v1437 = vsel %vm448, %v311, 0
      %1439 = vmatprep.subr.mxu0 0.0
      %1440 = vmatpush1.msra.mxu0 %v1432
      %1441 = vmatprep.subr.mxu0 0.0
      %1442 = vmatpush1.msra.mxu0 0.0
      %1443 = vmatprep.subr.mxu0 0.0
      %1444 = vmatpush1.msra.mxu0 0.0
      %1445 = vmatprep.subr.mxu0 0.0
      %1446 = vmatpush1.msra.mxu0 0.0
      %1447 = vmatprep.subr.mxu0 0.0
      %1448 = vmatpush1.msra.mxu0 0.0
      %1449 = vmatprep.subr.mxu0 0.0
      %1450 = vmatpush1.msra.mxu0 0.0
      %1451 = vmatprep.subr.mxu0 0.0
      %1452 = vmatpush1.msra.mxu0 0.0
      %1453 = vmatprep.subr.mxu0 0.0
      %1454 = vmatpush1.msra.mxu0 0.0
      %1455 = vmatprep.subr.mxu0 0.0
      %1456 = vmatpush1.msra.mxu0 0.0
      %1457 = vmatprep.subr.mxu0 0.0
      %1458 = vmatpush1.msra.mxu0 0.0
      %1459 = vmatprep.subr.mxu0 0.0
      %1460 = vmatpush1.msra.mxu0 0.0
      %1461 = vmatprep.subr.mxu0 0.0
      %1462 = vmatpush1.msra.mxu0 0.0
      %1463 = vmatprep.subr.mxu0 0.0
      %1464 = vmatpush1.msra.mxu0 0.0
      %1465 = vmatprep.subr.mxu0 0.0
      %1466 = vmatpush1.msra.mxu0 0.0
      %1467 = vmatprep.subr.mxu0 0.0
      %1468 = vmatpush1.msra.mxu0 0.0
      %1469 = vmatprep.subr.mxu0 0.0
      %1470 = vmatpush1.msra.mxu0 0.0
      %1471 = vmatprep.subr.mxu0 0.0
      %1472 = vmatpush1.msra.mxu0 0.0
      %1473 = vmatprep.subr.mxu0 0.0
      %1474 = vmatpush1.msra.mxu0 0.0
      %1475 = vmatprep.subr.mxu0 0.0
      %1476 = vmatpush1.msra.mxu0 0.0
      %1477 = vmatprep.subr.mxu0 0.0
      %1478 = vmatpush1.msra.mxu0 0.0
      %1479 = vmatprep.subr.mxu0 0.0
      %1480 = vmatpush1.msra.mxu0 0.0
      %1481 = vmatprep.subr.mxu0 0.0
      %1482 = vmatpush1.msra.mxu0 0.0
      %1483 = vmatprep.subr.mxu0 0.0
      %1484 = vmatpush1.msra.mxu0 0.0
      %1485 = vmatprep.subr.mxu0 0.0
      %1486 = vmatpush1.msra.mxu0 0.0
      %1487 = vmatprep.subr.mxu0 0.0
      %1488 = vmatpush1.msra.mxu0 0.0
      %1489 = vmatprep.subr.mxu0 0.0
      %1490 = vmatpush1.msra.mxu0 0.0
      %1491 = vmatprep.subr.mxu0 0.0
      %1492 = vmatpush1.msra.mxu0 0.0
      %1493 = vmatprep.subr.mxu0 0.0
      %1494 = vmatpush1.msra.mxu0 0.0
      %1495 = vmatprep.subr.mxu0 0.0
      %1496 = vmatpush1.msra.mxu0 0.0
      %1497 = vmatprep.subr.mxu0 0.0
      %1498 = vmatpush1.msra.mxu0 0.0
      %1499 = vmatprep.subr.mxu0 0.0
      %1500 = vmatpush1.msra.mxu0 0.0
      %1501 = vmatprep.subr.mxu0 0.0
      %1502 = vmatpush1.msra.mxu0 0.0
      %1503 = vmatprep.mubr.f32.mxu0 0.0
      %1504 = vmatmul.mubr.f32.gmra.mrb[0].mxu0 %v742
      %v1505 = vpop.f32.mrb[0].mxu0
      %v1506 = vadd.f32 0.0, %v1505
      %v1507 = vpop.f32.mrb[0].mxu0
      %1508 = vmatprep.mubr.f32.mxu0 0.0
      %1509 = vmatmul.mubr.f32.gmra.mrb[0].mxu0 %v744
      %v1510 = vpop.f32.mrb[0].mxu0
      %v1511 = vadd.f32 0.0, %v1510
      %v1512 = vpop.f32.mrb[0].mxu0
      %1513 = vmatprep.mubr.f32.mxu0 0.0
      %1514 = vmatmul.mubr.f32.gmra.mrb[0].mxu0 %v746
      %v1515 = vpop.f32.mrb[0].mxu0
      %v1516 = vadd.f32 0.0, %v1515
      %v1517 = vpop.f32.mrb[0].mxu0
      %1518 = vmatprep.mubr.f32.mxu0 0.0
      %1519 = vmatmul.mubr.f32.gmra.mrb[0].mxu0 %v748
      %v1520 = vpop.f32.mrb[0].mxu0
      %v1521 = vadd.f32 0.0, %v1520
      %v1522 = vpop.f32.mrb[0].mxu0
      %1523 = vmatprep.mubr.f32.mxu0 0.0
      %1524 = vmatmul.mubr.f32.gmra.mrb[0].mxu0 %v750
      %v1525 = vpop.f32.mrb[0].mxu0
      %v1526 = vadd.f32 0.0, %v1525
      %v1527 = vpop.f32.mrb[0].mxu0
      %1528 = vmatprep.mubr.f32.mxu0 0.0
      %1529 = vmatmul.mubr.f32.gmra.mrb[0].mxu0 %v752
      %v1530 = vpop.f32.mrb[0].mxu0
      %v1531 = vadd.f32 0.0, %v1530
      %v1532 = vpop.f32.mrb[0].mxu0
      %1533 = vmatprep.mubr.f32.mxu0 0.0
      %1534 = vmatmul.mubr.f32.gmra.mrb[0].mxu0 %v754
      %v1535 = vpop.f32.mrb[0].mxu0
      %v1536 = vadd.f32 0.0, %v1535
      %v1537 = vpop.f32.mrb[0].mxu0
      %1538 = vmatprep.mubr.f32.mxu0 0.0
      %1539 = vmatmul.mubr.f32.gmra.mrb[0].mxu0 %v756
      %v1540 = vpop.f32.mrb[0].mxu0
      %v1541 = vadd.f32 0.0, %v1540
      %v1542 = vpop.f32.mrb[0].mxu0
      %1543 = vmatprep.mubr.f32.mxu0 0.0
      %1544 = vmatmul.mubr.f32.gmra.mrb[0].mxu0 %v758
      %v1545 = vpop.f32.mrb[0].mxu0
      %v1546 = vadd.f32 0.0, %v1545
      %v1547 = vpop.f32.mrb[0].mxu0
      %1548 = vmatprep.mubr.f32.mxu0 0.0
      %1549 = vmatmul.mubr.f32.gmra.mrb[0].mxu0 %v760
      %v1550 = vpop.f32.mrb[0].mxu0
      %v1551 = vadd.f32 0.0, %v1550
      %v1552 = vpop.f32.mrb[0].mxu0
      %1553 = vmatprep.mubr.f32.mxu0 0.0
      %1554 = vmatmul.mubr.f32.gmra.mrb[0].mxu0 %v762
      %v1555 = vpop.f32.mrb[0].mxu0
      %v1556 = vadd.f32 0.0, %v1555
      %v1557 = vpop.f32.mrb[0].mxu0
      %1558 = vmatprep.mubr.f32.mxu0 0.0
      %1559 = vmatmul.mubr.f32.gmra.mrb[0].mxu0 %v764
      %v1560 = vpop.f32.mrb[0].mxu0
      %v1561 = vadd.f32 0.0, %v1560
      %v1562 = vpop.f32.mrb[0].mxu0
      %1563 = vmatprep.mubr.f32.mxu0 0.0
      %1564 = vmatmul.mubr.f32.gmra.mrb[0].mxu0 %v766
      %v1565 = vpop.f32.mrb[0].mxu0
      %v1566 = vadd.f32 0.0, %v1565
      %v1567 = vpop.f32.mrb[0].mxu0
      %1568 = vmatprep.mubr.f32.mxu0 0.0
      %1569 = vmatmul.mubr.f32.gmra.mrb[0].mxu0 %v768
      %v1570 = vpop.f32.mrb[0].mxu0
      %v1571 = vadd.f32 0.0, %v1570
      %v1572 = vpop.f32.mrb[0].mxu0
      %1573 = vmatprep.mubr.f32.mxu0 0.0
      %1574 = vmatmul.mubr.f32.gmra.mrb[0].mxu0 %v770
      %v1575 = vpop.f32.mrb[0].mxu0
      %v1576 = vadd.f32 0.0, %v1575
      %v1577 = vpop.f32.mrb[0].mxu0
      %1578 = vmatprep.mubr.f32.mxu0 0.0
      %1579 = vmatmul.mubr.f32.gmra.mrb[0].mxu0 %v772
      %v1580 = vpop.f32.mrb[0].mxu0
      %v1581 = vadd.f32 0.0, %v1580
      %v1582 = vpop.f32.mrb[0].mxu0
      %1583 = vmatprep.mubr.f32.mxu0 0.0
      %1584 = vmatmul.mubr.f32.gmra.mrb[0].mxu0 %v774
      %v1585 = vpop.f32.mrb[0].mxu0
      %v1586 = vadd.f32 0.0, %v1585
      %v1587 = vpop.f32.mrb[0].mxu0
      %1588 = vmatprep.mubr.f32.mxu0 0.0
      %1589 = vmatmul.mubr.f32.gmra.mrb[0].mxu0 %v776
      %v1590 = vpop.f32.mrb[0].mxu0
      %v1591 = vadd.f32 0.0, %v1590
      %v1592 = vpop.f32.mrb[0].mxu0
      %1593 = vmatprep.mubr.f32.mxu0 0.0
      %1594 = vmatmul.mubr.f32.gmra.mrb[0].mxu0 %v778
      %v1595 = vpop.f32.mrb[0].mxu0
      %v1596 = vadd.f32 0.0, %v1595
      %v1597 = vpop.f32.mrb[0].mxu0
      %1598 = vmatprep.mubr.f32.mxu0 0.0
      %1599 = vmatmul.mubr.f32.gmra.mrb[0].mxu0 %v780
      %v1600 = vpop.f32.mrb[0].mxu0
      %v1601 = vadd.f32 0.0, %v1600
      %v1602 = vpop.f32.mrb[0].mxu0
      %1603 = vmatprep.mubr.f32.mxu0 0.0
      %1604 = vmatmul.mubr.f32.gmra.mrb[0].mxu0 %v782
      %v1605 = vpop.f32.mrb[0].mxu0
      %v1606 = vadd.f32 0.0, %v1605
      %v1607 = vpop.f32.mrb[0].mxu0
      %1608 = vmatprep.mubr.f32.mxu0 0.0
      %1609 = vmatmul.mubr.f32.gmra.mrb[0].mxu0 %v784
      %v1610 = vpop.f32.mrb[0].mxu0
      %v1611 = vadd.f32 0.0, %v1610
      %v1612 = vpop.f32.mrb[0].mxu0
      %1613 = vmatprep.mubr.f32.mxu0 0.0
      %1614 = vmatmul.mubr.f32.gmra.mrb[0].mxu0 %v786
      %v1615 = vpop.f32.mrb[0].mxu0
      %v1616 = vadd.f32 0.0, %v1615
      %v1617 = vpop.f32.mrb[0].mxu0
      %1618 = vmatprep.mubr.f32.mxu0 0.0
      %1619 = vmatmul.mubr.f32.gmra.mrb[0].mxu0 %v788
      %v1620 = vpop.f32.mrb[0].mxu0
      %v1621 = vadd.f32 0.0, %v1620
      %v1622 = vpop.f32.mrb[0].mxu0
      %1623 = vmatprep.mubr.f32.mxu0 0.0
      %1624 = vmatmul.mubr.f32.gmra.mrb[0].mxu0 %v790
      %v1625 = vpop.f32.mrb[0].mxu0
      %v1626 = vadd.f32 0.0, %v1625
      %v1627 = vpop.f32.mrb[0].mxu0
      %1628 = vmatprep.mubr.f32.mxu0 0.0
      %1629 = vmatmul.mubr.f32.gmra.mrb[0].mxu0 %v792
      %v1630 = vpop.f32.mrb[0].mxu0
      %v1631 = vadd.f32 0.0, %v1630
      %v1632 = vpop.f32.mrb[0].mxu0
      %1633 = vmatprep.mubr.f32.mxu0 0.0
      %1634 = vmatmul.mubr.f32.gmra.mrb[0].mxu0 %v794
      %v1635 = vpop.f32.mrb[0].mxu0
      %v1636 = vadd.f32 0.0, %v1635
      %v1637 = vpop.f32.mrb[0].mxu0
      %1638 = vmatprep.mubr.f32.mxu0 0.0
      %1639 = vmatmul.mubr.f32.gmra.mrb[0].mxu0 %v796
      %v1640 = vpop.f32.mrb[0].mxu0
      %v1641 = vadd.f32 0.0, %v1640
      %v1642 = vpop.f32.mrb[0].mxu0
      %1643 = vmatprep.mubr.f32.mxu0 0.0
      %1644 = vmatmul.mubr.f32.gmra.mrb[0].mxu0 %v798
      %v1645 = vpop.f32.mrb[0].mxu0
      %v1646 = vadd.f32 0.0, %v1645
      %v1647 = vpop.f32.mrb[0].mxu0
      %1648 = vmatprep.mubr.f32.mxu0 0.0
      %1649 = vmatmul.mubr.f32.gmra.mrb[0].mxu0 %v800
      %v1650 = vpop.f32.mrb[0].mxu0
      %v1651 = vadd.f32 0.0, %v1650
      %v1652 = vpop.f32.mrb[0].mxu0
      %1653 = vmatprep.mubr.f32.mxu0 0.0
      %1654 = vmatmul.mubr.f32.gmra.mrb[0].mxu0 %v1434
      %v1655 = vpop.f32.mrb[0].mxu0
      %v1656 = vadd.f32 0.0, %v1655
      %v1657 = vpop.f32.mrb[0].mxu0
      %1658 = vmatprep.mubr.f32.mxu0 0.0
      %1659 = vmatmul.mubr.f32.gmra.mrb[0].mxu0 %v1437
      %v1660 = vpop.f32.mrb[0].mxu0
      %v1661 = vadd.f32 0.0, %v1660
      %v1662 = vpop.f32.mrb[0].mxu0
      %1663 = vdwg.mxu0
      %v1664 = vadd.f32 %v1399, %v1506
      %v1665 = vadd.f32 %v1400, %v1511
      %v1666 = vadd.f32 %v1401, %v1516
      %v1667 = vadd.f32 %v1402, %v1521
      %v1668 = vadd.f32 %v1403, %v1526
      %v1669 = vadd.f32 %v1404, %v1531
      %v1670 = vadd.f32 %v1405, %v1536
      %v1671 = vadd.f32 %v1406, %v1541
      %v1672 = vadd.f32 %v1407, %v1546
      %v1673 = vadd.f32 %v1408, %v1551
      %v1674 = vadd.f32 %v1409, %v1556
      %v1675 = vadd.f32 %v1410, %v1561
      %v1676 = vadd.f32 %v1411, %v1566
      %v1677 = vadd.f32 %v1412, %v1571
      %v1678 = vadd.f32 %v1413, %v1576
      %v1679 = vadd.f32 %v1414, %v1581
      %v1680 = vadd.f32 %v1415, %v1586
      %v1681 = vadd.f32 %v1416, %v1591
      %v1682 = vadd.f32 %v1417, %v1596
      %v1683 = vadd.f32 %v1418, %v1601
      %v1684 = vadd.f32 %v1419, %v1606
      %v1685 = vadd.f32 %v1420, %v1611
      %v1686 = vadd.f32 %v1421, %v1616
      %v1687 = vadd.f32 %v1422, %v1621
      %v1688 = vadd.f32 %v1423, %v1626
      %v1689 = vadd.f32 %v1424, %v1631
      %v1690 = vadd.f32 %v1425, %v1636
      %v1691 = vadd.f32 %v1426, %v1641
      %v1692 = vadd.f32 %v1427, %v1646
      %v1693 = vadd.f32 %v1428, %v1651
      %v1694 = vadd.f32 %v1429, %v1656
      %v1695 = vadd.f32 %v1430, %v1661
      %v1697 = vrot.slane %v310, 1
      %v1698 = vrot.slane %v311, 1
      %v1699 = vsel %vm365, %v1697, %v1698
      %v1700 = vrot.slane %v312, 1
      %v1701 = vsel %vm365, %v1698, %v1700
      %s1702 = scalar_lea.vmem %s2, 32
      %v1703 = vld [vmem:[%s1702] sm:$0xff]
      %v1704 = vsel %vm448, %v1699, 0
      %v1706 = vsel %vm448, %v1701, 0
      %1708 = vmatprep.subr.mxu0 0.0
      %1709 = vmatpush1.msra.mxu0 %v1703
      %1710 = vmatprep.subr.mxu0 0.0
      %1711 = vmatpush1.msra.mxu0 0.0
      %1712 = vmatprep.subr.mxu0 0.0
      %1713 = vmatpush1.msra.mxu0 0.0
      %1714 = vmatprep.subr.mxu0 0.0
      %1715 = vmatpush1.msra.mxu0 0.0
      %1716 = vmatprep.subr.mxu0 0.0
      %1717 = vmatpush1.msra.mxu0 0.0
      %1718 = vmatprep.subr.mxu0 0.0
      %1719 = vmatpush1.msra.mxu0 0.0
      %1720 = vmatprep.subr.mxu0 0.0
      %1721 = vmatpush1.msra.mxu0 0.0
      %1722 = vmatprep.subr.mxu0 0.0
      %1723 = vmatpush1.msra.mxu0 0.0
      %1724 = vmatprep.subr.mxu0 0.0
      %1725 = vmatpush1.msra.mxu0 0.0
      %1726 = vmatprep.subr.mxu0 0.0
      %1727 = vmatpush1.msra.mxu0 0.0
      %1728 = vmatprep.subr.mxu0 0.0
      %1729 = vmatpush1.msra.mxu0 0.0
      %1730 = vmatprep.subr.mxu0 0.0
      %1731 = vmatpush1.msra.mxu0 0.0
      %1732 = vmatprep.subr.mxu0 0.0
      %1733 = vmatpush1.msra.mxu0 0.0
      %1734 = vmatprep.subr.mxu0 0.0
      %1735 = vmatpush1.msra.mxu0 0.0
      %1736 = vmatprep.subr.mxu0 0.0
      %1737 = vmatpush1.msra.mxu0 0.0
      %1738 = vmatprep.subr.mxu0 0.0
      %1739 = vmatpush1.msra.mxu0 0.0
      %1740 = vmatprep.subr.mxu0 0.0
      %1741 = vmatpush1.msra.mxu0 0.0
      %1742 = vmatprep.subr.mxu0 0.0
      %1743 = vmatpush1.msra.mxu0 0.0
      %1744 = vmatprep.subr.mxu0 0.0
      %1745 = vmatpush1.msra.mxu0 0.0
      %1746 = vmatprep.subr.mxu0 0.0
      %1747 = vmatpush1.msra.mxu0 0.0
      %1748 = vmatprep.subr.mxu0 0.0
      %1749 = vmatpush1.msra.mxu0 0.0
      %1750 = vmatprep.subr.mxu0 0.0
      %1751 = vmatpush1.msra.mxu0 0.0
      %1752 = vmatprep.subr.mxu0 0.0
      %1753 = vmatpush1.msra.mxu0 0.0
      %1754 = vmatprep.subr.mxu0 0.0
      %1755 = vmatpush1.msra.mxu0 0.0
      %1756 = vmatprep.subr.mxu0 0.0
      %1757 = vmatpush1.msra.mxu0 0.0
      %1758 = vmatprep.subr.mxu0 0.0
      %1759 = vmatpush1.msra.mxu0 0.0
      %1760 = vmatprep.subr.mxu0 0.0
      %1761 = vmatpush1.msra.mxu0 0.0
      %1762 = vmatprep.subr.mxu0 0.0
      %1763 = vmatpush1.msra.mxu0 0.0
      %1764 = vmatprep.subr.mxu0 0.0
      %1765 = vmatpush1.msra.mxu0 0.0
      %1766 = vmatprep.subr.mxu0 0.0
      %1767 = vmatpush1.msra.mxu0 0.0
      %1768 = vmatprep.subr.mxu0 0.0
      %1769 = vmatpush1.msra.mxu0 0.0
      %1770 = vmatprep.subr.mxu0 0.0
      %1771 = vmatpush1.msra.mxu0 0.0
      %1772 = vmatprep.mubr.f32.mxu0 0.0
      %1773 = vmatmul.mubr.f32.gmra.mrb[0].mxu0 %v453
      %v1774 = vpop.f32.mrb[0].mxu0
      %v1775 = vadd.f32 0.0, %v1774
      %v1776 = vpop.f32.mrb[0].mxu0
      %1777 = vmatprep.mubr.f32.mxu0 0.0
      %1778 = vmatmul.mubr.f32.gmra.mrb[0].mxu0 %v455
      %v1779 = vpop.f32.mrb[0].mxu0
      %v1780 = vadd.f32 0.0, %v1779
      %v1781 = vpop.f32.mrb[0].mxu0
      %1782 = vmatprep.mubr.f32.mxu0 0.0
      %1783 = vmatmul.mubr.f32.gmra.mrb[0].mxu0 %v457
      %v1784 = vpop.f32.mrb[0].mxu0
      %v1785 = vadd.f32 0.0, %v1784
      %v1786 = vpop.f32.mrb[0].mxu0
      %1787 = vmatprep.mubr.f32.mxu0 0.0
      %1788 = vmatmul.mubr.f32.gmra.mrb[0].mxu0 %v459
      %v1789 = vpop.f32.mrb[0].mxu0
      %v1790 = vadd.f32 0.0, %v1789
      %v1791 = vpop.f32.mrb[0].mxu0
      %1792 = vmatprep.mubr.f32.mxu0 0.0
      %1793 = vmatmul.mubr.f32.gmra.mrb[0].mxu0 %v461
      %v1794 = vpop.f32.mrb[0].mxu0
      %v1795 = vadd.f32 0.0, %v1794
      %v1796 = vpop.f32.mrb[0].mxu0
      %1797 = vmatprep.mubr.f32.mxu0 0.0
      %1798 = vmatmul.mubr.f32.gmra.mrb[0].mxu0 %v463
      %v1799 = vpop.f32.mrb[0].mxu0
      %v1800 = vadd.f32 0.0, %v1799
      %v1801 = vpop.f32.mrb[0].mxu0
      %1802 = vmatprep.mubr.f32.mxu0 0.0
      %1803 = vmatmul.mubr.f32.gmra.mrb[0].mxu0 %v465
      %v1804 = vpop.f32.mrb[0].mxu0
      %v1805 = vadd.f32 0.0, %v1804
      %v1806 = vpop.f32.mrb[0].mxu0
      %1807 = vmatprep.mubr.f32.mxu0 0.0
      %1808 = vmatmul.mubr.f32.gmra.mrb[0].mxu0 %v467
      %v1809 = vpop.f32.mrb[0].mxu0
      %v1810 = vadd.f32 0.0, %v1809
      %v1811 = vpop.f32.mrb[0].mxu0
      %1812 = vmatprep.mubr.f32.mxu0 0.0
      %1813 = vmatmul.mubr.f32.gmra.mrb[0].mxu0 %v469
      %v1814 = vpop.f32.mrb[0].mxu0
      %v1815 = vadd.f32 0.0, %v1814
      %v1816 = vpop.f32.mrb[0].mxu0
      %1817 = vmatprep.mubr.f32.mxu0 0.0
      %1818 = vmatmul.mubr.f32.gmra.mrb[0].mxu0 %v471
      %v1819 = vpop.f32.mrb[0].mxu0
      %v1820 = vadd.f32 0.0, %v1819
      %v1821 = vpop.f32.mrb[0].mxu0
      %1822 = vmatprep.mubr.f32.mxu0 0.0
      %1823 = vmatmul.mubr.f32.gmra.mrb[0].mxu0 %v473
      %v1824 = vpop.f32.mrb[0].mxu0
      %v1825 = vadd.f32 0.0, %v1824
      %v1826 = vpop.f32.mrb[0].mxu0
      %1827 = vmatprep.mubr.f32.mxu0 0.0
      %1828 = vmatmul.mubr.f32.gmra.mrb[0].mxu0 %v475
      %v1829 = vpop.f32.mrb[0].mxu0
      %v1830 = vadd.f32 0.0, %v1829
      %v1831 = vpop.f32.mrb[0].mxu0
      %1832 = vmatprep.mubr.f32.mxu0 0.0
      %1833 = vmatmul.mubr.f32.gmra.mrb[0].mxu0 %v477
      %v1834 = vpop.f32.mrb[0].mxu0
      %v1835 = vadd.f32 0.0, %v1834
      %v1836 = vpop.f32.mrb[0].mxu0
      %1837 = vmatprep.mubr.f32.mxu0 0.0
      %1838 = vmatmul.mubr.f32.gmra.mrb[0].mxu0 %v479
      %v1839 = vpop.f32.mrb[0].mxu0
      %v1840 = vadd.f32 0.0, %v1839
      %v1841 = vpop.f32.mrb[0].mxu0
      %1842 = vmatprep.mubr.f32.mxu0 0.0
      %1843 = vmatmul.mubr.f32.gmra.mrb[0].mxu0 %v481
      %v1844 = vpop.f32.mrb[0].mxu0
      %v1845 = vadd.f32 0.0, %v1844
      %v1846 = vpop.f32.mrb[0].mxu0
      %1847 = vmatprep.mubr.f32.mxu0 0.0
      %1848 = vmatmul.mubr.f32.gmra.mrb[0].mxu0 %v483
      %v1849 = vpop.f32.mrb[0].mxu0
      %v1850 = vadd.f32 0.0, %v1849
      %v1851 = vpop.f32.mrb[0].mxu0
      %1852 = vmatprep.mubr.f32.mxu0 0.0
      %1853 = vmatmul.mubr.f32.gmra.mrb[0].mxu0 %v485
      %v1854 = vpop.f32.mrb[0].mxu0
      %v1855 = vadd.f32 0.0, %v1854
      %v1856 = vpop.f32.mrb[0].mxu0
      %1857 = vmatprep.mubr.f32.mxu0 0.0
      %1858 = vmatmul.mubr.f32.gmra.mrb[0].mxu0 %v487
      %v1859 = vpop.f32.mrb[0].mxu0
      %v1860 = vadd.f32 0.0, %v1859
      %v1861 = vpop.f32.mrb[0].mxu0
      %1862 = vmatprep.mubr.f32.mxu0 0.0
      %1863 = vmatmul.mubr.f32.gmra.mrb[0].mxu0 %v489
      %v1864 = vpop.f32.mrb[0].mxu0
      %v1865 = vadd.f32 0.0, %v1864
      %v1866 = vpop.f32.mrb[0].mxu0
      %1867 = vmatprep.mubr.f32.mxu0 0.0
      %1868 = vmatmul.mubr.f32.gmra.mrb[0].mxu0 %v491
      %v1869 = vpop.f32.mrb[0].mxu0
      %v1870 = vadd.f32 0.0, %v1869
      %v1871 = vpop.f32.mrb[0].mxu0
      %1872 = vmatprep.mubr.f32.mxu0 0.0
      %1873 = vmatmul.mubr.f32.gmra.mrb[0].mxu0 %v493
      %v1874 = vpop.f32.mrb[0].mxu0
      %v1875 = vadd.f32 0.0, %v1874
      %v1876 = vpop.f32.mrb[0].mxu0
      %1877 = vmatprep.mubr.f32.mxu0 0.0
      %1878 = vmatmul.mubr.f32.gmra.mrb[0].mxu0 %v495
      %v1879 = vpop.f32.mrb[0].mxu0
      %v1880 = vadd.f32 0.0, %v1879
      %v1881 = vpop.f32.mrb[0].mxu0
      %1882 = vmatprep.mubr.f32.mxu0 0.0
      %1883 = vmatmul.mubr.f32.gmra.mrb[0].mxu0 %v497
      %v1884 = vpop.f32.mrb[0].mxu0
      %v1885 = vadd.f32 0.0, %v1884
      %v1886 = vpop.f32.mrb[0].mxu0
      %1887 = vmatprep.mubr.f32.mxu0 0.0
      %1888 = vmatmul.mubr.f32.gmra.mrb[0].mxu0 %v499
      %v1889 = vpop.f32.mrb[0].mxu0
      %v1890 = vadd.f32 0.0, %v1889
      %v1891 = vpop.f32.mrb[0].mxu0
      %1892 = vmatprep.mubr.f32.mxu0 0.0
      %1893 = vmatmul.mubr.f32.gmra.mrb[0].mxu0 %v501
      %v1894 = vpop.f32.mrb[0].mxu0
      %v1895 = vadd.f32 0.0, %v1894
      %v1896 = vpop.f32.mrb[0].mxu0
      %1897 = vmatprep.mubr.f32.mxu0 0.0
      %1898 = vmatmul.mubr.f32.gmra.mrb[0].mxu0 %v503
      %v1899 = vpop.f32.mrb[0].mxu0
      %v1900 = vadd.f32 0.0, %v1899
      %v1901 = vpop.f32.mrb[0].mxu0
      %1902 = vmatprep.mubr.f32.mxu0 0.0
      %1903 = vmatmul.mubr.f32.gmra.mrb[0].mxu0 %v505
      %v1904 = vpop.f32.mrb[0].mxu0
      %v1905 = vadd.f32 0.0, %v1904
      %v1906 = vpop.f32.mrb[0].mxu0
      %1907 = vmatprep.mubr.f32.mxu0 0.0
      %1908 = vmatmul.mubr.f32.gmra.mrb[0].mxu0 %v507
      %v1909 = vpop.f32.mrb[0].mxu0
      %v1910 = vadd.f32 0.0, %v1909
      %v1911 = vpop.f32.mrb[0].mxu0
      %1912 = vmatprep.mubr.f32.mxu0 0.0
      %1913 = vmatmul.mubr.f32.gmra.mrb[0].mxu0 %v509
      %v1914 = vpop.f32.mrb[0].mxu0
      %v1915 = vadd.f32 0.0, %v1914
      %v1916 = vpop.f32.mrb[0].mxu0
      %1917 = vmatprep.mubr.f32.mxu0 0.0
      %1918 = vmatmul.mubr.f32.gmra.mrb[0].mxu0 %v511
      %v1919 = vpop.f32.mrb[0].mxu0
      %v1920 = vadd.f32 0.0, %v1919
      %v1921 = vpop.f32.mrb[0].mxu0
      %1922 = vmatprep.mubr.f32.mxu0 0.0
      %1923 = vmatmul.mubr.f32.gmra.mrb[0].mxu0 %v1704
      %v1924 = vpop.f32.mrb[0].mxu0
      %v1925 = vadd.f32 0.0, %v1924
      %v1926 = vpop.f32.mrb[0].mxu0
      %1927 = vmatprep.mubr.f32.mxu0 0.0
      %1928 = vmatmul.mubr.f32.gmra.mrb[0].mxu0 %v1706
      %v1929 = vpop.f32.mrb[0].mxu0
      %v1930 = vadd.f32 0.0, %v1929
      %v1931 = vpop.f32.mrb[0].mxu0
      %1932 = vdwg.mxu0
      %v1933 = vadd.f32 %v1664, %v1775
      %v1934 = vadd.f32 %v1665, %v1780
      %v1935 = vadd.f32 %v1666, %v1785
      %v1936 = vadd.f32 %v1667, %v1790
      %v1937 = vadd.f32 %v1668, %v1795
      %v1938 = vadd.f32 %v1669, %v1800
      %v1939 = vadd.f32 %v1670, %v1805
      %v1940 = vadd.f32 %v1671, %v1810
      %v1941 = vadd.f32 %v1672, %v1815
      %v1942 = vadd.f32 %v1673, %v1820
      %v1943 = vadd.f32 %v1674, %v1825
      %v1944 = vadd.f32 %v1675, %v1830
      %v1945 = vadd.f32 %v1676, %v1835
      %v1946 = vadd.f32 %v1677, %v1840
      %v1947 = vadd.f32 %v1678, %v1845
      %v1948 = vadd.f32 %v1679, %v1850
      %v1949 = vadd.f32 %v1680, %v1855
      %v1950 = vadd.f32 %v1681, %v1860
      %v1951 = vadd.f32 %v1682, %v1865
      %v1952 = vadd.f32 %v1683, %v1870
      %v1953 = vadd.f32 %v1684, %v1875
      %v1954 = vadd.f32 %v1685, %v1880
      %v1955 = vadd.f32 %v1686, %v1885
      %v1956 = vadd.f32 %v1687, %v1890
      %v1957 = vadd.f32 %v1688, %v1895
      %v1958 = vadd.f32 %v1689, %v1900
      %v1959 = vadd.f32 %v1690, %v1905
      %v1960 = vadd.f32 %v1691, %v1910
      %v1961 = vadd.f32 %v1692, %v1915
      %v1962 = vadd.f32 %v1693, %v1920
      %v1963 = vadd.f32 %v1694, %v1925
      %v1964 = vadd.f32 %v1695, %v1930
      %v1965 = vrot.slane %v310, 2
      %v1966 = vrot.slane %v311, 2
      %v1967 = vsel %vm1027, %v1965, %v1966
      %v1968 = vrot.slane %v312, 2
      %v1969 = vsel %vm1027, %v1966, %v1968
      %s1970 = scalar_lea.vmem %s2, 40
      %v1971 = vld [vmem:[%s1970] sm:$0xff]
      %v1972 = vsel %vm448, %v1967, 0
      %v1974 = vsel %vm448, %v1969, 0
      %1976 = vmatprep.subr.mxu0 0.0
      %1977 = vmatpush1.msra.mxu0 %v1971
      %1978 = vmatprep.subr.mxu0 0.0
      %1979 = vmatpush1.msra.mxu0 0.0
      %1980 = vmatprep.subr.mxu0 0.0
      %1981 = vmatpush1.msra.mxu0 0.0
      %1982 = vmatprep.subr.mxu0 0.0
      %1983 = vmatpush1.msra.mxu0 0.0
      %1984 = vmatprep.subr.mxu0 0.0
      %1985 = vmatpush1.msra.mxu0 0.0
      %1986 = vmatprep.subr.mxu0 0.0
      %1987 = vmatpush1.msra.mxu0 0.0
      %1988 = vmatprep.subr.mxu0 0.0
      %1989 = vmatpush1.msra.mxu0 0.0
      %1990 = vmatprep.subr.mxu0 0.0
      %1991 = vmatpush1.msra.mxu0 0.0
      %1992 = vmatprep.subr.mxu0 0.0
      %1993 = vmatpush1.msra.mxu0 0.0
      %1994 = vmatprep.subr.mxu0 0.0
      %1995 = vmatpush1.msra.mxu0 0.0
      %1996 = vmatprep.subr.mxu0 0.0
      %1997 = vmatpush1.msra.mxu0 0.0
      %1998 = vmatprep.subr.mxu0 0.0
      %1999 = vmatpush1.msra.mxu0 0.0
      %2000 = vmatprep.subr.mxu0 0.0
      %2001 = vmatpush1.msra.mxu0 0.0
      %2002 = vmatprep.subr.mxu0 0.0
      %2003 = vmatpush1.msra.mxu0 0.0
      %2004 = vmatprep.subr.mxu0 0.0
      %2005 = vmatpush1.msra.mxu0 0.0
      %2006 = vmatprep.subr.mxu0 0.0
      %2007 = vmatpush1.msra.mxu0 0.0
      %2008 = vmatprep.subr.mxu0 0.0
      %2009 = vmatpush1.msra.mxu0 0.0
      %2010 = vmatprep.subr.mxu0 0.0
      %2011 = vmatpush1.msra.mxu0 0.0
      %2012 = vmatprep.subr.mxu0 0.0
      %2013 = vmatpush1.msra.mxu0 0.0
      %2014 = vmatprep.subr.mxu0 0.0
      %2015 = vmatpush1.msra.mxu0 0.0
      %2016 = vmatprep.subr.mxu0 0.0
      %2017 = vmatpush1.msra.mxu0 0.0
      %2018 = vmatprep.subr.mxu0 0.0
      %2019 = vmatpush1.msra.mxu0 0.0
      %2020 = vmatprep.subr.mxu0 0.0
      %2021 = vmatpush1.msra.mxu0 0.0
      %2022 = vmatprep.subr.mxu0 0.0
      %2023 = vmatpush1.msra.mxu0 0.0
      %2024 = vmatprep.subr.mxu0 0.0
      %2025 = vmatpush1.msra.mxu0 0.0
      %2026 = vmatprep.subr.mxu0 0.0
      %2027 = vmatpush1.msra.mxu0 0.0
      %2028 = vmatprep.subr.mxu0 0.0
      %2029 = vmatpush1.msra.mxu0 0.0
      %2030 = vmatprep.subr.mxu0 0.0
      %2031 = vmatpush1.msra.mxu0 0.0
      %2032 = vmatprep.subr.mxu0 0.0
      %2033 = vmatpush1.msra.mxu0 0.0
      %2034 = vmatprep.subr.mxu0 0.0
      %2035 = vmatpush1.msra.mxu0 0.0
      %2036 = vmatprep.subr.mxu0 0.0
      %2037 = vmatpush1.msra.mxu0 0.0
      %2038 = vmatprep.subr.mxu0 0.0
      %2039 = vmatpush1.msra.mxu0 0.0
      %2040 = vmatprep.mubr.f32.mxu0 0.0
      %2041 = vmatmul.mubr.f32.gmra.mrb[0].mxu0 %v1114
      %v2042 = vpop.f32.mrb[0].mxu0
      %v2043 = vadd.f32 0.0, %v2042
      %v2044 = vpop.f32.mrb[0].mxu0
      %2045 = vmatprep.mubr.f32.mxu0 0.0
      %2046 = vmatmul.mubr.f32.gmra.mrb[0].mxu0 %v1116
      %v2047 = vpop.f32.mrb[0].mxu0
      %v2048 = vadd.f32 0.0, %v2047
      %v2049 = vpop.f32.mrb[0].mxu0
      %2050 = vmatprep.mubr.f32.mxu0 0.0
      %2051 = vmatmul.mubr.f32.gmra.mrb[0].mxu0 %v1118
      %v2052 = vpop.f32.mrb[0].mxu0
      %v2053 = vadd.f32 0.0, %v2052
      %v2054 = vpop.f32.mrb[0].mxu0
      %2055 = vmatprep.mubr.f32.mxu0 0.0
      %2056 = vmatmul.mubr.f32.gmra.mrb[0].mxu0 %v1120
      %v2057 = vpop.f32.mrb[0].mxu0
      %v2058 = vadd.f32 0.0, %v2057
      %v2059 = vpop.f32.mrb[0].mxu0
      %2060 = vmatprep.mubr.f32.mxu0 0.0
      %2061 = vmatmul.mubr.f32.gmra.mrb[0].mxu0 %v1122
      %v2062 = vpop.f32.mrb[0].mxu0
      %v2063 = vadd.f32 0.0, %v2062
      %v2064 = vpop.f32.mrb[0].mxu0
      %2065 = vmatprep.mubr.f32.mxu0 0.0
      %2066 = vmatmul.mubr.f32.gmra.mrb[0].mxu0 %v1124
      %v2067 = vpop.f32.mrb[0].mxu0
      %v2068 = vadd.f32 0.0, %v2067
      %v2069 = vpop.f32.mrb[0].mxu0
      %2070 = vmatprep.mubr.f32.mxu0 0.0
      %2071 = vmatmul.mubr.f32.gmra.mrb[0].mxu0 %v1126
      %v2072 = vpop.f32.mrb[0].mxu0
      %v2073 = vadd.f32 0.0, %v2072
      %v2074 = vpop.f32.mrb[0].mxu0
      %2075 = vmatprep.mubr.f32.mxu0 0.0
      %2076 = vmatmul.mubr.f32.gmra.mrb[0].mxu0 %v1128
      %v2077 = vpop.f32.mrb[0].mxu0
      %v2078 = vadd.f32 0.0, %v2077
      %v2079 = vpop.f32.mrb[0].mxu0
      %2080 = vmatprep.mubr.f32.mxu0 0.0
      %2081 = vmatmul.mubr.f32.gmra.mrb[0].mxu0 %v1130
      %v2082 = vpop.f32.mrb[0].mxu0
      %v2083 = vadd.f32 0.0, %v2082
      %v2084 = vpop.f32.mrb[0].mxu0
      %2085 = vmatprep.mubr.f32.mxu0 0.0
      %2086 = vmatmul.mubr.f32.gmra.mrb[0].mxu0 %v1132
      %v2087 = vpop.f32.mrb[0].mxu0
      %v2088 = vadd.f32 0.0, %v2087
      %v2089 = vpop.f32.mrb[0].mxu0
      %2090 = vmatprep.mubr.f32.mxu0 0.0
      %2091 = vmatmul.mubr.f32.gmra.mrb[0].mxu0 %v1134
      %v2092 = vpop.f32.mrb[0].mxu0
      %v2093 = vadd.f32 0.0, %v2092
      %v2094 = vpop.f32.mrb[0].mxu0
      %2095 = vmatprep.mubr.f32.mxu0 0.0
      %2096 = vmatmul.mubr.f32.gmra.mrb[0].mxu0 %v1136
      %v2097 = vpop.f32.mrb[0].mxu0
      %v2098 = vadd.f32 0.0, %v2097
      %v2099 = vpop.f32.mrb[0].mxu0
      %2100 = vmatprep.mubr.f32.mxu0 0.0
      %2101 = vmatmul.mubr.f32.gmra.mrb[0].mxu0 %v1138
      %v2102 = vpop.f32.mrb[0].mxu0
      %v2103 = vadd.f32 0.0, %v2102
      %v2104 = vpop.f32.mrb[0].mxu0
      %2105 = vmatprep.mubr.f32.mxu0 0.0
      %2106 = vmatmul.mubr.f32.gmra.mrb[0].mxu0 %v1140
      %v2107 = vpop.f32.mrb[0].mxu0
      %v2108 = vadd.f32 0.0, %v2107
      %v2109 = vpop.f32.mrb[0].mxu0
      %2110 = vmatprep.mubr.f32.mxu0 0.0
      %2111 = vmatmul.mubr.f32.gmra.mrb[0].mxu0 %v1142
      %v2112 = vpop.f32.mrb[0].mxu0
      %v2113 = vadd.f32 0.0, %v2112
      %v2114 = vpop.f32.mrb[0].mxu0
      %2115 = vmatprep.mubr.f32.mxu0 0.0
      %2116 = vmatmul.mubr.f32.gmra.mrb[0].mxu0 %v1144
      %v2117 = vpop.f32.mrb[0].mxu0
      %v2118 = vadd.f32 0.0, %v2117
      %v2119 = vpop.f32.mrb[0].mxu0
      %2120 = vmatprep.mubr.f32.mxu0 0.0
      %2121 = vmatmul.mubr.f32.gmra.mrb[0].mxu0 %v1146
      %v2122 = vpop.f32.mrb[0].mxu0
      %v2123 = vadd.f32 0.0, %v2122
      %v2124 = vpop.f32.mrb[0].mxu0
      %2125 = vmatprep.mubr.f32.mxu0 0.0
      %2126 = vmatmul.mubr.f32.gmra.mrb[0].mxu0 %v1148
      %v2127 = vpop.f32.mrb[0].mxu0
      %v2128 = vadd.f32 0.0, %v2127
      %v2129 = vpop.f32.mrb[0].mxu0
      %2130 = vmatprep.mubr.f32.mxu0 0.0
      %2131 = vmatmul.mubr.f32.gmra.mrb[0].mxu0 %v1150
      %v2132 = vpop.f32.mrb[0].mxu0
      %v2133 = vadd.f32 0.0, %v2132
      %v2134 = vpop.f32.mrb[0].mxu0
      %2135 = vmatprep.mubr.f32.mxu0 0.0
      %2136 = vmatmul.mubr.f32.gmra.mrb[0].mxu0 %v1152
      %v2137 = vpop.f32.mrb[0].mxu0
      %v2138 = vadd.f32 0.0, %v2137
      %v2139 = vpop.f32.mrb[0].mxu0
      %2140 = vmatprep.mubr.f32.mxu0 0.0
      %2141 = vmatmul.mubr.f32.gmra.mrb[0].mxu0 %v1154
      %v2142 = vpop.f32.mrb[0].mxu0
      %v2143 = vadd.f32 0.0, %v2142
      %v2144 = vpop.f32.mrb[0].mxu0
      %2145 = vmatprep.mubr.f32.mxu0 0.0
      %2146 = vmatmul.mubr.f32.gmra.mrb[0].mxu0 %v1156
      %v2147 = vpop.f32.mrb[0].mxu0
      %v2148 = vadd.f32 0.0, %v2147
      %v2149 = vpop.f32.mrb[0].mxu0
      %2150 = vmatprep.mubr.f32.mxu0 0.0
      %2151 = vmatmul.mubr.f32.gmra.mrb[0].mxu0 %v1158
      %v2152 = vpop.f32.mrb[0].mxu0
      %v2153 = vadd.f32 0.0, %v2152
      %v2154 = vpop.f32.mrb[0].mxu0
      %2155 = vmatprep.mubr.f32.mxu0 0.0
      %2156 = vmatmul.mubr.f32.gmra.mrb[0].mxu0 %v1160
      %v2157 = vpop.f32.mrb[0].mxu0
      %v2158 = vadd.f32 0.0, %v2157
      %v2159 = vpop.f32.mrb[0].mxu0
      %2160 = vmatprep.mubr.f32.mxu0 0.0
      %2161 = vmatmul.mubr.f32.gmra.mrb[0].mxu0 %v1162
      %v2162 = vpop.f32.mrb[0].mxu0
      %v2163 = vadd.f32 0.0, %v2162
      %v2164 = vpop.f32.mrb[0].mxu0
      %2165 = vmatprep.mubr.f32.mxu0 0.0
      %2166 = vmatmul.mubr.f32.gmra.mrb[0].mxu0 %v1164
      %v2167 = vpop.f32.mrb[0].mxu0
      %v2168 = vadd.f32 0.0, %v2167
      %v2169 = vpop.f32.mrb[0].mxu0
      %2170 = vmatprep.mubr.f32.mxu0 0.0
      %2171 = vmatmul.mubr.f32.gmra.mrb[0].mxu0 %v1166
      %v2172 = vpop.f32.mrb[0].mxu0
      %v2173 = vadd.f32 0.0, %v2172
      %v2174 = vpop.f32.mrb[0].mxu0
      %2175 = vmatprep.mubr.f32.mxu0 0.0
      %2176 = vmatmul.mubr.f32.gmra.mrb[0].mxu0 %v1168
      %v2177 = vpop.f32.mrb[0].mxu0
      %v2178 = vadd.f32 0.0, %v2177
      %v2179 = vpop.f32.mrb[0].mxu0
      %2180 = vmatprep.mubr.f32.mxu0 0.0
      %2181 = vmatmul.mubr.f32.gmra.mrb[0].mxu0 %v1170
      %v2182 = vpop.f32.mrb[0].mxu0
      %v2183 = vadd.f32 0.0, %v2182
      %v2184 = vpop.f32.mrb[0].mxu0
      %2185 = vmatprep.mubr.f32.mxu0 0.0
      %2186 = vmatmul.mubr.f32.gmra.mrb[0].mxu0 %v1172
      %v2187 = vpop.f32.mrb[0].mxu0
      %v2188 = vadd.f32 0.0, %v2187
      %v2189 = vpop.f32.mrb[0].mxu0
      %2190 = vmatprep.mubr.f32.mxu0 0.0
      %2191 = vmatmul.mubr.f32.gmra.mrb[0].mxu0 %v1972
      %v2192 = vpop.f32.mrb[0].mxu0
      %v2193 = vadd.f32 0.0, %v2192
      %v2194 = vpop.f32.mrb[0].mxu0
      %2195 = vmatprep.mubr.f32.mxu0 0.0
      %2196 = vmatmul.mubr.f32.gmra.mrb[0].mxu0 %v1974
      %v2197 = vpop.f32.mrb[0].mxu0
      %v2198 = vadd.f32 0.0, %v2197
      %v2199 = vpop.f32.mrb[0].mxu0
      %2200 = vdwg.mxu0
      %v2201 = vadd.f32 %v1933, %v2043
      %v2202 = vadd.f32 %v1934, %v2048
      %v2203 = vadd.f32 %v1935, %v2053
      %v2204 = vadd.f32 %v1936, %v2058
      %v2205 = vadd.f32 %v1937, %v2063
      %v2206 = vadd.f32 %v1938, %v2068
      %v2207 = vadd.f32 %v1939, %v2073
      %v2208 = vadd.f32 %v1940, %v2078
      %v2209 = vadd.f32 %v1941, %v2083
      %v2210 = vadd.f32 %v1942, %v2088
      %v2211 = vadd.f32 %v1943, %v2093
      %v2212 = vadd.f32 %v1944, %v2098
      %v2213 = vadd.f32 %v1945, %v2103
      %v2214 = vadd.f32 %v1946, %v2108
      %v2215 = vadd.f32 %v1947, %v2113
      %v2216 = vadd.f32 %v1948, %v2118
      %v2217 = vadd.f32 %v1949, %v2123
      %v2218 = vadd.f32 %v1950, %v2128
      %v2219 = vadd.f32 %v1951, %v2133
      %v2220 = vadd.f32 %v1952, %v2138
      %v2221 = vadd.f32 %v1953, %v2143
      %v2222 = vadd.f32 %v1954, %v2148
      %v2223 = vadd.f32 %v1955, %v2153
      %v2224 = vadd.f32 %v1956, %v2158
      %v2225 = vadd.f32 %v1957, %v2163
      %v2226 = vadd.f32 %v1958, %v2168
      %v2227 = vadd.f32 %v1959, %v2173
      %v2228 = vadd.f32 %v1960, %v2178
      %v2229 = vadd.f32 %v1961, %v2183
      %v2230 = vadd.f32 %v1962, %v2188
      %v2231 = vadd.f32 %v1963, %v2193
      %v2232 = vadd.f32 %v1964, %v2198
      %s2233 = scalar_lea.vmem %s2, 48
      %v2234 = vld [vmem:[%s2233] sm:$0xff]
      %v2236 = vsel %vm448, %v313, 0
      %v2239 = vsel %vm448, %v314, 0
      %2241 = vmatprep.subr.mxu0 0.0
      %2242 = vmatpush1.msra.mxu0 %v2234
      %2243 = vmatprep.subr.mxu0 0.0
      %2244 = vmatpush1.msra.mxu0 0.0
      %2245 = vmatprep.subr.mxu0 0.0
      %2246 = vmatpush1.msra.mxu0 0.0
      %2247 = vmatprep.subr.mxu0 0.0
      %2248 = vmatpush1.msra.mxu0 0.0
      %2249 = vmatprep.subr.mxu0 0.0
      %2250 = vmatpush1.msra.mxu0 0.0
      %2251 = vmatprep.subr.mxu0 0.0
      %2252 = vmatpush1.msra.mxu0 0.0
      %2253 = vmatprep.subr.mxu0 0.0
      %2254 = vmatpush1.msra.mxu0 0.0
      %2255 = vmatprep.subr.mxu0 0.0
      %2256 = vmatpush1.msra.mxu0 0.0
      %2257 = vmatprep.subr.mxu0 0.0
      %2258 = vmatpush1.msra.mxu0 0.0
      %2259 = vmatprep.subr.mxu0 0.0
      %2260 = vmatpush1.msra.mxu0 0.0
      %2261 = vmatprep.subr.mxu0 0.0
      %2262 = vmatpush1.msra.mxu0 0.0
      %2263 = vmatprep.subr.mxu0 0.0
      %2264 = vmatpush1.msra.mxu0 0.0
      %2265 = vmatprep.subr.mxu0 0.0
      %2266 = vmatpush1.msra.mxu0 0.0
      %2267 = vmatprep.subr.mxu0 0.0
      %2268 = vmatpush1.msra.mxu0 0.0
      %2269 = vmatprep.subr.mxu0 0.0
      %2270 = vmatpush1.msra.mxu0 0.0
      %2271 = vmatprep.subr.mxu0 0.0
      %2272 = vmatpush1.msra.mxu0 0.0
      %2273 = vmatprep.subr.mxu0 0.0
      %2274 = vmatpush1.msra.mxu0 0.0
      %2275 = vmatprep.subr.mxu0 0.0
      %2276 = vmatpush1.msra.mxu0 0.0
      %2277 = vmatprep.subr.mxu0 0.0
      %2278 = vmatpush1.msra.mxu0 0.0
      %2279 = vmatprep.subr.mxu0 0.0
      %2280 = vmatpush1.msra.mxu0 0.0
      %2281 = vmatprep.subr.mxu0 0.0
      %2282 = vmatpush1.msra.mxu0 0.0
      %2283 = vmatprep.subr.mxu0 0.0
      %2284 = vmatpush1.msra.mxu0 0.0
      %2285 = vmatprep.subr.mxu0 0.0
      %2286 = vmatpush1.msra.mxu0 0.0
      %2287 = vmatprep.subr.mxu0 0.0
      %2288 = vmatpush1.msra.mxu0 0.0
      %2289 = vmatprep.subr.mxu0 0.0
      %2290 = vmatpush1.msra.mxu0 0.0
      %2291 = vmatprep.subr.mxu0 0.0
      %2292 = vmatpush1.msra.mxu0 0.0
      %2293 = vmatprep.subr.mxu0 0.0
      %2294 = vmatpush1.msra.mxu0 0.0
      %2295 = vmatprep.subr.mxu0 0.0
      %2296 = vmatpush1.msra.mxu0 0.0
      %2297 = vmatprep.subr.mxu0 0.0
      %2298 = vmatpush1.msra.mxu0 0.0
      %2299 = vmatprep.subr.mxu0 0.0
      %2300 = vmatpush1.msra.mxu0 0.0
      %2301 = vmatprep.subr.mxu0 0.0
      %2302 = vmatpush1.msra.mxu0 0.0
      %2303 = vmatprep.subr.mxu0 0.0
      %2304 = vmatpush1.msra.mxu0 0.0
      %2305 = vmatprep.mubr.f32.mxu0 0.0
      %2306 = vmatmul.mubr.f32.gmra.mrb[0].mxu0 %v746
      %v2307 = vpop.f32.mrb[0].mxu0
      %v2308 = vadd.f32 0.0, %v2307
      %v2309 = vpop.f32.mrb[0].mxu0
      %2310 = vmatprep.mubr.f32.mxu0 0.0
      %2311 = vmatmul.mubr.f32.gmra.mrb[0].mxu0 %v748
      %v2312 = vpop.f32.mrb[0].mxu0
      %v2313 = vadd.f32 0.0, %v2312
      %v2314 = vpop.f32.mrb[0].mxu0
      %2315 = vmatprep.mubr.f32.mxu0 0.0
      %2316 = vmatmul.mubr.f32.gmra.mrb[0].mxu0 %v750
      %v2317 = vpop.f32.mrb[0].mxu0
      %v2318 = vadd.f32 0.0, %v2317
      %v2319 = vpop.f32.mrb[0].mxu0
      %2320 = vmatprep.mubr.f32.mxu0 0.0
      %2321 = vmatmul.mubr.f32.gmra.mrb[0].mxu0 %v752
      %v2322 = vpop.f32.mrb[0].mxu0
      %v2323 = vadd.f32 0.0, %v2322
      %v2324 = vpop.f32.mrb[0].mxu0
      %2325 = vmatprep.mubr.f32.mxu0 0.0
      %2326 = vmatmul.mubr.f32.gmra.mrb[0].mxu0 %v754
      %v2327 = vpop.f32.mrb[0].mxu0
      %v2328 = vadd.f32 0.0, %v2327
      %v2329 = vpop.f32.mrb[0].mxu0
      %2330 = vmatprep.mubr.f32.mxu0 0.0
      %2331 = vmatmul.mubr.f32.gmra.mrb[0].mxu0 %v756
      %v2332 = vpop.f32.mrb[0].mxu0
      %v2333 = vadd.f32 0.0, %v2332
      %v2334 = vpop.f32.mrb[0].mxu0
      %2335 = vmatprep.mubr.f32.mxu0 0.0
      %2336 = vmatmul.mubr.f32.gmra.mrb[0].mxu0 %v758
      %v2337 = vpop.f32.mrb[0].mxu0
      %v2338 = vadd.f32 0.0, %v2337
      %v2339 = vpop.f32.mrb[0].mxu0
      %2340 = vmatprep.mubr.f32.mxu0 0.0
      %2341 = vmatmul.mubr.f32.gmra.mrb[0].mxu0 %v760
      %v2342 = vpop.f32.mrb[0].mxu0
      %v2343 = vadd.f32 0.0, %v2342
      %v2344 = vpop.f32.mrb[0].mxu0
      %2345 = vmatprep.mubr.f32.mxu0 0.0
      %2346 = vmatmul.mubr.f32.gmra.mrb[0].mxu0 %v762
      %v2347 = vpop.f32.mrb[0].mxu0
      %v2348 = vadd.f32 0.0, %v2347
      %v2349 = vpop.f32.mrb[0].mxu0
      %2350 = vmatprep.mubr.f32.mxu0 0.0
      %2351 = vmatmul.mubr.f32.gmra.mrb[0].mxu0 %v764
      %v2352 = vpop.f32.mrb[0].mxu0
      %v2353 = vadd.f32 0.0, %v2352
      %v2354 = vpop.f32.mrb[0].mxu0
      %2355 = vmatprep.mubr.f32.mxu0 0.0
      %2356 = vmatmul.mubr.f32.gmra.mrb[0].mxu0 %v766
      %v2357 = vpop.f32.mrb[0].mxu0
      %v2358 = vadd.f32 0.0, %v2357
      %v2359 = vpop.f32.mrb[0].mxu0
      %2360 = vmatprep.mubr.f32.mxu0 0.0
      %2361 = vmatmul.mubr.f32.gmra.mrb[0].mxu0 %v768
      %v2362 = vpop.f32.mrb[0].mxu0
      %v2363 = vadd.f32 0.0, %v2362
      %v2364 = vpop.f32.mrb[0].mxu0
      %2365 = vmatprep.mubr.f32.mxu0 0.0
      %2366 = vmatmul.mubr.f32.gmra.mrb[0].mxu0 %v770
      %v2367 = vpop.f32.mrb[0].mxu0
      %v2368 = vadd.f32 0.0, %v2367
      %v2369 = vpop.f32.mrb[0].mxu0
      %2370 = vmatprep.mubr.f32.mxu0 0.0
      %2371 = vmatmul.mubr.f32.gmra.mrb[0].mxu0 %v772
      %v2372 = vpop.f32.mrb[0].mxu0
      %v2373 = vadd.f32 0.0, %v2372
      %v2374 = vpop.f32.mrb[0].mxu0
      %2375 = vmatprep.mubr.f32.mxu0 0.0
      %2376 = vmatmul.mubr.f32.gmra.mrb[0].mxu0 %v774
      %v2377 = vpop.f32.mrb[0].mxu0
      %v2378 = vadd.f32 0.0, %v2377
      %v2379 = vpop.f32.mrb[0].mxu0
      %2380 = vmatprep.mubr.f32.mxu0 0.0
      %2381 = vmatmul.mubr.f32.gmra.mrb[0].mxu0 %v776
      %v2382 = vpop.f32.mrb[0].mxu0
      %v2383 = vadd.f32 0.0, %v2382
      %v2384 = vpop.f32.mrb[0].mxu0
      %2385 = vmatprep.mubr.f32.mxu0 0.0
      %2386 = vmatmul.mubr.f32.gmra.mrb[0].mxu0 %v778
      %v2387 = vpop.f32.mrb[0].mxu0
      %v2388 = vadd.f32 0.0, %v2387
      %v2389 = vpop.f32.mrb[0].mxu0
      %2390 = vmatprep.mubr.f32.mxu0 0.0
      %2391 = vmatmul.mubr.f32.gmra.mrb[0].mxu0 %v780
      %v2392 = vpop.f32.mrb[0].mxu0
      %v2393 = vadd.f32 0.0, %v2392
      %v2394 = vpop.f32.mrb[0].mxu0
      %2395 = vmatprep.mubr.f32.mxu0 0.0
      %2396 = vmatmul.mubr.f32.gmra.mrb[0].mxu0 %v782
      %v2397 = vpop.f32.mrb[0].mxu0
      %v2398 = vadd.f32 0.0, %v2397
      %v2399 = vpop.f32.mrb[0].mxu0
      %2400 = vmatprep.mubr.f32.mxu0 0.0
      %2401 = vmatmul.mubr.f32.gmra.mrb[0].mxu0 %v784
      %v2402 = vpop.f32.mrb[0].mxu0
      %v2403 = vadd.f32 0.0, %v2402
      %v2404 = vpop.f32.mrb[0].mxu0
      %2405 = vmatprep.mubr.f32.mxu0 0.0
      %2406 = vmatmul.mubr.f32.gmra.mrb[0].mxu0 %v786
      %v2407 = vpop.f32.mrb[0].mxu0
      %v2408 = vadd.f32 0.0, %v2407
      %v2409 = vpop.f32.mrb[0].mxu0
      %2410 = vmatprep.mubr.f32.mxu0 0.0
      %2411 = vmatmul.mubr.f32.gmra.mrb[0].mxu0 %v788
      %v2412 = vpop.f32.mrb[0].mxu0
      %v2413 = vadd.f32 0.0, %v2412
      %v2414 = vpop.f32.mrb[0].mxu0
      %2415 = vmatprep.mubr.f32.mxu0 0.0
      %2416 = vmatmul.mubr.f32.gmra.mrb[0].mxu0 %v790
      %v2417 = vpop.f32.mrb[0].mxu0
      %v2418 = vadd.f32 0.0, %v2417
      %v2419 = vpop.f32.mrb[0].mxu0
      %2420 = vmatprep.mubr.f32.mxu0 0.0
      %2421 = vmatmul.mubr.f32.gmra.mrb[0].mxu0 %v792
      %v2422 = vpop.f32.mrb[0].mxu0
      %v2423 = vadd.f32 0.0, %v2422
      %v2424 = vpop.f32.mrb[0].mxu0
      %2425 = vmatprep.mubr.f32.mxu0 0.0
      %2426 = vmatmul.mubr.f32.gmra.mrb[0].mxu0 %v794
      %v2427 = vpop.f32.mrb[0].mxu0
      %v2428 = vadd.f32 0.0, %v2427
      %v2429 = vpop.f32.mrb[0].mxu0
      %2430 = vmatprep.mubr.f32.mxu0 0.0
      %2431 = vmatmul.mubr.f32.gmra.mrb[0].mxu0 %v796
      %v2432 = vpop.f32.mrb[0].mxu0
      %v2433 = vadd.f32 0.0, %v2432
      %v2434 = vpop.f32.mrb[0].mxu0
      %2435 = vmatprep.mubr.f32.mxu0 0.0
      %2436 = vmatmul.mubr.f32.gmra.mrb[0].mxu0 %v798
      %v2437 = vpop.f32.mrb[0].mxu0
      %v2438 = vadd.f32 0.0, %v2437
      %v2439 = vpop.f32.mrb[0].mxu0
      %2440 = vmatprep.mubr.f32.mxu0 0.0
      %2441 = vmatmul.mubr.f32.gmra.mrb[0].mxu0 %v800
      %v2442 = vpop.f32.mrb[0].mxu0
      %v2443 = vadd.f32 0.0, %v2442
      %v2444 = vpop.f32.mrb[0].mxu0
      %2445 = vmatprep.mubr.f32.mxu0 0.0
      %2446 = vmatmul.mubr.f32.gmra.mrb[0].mxu0 %v1434
      %v2447 = vpop.f32.mrb[0].mxu0
      %v2448 = vadd.f32 0.0, %v2447
      %v2449 = vpop.f32.mrb[0].mxu0
      %2450 = vmatprep.mubr.f32.mxu0 0.0
      %2451 = vmatmul.mubr.f32.gmra.mrb[0].mxu0 %v1437
      %v2452 = vpop.f32.mrb[0].mxu0
      %v2453 = vadd.f32 0.0, %v2452
      %v2454 = vpop.f32.mrb[0].mxu0
      %2455 = vmatprep.mubr.f32.mxu0 0.0
      %2456 = vmatmul.mubr.f32.gmra.mrb[0].mxu0 %v2236
      %v2457 = vpop.f32.mrb[0].mxu0
      %v2458 = vadd.f32 0.0, %v2457
      %v2459 = vpop.f32.mrb[0].mxu0
      %2460 = vmatprep.mubr.f32.mxu0 0.0
      %2461 = vmatmul.mubr.f32.gmra.mrb[0].mxu0 %v2239
      %v2462 = vpop.f32.mrb[0].mxu0
      %v2463 = vadd.f32 0.0, %v2462
      %v2464 = vpop.f32.mrb[0].mxu0
      %2465 = vdwg.mxu0
      %v2466 = vadd.f32 %v2201, %v2308
      %v2467 = vadd.f32 %v2202, %v2313
      %v2468 = vadd.f32 %v2203, %v2318
      %v2469 = vadd.f32 %v2204, %v2323
      %v2470 = vadd.f32 %v2205, %v2328
      %v2471 = vadd.f32 %v2206, %v2333
      %v2472 = vadd.f32 %v2207, %v2338
      %v2473 = vadd.f32 %v2208, %v2343
      %v2474 = vadd.f32 %v2209, %v2348
      %v2475 = vadd.f32 %v2210, %v2353
      %v2476 = vadd.f32 %v2211, %v2358
      %v2477 = vadd.f32 %v2212, %v2363
      %v2478 = vadd.f32 %v2213, %v2368
      %v2479 = vadd.f32 %v2214, %v2373
      %v2480 = vadd.f32 %v2215, %v2378
      %v2481 = vadd.f32 %v2216, %v2383
      %v2482 = vadd.f32 %v2217, %v2388
      %v2483 = vadd.f32 %v2218, %v2393
      %v2484 = vadd.f32 %v2219, %v2398
      %v2485 = vadd.f32 %v2220, %v2403
      %v2486 = vadd.f32 %v2221, %v2408
      %v2487 = vadd.f32 %v2222, %v2413
      %v2488 = vadd.f32 %v2223, %v2418
      %v2489 = vadd.f32 %v2224, %v2423
      %v2490 = vadd.f32 %v2225, %v2428
      %v2491 = vadd.f32 %v2226, %v2433
      %v2492 = vadd.f32 %v2227, %v2438
      %v2493 = vadd.f32 %v2228, %v2443
      %v2494 = vadd.f32 %v2229, %v2448
      %v2495 = vadd.f32 %v2230, %v2453
      %v2496 = vadd.f32 %v2231, %v2458
      %v2497 = vadd.f32 %v2232, %v2463
      %v2499 = vrot.slane %v313, 1
      %v2500 = vrot.slane %v314, 1
      %v2501 = vsel %vm365, %v2499, %v2500
      %v2502 = vrot.slane %v315, 1
      %v2503 = vsel %vm365, %v2500, %v2502
      %s2504 = scalar_lea.vmem %s2, 56
      %v2505 = vld [vmem:[%s2504] sm:$0xff]
      %v2506 = vsel %vm448, %v2501, 0
      %v2508 = vsel %vm448, %v2503, 0
      %2510 = vmatprep.subr.mxu0 0.0
      %2511 = vmatpush1.msra.mxu0 %v2505
      %2512 = vmatprep.subr.mxu0 0.0
      %2513 = vmatpush1.msra.mxu0 0.0
      %2514 = vmatprep.subr.mxu0 0.0
      %2515 = vmatpush1.msra.mxu0 0.0
      %2516 = vmatprep.subr.mxu0 0.0
      %2517 = vmatpush1.msra.mxu0 0.0
      %2518 = vmatprep.subr.mxu0 0.0
      %2519 = vmatpush1.msra.mxu0 0.0
      %2520 = vmatprep.subr.mxu0 0.0
      %2521 = vmatpush1.msra.mxu0 0.0
      %2522 = vmatprep.subr.mxu0 0.0
      %2523 = vmatpush1.msra.mxu0 0.0
      %2524 = vmatprep.subr.mxu0 0.0
      %2525 = vmatpush1.msra.mxu0 0.0
      %2526 = vmatprep.subr.mxu0 0.0
      %2527 = vmatpush1.msra.mxu0 0.0
      %2528 = vmatprep.subr.mxu0 0.0
      %2529 = vmatpush1.msra.mxu0 0.0
      %2530 = vmatprep.subr.mxu0 0.0
      %2531 = vmatpush1.msra.mxu0 0.0
      %2532 = vmatprep.subr.mxu0 0.0
      %2533 = vmatpush1.msra.mxu0 0.0
      %2534 = vmatprep.subr.mxu0 0.0
      %2535 = vmatpush1.msra.mxu0 0.0
      %2536 = vmatprep.subr.mxu0 0.0
      %2537 = vmatpush1.msra.mxu0 0.0
      %2538 = vmatprep.subr.mxu0 0.0
      %2539 = vmatpush1.msra.mxu0 0.0
      %2540 = vmatprep.subr.mxu0 0.0
      %2541 = vmatpush1.msra.mxu0 0.0
      %2542 = vmatprep.subr.mxu0 0.0
      %2543 = vmatpush1.msra.mxu0 0.0
      %2544 = vmatprep.subr.mxu0 0.0
      %2545 = vmatpush1.msra.mxu0 0.0
      %2546 = vmatprep.subr.mxu0 0.0
      %2547 = vmatpush1.msra.mxu0 0.0
      %2548 = vmatprep.subr.mxu0 0.0
      %2549 = vmatpush1.msra.mxu0 0.0
      %2550 = vmatprep.subr.mxu0 0.0
      %2551 = vmatpush1.msra.mxu0 0.0
      %2552 = vmatprep.subr.mxu0 0.0
      %2553 = vmatpush1.msra.mxu0 0.0
      %2554 = vmatprep.subr.mxu0 0.0
      %2555 = vmatpush1.msra.mxu0 0.0
      %2556 = vmatprep.subr.mxu0 0.0
      %2557 = vmatpush1.msra.mxu0 0.0
      %2558 = vmatprep.subr.mxu0 0.0
      %2559 = vmatpush1.msra.mxu0 0.0
      %2560 = vmatprep.subr.mxu0 0.0
      %2561 = vmatpush1.msra.mxu0 0.0
      %2562 = vmatprep.subr.mxu0 0.0
      %2563 = vmatpush1.msra.mxu0 0.0
      %2564 = vmatprep.subr.mxu0 0.0
      %2565 = vmatpush1.msra.mxu0 0.0
      %2566 = vmatprep.subr.mxu0 0.0
      %2567 = vmatpush1.msra.mxu0 0.0
      %2568 = vmatprep.subr.mxu0 0.0
      %2569 = vmatpush1.msra.mxu0 0.0
      %2570 = vmatprep.subr.mxu0 0.0
      %2571 = vmatpush1.msra.mxu0 0.0
      %2572 = vmatprep.subr.mxu0 0.0
      %2573 = vmatpush1.msra.mxu0 0.0
      %2574 = vmatprep.mubr.f32.mxu0 0.0
      %2575 = vmatmul.mubr.f32.gmra.mrb[0].mxu0 %v457
      %v2576 = vpop.f32.mrb[0].mxu0
      %v2577 = vadd.f32 0.0, %v2576
      %v2578 = vpop.f32.mrb[0].mxu0
      %2579 = vmatprep.mubr.f32.mxu0 0.0
      %2580 = vmatmul.mubr.f32.gmra.mrb[0].mxu0 %v459
      %v2581 = vpop.f32.mrb[0].mxu0
      %v2582 = vadd.f32 0.0, %v2581
      %v2583 = vpop.f32.mrb[0].mxu0
      %2584 = vmatprep.mubr.f32.mxu0 0.0
      %2585 = vmatmul.mubr.f32.gmra.mrb[0].mxu0 %v461
      %v2586 = vpop.f32.mrb[0].mxu0
      %v2587 = vadd.f32 0.0, %v2586
      %v2588 = vpop.f32.mrb[0].mxu0
      %2589 = vmatprep.mubr.f32.mxu0 0.0
      %2590 = vmatmul.mubr.f32.gmra.mrb[0].mxu0 %v463
      %v2591 = vpop.f32.mrb[0].mxu0
      %v2592 = vadd.f32 0.0, %v2591
      %v2593 = vpop.f32.mrb[0].mxu0
      %2594 = vmatprep.mubr.f32.mxu0 0.0
      %2595 = vmatmul.mubr.f32.gmra.mrb[0].mxu0 %v465
      %v2596 = vpop.f32.mrb[0].mxu0
      %v2597 = vadd.f32 0.0, %v2596
      %v2598 = vpop.f32.mrb[0].mxu0
      %2599 = vmatprep.mubr.f32.mxu0 0.0
      %2600 = vmatmul.mubr.f32.gmra.mrb[0].mxu0 %v467
      %v2601 = vpop.f32.mrb[0].mxu0
      %v2602 = vadd.f32 0.0, %v2601
      %v2603 = vpop.f32.mrb[0].mxu0
      %2604 = vmatprep.mubr.f32.mxu0 0.0
      %2605 = vmatmul.mubr.f32.gmra.mrb[0].mxu0 %v469
      %v2606 = vpop.f32.mrb[0].mxu0
      %v2607 = vadd.f32 0.0, %v2606
      %v2608 = vpop.f32.mrb[0].mxu0
      %2609 = vmatprep.mubr.f32.mxu0 0.0
      %2610 = vmatmul.mubr.f32.gmra.mrb[0].mxu0 %v471
      %v2611 = vpop.f32.mrb[0].mxu0
      %v2612 = vadd.f32 0.0, %v2611
      %v2613 = vpop.f32.mrb[0].mxu0
      %2614 = vmatprep.mubr.f32.mxu0 0.0
      %2615 = vmatmul.mubr.f32.gmra.mrb[0].mxu0 %v473
      %v2616 = vpop.f32.mrb[0].mxu0
      %v2617 = vadd.f32 0.0, %v2616
      %v2618 = vpop.f32.mrb[0].mxu0
      %2619 = vmatprep.mubr.f32.mxu0 0.0
      %2620 = vmatmul.mubr.f32.gmra.mrb[0].mxu0 %v475
      %v2621 = vpop.f32.mrb[0].mxu0
      %v2622 = vadd.f32 0.0, %v2621
      %v2623 = vpop.f32.mrb[0].mxu0
      %2624 = vmatprep.mubr.f32.mxu0 0.0
      %2625 = vmatmul.mubr.f32.gmra.mrb[0].mxu0 %v477
      %v2626 = vpop.f32.mrb[0].mxu0
      %v2627 = vadd.f32 0.0, %v2626
      %v2628 = vpop.f32.mrb[0].mxu0
      %2629 = vmatprep.mubr.f32.mxu0 0.0
      %2630 = vmatmul.mubr.f32.gmra.mrb[0].mxu0 %v479
      %v2631 = vpop.f32.mrb[0].mxu0
      %v2632 = vadd.f32 0.0, %v2631
      %v2633 = vpop.f32.mrb[0].mxu0
      %2634 = vmatprep.mubr.f32.mxu0 0.0
      %2635 = vmatmul.mubr.f32.gmra.mrb[0].mxu0 %v481
      %v2636 = vpop.f32.mrb[0].mxu0
      %v2637 = vadd.f32 0.0, %v2636
      %v2638 = vpop.f32.mrb[0].mxu0
      %2639 = vmatprep.mubr.f32.mxu0 0.0
      %2640 = vmatmul.mubr.f32.gmra.mrb[0].mxu0 %v483
      %v2641 = vpop.f32.mrb[0].mxu0
      %v2642 = vadd.f32 0.0, %v2641
      %v2643 = vpop.f32.mrb[0].mxu0
      %2644 = vmatprep.mubr.f32.mxu0 0.0
      %2645 = vmatmul.mubr.f32.gmra.mrb[0].mxu0 %v485
      %v2646 = vpop.f32.mrb[0].mxu0
      %v2647 = vadd.f32 0.0, %v2646
      %v2648 = vpop.f32.mrb[0].mxu0
      %2649 = vmatprep.mubr.f32.mxu0 0.0
      %2650 = vmatmul.mubr.f32.gmra.mrb[0].mxu0 %v487
      %v2651 = vpop.f32.mrb[0].mxu0
      %v2652 = vadd.f32 0.0, %v2651
      %v2653 = vpop.f32.mrb[0].mxu0
      %2654 = vmatprep.mubr.f32.mxu0 0.0
      %2655 = vmatmul.mubr.f32.gmra.mrb[0].mxu0 %v489
      %v2656 = vpop.f32.mrb[0].mxu0
      %v2657 = vadd.f32 0.0, %v2656
      %v2658 = vpop.f32.mrb[0].mxu0
      %2659 = vmatprep.mubr.f32.mxu0 0.0
      %2660 = vmatmul.mubr.f32.gmra.mrb[0].mxu0 %v491
      %v2661 = vpop.f32.mrb[0].mxu0
      %v2662 = vadd.f32 0.0, %v2661
      %v2663 = vpop.f32.mrb[0].mxu0
      %2664 = vmatprep.mubr.f32.mxu0 0.0
      %2665 = vmatmul.mubr.f32.gmra.mrb[0].mxu0 %v493
      %v2666 = vpop.f32.mrb[0].mxu0
      %v2667 = vadd.f32 0.0, %v2666
      %v2668 = vpop.f32.mrb[0].mxu0
      %2669 = vmatprep.mubr.f32.mxu0 0.0
      %2670 = vmatmul.mubr.f32.gmra.mrb[0].mxu0 %v495
      %v2671 = vpop.f32.mrb[0].mxu0
      %v2672 = vadd.f32 0.0, %v2671
      %v2673 = vpop.f32.mrb[0].mxu0
      %2674 = vmatprep.mubr.f32.mxu0 0.0
      %2675 = vmatmul.mubr.f32.gmra.mrb[0].mxu0 %v497
      %v2676 = vpop.f32.mrb[0].mxu0
      %v2677 = vadd.f32 0.0, %v2676
      %v2678 = vpop.f32.mrb[0].mxu0
      %2679 = vmatprep.mubr.f32.mxu0 0.0
      %2680 = vmatmul.mubr.f32.gmra.mrb[0].mxu0 %v499
      %v2681 = vpop.f32.mrb[0].mxu0
      %v2682 = vadd.f32 0.0, %v2681
      %v2683 = vpop.f32.mrb[0].mxu0
      %2684 = vmatprep.mubr.f32.mxu0 0.0
      %2685 = vmatmul.mubr.f32.gmra.mrb[0].mxu0 %v501
      %v2686 = vpop.f32.mrb[0].mxu0
      %v2687 = vadd.f32 0.0, %v2686
      %v2688 = vpop.f32.mrb[0].mxu0
      %2689 = vmatprep.mubr.f32.mxu0 0.0
      %2690 = vmatmul.mubr.f32.gmra.mrb[0].mxu0 %v503
      %v2691 = vpop.f32.mrb[0].mxu0
      %v2692 = vadd.f32 0.0, %v2691
      %v2693 = vpop.f32.mrb[0].mxu0
      %2694 = vmatprep.mubr.f32.mxu0 0.0
      %2695 = vmatmul.mubr.f32.gmra.mrb[0].mxu0 %v505
      %v2696 = vpop.f32.mrb[0].mxu0
      %v2697 = vadd.f32 0.0, %v2696
      %v2698 = vpop.f32.mrb[0].mxu0
      %2699 = vmatprep.mubr.f32.mxu0 0.0
      %2700 = vmatmul.mubr.f32.gmra.mrb[0].mxu0 %v507
      %v2701 = vpop.f32.mrb[0].mxu0
      %v2702 = vadd.f32 0.0, %v2701
      %v2703 = vpop.f32.mrb[0].mxu0
      %2704 = vmatprep.mubr.f32.mxu0 0.0
      %2705 = vmatmul.mubr.f32.gmra.mrb[0].mxu0 %v509
      %v2706 = vpop.f32.mrb[0].mxu0
      %v2707 = vadd.f32 0.0, %v2706
      %v2708 = vpop.f32.mrb[0].mxu0
      %2709 = vmatprep.mubr.f32.mxu0 0.0
      %2710 = vmatmul.mubr.f32.gmra.mrb[0].mxu0 %v511
      %v2711 = vpop.f32.mrb[0].mxu0
      %v2712 = vadd.f32 0.0, %v2711
      %v2713 = vpop.f32.mrb[0].mxu0
      %2714 = vmatprep.mubr.f32.mxu0 0.0
      %2715 = vmatmul.mubr.f32.gmra.mrb[0].mxu0 %v1704
      %v2716 = vpop.f32.mrb[0].mxu0
      %v2717 = vadd.f32 0.0, %v2716
      %v2718 = vpop.f32.mrb[0].mxu0
      %2719 = vmatprep.mubr.f32.mxu0 0.0
      %2720 = vmatmul.mubr.f32.gmra.mrb[0].mxu0 %v1706
      %v2721 = vpop.f32.mrb[0].mxu0
      %v2722 = vadd.f32 0.0, %v2721
      %v2723 = vpop.f32.mrb[0].mxu0
      %2724 = vmatprep.mubr.f32.mxu0 0.0
      %2725 = vmatmul.mubr.f32.gmra.mrb[0].mxu0 %v2506
      %v2726 = vpop.f32.mrb[0].mxu0
      %v2727 = vadd.f32 0.0, %v2726
      %v2728 = vpop.f32.mrb[0].mxu0
      %2729 = vmatprep.mubr.f32.mxu0 0.0
      %2730 = vmatmul.mubr.f32.gmra.mrb[0].mxu0 %v2508
      %v2731 = vpop.f32.mrb[0].mxu0
      %v2732 = vadd.f32 0.0, %v2731
      %v2733 = vpop.f32.mrb[0].mxu0
      %2734 = vdwg.mxu0
      %v2735 = vadd.f32 %v2466, %v2577
      %v2736 = vadd.f32 %v2467, %v2582
      %v2737 = vadd.f32 %v2468, %v2587
      %v2738 = vadd.f32 %v2469, %v2592
      %v2739 = vadd.f32 %v2470, %v2597
      %v2740 = vadd.f32 %v2471, %v2602
      %v2741 = vadd.f32 %v2472, %v2607
      %v2742 = vadd.f32 %v2473, %v2612
      %v2743 = vadd.f32 %v2474, %v2617
      %v2744 = vadd.f32 %v2475, %v2622
      %v2745 = vadd.f32 %v2476, %v2627
      %v2746 = vadd.f32 %v2477, %v2632
      %v2747 = vadd.f32 %v2478, %v2637
      %v2748 = vadd.f32 %v2479, %v2642
      %v2749 = vadd.f32 %v2480, %v2647
      %v2750 = vadd.f32 %v2481, %v2652
      %v2751 = vadd.f32 %v2482, %v2657
      %v2752 = vadd.f32 %v2483, %v2662
      %v2753 = vadd.f32 %v2484, %v2667
      %v2754 = vadd.f32 %v2485, %v2672
      %v2755 = vadd.f32 %v2486, %v2677
      %v2756 = vadd.f32 %v2487, %v2682
      %v2757 = vadd.f32 %v2488, %v2687
      %v2758 = vadd.f32 %v2489, %v2692
      %v2759 = vadd.f32 %v2490, %v2697
      %v2760 = vadd.f32 %v2491, %v2702
      %v2761 = vadd.f32 %v2492, %v2707
      %v2762 = vadd.f32 %v2493, %v2712
      %v2763 = vadd.f32 %v2494, %v2717
      %v2764 = vadd.f32 %v2495, %v2722
      %v2765 = vadd.f32 %v2496, %v2727
      %v2766 = vadd.f32 %v2497, %v2732
      %v2767 = vrot.slane %v313, 2
      %v2768 = vrot.slane %v314, 2
      %v2769 = vsel %vm1027, %v2767, %v2768
      %v2770 = vrot.slane %v315, 2
      %v2771 = vsel %vm1027, %v2768, %v2770
      %s2772 = scalar_lea.vmem %s2, 64
      %v2773 = vld [vmem:[%s2772] sm:$0xff]
      %v2774 = vsel %vm448, %v2769, 0
      %v2776 = vsel %vm448, %v2771, 0
      %2778 = vmatprep.subr.mxu0 0.0
      %2779 = vmatpush1.msra.mxu0 %v2773
      %2780 = vmatprep.subr.mxu0 0.0
      %2781 = vmatpush1.msra.mxu0 0.0
      %2782 = vmatprep.subr.mxu0 0.0
      %2783 = vmatpush1.msra.mxu0 0.0
      %2784 = vmatprep.subr.mxu0 0.0
      %2785 = vmatpush1.msra.mxu0 0.0
      %2786 = vmatprep.subr.mxu0 0.0
      %2787 = vmatpush1.msra.mxu0 0.0
      %2788 = vmatprep.subr.mxu0 0.0
      %2789 = vmatpush1.msra.mxu0 0.0
      %2790 = vmatprep.subr.mxu0 0.0
      %2791 = vmatpush1.msra.mxu0 0.0
      %2792 = vmatprep.subr.mxu0 0.0
      %2793 = vmatpush1.msra.mxu0 0.0
      %2794 = vmatprep.subr.mxu0 0.0
      %2795 = vmatpush1.msra.mxu0 0.0
      %2796 = vmatprep.subr.mxu0 0.0
      %2797 = vmatpush1.msra.mxu0 0.0
      %2798 = vmatprep.subr.mxu0 0.0
      %2799 = vmatpush1.msra.mxu0 0.0
      %2800 = vmatprep.subr.mxu0 0.0
      %2801 = vmatpush1.msra.mxu0 0.0
      %2802 = vmatprep.subr.mxu0 0.0
      %2803 = vmatpush1.msra.mxu0 0.0
      %2804 = vmatprep.subr.mxu0 0.0
      %2805 = vmatpush1.msra.mxu0 0.0
      %2806 = vmatprep.subr.mxu0 0.0
      %2807 = vmatpush1.msra.mxu0 0.0
      %2808 = vmatprep.subr.mxu0 0.0
      %2809 = vmatpush1.msra.mxu0 0.0
      %2810 = vmatprep.subr.mxu0 0.0
      %2811 = vmatpush1.msra.mxu0 0.0
      %2812 = vmatprep.subr.mxu0 0.0
      %2813 = vmatpush1.msra.mxu0 0.0
      %2814 = vmatprep.subr.mxu0 0.0
      %2815 = vmatpush1.msra.mxu0 0.0
      %2816 = vmatprep.subr.mxu0 0.0
      %2817 = vmatpush1.msra.mxu0 0.0
      %2818 = vmatprep.subr.mxu0 0.0
      %2819 = vmatpush1.msra.mxu0 0.0
      %2820 = vmatprep.subr.mxu0 0.0
      %2821 = vmatpush1.msra.mxu0 0.0
      %2822 = vmatprep.subr.mxu0 0.0
      %2823 = vmatpush1.msra.mxu0 0.0
      %2824 = vmatprep.subr.mxu0 0.0
      %2825 = vmatpush1.msra.mxu0 0.0
      %2826 = vmatprep.subr.mxu0 0.0
      %2827 = vmatpush1.msra.mxu0 0.0
      %2828 = vmatprep.subr.mxu0 0.0
      %2829 = vmatpush1.msra.mxu0 0.0
      %2830 = vmatprep.subr.mxu0 0.0
      %2831 = vmatpush1.msra.mxu0 0.0
      %2832 = vmatprep.subr.mxu0 0.0
      %2833 = vmatpush1.msra.mxu0 0.0
      %2834 = vmatprep.subr.mxu0 0.0
      %2835 = vmatpush1.msra.mxu0 0.0
      %2836 = vmatprep.subr.mxu0 0.0
      %2837 = vmatpush1.msra.mxu0 0.0
      %2838 = vmatprep.subr.mxu0 0.0
      %2839 = vmatpush1.msra.mxu0 0.0
      %2840 = vmatprep.subr.mxu0 0.0
      %2841 = vmatpush1.msra.mxu0 0.0
      %2842 = vmatprep.mubr.f32.mxu0 0.0
      %2843 = vmatmul.mubr.f32.gmra.mrb[0].mxu0 %v1118
      %v2844 = vpop.f32.mrb[0].mxu0
      %v2845 = vadd.f32 0.0, %v2844
      %v2846 = vpop.f32.mrb[0].mxu0
      %2847 = vmatprep.mubr.f32.mxu0 0.0
      %2848 = vmatmul.mubr.f32.gmra.mrb[0].mxu0 %v1120
      %v2849 = vpop.f32.mrb[0].mxu0
      %v2850 = vadd.f32 0.0, %v2849
      %v2851 = vpop.f32.mrb[0].mxu0
      %2852 = vmatprep.mubr.f32.mxu0 0.0
      %2853 = vmatmul.mubr.f32.gmra.mrb[0].mxu0 %v1122
      %v2854 = vpop.f32.mrb[0].mxu0
      %v2855 = vadd.f32 0.0, %v2854
      %v2856 = vpop.f32.mrb[0].mxu0
      %2857 = vmatprep.mubr.f32.mxu0 0.0
      %2858 = vmatmul.mubr.f32.gmra.mrb[0].mxu0 %v1124
      %v2859 = vpop.f32.mrb[0].mxu0
      %v2860 = vadd.f32 0.0, %v2859
      %v2861 = vpop.f32.mrb[0].mxu0
      %2862 = vmatprep.mubr.f32.mxu0 0.0
      %2863 = vmatmul.mubr.f32.gmra.mrb[0].mxu0 %v1126
      %v2864 = vpop.f32.mrb[0].mxu0
      %v2865 = vadd.f32 0.0, %v2864
      %v2866 = vpop.f32.mrb[0].mxu0
      %2867 = vmatprep.mubr.f32.mxu0 0.0
      %2868 = vmatmul.mubr.f32.gmra.mrb[0].mxu0 %v1128
      %v2869 = vpop.f32.mrb[0].mxu0
      %v2870 = vadd.f32 0.0, %v2869
      %v2871 = vpop.f32.mrb[0].mxu0
      %2872 = vmatprep.mubr.f32.mxu0 0.0
      %2873 = vmatmul.mubr.f32.gmra.mrb[0].mxu0 %v1130
      %v2874 = vpop.f32.mrb[0].mxu0
      %v2875 = vadd.f32 0.0, %v2874
      %v2876 = vpop.f32.mrb[0].mxu0
      %2877 = vmatprep.mubr.f32.mxu0 0.0
      %2878 = vmatmul.mubr.f32.gmra.mrb[0].mxu0 %v1132
      %v2879 = vpop.f32.mrb[0].mxu0
      %v2880 = vadd.f32 0.0, %v2879
      %v2881 = vpop.f32.mrb[0].mxu0
      %2882 = vmatprep.mubr.f32.mxu0 0.0
      %2883 = vmatmul.mubr.f32.gmra.mrb[0].mxu0 %v1134
      %v2884 = vpop.f32.mrb[0].mxu0
      %v2885 = vadd.f32 0.0, %v2884
      %v2886 = vpop.f32.mrb[0].mxu0
      %2887 = vmatprep.mubr.f32.mxu0 0.0
      %2888 = vmatmul.mubr.f32.gmra.mrb[0].mxu0 %v1136
      %v2889 = vpop.f32.mrb[0].mxu0
      %v2890 = vadd.f32 0.0, %v2889
      %v2891 = vpop.f32.mrb[0].mxu0
      %2892 = vmatprep.mubr.f32.mxu0 0.0
      %2893 = vmatmul.mubr.f32.gmra.mrb[0].mxu0 %v1138
      %v2894 = vpop.f32.mrb[0].mxu0
      %v2895 = vadd.f32 0.0, %v2894
      %v2896 = vpop.f32.mrb[0].mxu0
      %2897 = vmatprep.mubr.f32.mxu0 0.0
      %2898 = vmatmul.mubr.f32.gmra.mrb[0].mxu0 %v1140
      %v2899 = vpop.f32.mrb[0].mxu0
      %v2900 = vadd.f32 0.0, %v2899
      %v2901 = vpop.f32.mrb[0].mxu0
      %2902 = vmatprep.mubr.f32.mxu0 0.0
      %2903 = vmatmul.mubr.f32.gmra.mrb[0].mxu0 %v1142
      %v2904 = vpop.f32.mrb[0].mxu0
      %v2905 = vadd.f32 0.0, %v2904
      %v2906 = vpop.f32.mrb[0].mxu0
      %2907 = vmatprep.mubr.f32.mxu0 0.0
      %2908 = vmatmul.mubr.f32.gmra.mrb[0].mxu0 %v1144
      %v2909 = vpop.f32.mrb[0].mxu0
      %v2910 = vadd.f32 0.0, %v2909
      %v2911 = vpop.f32.mrb[0].mxu0
      %2912 = vmatprep.mubr.f32.mxu0 0.0
      %2913 = vmatmul.mubr.f32.gmra.mrb[0].mxu0 %v1146
      %v2914 = vpop.f32.mrb[0].mxu0
      %v2915 = vadd.f32 0.0, %v2914
      %v2916 = vpop.f32.mrb[0].mxu0
      %2917 = vmatprep.mubr.f32.mxu0 0.0
      %2918 = vmatmul.mubr.f32.gmra.mrb[0].mxu0 %v1148
      %v2919 = vpop.f32.mrb[0].mxu0
      %v2920 = vadd.f32 0.0, %v2919
      %v2921 = vpop.f32.mrb[0].mxu0
      %2922 = vmatprep.mubr.f32.mxu0 0.0
      %2923 = vmatmul.mubr.f32.gmra.mrb[0].mxu0 %v1150
      %v2924 = vpop.f32.mrb[0].mxu0
      %v2925 = vadd.f32 0.0, %v2924
      %v2926 = vpop.f32.mrb[0].mxu0
      %2927 = vmatprep.mubr.f32.mxu0 0.0
      %2928 = vmatmul.mubr.f32.gmra.mrb[0].mxu0 %v1152
      %v2929 = vpop.f32.mrb[0].mxu0
      %v2930 = vadd.f32 0.0, %v2929
      %v2931 = vpop.f32.mrb[0].mxu0
      %2932 = vmatprep.mubr.f32.mxu0 0.0
      %2933 = vmatmul.mubr.f32.gmra.mrb[0].mxu0 %v1154
      %v2934 = vpop.f32.mrb[0].mxu0
      %v2935 = vadd.f32 0.0, %v2934
      %v2936 = vpop.f32.mrb[0].mxu0
      %2937 = vmatprep.mubr.f32.mxu0 0.0
      %2938 = vmatmul.mubr.f32.gmra.mrb[0].mxu0 %v1156
      %v2939 = vpop.f32.mrb[0].mxu0
      %v2940 = vadd.f32 0.0, %v2939
      %v2941 = vpop.f32.mrb[0].mxu0
      %2942 = vmatprep.mubr.f32.mxu0 0.0
      %2943 = vmatmul.mubr.f32.gmra.mrb[0].mxu0 %v1158
      %v2944 = vpop.f32.mrb[0].mxu0
      %v2945 = vadd.f32 0.0, %v2944
      %v2946 = vpop.f32.mrb[0].mxu0
      %2947 = vmatprep.mubr.f32.mxu0 0.0
      %2948 = vmatmul.mubr.f32.gmra.mrb[0].mxu0 %v1160
      %v2949 = vpop.f32.mrb[0].mxu0
      %v2950 = vadd.f32 0.0, %v2949
      %v2951 = vpop.f32.mrb[0].mxu0
      %2952 = vmatprep.mubr.f32.mxu0 0.0
      %2953 = vmatmul.mubr.f32.gmra.mrb[0].mxu0 %v1162
      %v2954 = vpop.f32.mrb[0].mxu0
      %v2955 = vadd.f32 0.0, %v2954
      %v2956 = vpop.f32.mrb[0].mxu0
      %2957 = vmatprep.mubr.f32.mxu0 0.0
      %2958 = vmatmul.mubr.f32.gmra.mrb[0].mxu0 %v1164
      %v2959 = vpop.f32.mrb[0].mxu0
      %v2960 = vadd.f32 0.0, %v2959
      %v2961 = vpop.f32.mrb[0].mxu0
      %2962 = vmatprep.mubr.f32.mxu0 0.0
      %2963 = vmatmul.mubr.f32.gmra.mrb[0].mxu0 %v1166
      %v2964 = vpop.f32.mrb[0].mxu0
      %v2965 = vadd.f32 0.0, %v2964
      %v2966 = vpop.f32.mrb[0].mxu0
      %2967 = vmatprep.mubr.f32.mxu0 0.0
      %2968 = vmatmul.mubr.f32.gmra.mrb[0].mxu0 %v1168
      %v2969 = vpop.f32.mrb[0].mxu0
      %v2970 = vadd.f32 0.0, %v2969
      %v2971 = vpop.f32.mrb[0].mxu0
      %2972 = vmatprep.mubr.f32.mxu0 0.0
      %2973 = vmatmul.mubr.f32.gmra.mrb[0].mxu0 %v1170
      %v2974 = vpop.f32.mrb[0].mxu0
      %v2975 = vadd.f32 0.0, %v2974
      %v2976 = vpop.f32.mrb[0].mxu0
      %2977 = vmatprep.mubr.f32.mxu0 0.0
      %2978 = vmatmul.mubr.f32.gmra.mrb[0].mxu0 %v1172
      %v2979 = vpop.f32.mrb[0].mxu0
      %v2980 = vadd.f32 0.0, %v2979
      %v2981 = vpop.f32.mrb[0].mxu0
      %2982 = vmatprep.mubr.f32.mxu0 0.0
      %2983 = vmatmul.mubr.f32.gmra.mrb[0].mxu0 %v1972
      %v2984 = vpop.f32.mrb[0].mxu0
      %v2985 = vadd.f32 0.0, %v2984
      %v2986 = vpop.f32.mrb[0].mxu0
      %2987 = vmatprep.mubr.f32.mxu0 0.0
      %2988 = vmatmul.mubr.f32.gmra.mrb[0].mxu0 %v1974
      %v2989 = vpop.f32.mrb[0].mxu0
      %v2990 = vadd.f32 0.0, %v2989
      %v2991 = vpop.f32.mrb[0].mxu0
      %2992 = vmatprep.mubr.f32.mxu0 0.0
      %2993 = vmatmul.mubr.f32.gmra.mrb[0].mxu0 %v2774
      %v2994 = vpop.f32.mrb[0].mxu0
      %v2995 = vadd.f32 0.0, %v2994
      %v2996 = vpop.f32.mrb[0].mxu0
      %2997 = vmatprep.mubr.f32.mxu0 0.0
      %2998 = vmatmul.mubr.f32.gmra.mrb[0].mxu0 %v2776
      %v2999 = vpop.f32.mrb[0].mxu0
      %v3000 = vadd.f32 0.0, %v2999
      %v3001 = vpop.f32.mrb[0].mxu0
      %3002 = vdwg.mxu0
      %v3003 = vadd.f32 %v2735, %v2845
      %v3004 = vadd.f32 %v2736, %v2850
      %v3005 = vadd.f32 %v2737, %v2855
      %v3006 = vadd.f32 %v2738, %v2860
      %v3007 = vadd.f32 %v2739, %v2865
      %v3008 = vadd.f32 %v2740, %v2870
      %v3009 = vadd.f32 %v2741, %v2875
      %v3010 = vadd.f32 %v2742, %v2880
      %v3011 = vadd.f32 %v2743, %v2885
      %v3012 = vadd.f32 %v2744, %v2890
      %v3013 = vadd.f32 %v2745, %v2895
      %v3014 = vadd.f32 %v2746, %v2900
      %v3015 = vadd.f32 %v2747, %v2905
      %v3016 = vadd.f32 %v2748, %v2910
      %v3017 = vadd.f32 %v2749, %v2915
      %v3018 = vadd.f32 %v2750, %v2920
      %v3019 = vadd.f32 %v2751, %v2925
      %v3020 = vadd.f32 %v2752, %v2930
      %v3021 = vadd.f32 %v2753, %v2935
      %v3022 = vadd.f32 %v2754, %v2940
      %v3023 = vadd.f32 %v2755, %v2945
      %v3024 = vadd.f32 %v2756, %v2950
      %v3025 = vadd.f32 %v2757, %v2955
      %v3026 = vadd.f32 %v2758, %v2960
      %v3027 = vadd.f32 %v2759, %v2965
      %v3028 = vadd.f32 %v2760, %v2970
      %v3029 = vadd.f32 %v2761, %v2975
      %v3030 = vadd.f32 %v2762, %v2980
      %v3031 = vadd.f32 %v2763, %v2985
      %v3032 = vadd.f32 %v2764, %v2990
      %v3033 = vadd.f32 %v2765, %v2995
      %v3034 = vadd.f32 %v2766, %v3000
      %v3035 = vld [vmem:[%s3] sm:$0x1]
      %v3037 = vlaneseq
      %v3038 = vshrl.u32 %v3037, 7
      %v3039 = vsub.s32 0, %v3038
      %v3040 = vrot.slane %v3035, %v3039
      %v3042 = vadd.f32 %v3003, %v3040
      %v3043 = vadd.f32 %v3004, %v3040
      %v3044 = vadd.f32 %v3005, %v3040
      %v3045 = vadd.f32 %v3006, %v3040
      %v3046 = vadd.f32 %v3007, %v3040
      %v3047 = vadd.f32 %v3008, %v3040
      %v3048 = vadd.f32 %v3009, %v3040
      %v3049 = vadd.f32 %v3010, %v3040
      %v3050 = vadd.f32 %v3011, %v3040
      %v3051 = vadd.f32 %v3012, %v3040
      %v3052 = vadd.f32 %v3013, %v3040
      %v3053 = vadd.f32 %v3014, %v3040
      %v3054 = vadd.f32 %v3015, %v3040
      %v3055 = vadd.f32 %v3016, %v3040
      %v3056 = vadd.f32 %v3017, %v3040
      %v3057 = vadd.f32 %v3018, %v3040
      %v3058 = vadd.f32 %v3019, %v3040
      %v3059 = vadd.f32 %v3020, %v3040
      %v3060 = vadd.f32 %v3021, %v3040
      %v3061 = vadd.f32 %v3022, %v3040
      %v3062 = vadd.f32 %v3023, %v3040
      %v3063 = vadd.f32 %v3024, %v3040
      %v3064 = vadd.f32 %v3025, %v3040
      %v3065 = vadd.f32 %v3026, %v3040
      %v3066 = vadd.f32 %v3027, %v3040
      %v3067 = vadd.f32 %v3028, %v3040
      %v3068 = vadd.f32 %v3029, %v3040
      %v3069 = vadd.f32 %v3030, %v3040
      %v3070 = vadd.f32 %v3031, %v3040
      %v3071 = vadd.f32 %v3032, %v3040
      %v3072 = vadd.f32 %v3033, %v3040
      %v3073 = vadd.f32 %v3034, %v3040
      %v3074 = vmax.f32 %v3042, 0.0
      %v3075 = vmax.f32 %v3043, 0.0
      %v3076 = vmax.f32 %v3044, 0.0
      %v3077 = vmax.f32 %v3045, 0.0
      %v3078 = vmax.f32 %v3046, 0.0
      %v3079 = vmax.f32 %v3047, 0.0
      %v3080 = vmax.f32 %v3048, 0.0
      %v3081 = vmax.f32 %v3049, 0.0
      %v3082 = vmax.f32 %v3050, 0.0
      %v3083 = vmax.f32 %v3051, 0.0
      %v3084 = vmax.f32 %v3052, 0.0
      %v3085 = vmax.f32 %v3053, 0.0
      %v3086 = vmax.f32 %v3054, 0.0
      %v3087 = vmax.f32 %v3055, 0.0
      %v3088 = vmax.f32 %v3056, 0.0
      %v3089 = vmax.f32 %v3057, 0.0
      %v3090 = vmax.f32 %v3058, 0.0
      %v3091 = vmax.f32 %v3059, 0.0
      %v3092 = vmax.f32 %v3060, 0.0
      %v3093 = vmax.f32 %v3061, 0.0
      %v3094 = vmax.f32 %v3062, 0.0
      %v3095 = vmax.f32 %v3063, 0.0
      %v3096 = vmax.f32 %v3064, 0.0
      %v3097 = vmax.f32 %v3065, 0.0
      %v3098 = vmax.f32 %v3066, 0.0
      %v3099 = vmax.f32 %v3067, 0.0
      %v3100 = vmax.f32 %v3068, 0.0
      %v3101 = vmax.f32 %v3069, 0.0
      %v3102 = vmax.f32 %v3070, 0.0
      %v3103 = vmax.f32 %v3071, 0.0
      %v3104 = vmax.f32 %v3072, 0.0
      %v3105 = vmax.f32 %v3073, 0.0
      %vm3106 = vcmask 130048
      %v3107 = vsel %vm3106, %v3074, 0.0
      %v3108 = vsel %vm3106, %v3075, 0.0
      %v3109 = vadd.f32 %v3107, %v3108
      %v3110 = vsel %vm3106, %v3076, 0.0
      %v3111 = vadd.f32 %v3109, %v3110
      %v3112 = vsel %vm3106, %v3077, 0.0
      %v3113 = vadd.f32 %v3111, %v3112
      %v3114 = vsel %vm3106, %v3078, 0.0
      %v3115 = vadd.f32 %v3113, %v3114
      %v3116 = vsel %vm3106, %v3079, 0.0
      %v3117 = vadd.f32 %v3115, %v3116
      %v3118 = vsel %vm3106, %v3080, 0.0
      %v3119 = vadd.f32 %v3117, %v3118
      %v3120 = vsel %vm3106, %v3081, 0.0
      %v3121 = vadd.f32 %v3119, %v3120
      %v3122 = vsel %vm3106, %v3082, 0.0
      %v3123 = vadd.f32 %v3121, %v3122
      %v3124 = vsel %vm3106, %v3083, 0.0
      %v3125 = vadd.f32 %v3123, %v3124
      %v3126 = vsel %vm3106, %v3084, 0.0
      %v3127 = vadd.f32 %v3125, %v3126
      %v3128 = vsel %vm3106, %v3085, 0.0
      %v3129 = vadd.f32 %v3127, %v3128
      %v3130 = vsel %vm3106, %v3086, 0.0
      %v3131 = vadd.f32 %v3129, %v3130
      %v3132 = vsel %vm3106, %v3087, 0.0
      %v3133 = vadd.f32 %v3131, %v3132
      %v3134 = vsel %vm3106, %v3088, 0.0
      %v3135 = vadd.f32 %v3133, %v3134
      %v3136 = vsel %vm3106, %v3089, 0.0
      %v3137 = vadd.f32 %v3135, %v3136
      %v3138 = vsel %vm3106, %v3090, 0.0
      %v3139 = vadd.f32 %v3137, %v3138
      %v3140 = vsel %vm3106, %v3091, 0.0
      %v3141 = vadd.f32 %v3139, %v3140
      %v3142 = vsel %vm3106, %v3092, 0.0
      %v3143 = vadd.f32 %v3141, %v3142
      %v3144 = vsel %vm3106, %v3093, 0.0
      %v3145 = vadd.f32 %v3143, %v3144
      %v3146 = vsel %vm3106, %v3094, 0.0
      %v3147 = vadd.f32 %v3145, %v3146
      %v3148 = vsel %vm3106, %v3095, 0.0
      %v3149 = vadd.f32 %v3147, %v3148
      %v3150 = vsel %vm3106, %v3096, 0.0
      %v3151 = vadd.f32 %v3149, %v3150
      %v3152 = vsel %vm3106, %v3097, 0.0
      %v3153 = vadd.f32 %v3151, %v3152
      %v3154 = vsel %vm3106, %v3098, 0.0
      %v3155 = vadd.f32 %v3153, %v3154
      %v3156 = vsel %vm3106, %v3099, 0.0
      %v3157 = vadd.f32 %v3155, %v3156
      %v3158 = vsel %vm3106, %v3100, 0.0
      %v3159 = vadd.f32 %v3157, %v3158
      %v3160 = vsel %vm3106, %v3101, 0.0
      %v3161 = vadd.f32 %v3159, %v3160
      %v3162 = vsel %vm3106, %v3102, 0.0
      %v3163 = vadd.f32 %v3161, %v3162
      %v3164 = vsel %vm3106, %v3103, 0.0
      %v3165 = vadd.f32 %v3163, %v3164
      %v3166 = vsel %vm3106, %v3104, 0.0
      %v3167 = vadd.f32 %v3165, %v3166
      %v3168 = vsel %vm3106, %v3105, 0.0
      %v3169 = vadd.f32 %v3167, %v3168
      %v3170 = vrot.slane %v3169, 4
      %v3171 = vadd.f32 %v3169, %v3170
      %v3172 = vrot.slane %v3171, 2
      %v3173 = vadd.f32 %v3171, %v3172
      %v3174 = vrot.slane %v3173, 1
      %v3175 = vadd.f32 %v3173, %v3174
      %v3176 = vrcp.pop 256.0
      %v3177 = vmul.f32 %v3175, %v3176
      %v3178 = vld [vmem:[%s4] sm:$0xff]
      %v3179 = vld [vmem:[%s4 + $0x8] sm:$0xff]
      %v3180 = vld [vmem:[%s4 + $0x10] sm:$0x1]
      %v3181 = vld [vmem:[%s258] sm:$0x1]
      %3183 = vset.pattern.permute.xlu0 0
      %3184 = vperm.xlu0 %3183, %v3181
      %v3185 = vpop.permute.xlu0 %3184
      %v3187 = vlaneseq
      %v3188 = vshrl.u32 %v3187, 7
      %v3189 = vsub.s32 0, %v3188
      %v3190 = vrot.slane %v3185, %v3189
      %v3191 = vmul.f32 %v3190, %v3180
      %v3193 = vsel %vm3106, %v3177, 0
      %3195 = vmatprep.subr.mxu0 0.0
      %3196 = vmatpush1.msra.mxu0 %v3178
      %3197 = vmatprep.subr.mxu0 0.0
      %3198 = vmatpush1.msra.mxu0 %v3179
      %3199 = vmatprep.subr.mxu0 0.0
      %3200 = vmatpush1.msra.mxu0 0.0
      %3201 = vmatprep.subr.mxu0 0.0
      %3202 = vmatpush1.msra.mxu0 0.0
      %3203 = vmatprep.subr.mxu0 0.0
      %3204 = vmatpush1.msra.mxu0 0.0
      %3205 = vmatprep.subr.mxu0 0.0
      %3206 = vmatpush1.msra.mxu0 0.0
      %3207 = vmatprep.subr.mxu0 0.0
      %3208 = vmatpush1.msra.mxu0 0.0
      %3209 = vmatprep.subr.mxu0 0.0
      %3210 = vmatpush1.msra.mxu0 0.0
      %3211 = vmatprep.subr.mxu0 0.0
      %3212 = vmatpush1.msra.mxu0 0.0
      %3213 = vmatprep.subr.mxu0 0.0
      %3214 = vmatpush1.msra.mxu0 0.0
      %3215 = vmatprep.subr.mxu0 0.0
      %3216 = vmatpush1.msra.mxu0 0.0
      %3217 = vmatprep.subr.mxu0 0.0
      %3218 = vmatpush1.msra.mxu0 0.0
      %3219 = vmatprep.subr.mxu0 0.0
      %3220 = vmatpush1.msra.mxu0 0.0
      %3221 = vmatprep.subr.mxu0 0.0
      %3222 = vmatpush1.msra.mxu0 0.0
      %3223 = vmatprep.subr.mxu0 0.0
      %3224 = vmatpush1.msra.mxu0 0.0
      %3225 = vmatprep.subr.mxu0 0.0
      %3226 = vmatpush1.msra.mxu0 0.0
      %3227 = vmatprep.subr.mxu0 0.0
      %3228 = vmatpush1.msra.mxu0 0.0
      %3229 = vmatprep.subr.mxu0 0.0
      %3230 = vmatpush1.msra.mxu0 0.0
      %3231 = vmatprep.subr.mxu0 0.0
      %3232 = vmatpush1.msra.mxu0 0.0
      %3233 = vmatprep.subr.mxu0 0.0
      %3234 = vmatpush1.msra.mxu0 0.0
      %3235 = vmatprep.subr.mxu0 0.0
      %3236 = vmatpush1.msra.mxu0 0.0
      %3237 = vmatprep.subr.mxu0 0.0
      %3238 = vmatpush1.msra.mxu0 0.0
      %3239 = vmatprep.subr.mxu0 0.0
      %3240 = vmatpush1.msra.mxu0 0.0
      %3241 = vmatprep.subr.mxu0 0.0
      %3242 = vmatpush1.msra.mxu0 0.0
      %3243 = vmatprep.subr.mxu0 0.0
      %3244 = vmatpush1.msra.mxu0 0.0
      %3245 = vmatprep.subr.mxu0 0.0
      %3246 = vmatpush1.msra.mxu0 0.0
      %3247 = vmatprep.subr.mxu0 0.0
      %3248 = vmatpush1.msra.mxu0 0.0
      %3249 = vmatprep.subr.mxu0 0.0
      %3250 = vmatpush1.msra.mxu0 0.0
      %3251 = vmatprep.subr.mxu0 0.0
      %3252 = vmatpush1.msra.mxu0 0.0
      %3253 = vmatprep.subr.mxu0 0.0
      %3254 = vmatpush1.msra.mxu0 0.0
      %3255 = vmatprep.subr.mxu0 0.0
      %3256 = vmatpush1.msra.mxu0 0.0
      %3257 = vmatprep.subr.mxu0 0.0
      %3258 = vmatpush1.msra.mxu0 0.0
      %3259 = vmatprep.mubr.f32.mxu0 0.0
      %3260 = vmatmul.mubr.f32.gmra.mrb[0].mxu0 %v3193
      %v3261 = vpop.f32.mrb[0].mxu0
      %v3262 = vadd.f32 %v3191, %v3261
      %v3263 = vpop.f32.mrb[0].mxu0
      %3264 = vdwg.mxu0
      %v3265 = vld [vmem:[%s5] sm:$0x1]
      %v3266 = vadd.f32 %v3262, %v3265
      %vm3267 = vcmask 253952
      %3268 = vst.msk [vmem:[%s261] sm:$0x1] %vm3267, %v3266
      %p3269 = scmp.lt.s32.totalorder %s17, 1
      %s3270 = scalar_select %p3269, %s17, 1
      %s3271 = scalar_lea.vmem %s6, %s3270
      // Predicated region
      $region45: #{degae_forward.4} parent=43 // pred_check
        %p3272 = pneg %p171
      $region46: #{degae_forward.4} parent=43 // pred_check_branch
        %3274 = sbr.rel (%p3272) target = $region48
      $region47: #{degae_forward.4} parent=43 // pred_region
        _
      $region48: #{degae_forward.4} parent=43 // pred_fallthru
        _
    $region44: #{degae_forward.4} parent=5 // pred_fallthru
      _
    %p3275 = scmp.le.s32.totalorder 2, %s12
    // Predicated region
    $region49: #{degae_forward.4} parent=5 // pred_check
      %p3276 = pneg %p3275
    $region50: #{degae_forward.4} parent=5 // pred_check_branch
      %3278 = sbr.rel (%p3276) target = $region52
    $region51: #{degae_forward.4} parent=5 // pred_region
      %s3279 = ssub.s32 %s12, 2
      // Predicated region
      $region53: #{degae_forward.4} parent=51 // pred_check
        %p3280 = pneg %p177
      $region54: #{degae_forward.4} parent=51 // pred_check_branch
        %3282 = sbr.rel (%p3280) target = $region56
      $region55: #{degae_forward.4} parent=51 // pred_region
        %p3283 = scmp.lt.s32.totalorder %s18, 1
        %s3284 = scalar_select %p3283, %s18, 1
        %s3285 = scalar_lea.vmem %s6, %s3284
      $region56: #{degae_forward.4} parent=51 // pred_fallthru
        _
    $region52: #{degae_forward.4} parent=5 // pred_fallthru
      _
  $region6: #{degae_forward.4} parent=0 // loop_footer
    %s16 = sadd.s32 1, %s12
  $region7: #{degae_forward.4} parent=0 // loop_footer_branch
    %11 = sbr.rel target = $region3
  $region8: #{degae_forward.4} parent=0 // loop_exit
    _

// kernel: degae_forward.5
$region0: #{degae_forward.5}
  #allocation0 [shape = 'u32[]', space=smem, size = 0x4, offset = 0x4, fixed_abs, tag = 'smem constant byte address 0x4 - core index']
  #allocation1 [shape = 'u32[144,128]{1,0:T(1,128)}', space=vmem, size = 0x12000, scoped, tag = 'internal scratch']
  %s0 = inlined_call_operand.vmem [shape: f32[2,18,18,16], index: 0, kind: input, shape index: {}]
  %s1 = inlined_call_operand.vmem [shape: f32[2,1,32], index: 1, kind: input, shape index: {}]
  %s2 = inlined_call_operand.vmem [shape: f32[32,32], index: 2, kind: input, shape index: {}]
  %s3 = inlined_call_operand.vmem [shape: f32[1,32], index: 3, kind: input, shape index: {}]
  %s4 = inlined_call_operand.vmem [shape: f32[9,16,3], index: 4, kind: input, shape index: {}]
  %s5 = inlined_call_operand.vmem [shape: f32[1,3], index: 5, kind: input, shape index: {}]
  %s6 = inlined_call_operand.vmem [shape: f32[2,256,3], index: 6, kind: output, shape index: {}]
  %s7 = sld [smem:[#allocation0]]
  $region57: #{degae_forward.5} parent=0
    _
  %s9 = ssub.s32 1, %s7
  %s10 = scalar_select 0, %s9, %s7
  loop: start=0, step=1, limit=4
  $region2: #{degae_forward.5} parent=0 // loop_pre_header
    _
  $region3: #{degae_forward.5} parent=0 // loop_header
    %s12 = sphi 0, %s16
    %p13 = scmp.ge.s32.totalorder %s12, 4
    %s22 = sphi 0, %s24
    %s25 = sphi 0, %s22
    %s26 = sphi 0, %s25
    %s42 = sphi 0, %s26
    %s48 = sphi 0, %s50
    %s51 = sphi 0, %s48
    %s52 = sphi 0, %s51
    %s68 = sphi 0, %s52
    %s72 = sphi 0, %s72
    %s74 = sphi 0, %s72
    %s75 = sphi 0, %s74
    %s89 = sphi 0, %s75
    %s93 = sphi 0, %s93
    %s95 = sphi 0, %s93
    %s96 = sphi 0, %s95
    %s110 = sphi 0, %s96
    %s114 = sphi 0, %s114
    %s116 = sphi 0, %s114
    %s117 = sphi 0, %s116
    %s131 = sphi 0, %s117
    %s135 = sphi 0, %s135
    %s137 = sphi 0, %s135
    %s138 = sphi 0, %s137
    %s152 = sphi 0, %s138
    %s158 = sphi 0, %s160
    %s161 = sphi 0, %s158
    %s162 = sphi 0, %s161
    %s178 = sphi 0, %s162
  $region4: #{degae_forward.5} parent=0 // loop_header_branch
    %15 = sbr.rel (%p13) target = $region8
  $region5: #{degae_forward.5} parent=0 // loop_body
    %s17 = ssub.s32 %s12, 1
    %s18 = ssub.s32 %s12, 2
    %s19 = sadd.s32 %s12, 1
    %s20 = ssub.s32 %s12, %s19
    %p21 = scmp.eq.s32.totalorder %s20, 0
    %s23 = sadd.s32 %s22, 1
    %s24 = scalar_select %p21, %s22, %s23
    %p27 = pneg %p21
    %p28 = scmp.eq.s32.totalorder %s12, 1
    %p29 = por %p27, %p28
    %p30 = scmp.ne.s32.totalorder %s22, %s25
    %p31 = scmp.eq.s32.totalorder %s12, 0
    %p32 = por %p30, %p31
    %p33 = scmp.ne.s32.totalorder %s22, %s25
    %p34 = scmp.eq.s32.totalorder %s17, 1
    %p35 = por %p33, %p34
    %p36 = scmp.ne.s32.totalorder %s25, %s26
    %p37 = scmp.eq.s32.totalorder %s17, 0
    %p38 = por %p36, %p37
    %p39 = scmp.ne.s32.totalorder %s25, %s26
    %p40 = scmp.eq.s32.totalorder %s18, 1
    %p41 = por %p39, %p40
    %p43 = scmp.ne.s32.totalorder %s26, %s42
    %p44 = scmp.eq.s32.totalorder %s18, 0
    %p45 = por %p43, %p44
    %s46 = ssub.s32 %s12, %s19
    %p47 = scmp.eq.s32.totalorder %s46, 0
    %s49 = sadd.s32 %s48, 1
    %s50 = scalar_select %p47, %s48, %s49
    %p53 = pneg %p47
    %p54 = scmp.eq.s32.totalorder %s12, 1
    %p55 = por %p53, %p54
    %p56 = scmp.ne.s32.totalorder %s48, %s51
    %p57 = scmp.eq.s32.totalorder %s12, 0
    %p58 = por %p56, %p57
    %p59 = scmp.ne.s32.totalorder %s48, %s51
    %p60 = scmp.eq.s32.totalorder %s17, 1
    %p61 = por %p59, %p60
    %p62 = scmp.ne.s32.totalorder %s51, %s52
    %p63 = scmp.eq.s32.totalorder %s17, 0
    %p64 = por %p62, %p63
    %p65 = scmp.ne.s32.totalorder %s51, %s52
    %p66 = scmp.eq.s32.totalorder %s18, 1
    %p67 = por %p65, %p66
    %p69 = scmp.ne.s32.totalorder %s52, %s68
    %p70 = scmp.eq.s32.totalorder %s18, 0
    %p71 = por %p69, %p70
    %s73 = sadd.s32 %s72, 1
    %p76 = scmp.eq.s32.totalorder %s12, 1
    %p77 = scmp.ne.s32.totalorder %s72, %s74
    %p78 = scmp.eq.s32.totalorder %s12, 0
    %p79 = por %p77, %p78
    %p80 = scmp.ne.s32.totalorder %s72, %s74
    %p81 = scmp.eq.s32.totalorder %s17, 1
    %p82 = por %p80, %p81
    %p83 = scmp.ne.s32.totalorder %s74, %s75
    %p84 = scmp.eq.s32.totalorder %s17, 0
    %p85 = por %p83, %p84
    %p86 = scmp.ne.s32.totalorder %s74, %s75
    %p87 = scmp.eq.s32.totalorder %s18, 1
    %p88 = por %p86, %p87
    %p90 = scmp.ne.s32.totalorder %s75, %s89
    %p91 = scmp.eq.s32.totalorder %s18, 0
    %p92 = por %p90, %p91
    %s94 = sadd.s32 %s93, 1
    %p97 = scmp.eq.s32.totalorder %s12, 1
    %p98 = scmp.ne.s32.totalorder %s93, %s95
    %p99 = scmp.eq.s32.totalorder %s12, 0
    %p100 = por %p98, %p99
    %p101 = scmp.ne.s32.totalorder %s93, %s95
    %p102 = scmp.eq.s32.totalorder %s17, 1
    %p103 = por %p101, %p102
    %p104 = scmp.ne.s32.totalorder %s95, %s96
    %p105 = scmp.eq.s32.totalorder %s17, 0
    %p106 = por %p104, %p105
    %p107 = scmp.ne.s32.totalorder %s95, %s96
    %p108 = scmp.eq.s32.totalorder %s18, 1
    %p109 = por %p107, %p108
    %p111 = scmp.ne.s32.totalorder %s96, %s110
    %p112 = scmp.eq.s32.totalorder %s18, 0
    %p113 = por %p111, %p112
    %s115 = sadd.s32 %s114, 1
    %p118 = scmp.eq.s32.totalorder %s12, 1
    %p119 = scmp.ne.s32.totalorder %s114, %s116
    %p120 = scmp.eq.s32.totalorder %s12, 0
    %p121 = por %p119, %p120
    %p122 = scmp.ne.s32.totalorder %s114, %s116
    %p123 = scmp.eq.s32.totalorder %s17, 1
    %p124 = por %p122, %p123
    %p125 = scmp.ne.s32.totalorder %s116, %s117
    %p126 = scmp.eq.s32.totalorder %s17, 0
    %p127 = por %p125, %p126
    %p128 = scmp.ne.s32.totalorder %s116, %s117
    %p129 = scmp.eq.s32.totalorder %s18, 1
    %p130 = por %p128, %p129
    %p132 = scmp.ne.s32.totalorder %s117, %s131
    %p133 = scmp.eq.s32.totalorder %s18, 0
    %p134 = por %p132, %p133
    %s136 = sadd.s32 %s135, 1
    %p139 = scmp.eq.s32.totalorder %s12, 1
    %p140 = scmp.ne.s32.totalorder %s135, %s137
    %p141 = scmp.eq.s32.totalorder %s12, 0
    %p142 = por %p140, %p141
    %p143 = scmp.ne.s32.totalorder %s135, %s137
    %p144 = scmp.eq.s32.totalorder %s17, 1
    %p145 = por %p143, %p144
    %p146 = scmp.ne.s32.totalorder %s137, %s138
    %p147 = scmp.eq.s32.totalorder %s17, 0
    %p148 = por %p146, %p147
    %p149 = scmp.ne.s32.totalorder %s137, %s138
    %p150 = scmp.eq.s32.totalorder %s18, 1
    %p151 = por %p149, %p150
    %p153 = scmp.ne.s32.totalorder %s138, %s152
    %p154 = scmp.eq.s32.totalorder %s18, 0
    %p155 = por %p153, %p154
    %s156 = ssub.s32 %s12, %s19
    %p157 = scmp.eq.s32.totalorder %s156, 0
    %s159 = sadd.s32 %s158, 1
    %s160 = scalar_select %p157, %s158, %s159
    %p163 = pneg %p157
    %p164 = scmp.eq.s32.totalorder %s12, 1
    %p165 = por %p163, %p164
    %p166 = scmp.ne.s32.totalorder %s158, %s161
    %p167 = scmp.eq.s32.totalorder %s12, 0
    %p168 = por %p166, %p167
    %p169 = scmp.ne.s32.totalorder %s158, %s161
    %p170 = scmp.eq.s32.totalorder %s17, 1
    %p171 = por %p169, %p170
    %p172 = scmp.ne.s32.totalorder %s161, %s162
    %p173 = scmp.eq.s32.totalorder %s17, 0
    %p174 = por %p172, %p173
    %p175 = scmp.ne.s32.totalorder %s161, %s162
    %p176 = scmp.eq.s32.totalorder %s18, 1
    %p177 = por %p175, %p176
    %p179 = scmp.ne.s32.totalorder %s162, %s178
    %p180 = scmp.eq.s32.totalorder %s18, 0
    %p181 = por %p179, %p180
    %p182 = scmp.le.s32.totalorder 1, %s12
    %p183 = scmp.lt.s32.totalorder %s12, 3
    %p184 = pnand %p182, %p183
    %p185 = pneg %p184
    // Predicated region
    $region9: #{degae_forward.5} parent=5 // pred_check
      _
    $region10: #{degae_forward.5} parent=5 // pred_check_branch
      %187 = sbr.rel (%p184) target = $region12
    $region11: #{degae_forward.5} parent=5 // pred_region
      %s188 = ssub.s32 %s12, 1
      // Predicated region
      $region13: #{degae_forward.5} parent=11 // pred_check
        %p189 = pneg %p85
      $region14: #{degae_forward.5} parent=11 // pred_check_branch
        %191 = sbr.rel (%p189) target = $region16
      $region15: #{degae_forward.5} parent=11 // pred_region
        _
      $region16: #{degae_forward.5} parent=11 // pred_fallthru
        _
      // Predicated region
      $region17: #{degae_forward.5} parent=11 // pred_check
        %p192 = pneg %p106
      $region18: #{degae_forward.5} parent=11 // pred_check_branch
        %194 = sbr.rel (%p192) target = $region20
      $region19: #{degae_forward.5} parent=11 // pred_region
        _
      $region20: #{degae_forward.5} parent=11 // pred_fallthru
        _
      // Predicated region
      $region21: #{degae_forward.5} parent=11 // pred_check
        %p195 = pneg %p127
      $region22: #{degae_forward.5} parent=11 // pred_check_branch
        %197 = sbr.rel (%p195) target = $region24
      $region23: #{degae_forward.5} parent=11 // pred_region
        _
      $region24: #{degae_forward.5} parent=11 // pred_fallthru
        _
      // Predicated region
      $region25: #{degae_forward.5} parent=11 // pred_check
        %p198 = pneg %p148
      $region26: #{degae_forward.5} parent=11 // pred_check_branch
        %200 = sbr.rel (%p198) target = $region28
      $region27: #{degae_forward.5} parent=11 // pred_region
        _
      $region28: #{degae_forward.5} parent=11 // pred_fallthru
        _
    $region12: #{degae_forward.5} parent=5 // pred_fallthru
      _
    %p201 = scmp.lt.s32.totalorder %s12, 2
    // Predicated region
    $region29: #{degae_forward.5} parent=5 // pred_check
      %p202 = pneg %p201
    $region30: #{degae_forward.5} parent=5 // pred_check_branch
      %204 = sbr.rel (%p202) target = $region32
    $region31: #{degae_forward.5} parent=5 // pred_region
      // Predicated region
      $region33: #{degae_forward.5} parent=31 // pred_check
        %p205 = pneg %p32
      $region34: #{degae_forward.5} parent=31 // pred_check_branch
        %207 = sbr.rel (%p205) target = $region36
      $region35: #{degae_forward.5} parent=31 // pred_region
        %p208 = scmp.lt.s32.totalorder %s12, 1
        %s209 = scalar_select %p208, %s12, 1
        %s210 = smul.addr %s209, 54
        %s211 = smul.addr %s210, 8
        %s212 = scalar_lea.vmem %s0, %s211
      $region36: #{degae_forward.5} parent=31 // pred_fallthru
        _
      // Predicated region
      $region37: #{degae_forward.5} parent=31 // pred_check
        %p213 = pneg %p58
      $region38: #{degae_forward.5} parent=31 // pred_check_branch
        %215 = sbr.rel (%p213) target = $region40
      $region39: #{degae_forward.5} parent=31 // pred_region
        %p216 = scmp.lt.s32.totalorder %s12, 1
        %s217 = scalar_select %p216, %s12, 1
        %s218 = scalar_lea.vmem %s1, %s217
      $region40: #{degae_forward.5} parent=31 // pred_fallthru
        _
    $region32: #{degae_forward.5} parent=5 // pred_fallthru
      _
    %p219 = scmp.le.s32.totalorder 1, %s12
    %p220 = scmp.lt.s32.totalorder %s12, 3
    %p221 = pnand %p219, %p220
    %p222 = pneg %p221
    // Predicated region
    $region41: #{degae_forward.5} parent=5 // pred_check
      _
    $region42: #{degae_forward.5} parent=5 // pred_check_branch
      %224 = sbr.rel (%p221) target = $region44
    $region43: #{degae_forward.5} parent=5 // pred_region
      %s225 = ssub.s32 %s12, 1
      %p226 = scmp.lt.s32.totalorder %s17, 1
      %s227 = scalar_select %p226, %s17, 1
      %s228 = smul.addr %s227, 54
      %s229 = smul.addr %s228, 8
      %s230 = scalar_lea.vmem %s0, %s229
      %p231 = pneg %p38
      %p232 = pneg %p35
      %p233 = scmp.lt.s32.totalorder %s17, 1
      %s234 = scalar_select %p233, %s17, 1
      %s235 = scalar_lea.vmem %s1, %s234
      %p236 = pneg %p64
      %p237 = pneg %p61
      %p238 = pneg %p85
      %p239 = pneg %p82
      %p240 = pneg %p106
      %p241 = pneg %p103
      %p242 = pneg %p127
      %p243 = pneg %p124
      %p244 = pneg %p148
      %p245 = pneg %p145
      %p246 = pneg %p174
      %p247 = pneg %p171
      %p248 = scmp.lt.s32.totalorder %s17, 1
      %s249 = scalar_select %p248, %s17, 1
      %s250 = smul.addr %s249, 32
      %s251 = smul.addr %s250, 8
      %s252 = scalar_lea.vmem %s6, %s251
      %p253 = scmp.lt.s32.totalorder %s17, 1
      %s254 = scalar_select %p253, %s17, 1
      %s255 = smul.addr %s254, 54
      %s256 = smul.addr %s255, 8
      %s257 = scalar_lea.vmem %s0, %s256
      %p258 = scmp.lt.s32.totalorder %s17, 1
      %s259 = scalar_select %p258, %s17, 1
      %s260 = scalar_lea.vmem %s1, %s259
      %p261 = scmp.lt.s32.totalorder %s17, 1
      %s262 = scalar_select %p261, %s17, 1
      %s263 = smul.addr %s262, 32
      %s264 = smul.addr %s263, 8
      %s265 = scalar_lea.vmem %s6, %s264
      %v266 = vld [vmem:[%s257] sm:$0xff]
      %v267 = vld [vmem:[%s257 + $0x8] sm:$0xff]
      %v268 = vld [vmem:[%s257 + $0x10] sm:$0x3]
      %v269 = vld [vmem:[%s257 + $0x18] sm:$0xff]
      %v270 = vld [vmem:[%s257 + $0x20] sm:$0xff]
      %v271 = vld [vmem:[%s257 + $0x28] sm:$0x3]
      %v272 = vld [vmem:[%s257 + $0x30] sm:$0xff]
      %v273 = vld [vmem:[%s257 + $0x38] sm:$0xff]
      %v274 = vld [vmem:[%s257 + $0x40] sm:$0x3]
      %v275 = vld [vmem:[%s257 + $0x48] sm:$0xff]
      %v276 = vld [vmem:[%s257 + $0x50] sm:$0xff]
      %v277 = vld [vmem:[%s257 + $0x58] sm:$0x3]
      %v278 = vld [vmem:[%s257 + $0x60] sm:$0xff]
      %v279 = vld [vmem:[%s257 + $0x68] sm:$0xff]
      %v280 = vld [vmem:[%s257 + $0x70] sm:$0x3]
      %v281 = vld [vmem:[%s257 + $0x78] sm:$0xff]
      %v282 = vld [vmem:[%s257 + $0x80] sm:$0xff]
      %v283 = vld [vmem:[%s257 + $0x88] sm:$0x3]
      %v284 = vld [vmem:[%s257 + $0x90] sm:$0xff]
      %v285 = vld [vmem:[%s257 + $0x98] sm:$0xff]
      %v286 = vld [vmem:[%s257 + $0xa0] sm:$0x3]
      %v287 = vld [vmem:[%s257 + $0xa8] sm:$0xff]
      %v288 = vld [vmem:[%s257 + $0xb0] sm:$0xff]
      %v289 = vld [vmem:[%s257 + $0xb8] sm:$0x3]
      %v290 = vld [vmem:[%s257 + $0xc0] sm:$0xff]
      %v291 = vld [vmem:[%s257 + $0xc8] sm:$0xff]
      %v292 = vld [vmem:[%s257 + $0xd0] sm:$0x3]
      %v293 = vld [vmem:[%s257 + $0xd8] sm:$0xff]
      %v294 = vld [vmem:[%s257 + $0xe0] sm:$0xff]
      %v295 = vld [vmem:[%s257 + $0xe8] sm:$0x3]
      %v296 = vld [vmem:[%s257 + $0xf0] sm:$0xff]
      %v297 = vld [vmem:[%s257 + $0xf8] sm:$0xff]
      %v298 = vld [vmem:[%s257 + $0x100] sm:$0x3]
      %v299 = vld [vmem:[%s257 + $0x108] sm:$0xff]
      %v300 = vld [vmem:[%s257 + $0x110] sm:$0xff]
      %v301 = vld [vmem:[%s257 + $0x118] sm:$0x3]
      %v302 = vld [vmem:[%s257 + $0x120] sm:$0xff]
      %v303 = vld [vmem:[%s257 + $0x128] sm:$0xff]
      %v304 = vld [vmem:[%s257 + $0x130] sm:$0x3]
      %v305 = vld [vmem:[%s257 + $0x138] sm:$0xff]
      %v306 = vld [vmem:[%s257 + $0x140] sm:$0xff]
      %v307 = vld [vmem:[%s257 + $0x148] sm:$0x3]
      %v308 = vld [vmem:[%s257 + $0x150] sm:$0xff]
      %v309 = vld [vmem:[%s257 + $0x158] sm:$0xff]
      %v310 = vld [vmem:[%s257 + $0x160] sm:$0x3]
      %v311 = vld [vmem:[%s257 + $0x168] sm:$0xff]
      %v312 = vld [vmem:[%s257 + $0x170] sm:$0xff]
      %v313 = vld [vmem:[%s257 + $0x178] sm:$0x3]
      %v314 = vld [vmem:[%s257 + $0x180] sm:$0xff]
      %v315 = vld [vmem:[%s257 + $0x188] sm:$0xff]
      %v316 = vld [vmem:[%s257 + $0x190] sm:$0x3]
      %v317 = vld [vmem:[%s257 + $0x198] sm:$0xff]
      %v318 = vld [vmem:[%s257 + $0x1a0] sm:$0xff]
      %v319 = vld [vmem:[%s257 + $0x1a8] sm:$0x3]
      %v320 = vld [vmem:[%s260] sm:$0x1]
      %v321 = vld [vmem:[%s2] sm:$0xff]
      %v322 = vld [vmem:[%s2 + $0x8] sm:$0xff]
      %v323 = vld [vmem:[%s2 + $0x10] sm:$0xff]
      %v324 = vld [vmem:[%s2 + $0x18] sm:$0xff]
      %v325 = vld [vmem:[%s3] sm:$0x1]
      %vm326 = vcmask 261120
      %v328 = vsel %vm326, %v320, 0
      %330 = vmatprep.subr.mxu0 0.0
      %331 = vmatpush1.msra.mxu0 %v321
      %332 = vmatprep.subr.mxu0 0.0
      %333 = vmatpush1.msra.mxu0 %v322
      %334 = vmatprep.subr.mxu0 0.0
      %335 = vmatpush1.msra.mxu0 %v323
      %336 = vmatprep.subr.mxu0 0.0
      %337 = vmatpush1.msra.mxu0 %v324
      %338 = vmatprep.subr.mxu0 0.0
      %339 = vmatpush1.msra.mxu0 0.0
      %340 = vmatprep.subr.mxu0 0.0
      %341 = vmatpush1.msra.mxu0 0.0
      %342 = vmatprep.subr.mxu0 0.0
      %343 = vmatpush1.msra.mxu0 0.0
      %344 = vmatprep.subr.mxu0 0.0
      %345 = vmatpush1.msra.mxu0 0.0
      %346 = vmatprep.subr.mxu0 0.0
      %347 = vmatpush1.msra.mxu0 0.0
      %348 = vmatprep.subr.mxu0 0.0
      %349 = vmatpush1.msra.mxu0 0.0
      %350 = vmatprep.subr.mxu0 0.0
      %351 = vmatpush1.msra.mxu0 0.0
      %352 = vmatprep.subr.mxu0 0.0
      %353 = vmatpush1.msra.mxu0 0.0
      %354 = vmatprep.subr.mxu0 0.0
      %355 = vmatpush1.msra.mxu0 0.0
      %356 = vmatprep.subr.mxu0 0.0
      %357 = vmatpush1.msra.mxu0 0.0
      %358 = vmatprep.subr.mxu0 0.0
      %359 = vmatpush1.msra.mxu0 0.0
      %360 = vmatprep.subr.mxu0 0.0
      %361 = vmatpush1.msra.mxu0 0.0
      %362 = vmatprep.subr.mxu0 0.0
      %363 = vmatpush1.msra.mxu0 0.0
      %364 = vmatprep.subr.mxu0 0.0
      %365 = vmatpush1.msra.mxu0 0.0
      %366 = vmatprep.subr.mxu0 0.0
      %367 = vmatpush1.msra.mxu0 0.0
      %368 = vmatprep.subr.mxu0 0.0
      %369 = vmatpush1.msra.mxu0 0.0
      %370 = vmatprep.subr.mxu0 0.0
      %371 = vmatpush1.msra.mxu0 0.0
      %372 = vmatprep.subr.mxu0 0.0
      %373 = vmatpush1.msra.mxu0 0.0
      %374 = vmatprep.subr.mxu0 0.0
      %375 = vmatpush1.msra.mxu0 0.0
      %376 = vmatprep.subr.mxu0 0.0
      %377 = vmatpush1.msra.mxu0 0.0
      %378 = vmatprep.subr.mxu0 0.0
      %379 = vmatpush1.msra.mxu0 0.0
      %380 = vmatprep.subr.mxu0 0.0
      %381 = vmatpush1.msra.mxu0 0.0
      %382 = vmatprep.subr.mxu0 0.0
      %383 = vmatpush1.msra.mxu0 0.0
      %384 = vmatprep.subr.mxu0 0.0
      %385 = vmatpush1.msra.mxu0 0.0
      %386 = vmatprep.subr.mxu0 0.0
      %387 = vmatpush1.msra.mxu0 0.0
      %388 = vmatprep.subr.mxu0 0.0
      %389 = vmatpush1.msra.mxu0 0.0
      %390 = vmatprep.subr.mxu0 0.0
      %391 = vmatpush1.msra.mxu0 0.0
      %392 = vmatprep.subr.mxu0 0.0
      %393 = vmatpush1.msra.mxu0 0.0
      %394 = vmatprep.mubr.f32.mxu0 0.0
      %395 = vmatmul.mubr.f32.gmra.mrb[0].mxu0 %v328
      %v396 = vpop.f32.mrb[0].mxu0
      %v397 = vadd.f32 %v325, %v396
      %v398 = vpop.f32.mrb[0].mxu0
      %399 = vdwg.mxu0
      %v400 = vlaneseq
      %v401 = vshrl.u32 %v400, 7
      %v402 = vadd.s32 %v401, 8
      %v403 = vadd.s32 %v401, 16
      %vm404 = vcmp.ge.s32.totalorder %v401, 1
      %vm405 = vcmp.ge.s32.totalorder %v402, 1
      %vm406 = vcmp.ge.s32.totalorder %v403, 1
      %vm407 = vmand 0, %vm404
      %vm408 = vmand 0, %vm405
      %vm409 = vmand 0, %vm406
      %vm410 = vmand 1, %vm404
      %vm411 = vmand 1, %vm405
      %vm412 = vmand 1, %vm406
      %vm413 = vcmp.le.s32.totalorder %v401, 16
      %vm414 = vcmp.le.s32.totalorder %v402, 16
      %vm415 = vcmp.le.s32.totalorder %v403, 16
      %vm416 = vmand %vm407, %vm413
      %vm417 = vmand %vm408, %vm414
      %vm418 = vmand %vm409, %vm415
      %vm419 = vmand %vm410, %vm413
      %vm420 = vmand %vm411, %vm414
      %vm421 = vmand %vm412, %vm415
      %v422 = vsel %vm416, 1, 0
      %v423 = vsel %vm417, 1, 0
      %v424 = vsel %vm418, 1, 0
      %v425 = vsel %vm419, 1, 0
      %v426 = vsel %vm420, 1, 0
      %v427 = vsel %vm421, 1, 0
      %v428 = vcvt.s32.f32 %v422
      %v429 = vcvt.s32.f32 %v423
      %v430 = vcvt.s32.f32 %v424
      %v431 = vcvt.s32.f32 %v425
      %v432 = vcvt.s32.f32 %v426
      %v433 = vcvt.s32.f32 %v427
      %v434 = vadd.f32 %v397, 1.0
      %v435 = vlaneseq
      %v436 = vshrl.u32 %v435, 7
      %v437 = vsub.s32 0, %v436
      %v438 = vrot.slane %v434, %v437
      %v439 = vmul.f32 %v266, %v438
      %v440 = vmul.f32 %v267, %v438
      %v441 = vmul.f32 %v268, %v438
      %v442 = vmul.f32 %v269, %v438
      %v443 = vmul.f32 %v270, %v438
      %v444 = vmul.f32 %v271, %v438
      %v445 = vmul.f32 %v272, %v438
      %v446 = vmul.f32 %v273, %v438
      %v447 = vmul.f32 %v274, %v438
      %v448 = vmul.f32 %v275, %v438
      %v449 = vmul.f32 %v276, %v438
      %v450 = vmul.f32 %v277, %v438
      %v451 = vmul.f32 %v278, %v438
      %v452 = vmul.f32 %v279, %v438
      %v453 = vmul.f32 %v280, %v438
      %v454 = vmul.f32 %v281, %v438
      %v455 = vmul.f32 %v282, %v438
      %v456 = vmul.f32 %v283, %v438
      %v457 = vmul.f32 %v284, %v438
      %v458 = vmul.f32 %v285, %v438
      %v459 = vmul.f32 %v286, %v438
      %v460 = vmul.f32 %v287, %v438
      %v461 = vmul.f32 %v288, %v438
      %v462 = vmul.f32 %v289, %v438
      %v463 = vmul.f32 %v290, %v438
      %v464 = vmul.f32 %v291, %v438
      %v465 = vmul.f32 %v292, %v438
      %v466 = vmul.f32 %v293, %v438
      %v467 = vmul.f32 %v294, %v438
      %v468 = vmul.f32 %v295, %v438
      %v469 = vmul.f32 %v296, %v438
      %v470 = vmul.f32 %v297, %v438
      %v471 = vmul.f32 %v298, %v438
      %v472 = vmul.f32 %v299, %v438
      %v473 = vmul.f32 %v300, %v438
      %v474 = vmul.f32 %v301, %v438
      %v475 = vmul.f32 %v302, %v438
      %v476 = vmul.f32 %v303, %v438
      %v477 = vmul.f32 %v304, %v438
      %v478 = vmul.f32 %v305, %v438
      %v479 = vmul.f32 %v306, %v438
      %v480 = vmul.f32 %v307, %v438
      %v481 = vmul.f32 %v308, %v438
      %v482 = vmul.f32 %v309, %v438
      %v483 = vmul.f32 %v310, %v438
      %v484 = vmul.f32 %v311, %v438
      %v485 = vmul.f32 %v312, %v438
      %v486 = vmul.f32 %v313, %v438
      %v487 = vmul.f32 %v314, %v438
      %v488 = vmul.f32 %v315, %v438
      %v489 = vmul.f32 %v316, %v438
      %v490 = vmul.f32 %v317, %v438
      %v491 = vmul.f32 %v318, %v438
      %v492 = vmul.f32 %v319, %v438
      %v493 = vlaneseq
      %v494 = vshrl.u32 %v493, 7
      %v495 = vsub.s32 0, %v494
      %v496 = vrot.slane %v397, %v495
      %498 = vrot.lane.b32.xlu0 %v496, 112
      %v499 = vpop.permute.xlu0 %498
      %v501 = vadd.f32 %v439, %v499
      %v502 = vadd.f32 %v440, %v499
      %v503 = vadd.f32 %v441, %v499
      %v504 = vadd.f32 %v442, %v499
      %v505 = vadd.f32 %v443, %v499
      %v506 = vadd.f32 %v444, %v499
      %v507 = vadd.f32 %v445, %v499
      %v508 = vadd.f32 %v446, %v499
      %v509 = vadd.f32 %v447, %v499
      %v510 = vadd.f32 %v448, %v499
      %v511 = vadd.f32 %v449, %v499
      %v512 = vadd.f32 %v450, %v499
      %v513 = vadd.f32 %v451, %v499
      %v514 = vadd.f32 %v452, %v499
      %v515 = vadd.f32 %v453, %v499
      %v516 = vadd.f32 %v454, %v499
      %v517 = vadd.f32 %v455, %v499
      %v518 = vadd.f32 %v456, %v499
      %v519 = vadd.f32 %v457, %v499
      %v520 = vadd.f32 %v458, %v499
      %v521 = vadd.f32 %v459, %v499
      %v522 = vadd.f32 %v460, %v499
      %v523 = vadd.f32 %v461, %v499
      %v524 = vadd.f32 %v462, %v499
      %v525 = vadd.f32 %v463, %v499
      %v526 = vadd.f32 %v464, %v499
      %v527 = vadd.f32 %v465, %v499
      %v528 = vadd.f32 %v466, %v499
      %v529 = vadd.f32 %v467, %v499
      %v530 = vadd.f32 %v468, %v499
      %v531 = vadd.f32 %v469, %v499
      %v532 = vadd.f32 %v470, %v499
      %v533 = vadd.f32 %v471, %v499
      %v534 = vadd.f32 %v472, %v499
      %v535 = vadd.f32 %v473, %v499
      %v536 = vadd.f32 %v474, %v499
      %v537 = vadd.f32 %v475, %v499
      %v538 = vadd.f32 %v476, %v499
      %v539 = vadd.f32 %v477, %v499
      %v540 = vadd.f32 %v478, %v499
      %v541 = vadd.f32 %v479, %v499
      %v542 = vadd.f32 %v480, %v499
      %v543 = vadd.f32 %v481, %v499
      %v544 = vadd.f32 %v482, %v499
      %v545 = vadd.f32 %v483, %v499
      %v546 = vadd.f32 %v484, %v499
      %v547 = vadd.f32 %v485, %v499
      %v548 = vadd.f32 %v486, %v499
      %v549 = vadd.f32 %v487, %v499
      %v550 = vadd.f32 %v488, %v499
      %v551 = vadd.f32 %v489, %v499
      %v552 = vadd.f32 %v490, %v499
      %v553 = vadd.f32 %v491, %v499
      %v554 = vadd.f32 %v492, %v499
      %v555 = vmul.f32 %v501, %v428
      %v556 = vmul.f32 %v502, %v429
      %v557 = vmul.f32 %v503, %v430
      %v558 = vmul.f32 %v504, %v431
      %v559 = vmul.f32 %v505, %v432
      %v560 = vmul.f32 %v506, %v433
      %v561 = vmul.f32 %v507, %v431
      %v562 = vmul.f32 %v508, %v432
      %v563 = vmul.f32 %v509, %v433
      %v564 = vmul.f32 %v510, %v431
      %v565 = vmul.f32 %v511, %v432
      %v566 = vmul.f32 %v512, %v433
      %v567 = vmul.f32 %v513, %v431
      %v568 = vmul.f32 %v514, %v432
      %v569 = vmul.f32 %v515, %v433
      %v570 = vmul.f32 %v516, %v431
      %v571 = vmul.f32 %v517, %v432
      %v572 = vmul.f32 %v518, %v433
      %v573 = vmul.f32 %v519, %v431
      %v574 = vmul.f32 %v520, %v432
      %v575 = vmul.f32 %v521, %v433
      %v576 = vmul.f32 %v522, %v431
      %v577 = vmul.f32 %v523, %v432
      %v578 = vmul.f32 %v524, %v433
      %v579 = vmul.f32 %v525, %v431
      %v580 = vmul.f32 %v526, %v432
      %v581 = vmul.f32 %v527, %v433
      %v582 = vmul.f32 %v528, %v431
      %v583 = vmul.f32 %v529, %v432
      %v584 = vmul.f32 %v530, %v433
      %v585 = vmul.f32 %v531, %v431
      %v586 = vmul.f32 %v532, %v432
      %v587 = vmul.f32 %v533, %v433
      %v588 = vmul.f32 %v534, %v431
      %v589 = vmul.f32 %v535, %v432
      %v590 = vmul.f32 %v536, %v433
      %v591 = vmul.f32 %v537, %v431
      %v592 = vmul.f32 %v538, %v432
      %v593 = vmul.f32 %v539, %v433
      %v594 = vmul.f32 %v540, %v431
      %v595 = vmul.f32 %v541, %v432
      %v596 = vmul.f32 %v542, %v433
      %v597 = vmul.f32 %v543, %v431
      %v598 = vmul.f32 %v544, %v432
      %v599 = vmul.f32 %v545, %v433
      %v600 = vmul.f32 %v546, %v431
      %v601 = vmul.f32 %v547, %v432
      %v602 = vmul.f32 %v548, %v433
      %v603 = vmul.f32 %v549, %v431
      %v604 = vmul.f32 %v550, %v432
      %v605 = vmul.f32 %v551, %v433
      %v606 = vmul.f32 %v552, %v428
      %v607 = vmul.f32 %v553, %v429
      %v608 = vmul.f32 %v554, %v430
      %v609 = vld [vmem:[%s4] sm:$0xff]
      %v610 = vld [vmem:[%s4 + $0x8] sm:$0xff]
      %vm659 = vcmask 1046528
      %v660 = vrot.slane %v555, 1
      %v661 = vrot.slane %v556, 1
      %v662 = vsel %vm659, %v660, %v661
      %v663 = vrot.slane %v557, 1
      %v664 = vsel %vm659, %v661, %v663
      %v665 = vrot.slane %v558, 1
      %v666 = vrot.slane %v559, 1
      %v667 = vsel %vm659, %v665, %v666
      %v668 = vrot.slane %v560, 1
      %v669 = vsel %vm659, %v666, %v668
      %v670 = vrot.slane %v561, 1
      %v671 = vrot.slane %v562, 1
      %v672 = vsel %vm659, %v670, %v671
      %v673 = vrot.slane %v563, 1
      %v674 = vsel %vm659, %v671, %v673
      %v675 = vrot.slane %v564, 1
      %v676 = vrot.slane %v565, 1
      %v677 = vsel %vm659, %v675, %v676
      %v678 = vrot.slane %v566, 1
      %v679 = vsel %vm659, %v676, %v678
      %v680 = vrot.slane %v567, 1
      %v681 = vrot.slane %v568, 1
      %v682 = vsel %vm659, %v680, %v681
      %v683 = vrot.slane %v569, 1
      %v684 = vsel %vm659, %v681, %v683
      %v685 = vrot.slane %v570, 1
      %v686 = vrot.slane %v571, 1
      %v687 = vsel %vm659, %v685, %v686
      %v688 = vrot.slane %v572, 1
      %v689 = vsel %vm659, %v686, %v688
      %v690 = vrot.slane %v573, 1
      %v691 = vrot.slane %v574, 1
      %v692 = vsel %vm659, %v690, %v691
      %v693 = vrot.slane %v575, 1
      %v694 = vsel %vm659, %v691, %v693
      %v695 = vrot.slane %v576, 1
      %v696 = vrot.slane %v577, 1
      %v697 = vsel %vm659, %v695, %v696
      %v698 = vrot.slane %v578, 1
      %v699 = vsel %vm659, %v696, %v698
      %v700 = vrot.slane %v579, 1
      %v701 = vrot.slane %v580, 1
      %v702 = vsel %vm659, %v700, %v701
      %v703 = vrot.slane %v581, 1
      %v704 = vsel %vm659, %v701, %v703
      %v705 = vrot.slane %v582, 1
      %v706 = vrot.slane %v583, 1
      %v707 = vsel %vm659, %v705, %v706
      %v708 = vrot.slane %v584, 1
      %v709 = vsel %vm659, %v706, %v708
      %v710 = vrot.slane %v585, 1
      %v711 = vrot.slane %v586, 1
      %v712 = vsel %vm659, %v710, %v711
      %v713 = vrot.slane %v587, 1
      %v714 = vsel %vm659, %v711, %v713
      %v715 = vrot.slane %v588, 1
      %v716 = vrot.slane %v589, 1
      %v717 = vsel %vm659, %v715, %v716
      %v718 = vrot.slane %v590, 1
      %v719 = vsel %vm659, %v716, %v718
      %v720 = vrot.slane %v591, 1
      %v721 = vrot.slane %v592, 1
      %v722 = vsel %vm659, %v720, %v721
      %v723 = vrot.slane %v593, 1
      %v724 = vsel %vm659, %v721, %v723
      %v725 = vrot.slane %v594, 1
      %v726 = vrot.slane %v595, 1
      %v727 = vsel %vm659, %v725, %v726
      %v728 = vrot.slane %v596, 1
      %v729 = vsel %vm659, %v726, %v728
      %v730 = vrot.slane %v597, 1
      %v731 = vrot.slane %v598, 1
      %v732 = vsel %vm659, %v730, %v731
      %v733 = vrot.slane %v599, 1
      %v734 = vsel %vm659, %v731, %v733
      %v735 = vrot.slane %v600, 1
      %v736 = vrot.slane %v601, 1
      %v737 = vsel %vm659, %v735, %v736
      %v738 = vrot.slane %v602, 1
      %v739 = vsel %vm659, %v736, %v738
      %s740 = scalar_lea.vmem %s4, 16
      %v741 = vld [vmem:[%s740] sm:$0xff]
      %v742 = vld [vmem:[%s740 + $0x8] sm:$0xff]
      %vm743 = vcmask 130048
      %v744 = vsel %vm743, %v662, 0
      %v746 = vsel %vm743, %v664, 0
      %v748 = vsel %vm743, %v667, 0
      %v750 = vsel %vm743, %v669, 0
      %v752 = vsel %vm743, %v672, 0
      %v754 = vsel %vm743, %v674, 0
      %v756 = vsel %vm743, %v677, 0
      %v758 = vsel %vm743, %v679, 0
      %v760 = vsel %vm743, %v682, 0
      %v762 = vsel %vm743, %v684, 0
      %v764 = vsel %vm743, %v687, 0
      %v766 = vsel %vm743, %v689, 0
      %v768 = vsel %vm743, %v692, 0
      %v770 = vsel %vm743, %v694, 0
      %v772 = vsel %vm743, %v697, 0
      %v774 = vsel %vm743, %v699, 0
      %v776 = vsel %vm743, %v702, 0
      %v778 = vsel %vm743, %v704, 0
      %v780 = vsel %vm743, %v707, 0
      %v782 = vsel %vm743, %v709, 0
      %v784 = vsel %vm743, %v712, 0
      %v786 = vsel %vm743, %v714, 0
      %v788 = vsel %vm743, %v717, 0
      %v790 = vsel %vm743, %v719, 0
      %v792 = vsel %vm743, %v722, 0
      %v794 = vsel %vm743, %v724, 0
      %v796 = vsel %vm743, %v727, 0
      %v798 = vsel %vm743, %v729, 0
      %v800 = vsel %vm743, %v732, 0
      %v802 = vsel %vm743, %v734, 0
      %v804 = vsel %vm743, %v737, 0
      %v806 = vsel %vm743, %v739, 0
      %808 = vmatprep.subr.mxu0 0.0
      %809 = vmatpush1.msra.mxu0 %v741
      %810 = vmatprep.subr.mxu0 0.0
      %811 = vmatpush1.msra.mxu0 %v742
      %812 = vmatprep.subr.mxu0 0.0
      %813 = vmatpush1.msra.mxu0 0.0
      %814 = vmatprep.subr.mxu0 0.0
      %815 = vmatpush1.msra.mxu0 0.0
      %816 = vmatprep.subr.mxu0 0.0
      %817 = vmatpush1.msra.mxu0 0.0
      %818 = vmatprep.subr.mxu0 0.0
      %819 = vmatpush1.msra.mxu0 0.0
      %820 = vmatprep.subr.mxu0 0.0
      %821 = vmatpush1.msra.mxu0 0.0
      %822 = vmatprep.subr.mxu0 0.0
      %823 = vmatpush1.msra.mxu0 0.0
      %824 = vmatprep.subr.mxu0 0.0
      %825 = vmatpush1.msra.mxu0 0.0
      %826 = vmatprep.subr.mxu0 0.0
      %827 = vmatpush1.msra.mxu0 0.0
      %828 = vmatprep.subr.mxu0 0.0
      %829 = vmatpush1.msra.mxu0 0.0
      %830 = vmatprep.subr.mxu0 0.0
      %831 = vmatpush1.msra.mxu0 0.0
      %832 = vmatprep.subr.mxu0 0.0
      %833 = vmatpush1.msra.mxu0 0.0
      %834 = vmatprep.subr.mxu0 0.0
      %835 = vmatpush1.msra.mxu0 0.0
      %836 = vmatprep.subr.mxu0 0.0
      %837 = vmatpush1.msra.mxu0 0.0
      %838 = vmatprep.subr.mxu0 0.0
      %839 = vmatpush1.msra.mxu0 0.0
      %840 = vmatprep.subr.mxu0 0.0
      %841 = vmatpush1.msra.mxu0 0.0
      %842 = vmatprep.subr.mxu0 0.0
      %843 = vmatpush1.msra.mxu0 0.0
      %844 = vmatprep.subr.mxu0 0.0
      %845 = vmatpush1.msra.mxu0 0.0
      %846 = vmatprep.subr.mxu0 0.0
      %847 = vmatpush1.msra.mxu0 0.0
      %848 = vmatprep.subr.mxu0 0.0
      %849 = vmatpush1.msra.mxu0 0.0
      %850 = vmatprep.subr.mxu0 0.0
      %851 = vmatpush1.msra.mxu0 0.0
      %852 = vmatprep.subr.mxu0 0.0
      %853 = vmatpush1.msra.mxu0 0.0
      %854 = vmatprep.subr.mxu0 0.0
      %855 = vmatpush1.msra.mxu0 0.0
      %856 = vmatprep.subr.mxu0 0.0
      %857 = vmatpush1.msra.mxu0 0.0
      %858 = vmatprep.subr.mxu0 0.0
      %859 = vmatpush1.msra.mxu0 0.0
      %860 = vmatprep.subr.mxu0 0.0
      %861 = vmatpush1.msra.mxu0 0.0
      %862 = vmatprep.subr.mxu0 0.0
      %863 = vmatpush1.msra.mxu0 0.0
      %864 = vmatprep.subr.mxu0 0.0
      %865 = vmatpush1.msra.mxu0 0.0
      %866 = vmatprep.subr.mxu0 0.0
      %867 = vmatpush1.msra.mxu0 0.0
      %868 = vmatprep.subr.mxu0 0.0
      %869 = vmatpush1.msra.mxu0 0.0
      %870 = vmatprep.subr.mxu0 0.0
      %871 = vmatpush1.msra.mxu0 0.0
      %872 = vmatprep.mubr.f32.mxu0 0.0
      %873 = vmatmul.mubr.f32.gmra.mrb[0].mxu0 %v744
      %v874 = vpop.f32.mrb[0].mxu0
      %v875 = vadd.f32 0.0, %v874
      %v876 = vpop.f32.mrb[0].mxu0
      %877 = vmatprep.mubr.f32.mxu0 0.0
      %878 = vmatmul.mubr.f32.gmra.mrb[0].mxu0 %v746
      %v879 = vpop.f32.mrb[0].mxu0
      %v880 = vadd.f32 0.0, %v879
      %v881 = vpop.f32.mrb[0].mxu0
      %882 = vmatprep.mubr.f32.mxu0 0.0
      %883 = vmatmul.mubr.f32.gmra.mrb[0].mxu0 %v748
      %v884 = vpop.f32.mrb[0].mxu0
      %v885 = vadd.f32 0.0, %v884
      %v886 = vpop.f32.mrb[0].mxu0
      %887 = vmatprep.mubr.f32.mxu0 0.0
      %888 = vmatmul.mubr.f32.gmra.mrb[0].mxu0 %v750
      %v889 = vpop.f32.mrb[0].mxu0
      %v890 = vadd.f32 0.0, %v889
      %v891 = vpop.f32.mrb[0].mxu0
      %892 = vmatprep.mubr.f32.mxu0 0.0
      %893 = vmatmul.mubr.f32.gmra.mrb[0].mxu0 %v752
      %v894 = vpop.f32.mrb[0].mxu0
      %v895 = vadd.f32 0.0, %v894
      %v896 = vpop.f32.mrb[0].mxu0
      %897 = vmatprep.mubr.f32.mxu0 0.0
      %898 = vmatmul.mubr.f32.gmra.mrb[0].mxu0 %v754
      %v899 = vpop.f32.mrb[0].mxu0
      %v900 = vadd.f32 0.0, %v899
      %v901 = vpop.f32.mrb[0].mxu0
      %902 = vmatprep.mubr.f32.mxu0 0.0
      %903 = vmatmul.mubr.f32.gmra.mrb[0].mxu0 %v756
      %v904 = vpop.f32.mrb[0].mxu0
      %v905 = vadd.f32 0.0, %v904
      %v906 = vpop.f32.mrb[0].mxu0
      %907 = vmatprep.mubr.f32.mxu0 0.0
      %908 = vmatmul.mubr.f32.gmra.mrb[0].mxu0 %v758
      %v909 = vpop.f32.mrb[0].mxu0
      %v910 = vadd.f32 0.0, %v909
      %v911 = vpop.f32.mrb[0].mxu0
      %912 = vmatprep.mubr.f32.mxu0 0.0
      %913 = vmatmul.mubr.f32.gmra.mrb[0].mxu0 %v760
      %v914 = vpop.f32.mrb[0].mxu0
      %v915 = vadd.f32 0.0, %v914
      %v916 = vpop.f32.mrb[0].mxu0
      %917 = vmatprep.mubr.f32.mxu0 0.0
      %918 = vmatmul.mubr.f32.gmra.mrb[0].mxu0 %v762
      %v919 = vpop.f32.mrb[0].mxu0
      %v920 = vadd.f32 0.0, %v919
      %v921 = vpop.f32.mrb[0].mxu0
      %922 = vmatprep.mubr.f32.mxu0 0.0
      %923 = vmatmul.mubr.f32.gmra.mrb[0].mxu0 %v764
      %v924 = vpop.f32.mrb[0].mxu0
      %v925 = vadd.f32 0.0, %v924
      %v926 = vpop.f32.mrb[0].mxu0
      %927 = vmatprep.mubr.f32.mxu0 0.0
      %928 = vmatmul.mubr.f32.gmra.mrb[0].mxu0 %v766
      %v929 = vpop.f32.mrb[0].mxu0
      %v930 = vadd.f32 0.0, %v929
      %v931 = vpop.f32.mrb[0].mxu0
      %932 = vmatprep.mubr.f32.mxu0 0.0
      %933 = vmatmul.mubr.f32.gmra.mrb[0].mxu0 %v768
      %v934 = vpop.f32.mrb[0].mxu0
      %v935 = vadd.f32 0.0, %v934
      %v936 = vpop.f32.mrb[0].mxu0
      %937 = vmatprep.mubr.f32.mxu0 0.0
      %938 = vmatmul.mubr.f32.gmra.mrb[0].mxu0 %v770
      %v939 = vpop.f32.mrb[0].mxu0
      %v940 = vadd.f32 0.0, %v939
      %v941 = vpop.f32.mrb[0].mxu0
      %942 = vmatprep.mubr.f32.mxu0 0.0
      %943 = vmatmul.mubr.f32.gmra.mrb[0].mxu0 %v772
      %v944 = vpop.f32.mrb[0].mxu0
      %v945 = vadd.f32 0.0, %v944
      %v946 = vpop.f32.mrb[0].mxu0
      %947 = vmatprep.mubr.f32.mxu0 0.0
      %948 = vmatmul.mubr.f32.gmra.mrb[0].mxu0 %v774
      %v949 = vpop.f32.mrb[0].mxu0
      %v950 = vadd.f32 0.0, %v949
      %v951 = vpop.f32.mrb[0].mxu0
      %952 = vmatprep.mubr.f32.mxu0 0.0
      %953 = vmatmul.mubr.f32.gmra.mrb[0].mxu0 %v776
      %v954 = vpop.f32.mrb[0].mxu0
      %v955 = vadd.f32 0.0, %v954
      %v956 = vpop.f32.mrb[0].mxu0
      %957 = vmatprep.mubr.f32.mxu0 0.0
      %958 = vmatmul.mubr.f32.gmra.mrb[0].mxu0 %v778
      %v959 = vpop.f32.mrb[0].mxu0
      %v960 = vadd.f32 0.0, %v959
      %v961 = vpop.f32.mrb[0].mxu0
      %962 = vmatprep.mubr.f32.mxu0 0.0
      %963 = vmatmul.mubr.f32.gmra.mrb[0].mxu0 %v780
      %v964 = vpop.f32.mrb[0].mxu0
      %v965 = vadd.f32 0.0, %v964
      %v966 = vpop.f32.mrb[0].mxu0
      %967 = vmatprep.mubr.f32.mxu0 0.0
      %968 = vmatmul.mubr.f32.gmra.mrb[0].mxu0 %v782
      %v969 = vpop.f32.mrb[0].mxu0
      %v970 = vadd.f32 0.0, %v969
      %v971 = vpop.f32.mrb[0].mxu0
      %972 = vmatprep.mubr.f32.mxu0 0.0
      %973 = vmatmul.mubr.f32.gmra.mrb[0].mxu0 %v784
      %v974 = vpop.f32.mrb[0].mxu0
      %v975 = vadd.f32 0.0, %v974
      %v976 = vpop.f32.mrb[0].mxu0
      %977 = vmatprep.mubr.f32.mxu0 0.0
      %978 = vmatmul.mubr.f32.gmra.mrb[0].mxu0 %v786
      %v979 = vpop.f32.mrb[0].mxu0
      %v980 = vadd.f32 0.0, %v979
      %v981 = vpop.f32.mrb[0].mxu0
      %982 = vmatprep.mubr.f32.mxu0 0.0
      %983 = vmatmul.mubr.f32.gmra.mrb[0].mxu0 %v788
      %v984 = vpop.f32.mrb[0].mxu0
      %v985 = vadd.f32 0.0, %v984
      %v986 = vpop.f32.mrb[0].mxu0
      %987 = vmatprep.mubr.f32.mxu0 0.0
      %988 = vmatmul.mubr.f32.gmra.mrb[0].mxu0 %v790
      %v989 = vpop.f32.mrb[0].mxu0
      %v990 = vadd.f32 0.0, %v989
      %v991 = vpop.f32.mrb[0].mxu0
      %992 = vmatprep.mubr.f32.mxu0 0.0
      %993 = vmatmul.mubr.f32.gmra.mrb[0].mxu0 %v792
      %v994 = vpop.f32.mrb[0].mxu0
      %v995 = vadd.f32 0.0, %v994
      %v996 = vpop.f32.mrb[0].mxu0
      %997 = vmatprep.mubr.f32.mxu0 0.0
      %998 = vmatmul.mubr.f32.gmra.mrb[0].mxu0 %v794
      %v999 = vpop.f32.mrb[0].mxu0
      %v1000 = vadd.f32 0.0, %v999
      %v1001 = vpop.f32.mrb[0].mxu0
      %1002 = vmatprep.mubr.f32.mxu0 0.0
      %1003 = vmatmul.mubr.f32.gmra.mrb[0].mxu0 %v796
      %v1004 = vpop.f32.mrb[0].mxu0
      %v1005 = vadd.f32 0.0, %v1004
      %v1006 = vpop.f32.mrb[0].mxu0
      %1007 = vmatprep.mubr.f32.mxu0 0.0
      %1008 = vmatmul.mubr.f32.gmra.mrb[0].mxu0 %v798
      %v1009 = vpop.f32.mrb[0].mxu0
      %v1010 = vadd.f32 0.0, %v1009
      %v1011 = vpop.f32.mrb[0].mxu0
      %1012 = vmatprep.mubr.f32.mxu0 0.0
      %1013 = vmatmul.mubr.f32.gmra.mrb[0].mxu0 %v800
      %v1014 = vpop.f32.mrb[0].mxu0
      %v1015 = vadd.f32 0.0, %v1014
      %v1016 = vpop.f32.mrb[0].mxu0
      %1017 = vmatprep.mubr.f32.mxu0 0.0
      %1018 = vmatmul.mubr.f32.gmra.mrb[0].mxu0 %v802
      %v1019 = vpop.f32.mrb[0].mxu0
      %v1020 = vadd.f32 0.0, %v1019
      %v1021 = vpop.f32.mrb[0].mxu0
      %1022 = vmatprep.mubr.f32.mxu0 0.0
      %1023 = vmatmul.mubr.f32.gmra.mrb[0].mxu0 %v804
      %v1024 = vpop.f32.mrb[0].mxu0
      %v1025 = vadd.f32 0.0, %v1024
      %v1026 = vpop.f32.mrb[0].mxu0
      %1027 = vmatprep.mubr.f32.mxu0 0.0
      %1028 = vmatmul.mubr.f32.gmra.mrb[0].mxu0 %v806
      %v1029 = vpop.f32.mrb[0].mxu0
      %v1030 = vadd.f32 0.0, %v1029
      %v1031 = vpop.f32.mrb[0].mxu0
      %1032 = vdwg.mxu0
      %v1033 = vsel %vm743, %v555, 0
      %v1035 = vsel %vm743, %v556, 0
      %v1037 = vsel %vm743, %v558, 0
      %v1039 = vsel %vm743, %v559, 0
      %v1041 = vsel %vm743, %v561, 0
      %v1043 = vsel %vm743, %v562, 0
      %v1045 = vsel %vm743, %v564, 0
      %v1047 = vsel %vm743, %v565, 0
      %v1049 = vsel %vm743, %v567, 0
      %v1051 = vsel %vm743, %v568, 0
      %v1053 = vsel %vm743, %v570, 0
      %v1055 = vsel %vm743, %v571, 0
      %v1057 = vsel %vm743, %v573, 0
      %v1059 = vsel %vm743, %v574, 0
      %v1061 = vsel %vm743, %v576, 0
      %v1063 = vsel %vm743, %v577, 0
      %v1065 = vsel %vm743, %v579, 0
      %v1067 = vsel %vm743, %v580, 0
      %v1069 = vsel %vm743, %v582, 0
      %v1071 = vsel %vm743, %v583, 0
      %v1073 = vsel %vm743, %v585, 0
      %v1075 = vsel %vm743, %v586, 0
      %v1077 = vsel %vm743, %v588, 0
      %v1079 = vsel %vm743, %v589, 0
      %v1081 = vsel %vm743, %v591, 0
      %v1083 = vsel %vm743, %v592, 0
      %v1085 = vsel %vm743, %v594, 0
      %v1087 = vsel %vm743, %v595, 0
      %v1089 = vsel %vm743, %v597, 0
      %v1091 = vsel %vm743, %v598, 0
      %v1093 = vsel %vm743, %v600, 0
      %v1095 = vsel %vm743, %v601, 0
      %1097 = vmatprep.subr.mxu0 0.0
      %1098 = vmatpush1.msra.mxu0 %v609
      %1099 = vmatprep.subr.mxu0 0.0
      %1100 = vmatpush1.msra.mxu0 %v610
      %1101 = vmatprep.subr.mxu0 0.0
      %1102 = vmatpush1.msra.mxu0 0.0
      %1103 = vmatprep.subr.mxu0 0.0
      %1104 = vmatpush1.msra.mxu0 0.0
      %1105 = vmatprep.subr.mxu0 0.0
      %1106 = vmatpush1.msra.mxu0 0.0
      %1107 = vmatprep.subr.mxu0 0.0
      %1108 = vmatpush1.msra.mxu0 0.0
      %1109 = vmatprep.subr.mxu0 0.0
      %1110 = vmatpush1.msra.mxu0 0.0
      %1111 = vmatprep.subr.mxu0 0.0
      %1112 = vmatpush1.msra.mxu0 0.0
      %1113 = vmatprep.subr.mxu0 0.0
      %1114 = vmatpush1.msra.mxu0 0.0
      %1115 = vmatprep.subr.mxu0 0.0
      %1116 = vmatpush1.msra.mxu0 0.0
      %1117 = vmatprep.subr.mxu0 0.0
      %1118 = vmatpush1.msra.mxu0 0.0
      %1119 = vmatprep.subr.mxu0 0.0
      %1120 = vmatpush1.msra.mxu0 0.0
      %1121 = vmatprep.subr.mxu0 0.0
      %1122 = vmatpush1.msra.mxu0 0.0
      %1123 = vmatprep.subr.mxu0 0.0
      %1124 = vmatpush1.msra.mxu0 0.0
      %1125 = vmatprep.subr.mxu0 0.0
      %1126 = vmatpush1.msra.mxu0 0.0
      %1127 = vmatprep.subr.mxu0 0.0
      %1128 = vmatpush1.msra.mxu0 0.0
      %1129 = vmatprep.subr.mxu0 0.0
      %1130 = vmatpush1.msra.mxu0 0.0
      %1131 = vmatprep.subr.mxu0 0.0
      %1132 = vmatpush1.msra.mxu0 0.0
      %1133 = vmatprep.subr.mxu0 0.0
      %1134 = vmatpush1.msra.mxu0 0.0
      %1135 = vmatprep.subr.mxu0 0.0
      %1136 = vmatpush1.msra.mxu0 0.0
      %1137 = vmatprep.subr.mxu0 0.0
      %1138 = vmatpush1.msra.mxu0 0.0
      %1139 = vmatprep.subr.mxu0 0.0
      %1140 = vmatpush1.msra.mxu0 0.0
      %1141 = vmatprep.subr.mxu0 0.0
      %1142 = vmatpush1.msra.mxu0 0.0
      %1143 = vmatprep.subr.mxu0 0.0
      %1144 = vmatpush1.msra.mxu0 0.0
      %1145 = vmatprep.subr.mxu0 0.0
      %1146 = vmatpush1.msra.mxu0 0.0
      %1147 = vmatprep.subr.mxu0 0.0
      %1148 = vmatpush1.msra.mxu0 0.0
      %1149 = vmatprep.subr.mxu0 0.0
      %1150 = vmatpush1.msra.mxu0 0.0
      %1151 = vmatprep.subr.mxu0 0.0
      %1152 = vmatpush1.msra.mxu0 0.0
      %1153 = vmatprep.subr.mxu0 0.0
      %1154 = vmatpush1.msra.mxu0 0.0
      %1155 = vmatprep.subr.mxu0 0.0
      %1156 = vmatpush1.msra.mxu0 0.0
      %1157 = vmatprep.subr.mxu0 0.0
      %1158 = vmatpush1.msra.mxu0 0.0
      %1159 = vmatprep.subr.mxu0 0.0
      %1160 = vmatpush1.msra.mxu0 0.0
      %1161 = vmatprep.mubr.f32.mxu0 0.0
      %1162 = vmatmul.mubr.f32.gmra.mrb[0].mxu0 %v1033
      %v1163 = vpop.f32.mrb[0].mxu0
      %v1164 = vadd.f32 %v875, %v1163
      %v1165 = vpop.f32.mrb[0].mxu0
      %1166 = vmatprep.mubr.f32.mxu0 0.0
      %1167 = vmatmul.mubr.f32.gmra.mrb[0].mxu0 %v1035
      %v1168 = vpop.f32.mrb[0].mxu0
      %v1169 = vadd.f32 %v880, %v1168
      %v1170 = vpop.f32.mrb[0].mxu0
      %1171 = vmatprep.mubr.f32.mxu0 0.0
      %1172 = vmatmul.mubr.f32.gmra.mrb[0].mxu0 %v1037
      %v1173 = vpop.f32.mrb[0].mxu0
      %v1174 = vadd.f32 %v885, %v1173
      %v1175 = vpop.f32.mrb[0].mxu0
      %1176 = vmatprep.mubr.f32.mxu0 0.0
      %1177 = vmatmul.mubr.f32.gmra.mrb[0].mxu0 %v1039
      %v1178 = vpop.f32.mrb[0].mxu0
      %v1179 = vadd.f32 %v890, %v1178
      %v1180 = vpop.f32.mrb[0].mxu0
      %1181 = vmatprep.mubr.f32.mxu0 0.0
      %1182 = vmatmul.mubr.f32.gmra.mrb[0].mxu0 %v1041
      %v1183 = vpop.f32.mrb[0].mxu0
      %v1184 = vadd.f32 %v895, %v1183
      %v1185 = vpop.f32.mrb[0].mxu0
      %1186 = vmatprep.mubr.f32.mxu0 0.0
      %1187 = vmatmul.mubr.f32.gmra.mrb[0].mxu0 %v1043
      %v1188 = vpop.f32.mrb[0].mxu0
      %v1189 = vadd.f32 %v900, %v1188
      %v1190 = vpop.f32.mrb[0].mxu0
      %1191 = vmatprep.mubr.f32.mxu0 0.0
      %1192 = vmatmul.mubr.f32.gmra.mrb[0].mxu0 %v1045
      %v1193 = vpop.f32.mrb[0].mxu0
      %v1194 = vadd.f32 %v905, %v1193
      %v1195 = vpop.f32.mrb[0].mxu0
      %1196 = vmatprep.mubr.f32.mxu0 0.0
      %1197 = vmatmul.mubr.f32.gmra.mrb[0].mxu0 %v1047
      %v1198 = vpop.f32.mrb[0].mxu0
      %v1199 = vadd.f32 %v910, %v1198
      %v1200 = vpop.f32.mrb[0].mxu0
      %1201 = vmatprep.mubr.f32.mxu0 0.0
      %1202 = vmatmul.mubr.f32.gmra.mrb[0].mxu0 %v1049
      %v1203 = vpop.f32.mrb[0].mxu0
      %v1204 = vadd.f32 %v915, %v1203
      %v1205 = vpop.f32.mrb[0].mxu0
      %1206 = vmatprep.mubr.f32.mxu0 0.0
      %1207 = vmatmul.mubr.f32.gmra.mrb[0].mxu0 %v1051
      %v1208 = vpop.f32.mrb[0].mxu0
      %v1209 = vadd.f32 %v920, %v1208
      %v1210 = vpop.f32.mrb[0].mxu0
      %1211 = vmatprep.mubr.f32.mxu0 0.0
      %1212 = vmatmul.mubr.f32.gmra.mrb[0].mxu0 %v1053
      %v1213 = vpop.f32.mrb[0].mxu0
      %v1214 = vadd.f32 %v925, %v1213
      %v1215 = vpop.f32.mrb[0].mxu0
      %1216 = vmatprep.mubr.f32.mxu0 0.0
      %1217 = vmatmul.mubr.f32.gmra.mrb[0].mxu0 %v1055
      %v1218 = vpop.f32.mrb[0].mxu0
      %v1219 = vadd.f32 %v930, %v1218
      %v1220 = vpop.f32.mrb[0].mxu0
      %1221 = vmatprep.mubr.f32.mxu0 0.0
      %1222 = vmatmul.mubr.f32.gmra.mrb[0].mxu0 %v1057
      %v1223 = vpop.f32.mrb[0].mxu0
      %v1224 = vadd.f32 %v935, %v1223
      %v1225 = vpop.f32.mrb[0].mxu0
      %1226 = vmatprep.mubr.f32.mxu0 0.0
      %1227 = vmatmul.mubr.f32.gmra.mrb[0].mxu0 %v1059
      %v1228 = vpop.f32.mrb[0].mxu0
      %v1229 = vadd.f32 %v940, %v1228
      %v1230 = vpop.f32.mrb[0].mxu0
      %1231 = vmatprep.mubr.f32.mxu0 0.0
      %1232 = vmatmul.mubr.f32.gmra.mrb[0].mxu0 %v1061
      %v1233 = vpop.f32.mrb[0].mxu0
      %v1234 = vadd.f32 %v945, %v1233
      %v1235 = vpop.f32.mrb[0].mxu0
      %1236 = vmatprep.mubr.f32.mxu0 0.0
      %1237 = vmatmul.mubr.f32.gmra.mrb[0].mxu0 %v1063
      %v1238 = vpop.f32.mrb[0].mxu0
      %v1239 = vadd.f32 %v950, %v1238
      %v1240 = vpop.f32.mrb[0].mxu0
      %1241 = vmatprep.mubr.f32.mxu0 0.0
      %1242 = vmatmul.mubr.f32.gmra.mrb[0].mxu0 %v1065
      %v1243 = vpop.f32.mrb[0].mxu0
      %v1244 = vadd.f32 %v955, %v1243
      %v1245 = vpop.f32.mrb[0].mxu0
      %1246 = vmatprep.mubr.f32.mxu0 0.0
      %1247 = vmatmul.mubr.f32.gmra.mrb[0].mxu0 %v1067
      %v1248 = vpop.f32.mrb[0].mxu0
      %v1249 = vadd.f32 %v960, %v1248
      %v1250 = vpop.f32.mrb[0].mxu0
      %1251 = vmatprep.mubr.f32.mxu0 0.0
      %1252 = vmatmul.mubr.f32.gmra.mrb[0].mxu0 %v1069
      %v1253 = vpop.f32.mrb[0].mxu0
      %v1254 = vadd.f32 %v965, %v1253
      %v1255 = vpop.f32.mrb[0].mxu0
      %1256 = vmatprep.mubr.f32.mxu0 0.0
      %1257 = vmatmul.mubr.f32.gmra.mrb[0].mxu0 %v1071
      %v1258 = vpop.f32.mrb[0].mxu0
      %v1259 = vadd.f32 %v970, %v1258
      %v1260 = vpop.f32.mrb[0].mxu0
      %1261 = vmatprep.mubr.f32.mxu0 0.0
      %1262 = vmatmul.mubr.f32.gmra.mrb[0].mxu0 %v1073
      %v1263 = vpop.f32.mrb[0].mxu0
      %v1264 = vadd.f32 %v975, %v1263
      %v1265 = vpop.f32.mrb[0].mxu0
      %1266 = vmatprep.mubr.f32.mxu0 0.0
      %1267 = vmatmul.mubr.f32.gmra.mrb[0].mxu0 %v1075
      %v1268 = vpop.f32.mrb[0].mxu0
      %v1269 = vadd.f32 %v980, %v1268
      %v1270 = vpop.f32.mrb[0].mxu0
      %1271 = vmatprep.mubr.f32.mxu0 0.0
      %1272 = vmatmul.mubr.f32.gmra.mrb[0].mxu0 %v1077
      %v1273 = vpop.f32.mrb[0].mxu0
      %v1274 = vadd.f32 %v985, %v1273
      %v1275 = vpop.f32.mrb[0].mxu0
      %1276 = vmatprep.mubr.f32.mxu0 0.0
      %1277 = vmatmul.mubr.f32.gmra.mrb[0].mxu0 %v1079
      %v1278 = vpop.f32.mrb[0].mxu0
      %v1279 = vadd.f32 %v990, %v1278
      %v1280 = vpop.f32.mrb[0].mxu0
      %1281 = vmatprep.mubr.f32.mxu0 0.0
      %1282 = vmatmul.mubr.f32.gmra.mrb[0].mxu0 %v1081
      %v1283 = vpop.f32.mrb[0].mxu0
      %v1284 = vadd.f32 %v995, %v1283
      %v1285 = vpop.f32.mrb[0].mxu0
      %1286 = vmatprep.mubr.f32.mxu0 0.0
      %1287 = vmatmul.mubr.f32.gmra.mrb[0].mxu0 %v1083
      %v1288 = vpop.f32.mrb[0].mxu0
      %v1289 = vadd.f32 %v1000, %v1288
      %v1290 = vpop.f32.mrb[0].mxu0
      %1291 = vmatprep.mubr.f32.mxu0 0.0
      %1292 = vmatmul.mubr.f32.gmra.mrb[0].mxu0 %v1085
      %v1293 = vpop.f32.mrb[0].mxu0
      %v1294 = vadd.f32 %v1005, %v1293
      %v1295 = vpop.f32.mrb[0].mxu0
      %1296 = vmatprep.mubr.f32.mxu0 0.0
      %1297 = vmatmul.mubr.f32.gmra.mrb[0].mxu0 %v1087
      %v1298 = vpop.f32.mrb[0].mxu0
      %v1299 = vadd.f32 %v1010, %v1298
      %v1300 = vpop.f32.mrb[0].mxu0
      %1301 = vmatprep.mubr.f32.mxu0 0.0
      %1302 = vmatmul.mubr.f32.gmra.mrb[0].mxu0 %v1089
      %v1303 = vpop.f32.mrb[0].mxu0
      %v1304 = vadd.f32 %v1015, %v1303
      %v1305 = vpop.f32.mrb[0].mxu0
      %1306 = vmatprep.mubr.f32.mxu0 0.0
      %1307 = vmatmul.mubr.f32.gmra.mrb[0].mxu0 %v1091
      %v1308 = vpop.f32.mrb[0].mxu0
      %v1309 = vadd.f32 %v1020, %v1308
      %v1310 = vpop.f32.mrb[0].mxu0
      %1311 = vmatprep.mubr.f32.mxu0 0.0
      %1312 = vmatmul.mubr.f32.gmra.mrb[0].mxu0 %v1093
      %v1313 = vpop.f32.mrb[0].mxu0
      %v1314 = vadd.f32 %v1025, %v1313
      %v1315 = vpop.f32.mrb[0].mxu0
      %1316 = vmatprep.mubr.f32.mxu0 0.0
      %1317 = vmatmul.mubr.f32.gmra.mrb[0].mxu0 %v1095
      %v1318 = vpop.f32.mrb[0].mxu0
      %v1319 = vadd.f32 %v1030, %v1318
      %v1320 = vpop.f32.mrb[0].mxu0
      %1321 = vdwg.mxu0
      %vm1322 = vcmask 1045504
      %v1323 = vrot.slane %v555, 2
      %v1324 = vrot.slane %v556, 2
      %v1325 = vsel %vm1322, %v1323, %v1324
      %v1326 = vrot.slane %v557, 2
      %v1327 = vsel %vm1322, %v1324, %v1326
      %v1328 = vrot.slane %v558, 2
      %v1329 = vrot.slane %v559, 2
      %v1330 = vsel %vm1322, %v1328, %v1329
      %v1331 = vrot.slane %v560, 2
      %v1332 = vsel %vm1322, %v1329, %v1331
      %v1333 = vrot.slane %v561, 2
      %v1334 = vrot.slane %v562, 2
      %v1335 = vsel %vm1322, %v1333, %v1334
      %v1336 = vrot.slane %v563, 2
      %v1337 = vsel %vm1322, %v1334, %v1336
      %v1338 = vrot.slane %v564, 2
      %v1339 = vrot.slane %v565, 2
      %v1340 = vsel %vm1322, %v1338, %v1339
      %v1341 = vrot.slane %v566, 2
      %v1342 = vsel %vm1322, %v1339, %v1341
      %v1343 = vrot.slane %v567, 2
      %v1344 = vrot.slane %v568, 2
      %v1345 = vsel %vm1322, %v1343, %v1344
      %v1346 = vrot.slane %v569, 2
      %v1347 = vsel %vm1322, %v1344, %v1346
      %v1348 = vrot.slane %v570, 2
      %v1349 = vrot.slane %v571, 2
      %v1350 = vsel %vm1322, %v1348, %v1349
      %v1351 = vrot.slane %v572, 2
      %v1352 = vsel %vm1322, %v1349, %v1351
      %v1353 = vrot.slane %v573, 2
      %v1354 = vrot.slane %v574, 2
      %v1355 = vsel %vm1322, %v1353, %v1354
      %v1356 = vrot.slane %v575, 2
      %v1357 = vsel %vm1322, %v1354, %v1356
      %v1358 = vrot.slane %v576, 2
      %v1359 = vrot.slane %v577, 2
      %v1360 = vsel %vm1322, %v1358, %v1359
      %v1361 = vrot.slane %v578, 2
      %v1362 = vsel %vm1322, %v1359, %v1361
      %v1363 = vrot.slane %v579, 2
      %v1364 = vrot.slane %v580, 2
      %v1365 = vsel %vm1322, %v1363, %v1364
      %v1366 = vrot.slane %v581, 2
      %v1367 = vsel %vm1322, %v1364, %v1366
      %v1368 = vrot.slane %v582, 2
      %v1369 = vrot.slane %v583, 2
      %v1370 = vsel %vm1322, %v1368, %v1369
      %v1371 = vrot.slane %v584, 2
      %v1372 = vsel %vm1322, %v1369, %v1371
      %v1373 = vrot.slane %v585, 2
      %v1374 = vrot.slane %v586, 2
      %v1375 = vsel %vm1322, %v1373, %v1374
      %v1376 = vrot.slane %v587, 2
      %v1377 = vsel %vm1322, %v1374, %v1376
      %v1378 = vrot.slane %v588, 2
      %v1379 = vrot.slane %v589, 2
      %v1380 = vsel %vm1322, %v1378, %v1379
      %v1381 = vrot.slane %v590, 2
      %v1382 = vsel %vm1322, %v1379, %v1381
      %v1383 = vrot.slane %v591, 2
      %v1384 = vrot.slane %v592, 2
      %v1385 = vsel %vm1322, %v1383, %v1384
      %v1386 = vrot.slane %v593, 2
      %v1387 = vsel %vm1322, %v1384, %v1386
      %v1388 = vrot.slane %v594, 2
      %v1389 = vrot.slane %v595, 2
      %v1390 = vsel %vm1322, %v1388, %v1389
      %v1391 = vrot.slane %v596, 2
      %v1392 = vsel %vm1322, %v1389, %v1391
      %v1393 = vrot.slane %v597, 2
      %v1394 = vrot.slane %v598, 2
      %v1395 = vsel %vm1322, %v1393, %v1394
      %v1396 = vrot.slane %v599, 2
      %v1397 = vsel %vm1322, %v1394, %v1396
      %v1398 = vrot.slane %v600, 2
      %v1399 = vrot.slane %v601, 2
      %v1400 = vsel %vm1322, %v1398, %v1399
      %v1401 = vrot.slane %v602, 2
      %v1402 = vsel %vm1322, %v1399, %v1401
      %s1403 = scalar_lea.vmem %s4, 32
      %v1404 = vld [vmem:[%s1403] sm:$0xff]
      %v1405 = vld [vmem:[%s1403 + $0x8] sm:$0xff]
      %v1406 = vsel %vm743, %v1325, 0
      %v1408 = vsel %vm743, %v1327, 0
      %v1410 = vsel %vm743, %v1330, 0
      %v1412 = vsel %vm743, %v1332, 0
      %v1414 = vsel %vm743, %v1335, 0
      %v1416 = vsel %vm743, %v1337, 0
      %v1418 = vsel %vm743, %v1340, 0
      %v1420 = vsel %vm743, %v1342, 0
      %v1422 = vsel %vm743, %v1345, 0
      %v1424 = vsel %vm743, %v1347, 0
      %v1426 = vsel %vm743, %v1350, 0
      %v1428 = vsel %vm743, %v1352, 0
      %v1430 = vsel %vm743, %v1355, 0
      %v1432 = vsel %vm743, %v1357, 0
      %v1434 = vsel %vm743, %v1360, 0
      %v1436 = vsel %vm743, %v1362, 0
      %v1438 = vsel %vm743, %v1365, 0
      %v1440 = vsel %vm743, %v1367, 0
      %v1442 = vsel %vm743, %v1370, 0
      %v1444 = vsel %vm743, %v1372, 0
      %v1446 = vsel %vm743, %v1375, 0
      %v1448 = vsel %vm743, %v1377, 0
      %v1450 = vsel %vm743, %v1380, 0
      %v1452 = vsel %vm743, %v1382, 0
      %v1454 = vsel %vm743, %v1385, 0
      %v1456 = vsel %vm743, %v1387, 0
      %v1458 = vsel %vm743, %v1390, 0
      %v1460 = vsel %vm743, %v1392, 0
      %v1462 = vsel %vm743, %v1395, 0
      %v1464 = vsel %vm743, %v1397, 0
      %v1466 = vsel %vm743, %v1400, 0
      %v1468 = vsel %vm743, %v1402, 0
      %1470 = vmatprep.subr.mxu0 0.0
      %1471 = vmatpush1.msra.mxu0 %v1404
      %1472 = vmatprep.subr.mxu0 0.0
      %1473 = vmatpush1.msra.mxu0 %v1405
      %1474 = vmatprep.subr.mxu0 0.0
      %1475 = vmatpush1.msra.mxu0 0.0
      %1476 = vmatprep.subr.mxu0 0.0
      %1477 = vmatpush1.msra.mxu0 0.0
      %1478 = vmatprep.subr.mxu0 0.0
      %1479 = vmatpush1.msra.mxu0 0.0
      %1480 = vmatprep.subr.mxu0 0.0
      %1481 = vmatpush1.msra.mxu0 0.0
      %1482 = vmatprep.subr.mxu0 0.0
      %1483 = vmatpush1.msra.mxu0 0.0
      %1484 = vmatprep.subr.mxu0 0.0
      %1485 = vmatpush1.msra.mxu0 0.0
      %1486 = vmatprep.subr.mxu0 0.0
      %1487 = vmatpush1.msra.mxu0 0.0
      %1488 = vmatprep.subr.mxu0 0.0
      %1489 = vmatpush1.msra.mxu0 0.0
      %1490 = vmatprep.subr.mxu0 0.0
      %1491 = vmatpush1.msra.mxu0 0.0
      %1492 = vmatprep.subr.mxu0 0.0
      %1493 = vmatpush1.msra.mxu0 0.0
      %1494 = vmatprep.subr.mxu0 0.0
      %1495 = vmatpush1.msra.mxu0 0.0
      %1496 = vmatprep.subr.mxu0 0.0
      %1497 = vmatpush1.msra.mxu0 0.0
      %1498 = vmatprep.subr.mxu0 0.0
      %1499 = vmatpush1.msra.mxu0 0.0
      %1500 = vmatprep.subr.mxu0 0.0
      %1501 = vmatpush1.msra.mxu0 0.0
      %1502 = vmatprep.subr.mxu0 0.0
      %1503 = vmatpush1.msra.mxu0 0.0
      %1504 = vmatprep.subr.mxu0 0.0
      %1505 = vmatpush1.msra.mxu0 0.0
      %1506 = vmatprep.subr.mxu0 0.0
      %1507 = vmatpush1.msra.mxu0 0.0
      %1508 = vmatprep.subr.mxu0 0.0
      %1509 = vmatpush1.msra.mxu0 0.0
      %1510 = vmatprep.subr.mxu0 0.0
      %1511 = vmatpush1.msra.mxu0 0.0
      %1512 = vmatprep.subr.mxu0 0.0
      %1513 = vmatpush1.msra.mxu0 0.0
      %1514 = vmatprep.subr.mxu0 0.0
      %1515 = vmatpush1.msra.mxu0 0.0
      %1516 = vmatprep.subr.mxu0 0.0
      %1517 = vmatpush1.msra.mxu0 0.0
      %1518 = vmatprep.subr.mxu0 0.0
      %1519 = vmatpush1.msra.mxu0 0.0
      %1520 = vmatprep.subr.mxu0 0.0
      %1521 = vmatpush1.msra.mxu0 0.0
      %1522 = vmatprep.subr.mxu0 0.0
      %1523 = vmatpush1.msra.mxu0 0.0
      %1524 = vmatprep.subr.mxu0 0.0
      %1525 = vmatpush1.msra.mxu0 0.0
      %1526 = vmatprep.subr.mxu0 0.0
      %1527 = vmatpush1.msra.mxu0 0.0
      %1528 = vmatprep.subr.mxu0 0.0
      %1529 = vmatpush1.msra.mxu0 0.0
      %1530 = vmatprep.subr.mxu0 0.0
      %1531 = vmatpush1.msra.mxu0 0.0
      %1532 = vmatprep.subr.mxu0 0.0
      %1533 = vmatpush1.msra.mxu0 0.0
      %1534 = vmatprep.mubr.f32.mxu0 0.0
      %1535 = vmatmul.mubr.f32.gmra.mrb[0].mxu0 %v1406
      %v1536 = vpop.f32.mrb[0].mxu0
      %v1537 = vadd.f32 0.0, %v1536
      %v1538 = vpop.f32.mrb[0].mxu0
      %1539 = vmatprep.mubr.f32.mxu0 0.0
      %1540 = vmatmul.mubr.f32.gmra.mrb[0].mxu0 %v1408
      %v1541 = vpop.f32.mrb[0].mxu0
      %v1542 = vadd.f32 0.0, %v1541
      %v1543 = vpop.f32.mrb[0].mxu0
      %1544 = vmatprep.mubr.f32.mxu0 0.0
      %1545 = vmatmul.mubr.f32.gmra.mrb[0].mxu0 %v1410
      %v1546 = vpop.f32.mrb[0].mxu0
      %v1547 = vadd.f32 0.0, %v1546
      %v1548 = vpop.f32.mrb[0].mxu0
      %1549 = vmatprep.mubr.f32.mxu0 0.0
      %1550 = vmatmul.mubr.f32.gmra.mrb[0].mxu0 %v1412
      %v1551 = vpop.f32.mrb[0].mxu0
      %v1552 = vadd.f32 0.0, %v1551
      %v1553 = vpop.f32.mrb[0].mxu0
      %1554 = vmatprep.mubr.f32.mxu0 0.0
      %1555 = vmatmul.mubr.f32.gmra.mrb[0].mxu0 %v1414
      %v1556 = vpop.f32.mrb[0].mxu0
      %v1557 = vadd.f32 0.0, %v1556
      %v1558 = vpop.f32.mrb[0].mxu0
      %1559 = vmatprep.mubr.f32.mxu0 0.0
      %1560 = vmatmul.mubr.f32.gmra.mrb[0].mxu0 %v1416
      %v1561 = vpop.f32.mrb[0].mxu0
      %v1562 = vadd.f32 0.0, %v1561
      %v1563 = vpop.f32.mrb[0].mxu0
      %1564 = vmatprep.mubr.f32.mxu0 0.0
      %1565 = vmatmul.mubr.f32.gmra.mrb[0].mxu0 %v1418
      %v1566 = vpop.f32.mrb[0].mxu0
      %v1567 = vadd.f32 0.0, %v1566
      %v1568 = vpop.f32.mrb[0].mxu0
      %1569 = vmatprep.mubr.f32.mxu0 0.0
      %1570 = vmatmul.mubr.f32.gmra.mrb[0].mxu0 %v1420
      %v1571 = vpop.f32.mrb[0].mxu0
      %v1572 = vadd.f32 0.0, %v1571
      %v1573 = vpop.f32.mrb[0].mxu0
      %1574 = vmatprep.mubr.f32.mxu0 0.0
      %1575 = vmatmul.mubr.f32.gmra.mrb[0].mxu0 %v1422
      %v1576 = vpop.f32.mrb[0].mxu0
      %v1577 = vadd.f32 0.0, %v1576
      %v1578 = vpop.f32.mrb[0].mxu0
      %1579 = vmatprep.mubr.f32.mxu0 0.0
      %1580 = vmatmul.mubr.f32.gmra.mrb[0].mxu0 %v1424
      %v1581 = vpop.f32.mrb[0].mxu0
      %v1582 = vadd.f32 0.0, %v1581
      %v1583 = vpop.f32.mrb[0].mxu0
      %1584 = vmatprep.mubr.f32.mxu0 0.0
      %1585 = vmatmul.mubr.f32.gmra.mrb[0].mxu0 %v1426
      %v1586 = vpop.f32.mrb[0].mxu0
      %v1587 = vadd.f32 0.0, %v1586
      %v1588 = vpop.f32.mrb[0].mxu0
      %1589 = vmatprep.mubr.f32.mxu0 0.0
      %1590 = vmatmul.mubr.f32.gmra.mrb[0].mxu0 %v1428
      %v1591 = vpop.f32.mrb[0].mxu0
      %v1592 = vadd.f32 0.0, %v1591
      %v1593 = vpop.f32.mrb[0].mxu0
      %1594 = vmatprep.mubr.f32.mxu0 0.0
      %1595 = vmatmul.mubr.f32.gmra.mrb[0].mxu0 %v1430
      %v1596 = vpop.f32.mrb[0].mxu0
      %v1597 = vadd.f32 0.0, %v1596
      %v1598 = vpop.f32.mrb[0].mxu0
      %1599 = vmatprep.mubr.f32.mxu0 0.0
      %1600 = vmatmul.mubr.f32.gmra.mrb[0].mxu0 %v1432
      %v1601 = vpop.f32.mrb[0].mxu0
      %v1602 = vadd.f32 0.0, %v1601
      %v1603 = vpop.f32.mrb[0].mxu0
      %1604 = vmatprep.mubr.f32.mxu0 0.0
      %1605 = vmatmul.mubr.f32.gmra.mrb[0].mxu0 %v1434
      %v1606 = vpop.f32.mrb[0].mxu0
      %v1607 = vadd.f32 0.0, %v1606
      %v1608 = vpop.f32.mrb[0].mxu0
      %1609 = vmatprep.mubr.f32.mxu0 0.0
      %1610 = vmatmul.mubr.f32.gmra.mrb[0].mxu0 %v1436
      %v1611 = vpop.f32.mrb[0].mxu0
      %v1612 = vadd.f32 0.0, %v1611
      %v1613 = vpop.f32.mrb[0].mxu0
      %1614 = vmatprep.mubr.f32.mxu0 0.0
      %1615 = vmatmul.mubr.f32.gmra.mrb[0].mxu0 %v1438
      %v1616 = vpop.f32.mrb[0].mxu0
      %v1617 = vadd.f32 0.0, %v1616
      %v1618 = vpop.f32.mrb[0].mxu0
      %1619 = vmatprep.mubr.f32.mxu0 0.0
      %1620 = vmatmul.mubr.f32.gmra.mrb[0].mxu0 %v1440
      %v1621 = vpop.f32.mrb[0].mxu0
      %v1622 = vadd.f32 0.0, %v1621
      %v1623 = vpop.f32.mrb[0].mxu0
      %1624 = vmatprep.mubr.f32.mxu0 0.0
      %1625 = vmatmul.mubr.f32.gmra.mrb[0].mxu0 %v1442
      %v1626 = vpop.f32.mrb[0].mxu0
      %v1627 = vadd.f32 0.0, %v1626
      %v1628 = vpop.f32.mrb[0].mxu0
      %1629 = vmatprep.mubr.f32.mxu0 0.0
      %1630 = vmatmul.mubr.f32.gmra.mrb[0].mxu0 %v1444
      %v1631 = vpop.f32.mrb[0].mxu0
      %v1632 = vadd.f32 0.0, %v1631
      %v1633 = vpop.f32.mrb[0].mxu0
      %1634 = vmatprep.mubr.f32.mxu0 0.0
      %1635 = vmatmul.mubr.f32.gmra.mrb[0].mxu0 %v1446
      %v1636 = vpop.f32.mrb[0].mxu0
      %v1637 = vadd.f32 0.0, %v1636
      %v1638 = vpop.f32.mrb[0].mxu0
      %1639 = vmatprep.mubr.f32.mxu0 0.0
      %1640 = vmatmul.mubr.f32.gmra.mrb[0].mxu0 %v1448
      %v1641 = vpop.f32.mrb[0].mxu0
      %v1642 = vadd.f32 0.0, %v1641
      %v1643 = vpop.f32.mrb[0].mxu0
      %1644 = vmatprep.mubr.f32.mxu0 0.0
      %1645 = vmatmul.mubr.f32.gmra.mrb[0].mxu0 %v1450
      %v1646 = vpop.f32.mrb[0].mxu0
      %v1647 = vadd.f32 0.0, %v1646
      %v1648 = vpop.f32.mrb[0].mxu0
      %1649 = vmatprep.mubr.f32.mxu0 0.0
      %1650 = vmatmul.mubr.f32.gmra.mrb[0].mxu0 %v1452
      %v1651 = vpop.f32.mrb[0].mxu0
      %v1652 = vadd.f32 0.0, %v1651
      %v1653 = vpop.f32.mrb[0].mxu0
      %1654 = vmatprep.mubr.f32.mxu0 0.0
      %1655 = vmatmul.mubr.f32.gmra.mrb[0].mxu0 %v1454
      %v1656 = vpop.f32.mrb[0].mxu0
      %v1657 = vadd.f32 0.0, %v1656
      %v1658 = vpop.f32.mrb[0].mxu0
      %1659 = vmatprep.mubr.f32.mxu0 0.0
      %1660 = vmatmul.mubr.f32.gmra.mrb[0].mxu0 %v1456
      %v1661 = vpop.f32.mrb[0].mxu0
      %v1662 = vadd.f32 0.0, %v1661
      %v1663 = vpop.f32.mrb[0].mxu0
      %1664 = vmatprep.mubr.f32.mxu0 0.0
      %1665 = vmatmul.mubr.f32.gmra.mrb[0].mxu0 %v1458
      %v1666 = vpop.f32.mrb[0].mxu0
      %v1667 = vadd.f32 0.0, %v1666
      %v1668 = vpop.f32.mrb[0].mxu0
      %1669 = vmatprep.mubr.f32.mxu0 0.0
      %1670 = vmatmul.mubr.f32.gmra.mrb[0].mxu0 %v1460
      %v1671 = vpop.f32.mrb[0].mxu0
      %v1672 = vadd.f32 0.0, %v1671
      %v1673 = vpop.f32.mrb[0].mxu0
      %1674 = vmatprep.mubr.f32.mxu0 0.0
      %1675 = vmatmul.mubr.f32.gmra.mrb[0].mxu0 %v1462
      %v1676 = vpop.f32.mrb[0].mxu0
      %v1677 = vadd.f32 0.0, %v1676
      %v1678 = vpop.f32.mrb[0].mxu0
      %1679 = vmatprep.mubr.f32.mxu0 0.0
      %1680 = vmatmul.mubr.f32.gmra.mrb[0].mxu0 %v1464
      %v1681 = vpop.f32.mrb[0].mxu0
      %v1682 = vadd.f32 0.0, %v1681
      %v1683 = vpop.f32.mrb[0].mxu0
      %1684 = vmatprep.mubr.f32.mxu0 0.0
      %1685 = vmatmul.mubr.f32.gmra.mrb[0].mxu0 %v1466
      %v1686 = vpop.f32.mrb[0].mxu0
      %v1687 = vadd.f32 0.0, %v1686
      %v1688 = vpop.f32.mrb[0].mxu0
      %1689 = vmatprep.mubr.f32.mxu0 0.0
      %1690 = vmatmul.mubr.f32.gmra.mrb[0].mxu0 %v1468
      %v1691 = vpop.f32.mrb[0].mxu0
      %v1692 = vadd.f32 0.0, %v1691
      %v1693 = vpop.f32.mrb[0].mxu0
      %1694 = vdwg.mxu0
      %v1695 = vadd.f32 %v1164, %v1537
      %v1696 = vadd.f32 %v1169, %v1542
      %v1697 = vadd.f32 %v1174, %v1547
      %v1698 = vadd.f32 %v1179, %v1552
      %v1699 = vadd.f32 %v1184, %v1557
      %v1700 = vadd.f32 %v1189, %v1562
      %v1701 = vadd.f32 %v1194, %v1567
      %v1702 = vadd.f32 %v1199, %v1572
      %v1703 = vadd.f32 %v1204, %v1577
      %v1704 = vadd.f32 %v1209, %v1582
      %v1705 = vadd.f32 %v1214, %v1587
      %v1706 = vadd.f32 %v1219, %v1592
      %v1707 = vadd.f32 %v1224, %v1597
      %v1708 = vadd.f32 %v1229, %v1602
      %v1709 = vadd.f32 %v1234, %v1607
      %v1710 = vadd.f32 %v1239, %v1612
      %v1711 = vadd.f32 %v1244, %v1617
      %v1712 = vadd.f32 %v1249, %v1622
      %v1713 = vadd.f32 %v1254, %v1627
      %v1714 = vadd.f32 %v1259, %v1632
      %v1715 = vadd.f32 %v1264, %v1637
      %v1716 = vadd.f32 %v1269, %v1642
      %v1717 = vadd.f32 %v1274, %v1647
      %v1718 = vadd.f32 %v1279, %v1652
      %v1719 = vadd.f32 %v1284, %v1657
      %v1720 = vadd.f32 %v1289, %v1662
      %v1721 = vadd.f32 %v1294, %v1667
      %v1722 = vadd.f32 %v1299, %v1672
      %v1723 = vadd.f32 %v1304, %v1677
      %v1724 = vadd.f32 %v1309, %v1682
      %v1725 = vadd.f32 %v1314, %v1687
      %v1726 = vadd.f32 %v1319, %v1692
      %s1727 = scalar_lea.vmem %s4, 48
      %v1728 = vld [vmem:[%s1727] sm:$0xff]
      %v1729 = vld [vmem:[%s1727 + $0x8] sm:$0xff]
      %v1731 = vsel %vm743, %v603, 0
      %v1734 = vsel %vm743, %v604, 0
      %1736 = vmatprep.subr.mxu0 0.0
      %1737 = vmatpush1.msra.mxu0 %v1728
      %1738 = vmatprep.subr.mxu0 0.0
      %1739 = vmatpush1.msra.mxu0 %v1729
      %1740 = vmatprep.subr.mxu0 0.0
      %1741 = vmatpush1.msra.mxu0 0.0
      %1742 = vmatprep.subr.mxu0 0.0
      %1743 = vmatpush1.msra.mxu0 0.0
      %1744 = vmatprep.subr.mxu0 0.0
      %1745 = vmatpush1.msra.mxu0 0.0
      %1746 = vmatprep.subr.mxu0 0.0
      %1747 = vmatpush1.msra.mxu0 0.0
      %1748 = vmatprep.subr.mxu0 0.0
      %1749 = vmatpush1.msra.mxu0 0.0
      %1750 = vmatprep.subr.mxu0 0.0
      %1751 = vmatpush1.msra.mxu0 0.0
      %1752 = vmatprep.subr.mxu0 0.0
      %1753 = vmatpush1.msra.mxu0 0.0
      %1754 = vmatprep.subr.mxu0 0.0
      %1755 = vmatpush1.msra.mxu0 0.0
      %1756 = vmatprep.subr.mxu0 0.0
      %1757 = vmatpush1.msra.mxu0 0.0
      %1758 = vmatprep.subr.mxu0 0.0
      %1759 = vmatpush1.msra.mxu0 0.0
      %1760 = vmatprep.subr.mxu0 0.0
      %1761 = vmatpush1.msra.mxu0 0.0
      %1762 = vmatprep.subr.mxu0 0.0
      %1763 = vmatpush1.msra.mxu0 0.0
      %1764 = vmatprep.subr.mxu0 0.0
      %1765 = vmatpush1.msra.mxu0 0.0
      %1766 = vmatprep.subr.mxu0 0.0
      %1767 = vmatpush1.msra.mxu0 0.0
      %1768 = vmatprep.subr.mxu0 0.0
      %1769 = vmatpush1.msra.mxu0 0.0
      %1770 = vmatprep.subr.mxu0 0.0
      %1771 = vmatpush1.msra.mxu0 0.0
      %1772 = vmatprep.subr.mxu0 0.0
      %1773 = vmatpush1.msra.mxu0 0.0
      %1774 = vmatprep.subr.mxu0 0.0
      %1775 = vmatpush1.msra.mxu0 0.0
      %1776 = vmatprep.subr.mxu0 0.0
      %1777 = vmatpush1.msra.mxu0 0.0
      %1778 = vmatprep.subr.mxu0 0.0
      %1779 = vmatpush1.msra.mxu0 0.0
      %1780 = vmatprep.subr.mxu0 0.0
      %1781 = vmatpush1.msra.mxu0 0.0
      %1782 = vmatprep.subr.mxu0 0.0
      %1783 = vmatpush1.msra.mxu0 0.0
      %1784 = vmatprep.subr.mxu0 0.0
      %1785 = vmatpush1.msra.mxu0 0.0
      %1786 = vmatprep.subr.mxu0 0.0
      %1787 = vmatpush1.msra.mxu0 0.0
      %1788 = vmatprep.subr.mxu0 0.0
      %1789 = vmatpush1.msra.mxu0 0.0
      %1790 = vmatprep.subr.mxu0 0.0
      %1791 = vmatpush1.msra.mxu0 0.0
      %1792 = vmatprep.subr.mxu0 0.0
      %1793 = vmatpush1.msra.mxu0 0.0
      %1794 = vmatprep.subr.mxu0 0.0
      %1795 = vmatpush1.msra.mxu0 0.0
      %1796 = vmatprep.subr.mxu0 0.0
      %1797 = vmatpush1.msra.mxu0 0.0
      %1798 = vmatprep.subr.mxu0 0.0
      %1799 = vmatpush1.msra.mxu0 0.0
      %1800 = vmatprep.mubr.f32.mxu0 0.0
      %1801 = vmatmul.mubr.f32.gmra.mrb[0].mxu0 %v1037
      %v1802 = vpop.f32.mrb[0].mxu0
      %v1803 = vadd.f32 0.0, %v1802
      %v1804 = vpop.f32.mrb[0].mxu0
      %1805 = vmatprep.mubr.f32.mxu0 0.0
      %1806 = vmatmul.mubr.f32.gmra.mrb[0].mxu0 %v1039
      %v1807 = vpop.f32.mrb[0].mxu0
      %v1808 = vadd.f32 0.0, %v1807
      %v1809 = vpop.f32.mrb[0].mxu0
      %1810 = vmatprep.mubr.f32.mxu0 0.0
      %1811 = vmatmul.mubr.f32.gmra.mrb[0].mxu0 %v1041
      %v1812 = vpop.f32.mrb[0].mxu0
      %v1813 = vadd.f32 0.0, %v1812
      %v1814 = vpop.f32.mrb[0].mxu0
      %1815 = vmatprep.mubr.f32.mxu0 0.0
      %1816 = vmatmul.mubr.f32.gmra.mrb[0].mxu0 %v1043
      %v1817 = vpop.f32.mrb[0].mxu0
      %v1818 = vadd.f32 0.0, %v1817
      %v1819 = vpop.f32.mrb[0].mxu0
      %1820 = vmatprep.mubr.f32.mxu0 0.0
      %1821 = vmatmul.mubr.f32.gmra.mrb[0].mxu0 %v1045
      %v1822 = vpop.f32.mrb[0].mxu0
      %v1823 = vadd.f32 0.0, %v1822
      %v1824 = vpop.f32.mrb[0].mxu0
      %1825 = vmatprep.mubr.f32.mxu0 0.0
      %1826 = vmatmul.mubr.f32.gmra.mrb[0].mxu0 %v1047
      %v1827 = vpop.f32.mrb[0].mxu0
      %v1828 = vadd.f32 0.0, %v1827
      %v1829 = vpop.f32.mrb[0].mxu0
      %1830 = vmatprep.mubr.f32.mxu0 0.0
      %1831 = vmatmul.mubr.f32.gmra.mrb[0].mxu0 %v1049
      %v1832 = vpop.f32.mrb[0].mxu0
      %v1833 = vadd.f32 0.0, %v1832
      %v1834 = vpop.f32.mrb[0].mxu0
      %1835 = vmatprep.mubr.f32.mxu0 0.0
      %1836 = vmatmul.mubr.f32.gmra.mrb[0].mxu0 %v1051
      %v1837 = vpop.f32.mrb[0].mxu0
      %v1838 = vadd.f32 0.0, %v1837
      %v1839 = vpop.f32.mrb[0].mxu0
      %1840 = vmatprep.mubr.f32.mxu0 0.0
      %1841 = vmatmul.mubr.f32.gmra.mrb[0].mxu0 %v1053
      %v1842 = vpop.f32.mrb[0].mxu0
      %v1843 = vadd.f32 0.0, %v1842
      %v1844 = vpop.f32.mrb[0].mxu0
      %1845 = vmatprep.mubr.f32.mxu0 0.0
      %1846 = vmatmul.mubr.f32.gmra.mrb[0].mxu0 %v1055
      %v1847 = vpop.f32.mrb[0].mxu0
      %v1848 = vadd.f32 0.0, %v1847
      %v1849 = vpop.f32.mrb[0].mxu0
      %1850 = vmatprep.mubr.f32.mxu0 0.0
      %1851 = vmatmul.mubr.f32.gmra.mrb[0].mxu0 %v1057
      %v1852 = vpop.f32.mrb[0].mxu0
      %v1853 = vadd.f32 0.0, %v1852
      %v1854 = vpop.f32.mrb[0].mxu0
      %1855 = vmatprep.mubr.f32.mxu0 0.0
      %1856 = vmatmul.mubr.f32.gmra.mrb[0].mxu0 %v1059
      %v1857 = vpop.f32.mrb[0].mxu0
      %v1858 = vadd.f32 0.0, %v1857
      %v1859 = vpop.f32.mrb[0].mxu0
      %1860 = vmatprep.mubr.f32.mxu0 0.0
      %1861 = vmatmul.mubr.f32.gmra.mrb[0].mxu0 %v1061
      %v1862 = vpop.f32.mrb[0].mxu0
      %v1863 = vadd.f32 0.0, %v1862
      %v1864 = vpop.f32.mrb[0].mxu0
      %1865 = vmatprep.mubr.f32.mxu0 0.0
      %1866 = vmatmul.mubr.f32.gmra.mrb[0].mxu0 %v1063
      %v1867 = vpop.f32.mrb[0].mxu0
      %v1868 = vadd.f32 0.0, %v1867
      %v1869 = vpop.f32.mrb[0].mxu0
      %1870 = vmatprep.mubr.f32.mxu0 0.0
      %1871 = vmatmul.mubr.f32.gmra.mrb[0].mxu0 %v1065
      %v1872 = vpop.f32.mrb[0].mxu0
      %v1873 = vadd.f32 0.0, %v1872
      %v1874 = vpop.f32.mrb[0].mxu0
      %1875 = vmatprep.mubr.f32.mxu0 0.0
      %1876 = vmatmul.mubr.f32.gmra.mrb[0].mxu0 %v1067
      %v1877 = vpop.f32.mrb[0].mxu0
      %v1878 = vadd.f32 0.0, %v1877
      %v1879 = vpop.f32.mrb[0].mxu0
      %1880 = vmatprep.mubr.f32.mxu0 0.0
      %1881 = vmatmul.mubr.f32.gmra.mrb[0].mxu0 %v1069
      %v1882 = vpop.f32.mrb[0].mxu0
      %v1883 = vadd.f32 0.0, %v1882
      %v1884 = vpop.f32.mrb[0].mxu0
      %1885 = vmatprep.mubr.f32.mxu0 0.0
      %1886 = vmatmul.mubr.f32.gmra.mrb[0].mxu0 %v1071
      %v1887 = vpop.f32.mrb[0].mxu0
      %v1888 = vadd.f32 0.0, %v1887
      %v1889 = vpop.f32.mrb[0].mxu0
      %1890 = vmatprep.mubr.f32.mxu0 0.0
      %1891 = vmatmul.mubr.f32.gmra.mrb[0].mxu0 %v1073
      %v1892 = vpop.f32.mrb[0].mxu0
      %v1893 = vadd.f32 0.0, %v1892
      %v1894 = vpop.f32.mrb[0].mxu0
      %1895 = vmatprep.mubr.f32.mxu0 0.0
      %1896 = vmatmul.mubr.f32.gmra.mrb[0].mxu0 %v1075
      %v1897 = vpop.f32.mrb[0].mxu0
      %v1898 = vadd.f32 0.0, %v1897
      %v1899 = vpop.f32.mrb[0].mxu0
      %1900 = vmatprep.mubr.f32.mxu0 0.0
      %1901 = vmatmul.mubr.f32.gmra.mrb[0].mxu0 %v1077
      %v1902 = vpop.f32.mrb[0].mxu0
      %v1903 = vadd.f32 0.0, %v1902
      %v1904 = vpop.f32.mrb[0].mxu0
      %1905 = vmatprep.mubr.f32.mxu0 0.0
      %1906 = vmatmul.mubr.f32.gmra.mrb[0].mxu0 %v1079
      %v1907 = vpop.f32.mrb[0].mxu0
      %v1908 = vadd.f32 0.0, %v1907
      %v1909 = vpop.f32.mrb[0].mxu0
      %1910 = vmatprep.mubr.f32.mxu0 0.0
      %1911 = vmatmul.mubr.f32.gmra.mrb[0].mxu0 %v1081
      %v1912 = vpop.f32.mrb[0].mxu0
      %v1913 = vadd.f32 0.0, %v1912
      %v1914 = vpop.f32.mrb[0].mxu0
      %1915 = vmatprep.mubr.f32.mxu0 0.0
      %1916 = vmatmul.mubr.f32.gmra.mrb[0].mxu0 %v1083
      %v1917 = vpop.f32.mrb[0].mxu0
      %v1918 = vadd.f32 0.0, %v1917
      %v1919 = vpop.f32.mrb[0].mxu0
      %1920 = vmatprep.mubr.f32.mxu0 0.0
      %1921 = vmatmul.mubr.f32.gmra.mrb[0].mxu0 %v1085
      %v1922 = vpop.f32.mrb[0].mxu0
      %v1923 = vadd.f32 0.0, %v1922
      %v1924 = vpop.f32.mrb[0].mxu0
      %1925 = vmatprep.mubr.f32.mxu0 0.0
      %1926 = vmatmul.mubr.f32.gmra.mrb[0].mxu0 %v1087
      %v1927 = vpop.f32.mrb[0].mxu0
      %v1928 = vadd.f32 0.0, %v1927
      %v1929 = vpop.f32.mrb[0].mxu0
      %1930 = vmatprep.mubr.f32.mxu0 0.0
      %1931 = vmatmul.mubr.f32.gmra.mrb[0].mxu0 %v1089
      %v1932 = vpop.f32.mrb[0].mxu0
      %v1933 = vadd.f32 0.0, %v1932
      %v1934 = vpop.f32.mrb[0].mxu0
      %1935 = vmatprep.mubr.f32.mxu0 0.0
      %1936 = vmatmul.mubr.f32.gmra.mrb[0].mxu0 %v1091
      %v1937 = vpop.f32.mrb[0].mxu0
      %v1938 = vadd.f32 0.0, %v1937
      %v1939 = vpop.f32.mrb[0].mxu0
      %1940 = vmatprep.mubr.f32.mxu0 0.0
      %1941 = vmatmul.mubr.f32.gmra.mrb[0].mxu0 %v1093
      %v1942 = vpop.f32.mrb[0].mxu0
      %v1943 = vadd.f32 0.0, %v1942
      %v1944 = vpop.f32.mrb[0].mxu0
      %1945 = vmatprep.mubr.f32.mxu0 0.0
      %1946 = vmatmul.mubr.f32.gmra.mrb[0].mxu0 %v1095
      %v1947 = vpop.f32.mrb[0].mxu0
      %v1948 = vadd.f32 0.0, %v1947
      %v1949 = vpop.f32.mrb[0].mxu0
      %1950 = vmatprep.mubr.f32.mxu0 0.0
      %1951 = vmatmul.mubr.f32.gmra.mrb[0].mxu0 %v1731
      %v1952 = vpop.f32.mrb[0].mxu0
      %v1953 = vadd.f32 0.0, %v1952
      %v1954 = vpop.f32.mrb[0].mxu0
      %1955 = vmatprep.mubr.f32.mxu0 0.0
      %1956 = vmatmul.mubr.f32.gmra.mrb[0].mxu0 %v1734
      %v1957 = vpop.f32.mrb[0].mxu0
      %v1958 = vadd.f32 0.0, %v1957
      %v1959 = vpop.f32.mrb[0].mxu0
      %1960 = vdwg.mxu0
      %v1961 = vadd.f32 %v1695, %v1803
      %v1962 = vadd.f32 %v1696, %v1808
      %v1963 = vadd.f32 %v1697, %v1813
      %v1964 = vadd.f32 %v1698, %v1818
      %v1965 = vadd.f32 %v1699, %v1823
      %v1966 = vadd.f32 %v1700, %v1828
      %v1967 = vadd.f32 %v1701, %v1833
      %v1968 = vadd.f32 %v1702, %v1838
      %v1969 = vadd.f32 %v1703, %v1843
      %v1970 = vadd.f32 %v1704, %v1848
      %v1971 = vadd.f32 %v1705, %v1853
      %v1972 = vadd.f32 %v1706, %v1858
      %v1973 = vadd.f32 %v1707, %v1863
      %v1974 = vadd.f32 %v1708, %v1868
      %v1975 = vadd.f32 %v1709, %v1873
      %v1976 = vadd.f32 %v1710, %v1878
      %v1977 = vadd.f32 %v1711, %v1883
      %v1978 = vadd.f32 %v1712, %v1888
      %v1979 = vadd.f32 %v1713, %v1893
      %v1980 = vadd.f32 %v1714, %v1898
      %v1981 = vadd.f32 %v1715, %v1903
      %v1982 = vadd.f32 %v1716, %v1908
      %v1983 = vadd.f32 %v1717, %v1913
      %v1984 = vadd.f32 %v1718, %v1918
      %v1985 = vadd.f32 %v1719, %v1923
      %v1986 = vadd.f32 %v1720, %v1928
      %v1987 = vadd.f32 %v1721, %v1933
      %v1988 = vadd.f32 %v1722, %v1938
      %v1989 = vadd.f32 %v1723, %v1943
      %v1990 = vadd.f32 %v1724, %v1948
      %v1991 = vadd.f32 %v1725, %v1953
      %v1992 = vadd.f32 %v1726, %v1958
      %v1994 = vrot.slane %v603, 1
      %v1995 = vrot.slane %v604, 1
      %v1996 = vsel %vm659, %v1994, %v1995
      %v1997 = vrot.slane %v605, 1
      %v1998 = vsel %vm659, %v1995, %v1997
      %s1999 = scalar_lea.vmem %s4, 64
      %v2000 = vld [vmem:[%s1999] sm:$0xff]
      %v2001 = vld [vmem:[%s1999 + $0x8] sm:$0xff]
      %v2002 = vsel %vm743, %v1996, 0
      %v2004 = vsel %vm743, %v1998, 0
      %2006 = vmatprep.subr.mxu0 0.0
      %2007 = vmatpush1.msra.mxu0 %v2000
      %2008 = vmatprep.subr.mxu0 0.0
      %2009 = vmatpush1.msra.mxu0 %v2001
      %2010 = vmatprep.subr.mxu0 0.0
      %2011 = vmatpush1.msra.mxu0 0.0
      %2012 = vmatprep.subr.mxu0 0.0
      %2013 = vmatpush1.msra.mxu0 0.0
      %2014 = vmatprep.subr.mxu0 0.0
      %2015 = vmatpush1.msra.mxu0 0.0
      %2016 = vmatprep.subr.mxu0 0.0
      %2017 = vmatpush1.msra.mxu0 0.0
      %2018 = vmatprep.subr.mxu0 0.0
      %2019 = vmatpush1.msra.mxu0 0.0
      %2020 = vmatprep.subr.mxu0 0.0
      %2021 = vmatpush1.msra.mxu0 0.0
      %2022 = vmatprep.subr.mxu0 0.0
      %2023 = vmatpush1.msra.mxu0 0.0
      %2024 = vmatprep.subr.mxu0 0.0
      %2025 = vmatpush1.msra.mxu0 0.0
      %2026 = vmatprep.subr.mxu0 0.0
      %2027 = vmatpush1.msra.mxu0 0.0
      %2028 = vmatprep.subr.mxu0 0.0
      %2029 = vmatpush1.msra.mxu0 0.0
      %2030 = vmatprep.subr.mxu0 0.0
      %2031 = vmatpush1.msra.mxu0 0.0
      %2032 = vmatprep.subr.mxu0 0.0
      %2033 = vmatpush1.msra.mxu0 0.0
      %2034 = vmatprep.subr.mxu0 0.0
      %2035 = vmatpush1.msra.mxu0 0.0
      %2036 = vmatprep.subr.mxu0 0.0
      %2037 = vmatpush1.msra.mxu0 0.0
      %2038 = vmatprep.subr.mxu0 0.0
      %2039 = vmatpush1.msra.mxu0 0.0
      %2040 = vmatprep.subr.mxu0 0.0
      %2041 = vmatpush1.msra.mxu0 0.0
      %2042 = vmatprep.subr.mxu0 0.0
      %2043 = vmatpush1.msra.mxu0 0.0
      %2044 = vmatprep.subr.mxu0 0.0
      %2045 = vmatpush1.msra.mxu0 0.0
      %2046 = vmatprep.subr.mxu0 0.0
      %2047 = vmatpush1.msra.mxu0 0.0
      %2048 = vmatprep.subr.mxu0 0.0
      %2049 = vmatpush1.msra.mxu0 0.0
      %2050 = vmatprep.subr.mxu0 0.0
      %2051 = vmatpush1.msra.mxu0 0.0
      %2052 = vmatprep.subr.mxu0 0.0
      %2053 = vmatpush1.msra.mxu0 0.0
      %2054 = vmatprep.subr.mxu0 0.0
      %2055 = vmatpush1.msra.mxu0 0.0
      %2056 = vmatprep.subr.mxu0 0.0
      %2057 = vmatpush1.msra.mxu0 0.0
      %2058 = vmatprep.subr.mxu0 0.0
      %2059 = vmatpush1.msra.mxu0 0.0
      %2060 = vmatprep.subr.mxu0 0.0
      %2061 = vmatpush1.msra.mxu0 0.0
      %2062 = vmatprep.subr.mxu0 0.0
      %2063 = vmatpush1.msra.mxu0 0.0
      %2064 = vmatprep.subr.mxu0 0.0
      %2065 = vmatpush1.msra.mxu0 0.0
      %2066 = vmatprep.subr.mxu0 0.0
      %2067 = vmatpush1.msra.mxu0 0.0
      %2068 = vmatprep.subr.mxu0 0.0
      %2069 = vmatpush1.msra.mxu0 0.0
      %2070 = vmatprep.mubr.f32.mxu0 0.0
      %2071 = vmatmul.mubr.f32.gmra.mrb[0].mxu0 %v748
      %v2072 = vpop.f32.mrb[0].mxu0
      %v2073 = vadd.f32 0.0, %v2072
      %v2074 = vpop.f32.mrb[0].mxu0
      %2075 = vmatprep.mubr.f32.mxu0 0.0
      %2076 = vmatmul.mubr.f32.gmra.mrb[0].mxu0 %v750
      %v2077 = vpop.f32.mrb[0].mxu0
      %v2078 = vadd.f32 0.0, %v2077
      %v2079 = vpop.f32.mrb[0].mxu0
      %2080 = vmatprep.mubr.f32.mxu0 0.0
      %2081 = vmatmul.mubr.f32.gmra.mrb[0].mxu0 %v752
      %v2082 = vpop.f32.mrb[0].mxu0
      %v2083 = vadd.f32 0.0, %v2082
      %v2084 = vpop.f32.mrb[0].mxu0
      %2085 = vmatprep.mubr.f32.mxu0 0.0
      %2086 = vmatmul.mubr.f32.gmra.mrb[0].mxu0 %v754
      %v2087 = vpop.f32.mrb[0].mxu0
      %v2088 = vadd.f32 0.0, %v2087
      %v2089 = vpop.f32.mrb[0].mxu0
      %2090 = vmatprep.mubr.f32.mxu0 0.0
      %2091 = vmatmul.mubr.f32.gmra.mrb[0].mxu0 %v756
      %v2092 = vpop.f32.mrb[0].mxu0
      %v2093 = vadd.f32 0.0, %v2092
      %v2094 = vpop.f32.mrb[0].mxu0
      %2095 = vmatprep.mubr.f32.mxu0 0.0
      %2096 = vmatmul.mubr.f32.gmra.mrb[0].mxu0 %v758
      %v2097 = vpop.f32.mrb[0].mxu0
      %v2098 = vadd.f32 0.0, %v2097
      %v2099 = vpop.f32.mrb[0].mxu0
      %2100 = vmatprep.mubr.f32.mxu0 0.0
      %2101 = vmatmul.mubr.f32.gmra.mrb[0].mxu0 %v760
      %v2102 = vpop.f32.mrb[0].mxu0
      %v2103 = vadd.f32 0.0, %v2102
      %v2104 = vpop.f32.mrb[0].mxu0
      %2105 = vmatprep.mubr.f32.mxu0 0.0
      %2106 = vmatmul.mubr.f32.gmra.mrb[0].mxu0 %v762
      %v2107 = vpop.f32.mrb[0].mxu0
      %v2108 = vadd.f32 0.0, %v2107
      %v2109 = vpop.f32.mrb[0].mxu0
      %2110 = vmatprep.mubr.f32.mxu0 0.0
      %2111 = vmatmul.mubr.f32.gmra.mrb[0].mxu0 %v764
      %v2112 = vpop.f32.mrb[0].mxu0
      %v2113 = vadd.f32 0.0, %v2112
      %v2114 = vpop.f32.mrb[0].mxu0
      %2115 = vmatprep.mubr.f32.mxu0 0.0
      %2116 = vmatmul.mubr.f32.gmra.mrb[0].mxu0 %v766
      %v2117 = vpop.f32.mrb[0].mxu0
      %v2118 = vadd.f32 0.0, %v2117
      %v2119 = vpop.f32.mrb[0].mxu0
      %2120 = vmatprep.mubr.f32.mxu0 0.0
      %2121 = vmatmul.mubr.f32.gmra.mrb[0].mxu0 %v768
      %v2122 = vpop.f32.mrb[0].mxu0
      %v2123 = vadd.f32 0.0, %v2122
      %v2124 = vpop.f32.mrb[0].mxu0
      %2125 = vmatprep.mubr.f32.mxu0 0.0
      %2126 = vmatmul.mubr.f32.gmra.mrb[0].mxu0 %v770
      %v2127 = vpop.f32.mrb[0].mxu0
      %v2128 = vadd.f32 0.0, %v2127
      %v2129 = vpop.f32.mrb[0].mxu0
      %2130 = vmatprep.mubr.f32.mxu0 0.0
      %2131 = vmatmul.mubr.f32.gmra.mrb[0].mxu0 %v772
      %v2132 = vpop.f32.mrb[0].mxu0
      %v2133 = vadd.f32 0.0, %v2132
      %v2134 = vpop.f32.mrb[0].mxu0
      %2135 = vmatprep.mubr.f32.mxu0 0.0
      %2136 = vmatmul.mubr.f32.gmra.mrb[0].mxu0 %v774
      %v2137 = vpop.f32.mrb[0].mxu0
      %v2138 = vadd.f32 0.0, %v2137
      %v2139 = vpop.f32.mrb[0].mxu0
      %2140 = vmatprep.mubr.f32.mxu0 0.0
      %2141 = vmatmul.mubr.f32.gmra.mrb[0].mxu0 %v776
      %v2142 = vpop.f32.mrb[0].mxu0
      %v2143 = vadd.f32 0.0, %v2142
      %v2144 = vpop.f32.mrb[0].mxu0
      %2145 = vmatprep.mubr.f32.mxu0 0.0
      %2146 = vmatmul.mubr.f32.gmra.mrb[0].mxu0 %v778
      %v2147 = vpop.f32.mrb[0].mxu0
      %v2148 = vadd.f32 0.0, %v2147
      %v2149 = vpop.f32.mrb[0].mxu0
      %2150 = vmatprep.mubr.f32.mxu0 0.0
      %2151 = vmatmul.mubr.f32.gmra.mrb[0].mxu0 %v780
      %v2152 = vpop.f32.mrb[0].mxu0
      %v2153 = vadd.f32 0.0, %v2152
      %v2154 = vpop.f32.mrb[0].mxu0
      %2155 = vmatprep.mubr.f32.mxu0 0.0
      %2156 = vmatmul.mubr.f32.gmra.mrb[0].mxu0 %v782
      %v2157 = vpop.f32.mrb[0].mxu0
      %v2158 = vadd.f32 0.0, %v2157
      %v2159 = vpop.f32.mrb[0].mxu0
      %2160 = vmatprep.mubr.f32.mxu0 0.0
      %2161 = vmatmul.mubr.f32.gmra.mrb[0].mxu0 %v784
      %v2162 = vpop.f32.mrb[0].mxu0
      %v2163 = vadd.f32 0.0, %v2162
      %v2164 = vpop.f32.mrb[0].mxu0
      %2165 = vmatprep.mubr.f32.mxu0 0.0
      %2166 = vmatmul.mubr.f32.gmra.mrb[0].mxu0 %v786
      %v2167 = vpop.f32.mrb[0].mxu0
      %v2168 = vadd.f32 0.0, %v2167
      %v2169 = vpop.f32.mrb[0].mxu0
      %2170 = vmatprep.mubr.f32.mxu0 0.0
      %2171 = vmatmul.mubr.f32.gmra.mrb[0].mxu0 %v788
      %v2172 = vpop.f32.mrb[0].mxu0
      %v2173 = vadd.f32 0.0, %v2172
      %v2174 = vpop.f32.mrb[0].mxu0
      %2175 = vmatprep.mubr.f32.mxu0 0.0
      %2176 = vmatmul.mubr.f32.gmra.mrb[0].mxu0 %v790
      %v2177 = vpop.f32.mrb[0].mxu0
      %v2178 = vadd.f32 0.0, %v2177
      %v2179 = vpop.f32.mrb[0].mxu0
      %2180 = vmatprep.mubr.f32.mxu0 0.0
      %2181 = vmatmul.mubr.f32.gmra.mrb[0].mxu0 %v792
      %v2182 = vpop.f32.mrb[0].mxu0
      %v2183 = vadd.f32 0.0, %v2182
      %v2184 = vpop.f32.mrb[0].mxu0
      %2185 = vmatprep.mubr.f32.mxu0 0.0
      %2186 = vmatmul.mubr.f32.gmra.mrb[0].mxu0 %v794
      %v2187 = vpop.f32.mrb[0].mxu0
      %v2188 = vadd.f32 0.0, %v2187
      %v2189 = vpop.f32.mrb[0].mxu0
      %2190 = vmatprep.mubr.f32.mxu0 0.0
      %2191 = vmatmul.mubr.f32.gmra.mrb[0].mxu0 %v796
      %v2192 = vpop.f32.mrb[0].mxu0
      %v2193 = vadd.f32 0.0, %v2192
      %v2194 = vpop.f32.mrb[0].mxu0
      %2195 = vmatprep.mubr.f32.mxu0 0.0
      %2196 = vmatmul.mubr.f32.gmra.mrb[0].mxu0 %v798
      %v2197 = vpop.f32.mrb[0].mxu0
      %v2198 = vadd.f32 0.0, %v2197
      %v2199 = vpop.f32.mrb[0].mxu0
      %2200 = vmatprep.mubr.f32.mxu0 0.0
      %2201 = vmatmul.mubr.f32.gmra.mrb[0].mxu0 %v800
      %v2202 = vpop.f32.mrb[0].mxu0
      %v2203 = vadd.f32 0.0, %v2202
      %v2204 = vpop.f32.mrb[0].mxu0
      %2205 = vmatprep.mubr.f32.mxu0 0.0
      %2206 = vmatmul.mubr.f32.gmra.mrb[0].mxu0 %v802
      %v2207 = vpop.f32.mrb[0].mxu0
      %v2208 = vadd.f32 0.0, %v2207
      %v2209 = vpop.f32.mrb[0].mxu0
      %2210 = vmatprep.mubr.f32.mxu0 0.0
      %2211 = vmatmul.mubr.f32.gmra.mrb[0].mxu0 %v804
      %v2212 = vpop.f32.mrb[0].mxu0
      %v2213 = vadd.f32 0.0, %v2212
      %v2214 = vpop.f32.mrb[0].mxu0
      %2215 = vmatprep.mubr.f32.mxu0 0.0
      %2216 = vmatmul.mubr.f32.gmra.mrb[0].mxu0 %v806
      %v2217 = vpop.f32.mrb[0].mxu0
      %v2218 = vadd.f32 0.0, %v2217
      %v2219 = vpop.f32.mrb[0].mxu0
      %2220 = vmatprep.mubr.f32.mxu0 0.0
      %2221 = vmatmul.mubr.f32.gmra.mrb[0].mxu0 %v2002
      %v2222 = vpop.f32.mrb[0].mxu0
      %v2223 = vadd.f32 0.0, %v2222
      %v2224 = vpop.f32.mrb[0].mxu0
      %2225 = vmatprep.mubr.f32.mxu0 0.0
      %2226 = vmatmul.mubr.f32.gmra.mrb[0].mxu0 %v2004
      %v2227 = vpop.f32.mrb[0].mxu0
      %v2228 = vadd.f32 0.0, %v2227
      %v2229 = vpop.f32.mrb[0].mxu0
      %2230 = vdwg.mxu0
      %v2231 = vadd.f32 %v1961, %v2073
      %v2232 = vadd.f32 %v1962, %v2078
      %v2233 = vadd.f32 %v1963, %v2083
      %v2234 = vadd.f32 %v1964, %v2088
      %v2235 = vadd.f32 %v1965, %v2093
      %v2236 = vadd.f32 %v1966, %v2098
      %v2237 = vadd.f32 %v1967, %v2103
      %v2238 = vadd.f32 %v1968, %v2108
      %v2239 = vadd.f32 %v1969, %v2113
      %v2240 = vadd.f32 %v1970, %v2118
      %v2241 = vadd.f32 %v1971, %v2123
      %v2242 = vadd.f32 %v1972, %v2128
      %v2243 = vadd.f32 %v1973, %v2133
      %v2244 = vadd.f32 %v1974, %v2138
      %v2245 = vadd.f32 %v1975, %v2143
      %v2246 = vadd.f32 %v1976, %v2148
      %v2247 = vadd.f32 %v1977, %v2153
      %v2248 = vadd.f32 %v1978, %v2158
      %v2249 = vadd.f32 %v1979, %v2163
      %v2250 = vadd.f32 %v1980, %v2168
      %v2251 = vadd.f32 %v1981, %v2173
      %v2252 = vadd.f32 %v1982, %v2178
      %v2253 = vadd.f32 %v1983, %v2183
      %v2254 = vadd.f32 %v1984, %v2188
      %v2255 = vadd.f32 %v1985, %v2193
      %v2256 = vadd.f32 %v1986, %v2198
      %v2257 = vadd.f32 %v1987, %v2203
      %v2258 = vadd.f32 %v1988, %v2208
      %v2259 = vadd.f32 %v1989, %v2213
      %v2260 = vadd.f32 %v1990, %v2218
      %v2261 = vadd.f32 %v1991, %v2223
      %v2262 = vadd.f32 %v1992, %v2228
      %v2263 = vrot.slane %v603, 2
      %v2264 = vrot.slane %v604, 2
      %v2265 = vsel %vm1322, %v2263, %v2264
      %v2266 = vrot.slane %v605, 2
      %v2267 = vsel %vm1322, %v2264, %v2266
      %s2268 = scalar_lea.vmem %s4, 80
      %v2269 = vld [vmem:[%s2268] sm:$0xff]
      %v2270 = vld [vmem:[%s2268 + $0x8] sm:$0xff]
      %v2271 = vsel %vm743, %v2265, 0
      %v2273 = vsel %vm743, %v2267, 0
      %2275 = vmatprep.subr.mxu0 0.0
      %2276 = vmatpush1.msra.mxu0 %v2269
      %2277 = vmatprep.subr.mxu0 0.0
      %2278 = vmatpush1.msra.mxu0 %v2270
      %2279 = vmatprep.subr.mxu0 0.0
      %2280 = vmatpush1.msra.mxu0 0.0
      %2281 = vmatprep.subr.mxu0 0.0
      %2282 = vmatpush1.msra.mxu0 0.0
      %2283 = vmatprep.subr.mxu0 0.0
      %2284 = vmatpush1.msra.mxu0 0.0
      %2285 = vmatprep.subr.mxu0 0.0
      %2286 = vmatpush1.msra.mxu0 0.0
      %2287 = vmatprep.subr.mxu0 0.0
      %2288 = vmatpush1.msra.mxu0 0.0
      %2289 = vmatprep.subr.mxu0 0.0
      %2290 = vmatpush1.msra.mxu0 0.0
      %2291 = vmatprep.subr.mxu0 0.0
      %2292 = vmatpush1.msra.mxu0 0.0
      %2293 = vmatprep.subr.mxu0 0.0
      %2294 = vmatpush1.msra.mxu0 0.0
      %2295 = vmatprep.subr.mxu0 0.0
      %2296 = vmatpush1.msra.mxu0 0.0
      %2297 = vmatprep.subr.mxu0 0.0
      %2298 = vmatpush1.msra.mxu0 0.0
      %2299 = vmatprep.subr.mxu0 0.0
      %2300 = vmatpush1.msra.mxu0 0.0
      %2301 = vmatprep.subr.mxu0 0.0
      %2302 = vmatpush1.msra.mxu0 0.0
      %2303 = vmatprep.subr.mxu0 0.0
      %2304 = vmatpush1.msra.mxu0 0.0
      %2305 = vmatprep.subr.mxu0 0.0
      %2306 = vmatpush1.msra.mxu0 0.0
      %2307 = vmatprep.subr.mxu0 0.0
      %2308 = vmatpush1.msra.mxu0 0.0
      %2309 = vmatprep.subr.mxu0 0.0
      %2310 = vmatpush1.msra.mxu0 0.0
      %2311 = vmatprep.subr.mxu0 0.0
      %2312 = vmatpush1.msra.mxu0 0.0
      %2313 = vmatprep.subr.mxu0 0.0
      %2314 = vmatpush1.msra.mxu0 0.0
      %2315 = vmatprep.subr.mxu0 0.0
      %2316 = vmatpush1.msra.mxu0 0.0
      %2317 = vmatprep.subr.mxu0 0.0
      %2318 = vmatpush1.msra.mxu0 0.0
      %2319 = vmatprep.subr.mxu0 0.0
      %2320 = vmatpush1.msra.mxu0 0.0
      %2321 = vmatprep.subr.mxu0 0.0
      %2322 = vmatpush1.msra.mxu0 0.0
      %2323 = vmatprep.subr.mxu0 0.0
      %2324 = vmatpush1.msra.mxu0 0.0
      %2325 = vmatprep.subr.mxu0 0.0
      %2326 = vmatpush1.msra.mxu0 0.0
      %2327 = vmatprep.subr.mxu0 0.0
      %2328 = vmatpush1.msra.mxu0 0.0
      %2329 = vmatprep.subr.mxu0 0.0
      %2330 = vmatpush1.msra.mxu0 0.0
      %2331 = vmatprep.subr.mxu0 0.0
      %2332 = vmatpush1.msra.mxu0 0.0
      %2333 = vmatprep.subr.mxu0 0.0
      %2334 = vmatpush1.msra.mxu0 0.0
      %2335 = vmatprep.subr.mxu0 0.0
      %2336 = vmatpush1.msra.mxu0 0.0
      %2337 = vmatprep.subr.mxu0 0.0
      %2338 = vmatpush1.msra.mxu0 0.0
      %2339 = vmatprep.mubr.f32.mxu0 0.0
      %2340 = vmatmul.mubr.f32.gmra.mrb[0].mxu0 %v1410
      %v2341 = vpop.f32.mrb[0].mxu0
      %v2342 = vadd.f32 0.0, %v2341
      %v2343 = vpop.f32.mrb[0].mxu0
      %2344 = vmatprep.mubr.f32.mxu0 0.0
      %2345 = vmatmul.mubr.f32.gmra.mrb[0].mxu0 %v1412
      %v2346 = vpop.f32.mrb[0].mxu0
      %v2347 = vadd.f32 0.0, %v2346
      %v2348 = vpop.f32.mrb[0].mxu0
      %2349 = vmatprep.mubr.f32.mxu0 0.0
      %2350 = vmatmul.mubr.f32.gmra.mrb[0].mxu0 %v1414
      %v2351 = vpop.f32.mrb[0].mxu0
      %v2352 = vadd.f32 0.0, %v2351
      %v2353 = vpop.f32.mrb[0].mxu0
      %2354 = vmatprep.mubr.f32.mxu0 0.0
      %2355 = vmatmul.mubr.f32.gmra.mrb[0].mxu0 %v1416
      %v2356 = vpop.f32.mrb[0].mxu0
      %v2357 = vadd.f32 0.0, %v2356
      %v2358 = vpop.f32.mrb[0].mxu0
      %2359 = vmatprep.mubr.f32.mxu0 0.0
      %2360 = vmatmul.mubr.f32.gmra.mrb[0].mxu0 %v1418
      %v2361 = vpop.f32.mrb[0].mxu0
      %v2362 = vadd.f32 0.0, %v2361
      %v2363 = vpop.f32.mrb[0].mxu0
      %2364 = vmatprep.mubr.f32.mxu0 0.0
      %2365 = vmatmul.mubr.f32.gmra.mrb[0].mxu0 %v1420
      %v2366 = vpop.f32.mrb[0].mxu0
      %v2367 = vadd.f32 0.0, %v2366
      %v2368 = vpop.f32.mrb[0].mxu0
      %2369 = vmatprep.mubr.f32.mxu0 0.0
      %2370 = vmatmul.mubr.f32.gmra.mrb[0].mxu0 %v1422
      %v2371 = vpop.f32.mrb[0].mxu0
      %v2372 = vadd.f32 0.0, %v2371
      %v2373 = vpop.f32.mrb[0].mxu0
      %2374 = vmatprep.mubr.f32.mxu0 0.0
      %2375 = vmatmul.mubr.f32.gmra.mrb[0].mxu0 %v1424
      %v2376 = vpop.f32.mrb[0].mxu0
      %v2377 = vadd.f32 0.0, %v2376
      %v2378 = vpop.f32.mrb[0].mxu0
      %2379 = vmatprep.mubr.f32.mxu0 0.0
      %2380 = vmatmul.mubr.f32.gmra.mrb[0].mxu0 %v1426
      %v2381 = vpop.f32.mrb[0].mxu0
      %v2382 = vadd.f32 0.0, %v2381
      %v2383 = vpop.f32.mrb[0].mxu0
      %2384 = vmatprep.mubr.f32.mxu0 0.0
      %2385 = vmatmul.mubr.f32.gmra.mrb[0].mxu0 %v1428
      %v2386 = vpop.f32.mrb[0].mxu0
      %v2387 = vadd.f32 0.0, %v2386
      %v2388 = vpop.f32.mrb[0].mxu0
      %2389 = vmatprep.mubr.f32.mxu0 0.0
      %2390 = vmatmul.mubr.f32.gmra.mrb[0].mxu0 %v1430
      %v2391 = vpop.f32.mrb[0].mxu0
      %v2392 = vadd.f32 0.0, %v2391
      %v2393 = vpop.f32.mrb[0].mxu0
      %2394 = vmatprep.mubr.f32.mxu0 0.0
      %2395 = vmatmul.mubr.f32.gmra.mrb[0].mxu0 %v1432
      %v2396 = vpop.f32.mrb[0].mxu0
      %v2397 = vadd.f32 0.0, %v2396
      %v2398 = vpop.f32.mrb[0].mxu0
      %2399 = vmatprep.mubr.f32.mxu0 0.0
      %2400 = vmatmul.mubr.f32.gmra.mrb[0].mxu0 %v1434
      %v2401 = vpop.f32.mrb[0].mxu0
      %v2402 = vadd.f32 0.0, %v2401
      %v2403 = vpop.f32.mrb[0].mxu0
      %2404 = vmatprep.mubr.f32.mxu0 0.0
      %2405 = vmatmul.mubr.f32.gmra.mrb[0].mxu0 %v1436
      %v2406 = vpop.f32.mrb[0].mxu0
      %v2407 = vadd.f32 0.0, %v2406
      %v2408 = vpop.f32.mrb[0].mxu0
      %2409 = vmatprep.mubr.f32.mxu0 0.0
      %2410 = vmatmul.mubr.f32.gmra.mrb[0].mxu0 %v1438
      %v2411 = vpop.f32.mrb[0].mxu0
      %v2412 = vadd.f32 0.0, %v2411
      %v2413 = vpop.f32.mrb[0].mxu0
      %2414 = vmatprep.mubr.f32.mxu0 0.0
      %2415 = vmatmul.mubr.f32.gmra.mrb[0].mxu0 %v1440
      %v2416 = vpop.f32.mrb[0].mxu0
      %v2417 = vadd.f32 0.0, %v2416
      %v2418 = vpop.f32.mrb[0].mxu0
      %2419 = vmatprep.mubr.f32.mxu0 0.0
      %2420 = vmatmul.mubr.f32.gmra.mrb[0].mxu0 %v1442
      %v2421 = vpop.f32.mrb[0].mxu0
      %v2422 = vadd.f32 0.0, %v2421
      %v2423 = vpop.f32.mrb[0].mxu0
      %2424 = vmatprep.mubr.f32.mxu0 0.0
      %2425 = vmatmul.mubr.f32.gmra.mrb[0].mxu0 %v1444
      %v2426 = vpop.f32.mrb[0].mxu0
      %v2427 = vadd.f32 0.0, %v2426
      %v2428 = vpop.f32.mrb[0].mxu0
      %2429 = vmatprep.mubr.f32.mxu0 0.0
      %2430 = vmatmul.mubr.f32.gmra.mrb[0].mxu0 %v1446
      %v2431 = vpop.f32.mrb[0].mxu0
      %v2432 = vadd.f32 0.0, %v2431
      %v2433 = vpop.f32.mrb[0].mxu0
      %2434 = vmatprep.mubr.f32.mxu0 0.0
      %2435 = vmatmul.mubr.f32.gmra.mrb[0].mxu0 %v1448
      %v2436 = vpop.f32.mrb[0].mxu0
      %v2437 = vadd.f32 0.0, %v2436
      %v2438 = vpop.f32.mrb[0].mxu0
      %2439 = vmatprep.mubr.f32.mxu0 0.0
      %2440 = vmatmul.mubr.f32.gmra.mrb[0].mxu0 %v1450
      %v2441 = vpop.f32.mrb[0].mxu0
      %v2442 = vadd.f32 0.0, %v2441
      %v2443 = vpop.f32.mrb[0].mxu0
      %2444 = vmatprep.mubr.f32.mxu0 0.0
      %2445 = vmatmul.mubr.f32.gmra.mrb[0].mxu0 %v1452
      %v2446 = vpop.f32.mrb[0].mxu0
      %v2447 = vadd.f32 0.0, %v2446
      %v2448 = vpop.f32.mrb[0].mxu0
      %2449 = vmatprep.mubr.f32.mxu0 0.0
      %2450 = vmatmul.mubr.f32.gmra.mrb[0].mxu0 %v1454
      %v2451 = vpop.f32.mrb[0].mxu0
      %v2452 = vadd.f32 0.0, %v2451
      %v2453 = vpop.f32.mrb[0].mxu0
      %2454 = vmatprep.mubr.f32.mxu0 0.0
      %2455 = vmatmul.mubr.f32.gmra.mrb[0].mxu0 %v1456
      %v2456 = vpop.f32.mrb[0].mxu0
      %v2457 = vadd.f32 0.0, %v2456
      %v2458 = vpop.f32.mrb[0].mxu0
      %2459 = vmatprep.mubr.f32.mxu0 0.0
      %2460 = vmatmul.mubr.f32.gmra.mrb[0].mxu0 %v1458
      %v2461 = vpop.f32.mrb[0].mxu0
      %v2462 = vadd.f32 0.0, %v2461
      %v2463 = vpop.f32.mrb[0].mxu0
      %2464 = vmatprep.mubr.f32.mxu0 0.0
      %2465 = vmatmul.mubr.f32.gmra.mrb[0].mxu0 %v1460
      %v2466 = vpop.f32.mrb[0].mxu0
      %v2467 = vadd.f32 0.0, %v2466
      %v2468 = vpop.f32.mrb[0].mxu0
      %2469 = vmatprep.mubr.f32.mxu0 0.0
      %2470 = vmatmul.mubr.f32.gmra.mrb[0].mxu0 %v1462
      %v2471 = vpop.f32.mrb[0].mxu0
      %v2472 = vadd.f32 0.0, %v2471
      %v2473 = vpop.f32.mrb[0].mxu0
      %2474 = vmatprep.mubr.f32.mxu0 0.0
      %2475 = vmatmul.mubr.f32.gmra.mrb[0].mxu0 %v1464
      %v2476 = vpop.f32.mrb[0].mxu0
      %v2477 = vadd.f32 0.0, %v2476
      %v2478 = vpop.f32.mrb[0].mxu0
      %2479 = vmatprep.mubr.f32.mxu0 0.0
      %2480 = vmatmul.mubr.f32.gmra.mrb[0].mxu0 %v1466
      %v2481 = vpop.f32.mrb[0].mxu0
      %v2482 = vadd.f32 0.0, %v2481
      %v2483 = vpop.f32.mrb[0].mxu0
      %2484 = vmatprep.mubr.f32.mxu0 0.0
      %2485 = vmatmul.mubr.f32.gmra.mrb[0].mxu0 %v1468
      %v2486 = vpop.f32.mrb[0].mxu0
      %v2487 = vadd.f32 0.0, %v2486
      %v2488 = vpop.f32.mrb[0].mxu0
      %2489 = vmatprep.mubr.f32.mxu0 0.0
      %2490 = vmatmul.mubr.f32.gmra.mrb[0].mxu0 %v2271
      %v2491 = vpop.f32.mrb[0].mxu0
      %v2492 = vadd.f32 0.0, %v2491
      %v2493 = vpop.f32.mrb[0].mxu0
      %2494 = vmatprep.mubr.f32.mxu0 0.0
      %2495 = vmatmul.mubr.f32.gmra.mrb[0].mxu0 %v2273
      %v2496 = vpop.f32.mrb[0].mxu0
      %v2497 = vadd.f32 0.0, %v2496
      %v2498 = vpop.f32.mrb[0].mxu0
      %2499 = vdwg.mxu0
      %v2500 = vadd.f32 %v2231, %v2342
      %v2501 = vadd.f32 %v2232, %v2347
      %v2502 = vadd.f32 %v2233, %v2352
      %v2503 = vadd.f32 %v2234, %v2357
      %v2504 = vadd.f32 %v2235, %v2362
      %v2505 = vadd.f32 %v2236, %v2367
      %v2506 = vadd.f32 %v2237, %v2372
      %v2507 = vadd.f32 %v2238, %v2377
      %v2508 = vadd.f32 %v2239, %v2382
      %v2509 = vadd.f32 %v2240, %v2387
      %v2510 = vadd.f32 %v2241, %v2392
      %v2511 = vadd.f32 %v2242, %v2397
      %v2512 = vadd.f32 %v2243, %v2402
      %v2513 = vadd.f32 %v2244, %v2407
      %v2514 = vadd.f32 %v2245, %v2412
      %v2515 = vadd.f32 %v2246, %v2417
      %v2516 = vadd.f32 %v2247, %v2422
      %v2517 = vadd.f32 %v2248, %v2427
      %v2518 = vadd.f32 %v2249, %v2432
      %v2519 = vadd.f32 %v2250, %v2437
      %v2520 = vadd.f32 %v2251, %v2442
      %v2521 = vadd.f32 %v2252, %v2447
      %v2522 = vadd.f32 %v2253, %v2452
      %v2523 = vadd.f32 %v2254, %v2457
      %v2524 = vadd.f32 %v2255, %v2462
      %v2525 = vadd.f32 %v2256, %v2467
      %v2526 = vadd.f32 %v2257, %v2472
      %v2527 = vadd.f32 %v2258, %v2477
      %v2528 = vadd.f32 %v2259, %v2482
      %v2529 = vadd.f32 %v2260, %v2487
      %v2530 = vadd.f32 %v2261, %v2492
      %v2531 = vadd.f32 %v2262, %v2497
      %s2532 = scalar_lea.vmem %s4, 96
      %v2533 = vld [vmem:[%s2532] sm:$0xff]
      %v2534 = vld [vmem:[%s2532 + $0x8] sm:$0xff]
      %v2536 = vsel %vm743, %v606, 0
      %v2539 = vsel %vm743, %v607, 0
      %2541 = vmatprep.subr.mxu0 0.0
      %2542 = vmatpush1.msra.mxu0 %v2533
      %2543 = vmatprep.subr.mxu0 0.0
      %2544 = vmatpush1.msra.mxu0 %v2534
      %2545 = vmatprep.subr.mxu0 0.0
      %2546 = vmatpush1.msra.mxu0 0.0
      %2547 = vmatprep.subr.mxu0 0.0
      %2548 = vmatpush1.msra.mxu0 0.0
      %2549 = vmatprep.subr.mxu0 0.0
      %2550 = vmatpush1.msra.mxu0 0.0
      %2551 = vmatprep.subr.mxu0 0.0
      %2552 = vmatpush1.msra.mxu0 0.0
      %2553 = vmatprep.subr.mxu0 0.0
      %2554 = vmatpush1.msra.mxu0 0.0
      %2555 = vmatprep.subr.mxu0 0.0
      %2556 = vmatpush1.msra.mxu0 0.0
      %2557 = vmatprep.subr.mxu0 0.0
      %2558 = vmatpush1.msra.mxu0 0.0
      %2559 = vmatprep.subr.mxu0 0.0
      %2560 = vmatpush1.msra.mxu0 0.0
      %2561 = vmatprep.subr.mxu0 0.0
      %2562 = vmatpush1.msra.mxu0 0.0
      %2563 = vmatprep.subr.mxu0 0.0
      %2564 = vmatpush1.msra.mxu0 0.0
      %2565 = vmatprep.subr.mxu0 0.0
      %2566 = vmatpush1.msra.mxu0 0.0
      %2567 = vmatprep.subr.mxu0 0.0
      %2568 = vmatpush1.msra.mxu0 0.0
      %2569 = vmatprep.subr.mxu0 0.0
      %2570 = vmatpush1.msra.mxu0 0.0
      %2571 = vmatprep.subr.mxu0 0.0
      %2572 = vmatpush1.msra.mxu0 0.0
      %2573 = vmatprep.subr.mxu0 0.0
      %2574 = vmatpush1.msra.mxu0 0.0
      %2575 = vmatprep.subr.mxu0 0.0
      %2576 = vmatpush1.msra.mxu0 0.0
      %2577 = vmatprep.subr.mxu0 0.0
      %2578 = vmatpush1.msra.mxu0 0.0
      %2579 = vmatprep.subr.mxu0 0.0
      %2580 = vmatpush1.msra.mxu0 0.0
      %2581 = vmatprep.subr.mxu0 0.0
      %2582 = vmatpush1.msra.mxu0 0.0
      %2583 = vmatprep.subr.mxu0 0.0
      %2584 = vmatpush1.msra.mxu0 0.0
      %2585 = vmatprep.subr.mxu0 0.0
      %2586 = vmatpush1.msra.mxu0 0.0
      %2587 = vmatprep.subr.mxu0 0.0
      %2588 = vmatpush1.msra.mxu0 0.0
      %2589 = vmatprep.subr.mxu0 0.0
      %2590 = vmatpush1.msra.mxu0 0.0
      %2591 = vmatprep.subr.mxu0 0.0
      %2592 = vmatpush1.msra.mxu0 0.0
      %2593 = vmatprep.subr.mxu0 0.0
      %2594 = vmatpush1.msra.mxu0 0.0
      %2595 = vmatprep.subr.mxu0 0.0
      %2596 = vmatpush1.msra.mxu0 0.0
      %2597 = vmatprep.subr.mxu0 0.0
      %2598 = vmatpush1.msra.mxu0 0.0
      %2599 = vmatprep.subr.mxu0 0.0
      %2600 = vmatpush1.msra.mxu0 0.0
      %2601 = vmatprep.subr.mxu0 0.0
      %2602 = vmatpush1.msra.mxu0 0.0
      %2603 = vmatprep.subr.mxu0 0.0
      %2604 = vmatpush1.msra.mxu0 0.0
      %2605 = vmatprep.mubr.f32.mxu0 0.0
      %2606 = vmatmul.mubr.f32.gmra.mrb[0].mxu0 %v1041
      %v2607 = vpop.f32.mrb[0].mxu0
      %v2608 = vadd.f32 0.0, %v2607
      %v2609 = vpop.f32.mrb[0].mxu0
      %2610 = vmatprep.mubr.f32.mxu0 0.0
      %2611 = vmatmul.mubr.f32.gmra.mrb[0].mxu0 %v1043
      %v2612 = vpop.f32.mrb[0].mxu0
      %v2613 = vadd.f32 0.0, %v2612
      %v2614 = vpop.f32.mrb[0].mxu0
      %2615 = vmatprep.mubr.f32.mxu0 0.0
      %2616 = vmatmul.mubr.f32.gmra.mrb[0].mxu0 %v1045
      %v2617 = vpop.f32.mrb[0].mxu0
      %v2618 = vadd.f32 0.0, %v2617
      %v2619 = vpop.f32.mrb[0].mxu0
      %2620 = vmatprep.mubr.f32.mxu0 0.0
      %2621 = vmatmul.mubr.f32.gmra.mrb[0].mxu0 %v1047
      %v2622 = vpop.f32.mrb[0].mxu0
      %v2623 = vadd.f32 0.0, %v2622
      %v2624 = vpop.f32.mrb[0].mxu0
      %2625 = vmatprep.mubr.f32.mxu0 0.0
      %2626 = vmatmul.mubr.f32.gmra.mrb[0].mxu0 %v1049
      %v2627 = vpop.f32.mrb[0].mxu0
      %v2628 = vadd.f32 0.0, %v2627
      %v2629 = vpop.f32.mrb[0].mxu0
      %2630 = vmatprep.mubr.f32.mxu0 0.0
      %2631 = vmatmul.mubr.f32.gmra.mrb[0].mxu0 %v1051
      %v2632 = vpop.f32.mrb[0].mxu0
      %v2633 = vadd.f32 0.0, %v2632
      %v2634 = vpop.f32.mrb[0].mxu0
      %2635 = vmatprep.mubr.f32.mxu0 0.0
      %2636 = vmatmul.mubr.f32.gmra.mrb[0].mxu0 %v1053
      %v2637 = vpop.f32.mrb[0].mxu0
      %v2638 = vadd.f32 0.0, %v2637
      %v2639 = vpop.f32.mrb[0].mxu0
      %2640 = vmatprep.mubr.f32.mxu0 0.0
      %2641 = vmatmul.mubr.f32.gmra.mrb[0].mxu0 %v1055
      %v2642 = vpop.f32.mrb[0].mxu0
      %v2643 = vadd.f32 0.0, %v2642
      %v2644 = vpop.f32.mrb[0].mxu0
      %2645 = vmatprep.mubr.f32.mxu0 0.0
      %2646 = vmatmul.mubr.f32.gmra.mrb[0].mxu0 %v1057
      %v2647 = vpop.f32.mrb[0].mxu0
      %v2648 = vadd.f32 0.0, %v2647
      %v2649 = vpop.f32.mrb[0].mxu0
      %2650 = vmatprep.mubr.f32.mxu0 0.0
      %2651 = vmatmul.mubr.f32.gmra.mrb[0].mxu0 %v1059
      %v2652 = vpop.f32.mrb[0].mxu0
      %v2653 = vadd.f32 0.0, %v2652
      %v2654 = vpop.f32.mrb[0].mxu0
      %2655 = vmatprep.mubr.f32.mxu0 0.0
      %2656 = vmatmul.mubr.f32.gmra.mrb[0].mxu0 %v1061
      %v2657 = vpop.f32.mrb[0].mxu0
      %v2658 = vadd.f32 0.0, %v2657
      %v2659 = vpop.f32.mrb[0].mxu0
      %2660 = vmatprep.mubr.f32.mxu0 0.0
      %2661 = vmatmul.mubr.f32.gmra.mrb[0].mxu0 %v1063
      %v2662 = vpop.f32.mrb[0].mxu0
      %v2663 = vadd.f32 0.0, %v2662
      %v2664 = vpop.f32.mrb[0].mxu0
      %2665 = vmatprep.mubr.f32.mxu0 0.0
      %2666 = vmatmul.mubr.f32.gmra.mrb[0].mxu0 %v1065
      %v2667 = vpop.f32.mrb[0].mxu0
      %v2668 = vadd.f32 0.0, %v2667
      %v2669 = vpop.f32.mrb[0].mxu0
      %2670 = vmatprep.mubr.f32.mxu0 0.0
      %2671 = vmatmul.mubr.f32.gmra.mrb[0].mxu0 %v1067
      %v2672 = vpop.f32.mrb[0].mxu0
      %v2673 = vadd.f32 0.0, %v2672
      %v2674 = vpop.f32.mrb[0].mxu0
      %2675 = vmatprep.mubr.f32.mxu0 0.0
      %2676 = vmatmul.mubr.f32.gmra.mrb[0].mxu0 %v1069
      %v2677 = vpop.f32.mrb[0].mxu0
      %v2678 = vadd.f32 0.0, %v2677
      %v2679 = vpop.f32.mrb[0].mxu0
      %2680 = vmatprep.mubr.f32.mxu0 0.0
      %2681 = vmatmul.mubr.f32.gmra.mrb[0].mxu0 %v1071
      %v2682 = vpop.f32.mrb[0].mxu0
      %v2683 = vadd.f32 0.0, %v2682
      %v2684 = vpop.f32.mrb[0].mxu0
      %2685 = vmatprep.mubr.f32.mxu0 0.0
      %2686 = vmatmul.mubr.f32.gmra.mrb[0].mxu0 %v1073
      %v2687 = vpop.f32.mrb[0].mxu0
      %v2688 = vadd.f32 0.0, %v2687
      %v2689 = vpop.f32.mrb[0].mxu0
      %2690 = vmatprep.mubr.f32.mxu0 0.0
      %2691 = vmatmul.mubr.f32.gmra.mrb[0].mxu0 %v1075
      %v2692 = vpop.f32.mrb[0].mxu0
      %v2693 = vadd.f32 0.0, %v2692
      %v2694 = vpop.f32.mrb[0].mxu0
      %2695 = vmatprep.mubr.f32.mxu0 0.0
      %2696 = vmatmul.mubr.f32.gmra.mrb[0].mxu0 %v1077
      %v2697 = vpop.f32.mrb[0].mxu0
      %v2698 = vadd.f32 0.0, %v2697
      %v2699 = vpop.f32.mrb[0].mxu0
      %2700 = vmatprep.mubr.f32.mxu0 0.0
      %2701 = vmatmul.mubr.f32.gmra.mrb[0].mxu0 %v1079
      %v2702 = vpop.f32.mrb[0].mxu0
      %v2703 = vadd.f32 0.0, %v2702
      %v2704 = vpop.f32.mrb[0].mxu0
      %2705 = vmatprep.mubr.f32.mxu0 0.0
      %2706 = vmatmul.mubr.f32.gmra.mrb[0].mxu0 %v1081
      %v2707 = vpop.f32.mrb[0].mxu0
      %v2708 = vadd.f32 0.0, %v2707
      %v2709 = vpop.f32.mrb[0].mxu0
      %2710 = vmatprep.mubr.f32.mxu0 0.0
      %2711 = vmatmul.mubr.f32.gmra.mrb[0].mxu0 %v1083
      %v2712 = vpop.f32.mrb[0].mxu0
      %v2713 = vadd.f32 0.0, %v2712
      %v2714 = vpop.f32.mrb[0].mxu0
      %2715 = vmatprep.mubr.f32.mxu0 0.0
      %2716 = vmatmul.mubr.f32.gmra.mrb[0].mxu0 %v1085
      %v2717 = vpop.f32.mrb[0].mxu0
      %v2718 = vadd.f32 0.0, %v2717
      %v2719 = vpop.f32.mrb[0].mxu0
      %2720 = vmatprep.mubr.f32.mxu0 0.0
      %2721 = vmatmul.mubr.f32.gmra.mrb[0].mxu0 %v1087
      %v2722 = vpop.f32.mrb[0].mxu0
      %v2723 = vadd.f32 0.0, %v2722
      %v2724 = vpop.f32.mrb[0].mxu0
      %2725 = vmatprep.mubr.f32.mxu0 0.0
      %2726 = vmatmul.mubr.f32.gmra.mrb[0].mxu0 %v1089
      %v2727 = vpop.f32.mrb[0].mxu0
      %v2728 = vadd.f32 0.0, %v2727
      %v2729 = vpop.f32.mrb[0].mxu0
      %2730 = vmatprep.mubr.f32.mxu0 0.0
      %2731 = vmatmul.mubr.f32.gmra.mrb[0].mxu0 %v1091
      %v2732 = vpop.f32.mrb[0].mxu0
      %v2733 = vadd.f32 0.0, %v2732
      %v2734 = vpop.f32.mrb[0].mxu0
      %2735 = vmatprep.mubr.f32.mxu0 0.0
      %2736 = vmatmul.mubr.f32.gmra.mrb[0].mxu0 %v1093
      %v2737 = vpop.f32.mrb[0].mxu0
      %v2738 = vadd.f32 0.0, %v2737
      %v2739 = vpop.f32.mrb[0].mxu0
      %2740 = vmatprep.mubr.f32.mxu0 0.0
      %2741 = vmatmul.mubr.f32.gmra.mrb[0].mxu0 %v1095
      %v2742 = vpop.f32.mrb[0].mxu0
      %v2743 = vadd.f32 0.0, %v2742
      %v2744 = vpop.f32.mrb[0].mxu0
      %2745 = vmatprep.mubr.f32.mxu0 0.0
      %2746 = vmatmul.mubr.f32.gmra.mrb[0].mxu0 %v1731
      %v2747 = vpop.f32.mrb[0].mxu0
      %v2748 = vadd.f32 0.0, %v2747
      %v2749 = vpop.f32.mrb[0].mxu0
      %2750 = vmatprep.mubr.f32.mxu0 0.0
      %2751 = vmatmul.mubr.f32.gmra.mrb[0].mxu0 %v1734
      %v2752 = vpop.f32.mrb[0].mxu0
      %v2753 = vadd.f32 0.0, %v2752
      %v2754 = vpop.f32.mrb[0].mxu0
      %2755 = vmatprep.mubr.f32.mxu0 0.0
      %2756 = vmatmul.mubr.f32.gmra.mrb[0].mxu0 %v2536
      %v2757 = vpop.f32.mrb[0].mxu0
      %v2758 = vadd.f32 0.0, %v2757
      %v2759 = vpop.f32.mrb[0].mxu0
      %2760 = vmatprep.mubr.f32.mxu0 0.0
      %2761 = vmatmul.mubr.f32.gmra.mrb[0].mxu0 %v2539
      %v2762 = vpop.f32.mrb[0].mxu0
      %v2763 = vadd.f32 0.0, %v2762
      %v2764 = vpop.f32.mrb[0].mxu0
      %2765 = vdwg.mxu0
      %v2766 = vadd.f32 %v2500, %v2608
      %v2767 = vadd.f32 %v2501, %v2613
      %v2768 = vadd.f32 %v2502, %v2618
      %v2769 = vadd.f32 %v2503, %v2623
      %v2770 = vadd.f32 %v2504, %v2628
      %v2771 = vadd.f32 %v2505, %v2633
      %v2772 = vadd.f32 %v2506, %v2638
      %v2773 = vadd.f32 %v2507, %v2643
      %v2774 = vadd.f32 %v2508, %v2648
      %v2775 = vadd.f32 %v2509, %v2653
      %v2776 = vadd.f32 %v2510, %v2658
      %v2777 = vadd.f32 %v2511, %v2663
      %v2778 = vadd.f32 %v2512, %v2668
      %v2779 = vadd.f32 %v2513, %v2673
      %v2780 = vadd.f32 %v2514, %v2678
      %v2781 = vadd.f32 %v2515, %v2683
      %v2782 = vadd.f32 %v2516, %v2688
      %v2783 = vadd.f32 %v2517, %v2693
      %v2784 = vadd.f32 %v2518, %v2698
      %v2785 = vadd.f32 %v2519, %v2703
      %v2786 = vadd.f32 %v2520, %v2708
      %v2787 = vadd.f32 %v2521, %v2713
      %v2788 = vadd.f32 %v2522, %v2718
      %v2789 = vadd.f32 %v2523, %v2723
      %v2790 = vadd.f32 %v2524, %v2728
      %v2791 = vadd.f32 %v2525, %v2733
      %v2792 = vadd.f32 %v2526, %v2738
      %v2793 = vadd.f32 %v2527, %v2743
      %v2794 = vadd.f32 %v2528, %v2748
      %v2795 = vadd.f32 %v2529, %v2753
      %v2796 = vadd.f32 %v2530, %v2758
      %v2797 = vadd.f32 %v2531, %v2763
      %v2799 = vrot.slane %v606, 1
      %v2800 = vrot.slane %v607, 1
      %v2801 = vsel %vm659, %v2799, %v2800
      %v2802 = vrot.slane %v608, 1
      %v2803 = vsel %vm659, %v2800, %v2802
      %s2804 = scalar_lea.vmem %s4, 112
      %v2805 = vld [vmem:[%s2804] sm:$0xff]
      %v2806 = vld [vmem:[%s2804 + $0x8] sm:$0xff]
      %v2807 = vsel %vm743, %v2801, 0
      %v2809 = vsel %vm743, %v2803, 0
      %2811 = vmatprep.subr.mxu0 0.0
      %2812 = vmatpush1.msra.mxu0 %v2805
      %2813 = vmatprep.subr.mxu0 0.0
      %2814 = vmatpush1.msra.mxu0 %v2806
      %2815 = vmatprep.subr.mxu0 0.0
      %2816 = vmatpush1.msra.mxu0 0.0
      %2817 = vmatprep.subr.mxu0 0.0
      %2818 = vmatpush1.msra.mxu0 0.0
      %2819 = vmatprep.subr.mxu0 0.0
      %2820 = vmatpush1.msra.mxu0 0.0
      %2821 = vmatprep.subr.mxu0 0.0
      %2822 = vmatpush1.msra.mxu0 0.0
      %2823 = vmatprep.subr.mxu0 0.0
      %2824 = vmatpush1.msra.mxu0 0.0
      %2825 = vmatprep.subr.mxu0 0.0
      %2826 = vmatpush1.msra.mxu0 0.0
      %2827 = vmatprep.subr.mxu0 0.0
      %2828 = vmatpush1.msra.mxu0 0.0
      %2829 = vmatprep.subr.mxu0 0.0
      %2830 = vmatpush1.msra.mxu0 0.0
      %2831 = vmatprep.subr.mxu0 0.0
      %2832 = vmatpush1.msra.mxu0 0.0
      %2833 = vmatprep.subr.mxu0 0.0
      %2834 = vmatpush1.msra.mxu0 0.0
      %2835 = vmatprep.subr.mxu0 0.0
      %2836 = vmatpush1.msra.mxu0 0.0
      %2837 = vmatprep.subr.mxu0 0.0
      %2838 = vmatpush1.msra.mxu0 0.0
      %2839 = vmatprep.subr.mxu0 0.0
      %2840 = vmatpush1.msra.mxu0 0.0
      %2841 = vmatprep.subr.mxu0 0.0
      %2842 = vmatpush1.msra.mxu0 0.0
      %2843 = vmatprep.subr.mxu0 0.0
      %2844 = vmatpush1.msra.mxu0 0.0
      %2845 = vmatprep.subr.mxu0 0.0
      %2846 = vmatpush1.msra.mxu0 0.0
      %2847 = vmatprep.subr.mxu0 0.0
      %2848 = vmatpush1.msra.mxu0 0.0
      %2849 = vmatprep.subr.mxu0 0.0
      %2850 = vmatpush1.msra.mxu0 0.0
      %2851 = vmatprep.subr.mxu0 0.0
      %2852 = vmatpush1.msra.mxu0 0.0
      %2853 = vmatprep.subr.mxu0 0.0
      %2854 = vmatpush1.msra.mxu0 0.0
      %2855 = vmatprep.subr.mxu0 0.0
      %2856 = vmatpush1.msra.mxu0 0.0
      %2857 = vmatprep.subr.mxu0 0.0
      %2858 = vmatpush1.msra.mxu0 0.0
      %2859 = vmatprep.subr.mxu0 0.0
      %2860 = vmatpush1.msra.mxu0 0.0
      %2861 = vmatprep.subr.mxu0 0.0
      %2862 = vmatpush1.msra.mxu0 0.0
      %2863 = vmatprep.subr.mxu0 0.0
      %2864 = vmatpush1.msra.mxu0 0.0
      %2865 = vmatprep.subr.mxu0 0.0
      %2866 = vmatpush1.msra.mxu0 0.0
      %2867 = vmatprep.subr.mxu0 0.0
      %2868 = vmatpush1.msra.mxu0 0.0
      %2869 = vmatprep.subr.mxu0 0.0
      %2870 = vmatpush1.msra.mxu0 0.0
      %2871 = vmatprep.subr.mxu0 0.0
      %2872 = vmatpush1.msra.mxu0 0.0
      %2873 = vmatprep.subr.mxu0 0.0
      %2874 = vmatpush1.msra.mxu0 0.0
      %2875 = vmatprep.mubr.f32.mxu0 0.0
      %2876 = vmatmul.mubr.f32.gmra.mrb[0].mxu0 %v752
      %v2877 = vpop.f32.mrb[0].mxu0
      %v2878 = vadd.f32 0.0, %v2877
      %v2879 = vpop.f32.mrb[0].mxu0
      %2880 = vmatprep.mubr.f32.mxu0 0.0
      %2881 = vmatmul.mubr.f32.gmra.mrb[0].mxu0 %v754
      %v2882 = vpop.f32.mrb[0].mxu0
      %v2883 = vadd.f32 0.0, %v2882
      %v2884 = vpop.f32.mrb[0].mxu0
      %2885 = vmatprep.mubr.f32.mxu0 0.0
      %2886 = vmatmul.mubr.f32.gmra.mrb[0].mxu0 %v756
      %v2887 = vpop.f32.mrb[0].mxu0
      %v2888 = vadd.f32 0.0, %v2887
      %v2889 = vpop.f32.mrb[0].mxu0
      %2890 = vmatprep.mubr.f32.mxu0 0.0
      %2891 = vmatmul.mubr.f32.gmra.mrb[0].mxu0 %v758
      %v2892 = vpop.f32.mrb[0].mxu0
      %v2893 = vadd.f32 0.0, %v2892
      %v2894 = vpop.f32.mrb[0].mxu0
      %2895 = vmatprep.mubr.f32.mxu0 0.0
      %2896 = vmatmul.mubr.f32.gmra.mrb[0].mxu0 %v760
      %v2897 = vpop.f32.mrb[0].mxu0
      %v2898 = vadd.f32 0.0, %v2897
      %v2899 = vpop.f32.mrb[0].mxu0
      %2900 = vmatprep.mubr.f32.mxu0 0.0
      %2901 = vmatmul.mubr.f32.gmra.mrb[0].mxu0 %v762
      %v2902 = vpop.f32.mrb[0].mxu0
      %v2903 = vadd.f32 0.0, %v2902
      %v2904 = vpop.f32.mrb[0].mxu0
      %2905 = vmatprep.mubr.f32.mxu0 0.0
      %2906 = vmatmul.mubr.f32.gmra.mrb[0].mxu0 %v764
      %v2907 = vpop.f32.mrb[0].mxu0
      %v2908 = vadd.f32 0.0, %v2907
      %v2909 = vpop.f32.mrb[0].mxu0
      %2910 = vmatprep.mubr.f32.mxu0 0.0
      %2911 = vmatmul.mubr.f32.gmra.mrb[0].mxu0 %v766
      %v2912 = vpop.f32.mrb[0].mxu0
      %v2913 = vadd.f32 0.0, %v2912
      %v2914 = vpop.f32.mrb[0].mxu0
      %2915 = vmatprep.mubr.f32.mxu0 0.0
      %2916 = vmatmul.mubr.f32.gmra.mrb[0].mxu0 %v768
      %v2917 = vpop.f32.mrb[0].mxu0
      %v2918 = vadd.f32 0.0, %v2917
      %v2919 = vpop.f32.mrb[0].mxu0
      %2920 = vmatprep.mubr.f32.mxu0 0.0
      %2921 = vmatmul.mubr.f32.gmra.mrb[0].mxu0 %v770
      %v2922 = vpop.f32.mrb[0].mxu0
      %v2923 = vadd.f32 0.0, %v2922
      %v2924 = vpop.f32.mrb[0].mxu0
      %2925 = vmatprep.mubr.f32.mxu0 0.0
      %2926 = vmatmul.mubr.f32.gmra.mrb[0].mxu0 %v772
      %v2927 = vpop.f32.mrb[0].mxu0
      %v2928 = vadd.f32 0.0, %v2927
      %v2929 = vpop.f32.mrb[0].mxu0
      %2930 = vmatprep.mubr.f32.mxu0 0.0
      %2931 = vmatmul.mubr.f32.gmra.mrb[0].mxu0 %v774
      %v2932 = vpop.f32.mrb[0].mxu0
      %v2933 = vadd.f32 0.0, %v2932
      %v2934 = vpop.f32.mrb[0].mxu0
      %2935 = vmatprep.mubr.f32.mxu0 0.0
      %2936 = vmatmul.mubr.f32.gmra.mrb[0].mxu0 %v776
      %v2937 = vpop.f32.mrb[0].mxu0
      %v2938 = vadd.f32 0.0, %v2937
      %v2939 = vpop.f32.mrb[0].mxu0
      %2940 = vmatprep.mubr.f32.mxu0 0.0
      %2941 = vmatmul.mubr.f32.gmra.mrb[0].mxu0 %v778
      %v2942 = vpop.f32.mrb[0].mxu0
      %v2943 = vadd.f32 0.0, %v2942
      %v2944 = vpop.f32.mrb[0].mxu0
      %2945 = vmatprep.mubr.f32.mxu0 0.0
      %2946 = vmatmul.mubr.f32.gmra.mrb[0].mxu0 %v780
      %v2947 = vpop.f32.mrb[0].mxu0
      %v2948 = vadd.f32 0.0, %v2947
      %v2949 = vpop.f32.mrb[0].mxu0
      %2950 = vmatprep.mubr.f32.mxu0 0.0
      %2951 = vmatmul.mubr.f32.gmra.mrb[0].mxu0 %v782
      %v2952 = vpop.f32.mrb[0].mxu0
      %v2953 = vadd.f32 0.0, %v2952
      %v2954 = vpop.f32.mrb[0].mxu0
      %2955 = vmatprep.mubr.f32.mxu0 0.0
      %2956 = vmatmul.mubr.f32.gmra.mrb[0].mxu0 %v784
      %v2957 = vpop.f32.mrb[0].mxu0
      %v2958 = vadd.f32 0.0, %v2957
      %v2959 = vpop.f32.mrb[0].mxu0
      %2960 = vmatprep.mubr.f32.mxu0 0.0
      %2961 = vmatmul.mubr.f32.gmra.mrb[0].mxu0 %v786
      %v2962 = vpop.f32.mrb[0].mxu0
      %v2963 = vadd.f32 0.0, %v2962
      %v2964 = vpop.f32.mrb[0].mxu0
      %2965 = vmatprep.mubr.f32.mxu0 0.0
      %2966 = vmatmul.mubr.f32.gmra.mrb[0].mxu0 %v788
      %v2967 = vpop.f32.mrb[0].mxu0
      %v2968 = vadd.f32 0.0, %v2967
      %v2969 = vpop.f32.mrb[0].mxu0
      %2970 = vmatprep.mubr.f32.mxu0 0.0
      %2971 = vmatmul.mubr.f32.gmra.mrb[0].mxu0 %v790
      %v2972 = vpop.f32.mrb[0].mxu0
      %v2973 = vadd.f32 0.0, %v2972
      %v2974 = vpop.f32.mrb[0].mxu0
      %2975 = vmatprep.mubr.f32.mxu0 0.0
      %2976 = vmatmul.mubr.f32.gmra.mrb[0].mxu0 %v792
      %v2977 = vpop.f32.mrb[0].mxu0
      %v2978 = vadd.f32 0.0, %v2977
      %v2979 = vpop.f32.mrb[0].mxu0
      %2980 = vmatprep.mubr.f32.mxu0 0.0
      %2981 = vmatmul.mubr.f32.gmra.mrb[0].mxu0 %v794
      %v2982 = vpop.f32.mrb[0].mxu0
      %v2983 = vadd.f32 0.0, %v2982
      %v2984 = vpop.f32.mrb[0].mxu0
      %2985 = vmatprep.mubr.f32.mxu0 0.0
      %2986 = vmatmul.mubr.f32.gmra.mrb[0].mxu0 %v796
      %v2987 = vpop.f32.mrb[0].mxu0
      %v2988 = vadd.f32 0.0, %v2987
      %v2989 = vpop.f32.mrb[0].mxu0
      %2990 = vmatprep.mubr.f32.mxu0 0.0
      %2991 = vmatmul.mubr.f32.gmra.mrb[0].mxu0 %v798
      %v2992 = vpop.f32.mrb[0].mxu0
      %v2993 = vadd.f32 0.0, %v2992
      %v2994 = vpop.f32.mrb[0].mxu0
      %2995 = vmatprep.mubr.f32.mxu0 0.0
      %2996 = vmatmul.mubr.f32.gmra.mrb[0].mxu0 %v800
      %v2997 = vpop.f32.mrb[0].mxu0
      %v2998 = vadd.f32 0.0, %v2997
      %v2999 = vpop.f32.mrb[0].mxu0
      %3000 = vmatprep.mubr.f32.mxu0 0.0
      %3001 = vmatmul.mubr.f32.gmra.mrb[0].mxu0 %v802
      %v3002 = vpop.f32.mrb[0].mxu0
      %v3003 = vadd.f32 0.0, %v3002
      %v3004 = vpop.f32.mrb[0].mxu0
      %3005 = vmatprep.mubr.f32.mxu0 0.0
      %3006 = vmatmul.mubr.f32.gmra.mrb[0].mxu0 %v804
      %v3007 = vpop.f32.mrb[0].mxu0
      %v3008 = vadd.f32 0.0, %v3007
      %v3009 = vpop.f32.mrb[0].mxu0
      %3010 = vmatprep.mubr.f32.mxu0 0.0
      %3011 = vmatmul.mubr.f32.gmra.mrb[0].mxu0 %v806
      %v3012 = vpop.f32.mrb[0].mxu0
      %v3013 = vadd.f32 0.0, %v3012
      %v3014 = vpop.f32.mrb[0].mxu0
      %3015 = vmatprep.mubr.f32.mxu0 0.0
      %3016 = vmatmul.mubr.f32.gmra.mrb[0].mxu0 %v2002
      %v3017 = vpop.f32.mrb[0].mxu0
      %v3018 = vadd.f32 0.0, %v3017
      %v3019 = vpop.f32.mrb[0].mxu0
      %3020 = vmatprep.mubr.f32.mxu0 0.0
      %3021 = vmatmul.mubr.f32.gmra.mrb[0].mxu0 %v2004
      %v3022 = vpop.f32.mrb[0].mxu0
      %v3023 = vadd.f32 0.0, %v3022
      %v3024 = vpop.f32.mrb[0].mxu0
      %3025 = vmatprep.mubr.f32.mxu0 0.0
      %3026 = vmatmul.mubr.f32.gmra.mrb[0].mxu0 %v2807
      %v3027 = vpop.f32.mrb[0].mxu0
      %v3028 = vadd.f32 0.0, %v3027
      %v3029 = vpop.f32.mrb[0].mxu0
      %3030 = vmatprep.mubr.f32.mxu0 0.0
      %3031 = vmatmul.mubr.f32.gmra.mrb[0].mxu0 %v2809
      %v3032 = vpop.f32.mrb[0].mxu0
      %v3033 = vadd.f32 0.0, %v3032
      %v3034 = vpop.f32.mrb[0].mxu0
      %3035 = vdwg.mxu0
      %v3036 = vadd.f32 %v2766, %v2878
      %v3037 = vadd.f32 %v2767, %v2883
      %v3038 = vadd.f32 %v2768, %v2888
      %v3039 = vadd.f32 %v2769, %v2893
      %v3040 = vadd.f32 %v2770, %v2898
      %v3041 = vadd.f32 %v2771, %v2903
      %v3042 = vadd.f32 %v2772, %v2908
      %v3043 = vadd.f32 %v2773, %v2913
      %v3044 = vadd.f32 %v2774, %v2918
      %v3045 = vadd.f32 %v2775, %v2923
      %v3046 = vadd.f32 %v2776, %v2928
      %v3047 = vadd.f32 %v2777, %v2933
      %v3048 = vadd.f32 %v2778, %v2938
      %v3049 = vadd.f32 %v2779, %v2943
      %v3050 = vadd.f32 %v2780, %v2948
      %v3051 = vadd.f32 %v2781, %v2953
      %v3052 = vadd.f32 %v2782, %v2958
      %v3053 = vadd.f32 %v2783, %v2963
      %v3054 = vadd.f32 %v2784, %v2968
      %v3055 = vadd.f32 %v2785, %v2973
      %v3056 = vadd.f32 %v2786, %v2978
      %v3057 = vadd.f32 %v2787, %v2983
      %v3058 = vadd.f32 %v2788, %v2988
      %v3059 = vadd.f32 %v2789, %v2993
      %v3060 = vadd.f32 %v2790, %v2998
      %v3061 = vadd.f32 %v2791, %v3003
      %v3062 = vadd.f32 %v2792, %v3008
      %v3063 = vadd.f32 %v2793, %v3013
      %v3064 = vadd.f32 %v2794, %v3018
      %v3065 = vadd.f32 %v2795, %v3023
      %v3066 = vadd.f32 %v2796, %v3028
      %v3067 = vadd.f32 %v2797, %v3033
      %v3068 = vrot.slane %v606, 2
      %v3069 = vrot.slane %v607, 2
      %v3070 = vsel %vm1322, %v3068, %v3069
      %v3071 = vrot.slane %v608, 2
      %v3072 = vsel %vm1322, %v3069, %v3071
      %s3073 = scalar_lea.vmem %s4, 128
      %v3074 = vld [vmem:[%s3073] sm:$0xff]
      %v3075 = vld [vmem:[%s3073 + $0x8] sm:$0xff]
      %v3076 = vsel %vm743, %v3070, 0
      %v3078 = vsel %vm743, %v3072, 0
      %3080 = vmatprep.subr.mxu0 0.0
      %3081 = vmatpush1.msra.mxu0 %v3074
      %3082 = vmatprep.subr.mxu0 0.0
      %3083 = vmatpush1.msra.mxu0 %v3075
      %3084 = vmatprep.subr.mxu0 0.0
      %3085 = vmatpush1.msra.mxu0 0.0
      %3086 = vmatprep.subr.mxu0 0.0
      %3087 = vmatpush1.msra.mxu0 0.0
      %3088 = vmatprep.subr.mxu0 0.0
      %3089 = vmatpush1.msra.mxu0 0.0
      %3090 = vmatprep.subr.mxu0 0.0
      %3091 = vmatpush1.msra.mxu0 0.0
      %3092 = vmatprep.subr.mxu0 0.0
      %3093 = vmatpush1.msra.mxu0 0.0
      %3094 = vmatprep.subr.mxu0 0.0
      %3095 = vmatpush1.msra.mxu0 0.0
      %3096 = vmatprep.subr.mxu0 0.0
      %3097 = vmatpush1.msra.mxu0 0.0
      %3098 = vmatprep.subr.mxu0 0.0
      %3099 = vmatpush1.msra.mxu0 0.0
      %3100 = vmatprep.subr.mxu0 0.0
      %3101 = vmatpush1.msra.mxu0 0.0
      %3102 = vmatprep.subr.mxu0 0.0
      %3103 = vmatpush1.msra.mxu0 0.0
      %3104 = vmatprep.subr.mxu0 0.0
      %3105 = vmatpush1.msra.mxu0 0.0
      %3106 = vmatprep.subr.mxu0 0.0
      %3107 = vmatpush1.msra.mxu0 0.0
      %3108 = vmatprep.subr.mxu0 0.0
      %3109 = vmatpush1.msra.mxu0 0.0
      %3110 = vmatprep.subr.mxu0 0.0
      %3111 = vmatpush1.msra.mxu0 0.0
      %3112 = vmatprep.subr.mxu0 0.0
      %3113 = vmatpush1.msra.mxu0 0.0
      %3114 = vmatprep.subr.mxu0 0.0
      %3115 = vmatpush1.msra.mxu0 0.0
      %3116 = vmatprep.subr.mxu0 0.0
      %3117 = vmatpush1.msra.mxu0 0.0
      %3118 = vmatprep.subr.mxu0 0.0
      %3119 = vmatpush1.msra.mxu0 0.0
      %3120 = vmatprep.subr.mxu0 0.0
      %3121 = vmatpush1.msra.mxu0 0.0
      %3122 = vmatprep.subr.mxu0 0.0
      %3123 = vmatpush1.msra.mxu0 0.0
      %3124 = vmatprep.subr.mxu0 0.0
      %3125 = vmatpush1.msra.mxu0 0.0
      %3126 = vmatprep.subr.mxu0 0.0
      %3127 = vmatpush1.msra.mxu0 0.0
      %3128 = vmatprep.subr.mxu0 0.0
      %3129 = vmatpush1.msra.mxu0 0.0
      %3130 = vmatprep.subr.mxu0 0.0
      %3131 = vmatpush1.msra.mxu0 0.0
      %3132 = vmatprep.subr.mxu0 0.0
      %3133 = vmatpush1.msra.mxu0 0.0
      %3134 = vmatprep.subr.mxu0 0.0
      %3135 = vmatpush1.msra.mxu0 0.0
      %3136 = vmatprep.subr.mxu0 0.0
      %3137 = vmatpush1.msra.mxu0 0.0
      %3138 = vmatprep.subr.mxu0 0.0
      %3139 = vmatpush1.msra.mxu0 0.0
      %3140 = vmatprep.subr.mxu0 0.0
      %3141 = vmatpush1.msra.mxu0 0.0
      %3142 = vmatprep.subr.mxu0 0.0
      %3143 = vmatpush1.msra.mxu0 0.0
      %3144 = vmatprep.mubr.f32.mxu0 0.0
      %3145 = vmatmul.mubr.f32.gmra.mrb[0].mxu0 %v1414
      %v3146 = vpop.f32.mrb[0].mxu0
      %v3147 = vadd.f32 0.0, %v3146
      %v3148 = vpop.f32.mrb[0].mxu0
      %3149 = vmatprep.mubr.f32.mxu0 0.0
      %3150 = vmatmul.mubr.f32.gmra.mrb[0].mxu0 %v1416
      %v3151 = vpop.f32.mrb[0].mxu0
      %v3152 = vadd.f32 0.0, %v3151
      %v3153 = vpop.f32.mrb[0].mxu0
      %3154 = vmatprep.mubr.f32.mxu0 0.0
      %3155 = vmatmul.mubr.f32.gmra.mrb[0].mxu0 %v1418
      %v3156 = vpop.f32.mrb[0].mxu0
      %v3157 = vadd.f32 0.0, %v3156
      %v3158 = vpop.f32.mrb[0].mxu0
      %3159 = vmatprep.mubr.f32.mxu0 0.0
      %3160 = vmatmul.mubr.f32.gmra.mrb[0].mxu0 %v1420
      %v3161 = vpop.f32.mrb[0].mxu0
      %v3162 = vadd.f32 0.0, %v3161
      %v3163 = vpop.f32.mrb[0].mxu0
      %3164 = vmatprep.mubr.f32.mxu0 0.0
      %3165 = vmatmul.mubr.f32.gmra.mrb[0].mxu0 %v1422
      %v3166 = vpop.f32.mrb[0].mxu0
      %v3167 = vadd.f32 0.0, %v3166
      %v3168 = vpop.f32.mrb[0].mxu0
      %3169 = vmatprep.mubr.f32.mxu0 0.0
      %3170 = vmatmul.mubr.f32.gmra.mrb[0].mxu0 %v1424
      %v3171 = vpop.f32.mrb[0].mxu0
      %v3172 = vadd.f32 0.0, %v3171
      %v3173 = vpop.f32.mrb[0].mxu0
      %3174 = vmatprep.mubr.f32.mxu0 0.0
      %3175 = vmatmul.mubr.f32.gmra.mrb[0].mxu0 %v1426
      %v3176 = vpop.f32.mrb[0].mxu0
      %v3177 = vadd.f32 0.0, %v3176
      %v3178 = vpop.f32.mrb[0].mxu0
      %3179 = vmatprep.mubr.f32.mxu0 0.0
      %3180 = vmatmul.mubr.f32.gmra.mrb[0].mxu0 %v1428
      %v3181 = vpop.f32.mrb[0].mxu0
      %v3182 = vadd.f32 0.0, %v3181
      %v3183 = vpop.f32.mrb[0].mxu0
      %3184 = vmatprep.mubr.f32.mxu0 0.0
      %3185 = vmatmul.mubr.f32.gmra.mrb[0].mxu0 %v1430
      %v3186 = vpop.f32.mrb[0].mxu0
      %v3187 = vadd.f32 0.0, %v3186
      %v3188 = vpop.f32.mrb[0].mxu0
      %3189 = vmatprep.mubr.f32.mxu0 0.0
      %3190 = vmatmul.mubr.f32.gmra.mrb[0].mxu0 %v1432
      %v3191 = vpop.f32.mrb[0].mxu0
      %v3192 = vadd.f32 0.0, %v3191
      %v3193 = vpop.f32.mrb[0].mxu0
      %3194 = vmatprep.mubr.f32.mxu0 0.0
      %3195 = vmatmul.mubr.f32.gmra.mrb[0].mxu0 %v1434
      %v3196 = vpop.f32.mrb[0].mxu0
      %v3197 = vadd.f32 0.0, %v3196
      %v3198 = vpop.f32.mrb[0].mxu0
      %3199 = vmatprep.mubr.f32.mxu0 0.0
      %3200 = vmatmul.mubr.f32.gmra.mrb[0].mxu0 %v1436
      %v3201 = vpop.f32.mrb[0].mxu0
      %v3202 = vadd.f32 0.0, %v3201
      %v3203 = vpop.f32.mrb[0].mxu0
      %3204 = vmatprep.mubr.f32.mxu0 0.0
      %3205 = vmatmul.mubr.f32.gmra.mrb[0].mxu0 %v1438
      %v3206 = vpop.f32.mrb[0].mxu0
      %v3207 = vadd.f32 0.0, %v3206
      %v3208 = vpop.f32.mrb[0].mxu0
      %3209 = vmatprep.mubr.f32.mxu0 0.0
      %3210 = vmatmul.mubr.f32.gmra.mrb[0].mxu0 %v1440
      %v3211 = vpop.f32.mrb[0].mxu0
      %v3212 = vadd.f32 0.0, %v3211
      %v3213 = vpop.f32.mrb[0].mxu0
      %3214 = vmatprep.mubr.f32.mxu0 0.0
      %3215 = vmatmul.mubr.f32.gmra.mrb[0].mxu0 %v1442
      %v3216 = vpop.f32.mrb[0].mxu0
      %v3217 = vadd.f32 0.0, %v3216
      %v3218 = vpop.f32.mrb[0].mxu0
      %3219 = vmatprep.mubr.f32.mxu0 0.0
      %3220 = vmatmul.mubr.f32.gmra.mrb[0].mxu0 %v1444
      %v3221 = vpop.f32.mrb[0].mxu0
      %v3222 = vadd.f32 0.0, %v3221
      %v3223 = vpop.f32.mrb[0].mxu0
      %3224 = vmatprep.mubr.f32.mxu0 0.0
      %3225 = vmatmul.mubr.f32.gmra.mrb[0].mxu0 %v1446
      %v3226 = vpop.f32.mrb[0].mxu0
      %v3227 = vadd.f32 0.0, %v3226
      %v3228 = vpop.f32.mrb[0].mxu0
      %3229 = vmatprep.mubr.f32.mxu0 0.0
      %3230 = vmatmul.mubr.f32.gmra.mrb[0].mxu0 %v1448
      %v3231 = vpop.f32.mrb[0].mxu0
      %v3232 = vadd.f32 0.0, %v3231
      %v3233 = vpop.f32.mrb[0].mxu0
      %3234 = vmatprep.mubr.f32.mxu0 0.0
      %3235 = vmatmul.mubr.f32.gmra.mrb[0].mxu0 %v1450
      %v3236 = vpop.f32.mrb[0].mxu0
      %v3237 = vadd.f32 0.0, %v3236
      %v3238 = vpop.f32.mrb[0].mxu0
      %3239 = vmatprep.mubr.f32.mxu0 0.0
      %3240 = vmatmul.mubr.f32.gmra.mrb[0].mxu0 %v1452
      %v3241 = vpop.f32.mrb[0].mxu0
      %v3242 = vadd.f32 0.0, %v3241
      %v3243 = vpop.f32.mrb[0].mxu0
      %3244 = vmatprep.mubr.f32.mxu0 0.0
      %3245 = vmatmul.mubr.f32.gmra.mrb[0].mxu0 %v1454
      %v3246 = vpop.f32.mrb[0].mxu0
      %v3247 = vadd.f32 0.0, %v3246
      %v3248 = vpop.f32.mrb[0].mxu0
      %3249 = vmatprep.mubr.f32.mxu0 0.0
      %3250 = vmatmul.mubr.f32.gmra.mrb[0].mxu0 %v1456
      %v3251 = vpop.f32.mrb[0].mxu0
      %v3252 = vadd.f32 0.0, %v3251
      %v3253 = vpop.f32.mrb[0].mxu0
      %3254 = vmatprep.mubr.f32.mxu0 0.0
      %3255 = vmatmul.mubr.f32.gmra.mrb[0].mxu0 %v1458
      %v3256 = vpop.f32.mrb[0].mxu0
      %v3257 = vadd.f32 0.0, %v3256
      %v3258 = vpop.f32.mrb[0].mxu0
      %3259 = vmatprep.mubr.f32.mxu0 0.0
      %3260 = vmatmul.mubr.f32.gmra.mrb[0].mxu0 %v1460
      %v3261 = vpop.f32.mrb[0].mxu0
      %v3262 = vadd.f32 0.0, %v3261
      %v3263 = vpop.f32.mrb[0].mxu0
      %3264 = vmatprep.mubr.f32.mxu0 0.0
      %3265 = vmatmul.mubr.f32.gmra.mrb[0].mxu0 %v1462
      %v3266 = vpop.f32.mrb[0].mxu0
      %v3267 = vadd.f32 0.0, %v3266
      %v3268 = vpop.f32.mrb[0].mxu0
      %3269 = vmatprep.mubr.f32.mxu0 0.0
      %3270 = vmatmul.mubr.f32.gmra.mrb[0].mxu0 %v1464
      %v3271 = vpop.f32.mrb[0].mxu0
      %v3272 = vadd.f32 0.0, %v3271
      %v3273 = vpop.f32.mrb[0].mxu0
      %3274 = vmatprep.mubr.f32.mxu0 0.0
      %3275 = vmatmul.mubr.f32.gmra.mrb[0].mxu0 %v1466
      %v3276 = vpop.f32.mrb[0].mxu0
      %v3277 = vadd.f32 0.0, %v3276
      %v3278 = vpop.f32.mrb[0].mxu0
      %3279 = vmatprep.mubr.f32.mxu0 0.0
      %3280 = vmatmul.mubr.f32.gmra.mrb[0].mxu0 %v1468
      %v3281 = vpop.f32.mrb[0].mxu0
      %v3282 = vadd.f32 0.0, %v3281
      %v3283 = vpop.f32.mrb[0].mxu0
      %3284 = vmatprep.mubr.f32.mxu0 0.0
      %3285 = vmatmul.mubr.f32.gmra.mrb[0].mxu0 %v2271
      %v3286 = vpop.f32.mrb[0].mxu0
      %v3287 = vadd.f32 0.0, %v3286
      %v3288 = vpop.f32.mrb[0].mxu0
      %3289 = vmatprep.mubr.f32.mxu0 0.0
      %3290 = vmatmul.mubr.f32.gmra.mrb[0].mxu0 %v2273
      %v3291 = vpop.f32.mrb[0].mxu0
      %v3292 = vadd.f32 0.0, %v3291
      %v3293 = vpop.f32.mrb[0].mxu0
      %3294 = vmatprep.mubr.f32.mxu0 0.0
      %3295 = vmatmul.mubr.f32.gmra.mrb[0].mxu0 %v3076
      %v3296 = vpop.f32.mrb[0].mxu0
      %v3297 = vadd.f32 0.0, %v3296
      %v3298 = vpop.f32.mrb[0].mxu0
      %3299 = vmatprep.mubr.f32.mxu0 0.0
      %3300 = vmatmul.mubr.f32.gmra.mrb[0].mxu0 %v3078
      %v3301 = vpop.f32.mrb[0].mxu0
      %v3302 = vadd.f32 0.0, %v3301
      %v3303 = vpop.f32.mrb[0].mxu0
      %3304 = vdwg.mxu0
      %v3305 = vadd.f32 %v3036, %v3147
      %v3306 = vadd.f32 %v3037, %v3152
      %v3307 = vadd.f32 %v3038, %v3157
      %v3308 = vadd.f32 %v3039, %v3162
      %v3309 = vadd.f32 %v3040, %v3167
      %v3310 = vadd.f32 %v3041, %v3172
      %v3311 = vadd.f32 %v3042, %v3177
      %v3312 = vadd.f32 %v3043, %v3182
      %v3313 = vadd.f32 %v3044, %v3187
      %v3314 = vadd.f32 %v3045, %v3192
      %v3315 = vadd.f32 %v3046, %v3197
      %v3316 = vadd.f32 %v3047, %v3202
      %v3317 = vadd.f32 %v3048, %v3207
      %v3318 = vadd.f32 %v3049, %v3212
      %v3319 = vadd.f32 %v3050, %v3217
      %v3320 = vadd.f32 %v3051, %v3222
      %v3321 = vadd.f32 %v3052, %v3227
      %v3322 = vadd.f32 %v3053, %v3232
      %v3323 = vadd.f32 %v3054, %v3237
      %v3324 = vadd.f32 %v3055, %v3242
      %v3325 = vadd.f32 %v3056, %v3247
      %v3326 = vadd.f32 %v3057, %v3252
      %v3327 = vadd.f32 %v3058, %v3257
      %v3328 = vadd.f32 %v3059, %v3262
      %v3329 = vadd.f32 %v3060, %v3267
      %v3330 = vadd.f32 %v3061, %v3272
      %v3331 = vadd.f32 %v3062, %v3277
      %v3332 = vadd.f32 %v3063, %v3282
      %v3333 = vadd.f32 %v3064, %v3287
      %v3334 = vadd.f32 %v3065, %v3292
      %v3335 = vadd.f32 %v3066, %v3297
      %v3336 = vadd.f32 %v3067, %v3302
      %v3337 = vld [vmem:[%s5] sm:$0x1]
      %v3339 = vlaneseq
      %v3340 = vshrl.u32 %v3339, 7
      %v3341 = vsub.s32 0, %v3340
      %v3342 = vrot.slane %v3337, %v3341
      %v3344 = vadd.f32 %v3305, %v3342
      %v3345 = vadd.f32 %v3306, %v3342
      %v3346 = vadd.f32 %v3307, %v3342
      %v3347 = vadd.f32 %v3308, %v3342
      %v3348 = vadd.f32 %v3309, %v3342
      %v3349 = vadd.f32 %v3310, %v3342
      %v3350 = vadd.f32 %v3311, %v3342
      %v3351 = vadd.f32 %v3312, %v3342
      %v3352 = vadd.f32 %v3313, %v3342
      %v3353 = vadd.f32 %v3314, %v3342
      %v3354 = vadd.f32 %v3315, %v3342
      %v3355 = vadd.f32 %v3316, %v3342
      %v3356 = vadd.f32 %v3317, %v3342
      %v3357 = vadd.f32 %v3318, %v3342
      %v3358 = vadd.f32 %v3319, %v3342
      %v3359 = vadd.f32 %v3320, %v3342
      %v3360 = vadd.f32 %v3321, %v3342
      %v3361 = vadd.f32 %v3322, %v3342
      %v3362 = vadd.f32 %v3323, %v3342
      %v3363 = vadd.f32 %v3324, %v3342
      %v3364 = vadd.f32 %v3325, %v3342
      %v3365 = vadd.f32 %v3326, %v3342
      %v3366 = vadd.f32 %v3327, %v3342
      %v3367 = vadd.f32 %v3328, %v3342
      %v3368 = vadd.f32 %v3329, %v3342
      %v3369 = vadd.f32 %v3330, %v3342
      %v3370 = vadd.f32 %v3331, %v3342
      %v3371 = vadd.f32 %v3332, %v3342
      %v3372 = vadd.f32 %v3333, %v3342
      %v3373 = vadd.f32 %v3334, %v3342
      %v3374 = vadd.f32 %v3335, %v3342
      %v3375 = vadd.f32 %v3336, %v3342
      %vm3376 = vcmask 23552
      %3377 = vst.msk [vmem:[%s265] sm:$0xff] %vm3376, %v3344
      %3378 = vst.msk [vmem:[%s265 + $0x8] sm:$0xff] %vm3376, %v3345
      %3379 = vst.msk [vmem:[%s265 + $0x10] sm:$0xff] %vm3376, %v3346
      %3380 = vst.msk [vmem:[%s265 + $0x18] sm:$0xff] %vm3376, %v3347
      %3381 = vst.msk [vmem:[%s265 + $0x20] sm:$0xff] %vm3376, %v3348
      %3382 = vst.msk [vmem:[%s265 + $0x28] sm:$0xff] %vm3376, %v3349
      %3383 = vst.msk [vmem:[%s265 + $0x30] sm:$0xff] %vm3376, %v3350
      %3384 = vst.msk [vmem:[%s265 + $0x38] sm:$0xff] %vm3376, %v3351
      %3385 = vst.msk [vmem:[%s265 + $0x40] sm:$0xff] %vm3376, %v3352
      %3386 = vst.msk [vmem:[%s265 + $0x48] sm:$0xff] %vm3376, %v3353
      %3387 = vst.msk [vmem:[%s265 + $0x50] sm:$0xff] %vm3376, %v3354
      %3388 = vst.msk [vmem:[%s265 + $0x58] sm:$0xff] %vm3376, %v3355
      %3389 = vst.msk [vmem:[%s265 + $0x60] sm:$0xff] %vm3376, %v3356
      %3390 = vst.msk [vmem:[%s265 + $0x68] sm:$0xff] %vm3376, %v3357
      %3391 = vst.msk [vmem:[%s265 + $0x70] sm:$0xff] %vm3376, %v3358
      %3392 = vst.msk [vmem:[%s265 + $0x78] sm:$0xff] %vm3376, %v3359
      %3393 = vst.msk [vmem:[%s265 + $0x80] sm:$0xff] %vm3376, %v3360
      %3394 = vst.msk [vmem:[%s265 + $0x88] sm:$0xff] %vm3376, %v3361
      %3395 = vst.msk [vmem:[%s265 + $0x90] sm:$0xff] %vm3376, %v3362
      %3396 = vst.msk [vmem:[%s265 + $0x98] sm:$0xff] %vm3376, %v3363
      %3397 = vst.msk [vmem:[%s265 + $0xa0] sm:$0xff] %vm3376, %v3364
      %3398 = vst.msk [vmem:[%s265 + $0xa8] sm:$0xff] %vm3376, %v3365
      %3399 = vst.msk [vmem:[%s265 + $0xb0] sm:$0xff] %vm3376, %v3366
      %3400 = vst.msk [vmem:[%s265 + $0xb8] sm:$0xff] %vm3376, %v3367
      %3401 = vst.msk [vmem:[%s265 + $0xc0] sm:$0xff] %vm3376, %v3368
      %3402 = vst.msk [vmem:[%s265 + $0xc8] sm:$0xff] %vm3376, %v3369
      %3403 = vst.msk [vmem:[%s265 + $0xd0] sm:$0xff] %vm3376, %v3370
      %3404 = vst.msk [vmem:[%s265 + $0xd8] sm:$0xff] %vm3376, %v3371
      %3405 = vst.msk [vmem:[%s265 + $0xe0] sm:$0xff] %vm3376, %v3372
      %3406 = vst.msk [vmem:[%s265 + $0xe8] sm:$0xff] %vm3376, %v3373
      %3407 = vst.msk [vmem:[%s265 + $0xf0] sm:$0xff] %vm3376, %v3374
      %3408 = vst.msk [vmem:[%s265 + $0xf8] sm:$0xff] %vm3376, %v3375
      %p3409 = scmp.lt.s32.totalorder %s17, 1
      %s3410 = scalar_select %p3409, %s17, 1
      %s3411 = smul.addr %s3410, 32
      %s3412 = smul.addr %s3411, 8
      %s3413 = scalar_lea.vmem %s6, %s3412
      // Predicated region
      $region45: #{degae_forward.5} parent=43 // pred_check
        %p3414 = pneg %p171
      $region46: #{degae_forward.5} parent=43 // pred_check_branch
        %3416 = sbr.rel (%p3414) target = $region48
      $region47: #{degae_forward.5} parent=43 // pred_region
        _
      $region48: #{degae_forward.5} parent=43 // pred_fallthru
        _
    $region44: #{degae_forward.5} parent=5 // pred_fallthru
      _
    %p3417 = scmp.le.s32.totalorder 2, %s12
    // Predicated region
    $region49: #{degae_forward.5} parent=5 // pred_check
      %p3418 = pneg %p3417
    $region50: #{degae_forward.5} parent=5 // pred_check_branch
      %3420 = sbr.rel (%p3418) target = $region52
    $region51: #{degae_forward.5} parent=5 // pred_region
      %s3421 = ssub.s32 %s12, 2
      // Predicated region
      $region53: #{degae_forward.5} parent=51 // pred_check
        %p3422 = pneg %p177
      $region54: #{degae_forward.5} parent=51 // pred_check_branch
        %3424 = sbr.rel (%p3422) target = $region56
      $region55: #{degae_forward.5} parent=51 // pred_region
        %p3425 = scmp.lt.s32.totalorder %s18, 1
        %s3426 = scalar_select %p3425, %s18, 1
        %s3427 = smul.addr %s3426, 32
        %s3428 = smul.addr %s3427, 8
        %s3429 = scalar_lea.vmem %s6, %s3428
      $region56: #{degae_forward.5} parent=51 // pred_fallthru
        _
    $region52: #{degae_forward.5} parent=5 // pred_fallthru
      _
  $region6: #{degae_forward.5} parent=0 // loop_footer
    %s16 = sadd.s32 1, %s12
  $region7: #{degae_forward.5} parent=0 // loop_footer_branch
    %11 = sbr.rel target = $region3
  $region8: #{degae_forward.5} parent=0 // loop_exit
    _

</llo_original>
